<compile_context>
chip_gen: v6e
topology: v6e:2x2x1
jax: 0.10.0
libtpu: 0.0.40
codegen_flags: <defaults>
</compile_context>

<pallas_src>
import functools

import jax
import jax.numpy as jnp
import numpy as np
from jax.experimental import pallas as pl
from jax.experimental.pallas import tpu as pltpu

LATENT = 16       # latent_size
NUM_LAYERS = 2    # num_layers
NODE_OUT = 3      # node_output_size
EDGE_OUT = 3      # edge_output_size
STEPS = 5         # forward(..., steps=5)
LANE = 128        # lane-dense output width


def _vmem_specs(n):
    return [pl.BlockSpec(memory_space=pltpu.MemorySpace.VMEM) for _ in range(n)]


def _relu(x):
    return jnp.maximum(x, 0.0)


def _dot(a, b):
    return jnp.dot(a, b, preferred_element_type=jnp.float32)


# ----------------------------- fused Pallas kernel -------------------------- #

def _kgcn_fused_kernel(
    xn_ref, xe_ref, gsrc_ref, gdst_ref, adj_ref,
    new1_ref, neb1_ref, new2_ref, neb2_ref,
    eew1_ref, eeb1_ref, eew2_ref, eeb2_ref,
    we1_ref, be1_ref, we2_ref, be2_ref,
    wn1_ref, bn1_ref, wn2_ref, bn2_ref,
    ndw1_ref, ndb1_ref, ndw2_ref, ndb2_ref, ndw3_ref, ndb3_ref,
    edw1_ref, edb1_ref, edw2_ref, edb2_ref, edw3_ref, edb3_ref,
    pn_ref, pe_ref, *, steps):
    N = xn_ref.shape[0]
    E = xe_ref.shape[0]
    L = new2_ref.shape[1]

    # ---------------- encoders: mlp([in, L, L], activate_final=True) --------
    xn0 = _relu(_dot(xn_ref[...], new1_ref[...]) + neb1_ref[...])
    xn0 = _relu(_dot(xn0, new2_ref[...]) + neb2_ref[...])
    xe0 = _relu(_dot(xe_ref[...], eew1_ref[...]) + eeb1_ref[...])
    xe0 = _relu(_dot(xe0, eew2_ref[...]) + eeb2_ref[...])

    gsrc = gsrc_ref[...]          # [E, N] one-hot(src)  -> gather x[src]
    gdst = gdst_ref[...]          # [E, N] one-hot(dst)  -> gather x[dst]
    adj = adj_ref[...]            # [N, E] = one-hot(dst).T -> scatter-add over dst

    # Static row-block split of We1 ([6L, L]) and Wn1 ([3L, L]); folds the
    # edge_in / message concatenations into separate small matmuls.
    we1 = we1_ref[...]
    we1_s0, we1_s1 = we1[0 * L:1 * L], we1[1 * L:2 * L]   # x_node_0[src], x_node[src]
    we1_e0, we1_e1 = we1[2 * L:3 * L], we1[3 * L:4 * L]   # x_edge_0,      x_edge
    we1_d0, we1_d1 = we1[4 * L:5 * L], we1[5 * L:6 * L]   # x_node_0[dst], x_node[dst]
    wn1 = wn1_ref[...]
    wn1_s0, wn1_s1, wn1_er = wn1[0:L], wn1[L:2 * L], wn1[2 * L:3 * L]

    we2 = we2_ref[...]
    wn2 = wn2_ref[...]

    # Bias broadcasts hoisted once (not re-emitted inside the unrolled loop).
    be2_b = jnp.broadcast_to(be2_ref[...], (E, L))
    bn2_b = jnp.broadcast_to(bn2_ref[...], (N, L))

    # ---------------- step-invariant precomputes -----------------------------
    xs0 = _dot(gsrc, xn0)                  # x_node_0[src]                 [E, L]
    xd0 = _dot(gdst, xn0)                  # x_node_0[dst]                 [E, L]
    s_mat = _dot(adj, gsrc)                # edge-count matrix scatter(dst) o gather(src)  [N, N]
    agg_s0 = _dot(adj, xs0)                # scatter-add of x_node_0[src]  [N, L]

    c_edge = (_dot(xs0, we1_s0) + _dot(xe0, we1_e0) + _dot(xd0, we1_d0)
              + jnp.broadcast_to(be1_ref[...], (E, L)))                   # [E, L]
    c_node = _dot(agg_s0, wn1_s0) + jnp.broadcast_to(bn1_ref[...], (N, L))  # [N, L]

    # ---------------- message-passing steps ----------------------------------
    x_node, x_edge = xn0, xe0
    for _ in range(steps):
        xsg = _dot(gsrc, x_node)           # x_node[src]  [E, L]
        xdg = _dot(gdst, x_node)           # x_node[dst]  [E, L]

        # nn_edge(cat(x[src], edge_attr, x[dst])), activate_final=True
        h_e = _relu(c_edge + _dot(xsg, we1_s1) + _dot(x_edge, we1_e1)
                    + _dot(xdg, we1_d1))
        edge_repr = _relu(_dot(h_e, we2) + be2_b)            # [E, L]

        # scatter-add aggregation of cat(x_j, edge_repr) over dst;
        # adj goes through the MXU only once per step (RHS = edge_repr).
        agg_er = _dot(adj, edge_repr)      # [N, L]
        agg_sx = _dot(s_mat, x_node)       # [N, L]  == adj @ (gsrc @ x_node)

        # nn_node(agg), activate_final=True
        h_n = _relu(c_node + _dot(agg_sx, wn1_s1) + _dot(agg_er, wn1_er))
        x_node = _relu(_dot(h_n, wn2) + bn2_b)
        x_edge = edge_repr

    # ---------------- decoders (once, after the last step) -------------------
    hn = _relu(_dot(x_node, ndw1_ref[...]) + ndb1_ref[...])
    hn = _relu(_dot(hn, ndw2_ref[...]) + ndb2_ref[...])
    pn_ref[...] = _dot(hn, ndw3_ref[...]) + ndb3_ref[...]    # [N, LANE] lane-dense

    he = _relu(_dot(x_edge, edw1_ref[...]) + edb1_ref[...])
    he = _relu(_dot(he, edw2_ref[...]) + edb2_ref[...])
    pe_ref[...] = _dot(he, edw3_ref[...]) + edb3_ref[...]    # [E, LANE] lane-dense


# ------------------------------ parameters ---------------------------------- #

def _init_linear(key, n_in, n_out):
    kw, kb = jax.random.split(key)
    bound = 1.0 / np.sqrt(n_in)
    w = jax.random.uniform(kw, (n_in, n_out), jnp.float32, -bound, bound)
    b = jax.random.uniform(kb, (1, n_out), jnp.float32, -bound, bound)
    return w, b


def init_params(key, node_in_feats, edge_in_feats):
    keys = jax.random.split(key, 12)
    L = LATENT

    # encoders: mlp([n_in, L, L], activate_final=True)
    ne_w1, ne_b1 = _init_linear(keys[0], node_in_feats, L)
    ne_w2, ne_b2 = _init_linear(keys[1], L, L)
    ee_w1, ee_b1 = _init_linear(keys[2], edge_in_feats, L)
    ee_w2, ee_b2 = _init_linear(keys[3], L, L)

    # conv.nn_edge: mlp([6L, L, L], activate_final=True)
    we1, be1 = _init_linear(keys[4], 6 * L, L)
    we2, be2 = _init_linear(keys[5], L, L)
    # conv.nn_node: mlp([3L, L, L], activate_final=True)
    wn1, bn1 = _init_linear(keys[6], 3 * L, L)
    wn2, bn2 = _init_linear(keys[7], L, L)

    # decoders: mlp([L, L, L, out]) (no final activation)
    nd_w1, nd_b1 = _init_linear(keys[8], L, L)
    nd_w2, nd_b2 = _init_linear(keys[9], L, L)
    nd_w3, nd_b3 = _init_linear(keys[10], L, NODE_OUT)
    ed_w1, ed_b1 = _init_linear(jax.random.fold_in(keys[11], 0), L, L)
    ed_w2, ed_b2 = _init_linear(jax.random.fold_in(keys[11], 1), L, L)
    ed_w3, ed_b3 = _init_linear(jax.random.fold_in(keys[11], 2), L, EDGE_OUT)

    return {
        "node_enc": (ne_w1, ne_b1, ne_w2, ne_b2),
        "edge_enc": (ee_w1, ee_b1, ee_w2, ee_b2),
        "conv": (we1, be1, we2, be2, wn1, bn1, wn2, bn2),
        "node_dec": (nd_w1, nd_b1, nd_w2, nd_b2, nd_w3, nd_b3),
        "edge_dec": (ed_w1, ed_b1, ed_w2, ed_b2, ed_w3, ed_b3),
    }


# ------------------------------ forward pass --------------------------------- #

@functools.partial(jax.jit, static_argnames=("steps",))
def kgcn_forward(params, x_node, x_edge, edge_index, steps=STEPS):
    """Mirrors KGCN.forward with return_all_steps=False (single fused kernel)."""
    src, dst = edge_index[0], edge_index[1]
    n_nodes = x_node.shape[0]
    n_edges = x_edge.shape[0]

    # dense one-hot gather / scatter operators (exact in f32)
    gsrc = jax.nn.one_hot(src, n_nodes, dtype=jnp.float32)   # [E, N]
    gdst = jax.nn.one_hot(dst, n_nodes, dtype=jnp.float32)   # [E, N]
    adj = gdst.T                                             # [N, E]

    ne = params["node_enc"]
    ee = params["edge_enc"]
    we1, be1, we2, be2, wn1, bn1, wn2, bn2 = params["conv"]
    nd_w1, nd_b1, nd_w2, nd_b2, nd_w3, nd_b3 = params["node_dec"]
    ed_w1, ed_b1, ed_w2, ed_b2, ed_w3, ed_b3 = params["edge_dec"]

    # Zero-pad final decoder weights/biases to a 128-lane output slab so the
    # kernel stores are lane-dense (unmasked vst); sliced back below.
    ndw3p = jnp.pad(nd_w3, ((0, 0), (0, LANE - nd_w3.shape[1])))
    ndb3p = jnp.pad(nd_b3, ((0, 0), (0, LANE - nd_b3.shape[1])))
    edw3p = jnp.pad(ed_w3, ((0, 0), (0, LANE - ed_w3.shape[1])))
    edb3p = jnp.pad(ed_b3, ((0, 0), (0, LANE - ed_b3.shape[1])))

    inputs = (x_node, x_edge, gsrc, gdst, adj,
              *ne, *ee,
              we1, be1, we2, be2, wn1, bn1, wn2, bn2,
              nd_w1, nd_b1, nd_w2, nd_b2, ndw3p, ndb3p,
              ed_w1, ed_b1, ed_w2, ed_b2, edw3p, edb3p)

    pn_pad, pe_pad = pl.pallas_call(
        functools.partial(_kgcn_fused_kernel, steps=steps),
        out_shape=(jax.ShapeDtypeStruct((n_nodes, LANE), jnp.float32),
                   jax.ShapeDtypeStruct((n_edges, LANE), jnp.float32)),
        in_specs=_vmem_specs(len(inputs)),
        out_specs=tuple(_vmem_specs(2)),
        compiler_params=pltpu.CompilerParams(
            vmem_limit_bytes=32 * 1024 * 1024),
    )(*inputs)

    return pn_pad[:, :NODE_OUT], pe_pad[:, :EDGE_OUT]


# -------------------------- pure-JAX reference ------------------------------- #

def kgcn_reference(params, x_node, x_edge, edge_index, steps=STEPS):
    def mlp2_ref(x, w1, b1, w2, b2, final_relu):
        h = jnp.maximum(x @ w1 + b1, 0.0)
        y = h @ w2 + b2
        return jnp.maximum(y, 0.0) if final_relu else y

    def mlp3_ref(x, w1, b1, w2, b2, w3, b3):
        h = jnp.maximum(x @ w1 + b1, 0.0)
        h = jnp.maximum(h @ w2 + b2, 0.0)
        return h @ w3 + b3

    src, dst = edge_index[0], edge_index[1]
    n_nodes = x_node.shape[0]
    xn = mlp2_ref(x_node, *params["node_enc"], True)
    xe = mlp2_ref(x_edge, *params["edge_enc"], True)
    xn0, xe0 = xn, xe
    we1, be1, we2, be2, wn1, bn1, wn2, bn2 = params["conv"]
    pn = pe = None
    for _ in range(steps):
        xcat = jnp.concatenate([xn0, xn], axis=1)
        ecat = jnp.concatenate([xe0, xe], axis=1)
        xs, xd = xcat[src], xcat[dst]
        edge_in = jnp.concatenate([xs, ecat, xd], axis=1)
        er = mlp2_ref(edge_in, we1, be1, we2, be2, True)
        msg = jnp.concatenate([xs, er], axis=1)
        agg = jnp.zeros((n_nodes, msg.shape[1]), jnp.float32).at[dst].add(msg)
        xn = mlp2_ref(agg, wn1, bn1, wn2, bn2, True)
        xe = er
        pn = mlp3_ref(xn, *params["node_dec"])
        pe = mlp3_ref(xe, *params["edge_dec"])
    return pn, pe


# ---------------------------------- main ------------------------------------- #

if __name__ == "__main__":
    key = jax.random.PRNGKey(0)
    N, E = 12, 24
    NODE_IN_FEATS, EDGE_IN_FEATS = 7, 5

    k_xn, k_xe, k_src, k_dst, k_par = jax.random.split(key, 5)
    x_node = jax.random.normal(k_xn, (N, NODE_IN_FEATS), jnp.float32)
    x_edge = jax.random.normal(k_xe, (E, EDGE_IN_FEATS), jnp.float32)
    src = jax.random.randint(k_src, (E,), 0, N)
    dst = jax.random.randint(k_dst, (E,), 0, N)
    edge_index = jnp.stack([src, dst], axis=0)

    params = init_params(k_par, NODE_IN_FEATS, EDGE_IN_FEATS)

    pred_node, pred_edge = kgcn_forward(params, x_node, x_edge, edge_index, steps=STEPS)
    jax.block_until_ready((pred_node, pred_edge))

    ref_node, ref_edge = kgcn_reference(params, x_node, x_edge, edge_index, steps=STEPS)
    assert pred_node.shape == (N, NODE_OUT) and pred_edge.shape == (E, EDGE_OUT)
    np.testing.assert_allclose(np.asarray(pred_node), np.asarray(ref_node), rtol=1e-4, atol=2e-4)
    np.testing.assert_allclose(np.asarray(pred_edge), np.asarray(ref_edge), rtol=1e-4, atol=2e-4)

    print("KERNEL_OK")
</pallas_src>

<mosaic_0001>
module attributes {stable_mosaic.version = 11 : i64} {
  func.func @_kgcn_fused_kernel(%arg0: memref<12x7xf32, #tpu.memory_space<vmem>>, %arg1: memref<24x5xf32, #tpu.memory_space<vmem>>, %arg2: memref<24x12xf32, #tpu.memory_space<vmem>>, %arg3: memref<24x12xf32, #tpu.memory_space<vmem>>, %arg4: memref<12x24xf32, #tpu.memory_space<vmem>>, %arg5: memref<7x16xf32, #tpu.memory_space<vmem>>, %arg6: memref<1x16xf32, #tpu.memory_space<vmem>>, %arg7: memref<16x16xf32, #tpu.memory_space<vmem>>, %arg8: memref<1x16xf32, #tpu.memory_space<vmem>>, %arg9: memref<5x16xf32, #tpu.memory_space<vmem>>, %arg10: memref<1x16xf32, #tpu.memory_space<vmem>>, %arg11: memref<16x16xf32, #tpu.memory_space<vmem>>, %arg12: memref<1x16xf32, #tpu.memory_space<vmem>>, %arg13: memref<96x16xf32, #tpu.memory_space<vmem>>, %arg14: memref<1x16xf32, #tpu.memory_space<vmem>>, %arg15: memref<16x16xf32, #tpu.memory_space<vmem>>, %arg16: memref<1x16xf32, #tpu.memory_space<vmem>>, %arg17: memref<48x16xf32, #tpu.memory_space<vmem>>, %arg18: memref<1x16xf32, #tpu.memory_space<vmem>>, %arg19: memref<16x16xf32, #tpu.memory_space<vmem>>, %arg20: memref<1x16xf32, #tpu.memory_space<vmem>>, %arg21: memref<16x16xf32, #tpu.memory_space<vmem>>, %arg22: memref<1x16xf32, #tpu.memory_space<vmem>>, %arg23: memref<16x16xf32, #tpu.memory_space<vmem>>, %arg24: memref<1x16xf32, #tpu.memory_space<vmem>>, %arg25: memref<16x128xf32, #tpu.memory_space<vmem>>, %arg26: memref<1x128xf32, #tpu.memory_space<vmem>>, %arg27: memref<16x16xf32, #tpu.memory_space<vmem>>, %arg28: memref<1x16xf32, #tpu.memory_space<vmem>>, %arg29: memref<16x16xf32, #tpu.memory_space<vmem>>, %arg30: memref<1x16xf32, #tpu.memory_space<vmem>>, %arg31: memref<16x128xf32, #tpu.memory_space<vmem>>, %arg32: memref<1x128xf32, #tpu.memory_space<vmem>>, %arg33: memref<12x128xf32, #tpu.memory_space<vmem>>, %arg34: memref<24x128xf32, #tpu.memory_space<vmem>>) attributes {dimension_semantics = [], scalar_prefetch = 0 : i64, scratch_operands = 0 : i64, tpu.core_type = #tpu.core_type<tc>} {
    %c0 = arith.constant 0 : index
    %c0_0 = arith.constant 0 : index
    %0 = vector.load %arg0[%c0, %c0_0] : memref<12x7xf32, #tpu.memory_space<vmem>>, vector<12x7xf32>
    %c0_1 = arith.constant 0 : index
    %c0_2 = arith.constant 0 : index
    %1 = vector.load %arg5[%c0_1, %c0_2] : memref<7x16xf32, #tpu.memory_space<vmem>>, vector<7x16xf32>
    %cst = arith.constant dense<0.000000e+00> : vector<12x16xf32>
    %2 = tpu.matmul %0, %1, %cst {dimension_numbers = #tpu.dot_dimension_numbers<[1], [0], [0], [1], [0, 0, 1, 1], [], []>} : vector<12x7xf32>, vector<7x16xf32>, vector<12x16xf32> -> vector<12x16xf32>
    %c0_3 = arith.constant 0 : index
    %c0_4 = arith.constant 0 : index
    %3 = vector.load %arg6[%c0_3, %c0_4] : memref<1x16xf32, #tpu.memory_space<vmem>>, vector<1x16xf32>
    %4 = vector.broadcast %3 : vector<1x16xf32> to vector<12x16xf32>
    %5 = arith.addf %2, %4 : vector<12x16xf32>
    %cst_5 = arith.constant 0.000000e+00 : f32
    %6 = vector.broadcast %cst_5 : f32 to vector<12x16xf32>
    %7 = arith.maximumf %5, %6 : vector<12x16xf32>
    %c0_6 = arith.constant 0 : index
    %c0_7 = arith.constant 0 : index
    %8 = vector.load %arg7[%c0_6, %c0_7] : memref<16x16xf32, #tpu.memory_space<vmem>>, vector<16x16xf32>
    %cst_8 = arith.constant dense<0.000000e+00> : vector<12x16xf32>
    %9 = tpu.matmul %7, %8, %cst_8 {dimension_numbers = #tpu.dot_dimension_numbers<[1], [0], [0], [1], [0, 0, 1, 1], [], []>} : vector<12x16xf32>, vector<16x16xf32>, vector<12x16xf32> -> vector<12x16xf32>
    %c0_9 = arith.constant 0 : index
    %c0_10 = arith.constant 0 : index
    %10 = vector.load %arg8[%c0_9, %c0_10] : memref<1x16xf32, #tpu.memory_space<vmem>>, vector<1x16xf32>
    %11 = vector.broadcast %10 : vector<1x16xf32> to vector<12x16xf32>
    %12 = arith.addf %9, %11 : vector<12x16xf32>
    %cst_11 = arith.constant 0.000000e+00 : f32
    %13 = vector.broadcast %cst_11 : f32 to vector<12x16xf32>
    %14 = arith.maximumf %12, %13 : vector<12x16xf32>
    %c0_12 = arith.constant 0 : index
    %c0_13 = arith.constant 0 : index
    %15 = vector.load %arg1[%c0_12, %c0_13] : memref<24x5xf32, #tpu.memory_space<vmem>>, vector<24x5xf32>
    %c0_14 = arith.constant 0 : index
    %c0_15 = arith.constant 0 : index
    %16 = vector.load %arg9[%c0_14, %c0_15] : memref<5x16xf32, #tpu.memory_space<vmem>>, vector<5x16xf32>
    %cst_16 = arith.constant dense<0.000000e+00> : vector<24x16xf32>
    %17 = tpu.matmul %15, %16, %cst_16 {dimension_numbers = #tpu.dot_dimension_numbers<[1], [0], [0], [1], [0, 0, 1, 1], [], []>} : vector<24x5xf32>, vector<5x16xf32>, vector<24x16xf32> -> vector<24x16xf32>
    %c0_17 = arith.constant 0 : index
    %c0_18 = arith.constant 0 : index
    %18 = vector.load %arg10[%c0_17, %c0_18] : memref<1x16xf32, #tpu.memory_space<vmem>>, vector<1x16xf32>
    %19 = vector.broadcast %18 : vector<1x16xf32> to vector<24x16xf32>
    %20 = arith.addf %17, %19 : vector<24x16xf32>
    %cst_19 = arith.constant 0.000000e+00 : f32
    %21 = vector.broadcast %cst_19 : f32 to vector<24x16xf32>
    %22 = arith.maximumf %20, %21 : vector<24x16xf32>
    %c0_20 = arith.constant 0 : index
    %c0_21 = arith.constant 0 : index
    %23 = vector.load %arg11[%c0_20, %c0_21] : memref<16x16xf32, #tpu.memory_space<vmem>>, vector<16x16xf32>
    %cst_22 = arith.constant dense<0.000000e+00> : vector<24x16xf32>
    %24 = tpu.matmul %22, %23, %cst_22 {dimension_numbers = #tpu.dot_dimension_numbers<[1], [0], [0], [1], [0, 0, 1, 1], [], []>} : vector<24x16xf32>, vector<16x16xf32>, vector<24x16xf32> -> vector<24x16xf32>
    %c0_23 = arith.constant 0 : index
    %c0_24 = arith.constant 0 : index
    %25 = vector.load %arg12[%c0_23, %c0_24] : memref<1x16xf32, #tpu.memory_space<vmem>>, vector<1x16xf32>
    %26 = vector.broadcast %25 : vector<1x16xf32> to vector<24x16xf32>
    %27 = arith.addf %24, %26 : vector<24x16xf32>
    %cst_25 = arith.constant 0.000000e+00 : f32
    %28 = vector.broadcast %cst_25 : f32 to vector<24x16xf32>
    %29 = arith.maximumf %27, %28 : vector<24x16xf32>
    %c0_26 = arith.constant 0 : index
    %c0_27 = arith.constant 0 : index
    %30 = vector.load %arg2[%c0_26, %c0_27] : memref<24x12xf32, #tpu.memory_space<vmem>>, vector<24x12xf32>
    %c0_28 = arith.constant 0 : index
    %c0_29 = arith.constant 0 : index
    %31 = vector.load %arg3[%c0_28, %c0_29] : memref<24x12xf32, #tpu.memory_space<vmem>>, vector<24x12xf32>
    %c0_30 = arith.constant 0 : index
    %c0_31 = arith.constant 0 : index
    %32 = vector.load %arg4[%c0_30, %c0_31] : memref<12x24xf32, #tpu.memory_space<vmem>>, vector<12x24xf32>
    %c0_32 = arith.constant 0 : index
    %c0_33 = arith.constant 0 : index
    %33 = vector.load %arg13[%c0_32, %c0_33] : memref<96x16xf32, #tpu.memory_space<vmem>>, vector<96x16xf32>
    %34 = vector.extract_strided_slice %33 {offsets = [0, 0], sizes = [16, 16], strides = [1, 1]} : vector<96x16xf32> to vector<16x16xf32>
    %35 = vector.extract_strided_slice %33 {offsets = [16, 0], sizes = [16, 16], strides = [1, 1]} : vector<96x16xf32> to vector<16x16xf32>
    %36 = vector.extract_strided_slice %33 {offsets = [32, 0], sizes = [16, 16], strides = [1, 1]} : vector<96x16xf32> to vector<16x16xf32>
    %37 = vector.extract_strided_slice %33 {offsets = [48, 0], sizes = [16, 16], strides = [1, 1]} : vector<96x16xf32> to vector<16x16xf32>
    %38 = vector.extract_strided_slice %33 {offsets = [64, 0], sizes = [16, 16], strides = [1, 1]} : vector<96x16xf32> to vector<16x16xf32>
    %39 = vector.extract_strided_slice %33 {offsets = [80, 0], sizes = [16, 16], strides = [1, 1]} : vector<96x16xf32> to vector<16x16xf32>
    %c0_34 = arith.constant 0 : index
    %c0_35 = arith.constant 0 : index
    %40 = vector.load %arg17[%c0_34, %c0_35] : memref<48x16xf32, #tpu.memory_space<vmem>>, vector<48x16xf32>
    %41 = vector.extract_strided_slice %40 {offsets = [0, 0], sizes = [16, 16], strides = [1, 1]} : vector<48x16xf32> to vector<16x16xf32>
    %42 = vector.extract_strided_slice %40 {offsets = [16, 0], sizes = [16, 16], strides = [1, 1]} : vector<48x16xf32> to vector<16x16xf32>
    %43 = vector.extract_strided_slice %40 {offsets = [32, 0], sizes = [16, 16], strides = [1, 1]} : vector<48x16xf32> to vector<16x16xf32>
    %c0_36 = arith.constant 0 : index
    %c0_37 = arith.constant 0 : index
    %44 = vector.load %arg15[%c0_36, %c0_37] : memref<16x16xf32, #tpu.memory_space<vmem>>, vector<16x16xf32>
    %c0_38 = arith.constant 0 : index
    %c0_39 = arith.constant 0 : index
    %45 = vector.load %arg19[%c0_38, %c0_39] : memref<16x16xf32, #tpu.memory_space<vmem>>, vector<16x16xf32>
    %c0_40 = arith.constant 0 : index
    %c0_41 = arith.constant 0 : index
    %46 = vector.load %arg16[%c0_40, %c0_41] : memref<1x16xf32, #tpu.memory_space<vmem>>, vector<1x16xf32>
    %47 = vector.shape_cast %46 : vector<1x16xf32> to vector<1x16xf32>
    %48 = vector.broadcast %47 : vector<1x16xf32> to vector<24x16xf32>
    %c0_42 = arith.constant 0 : index
    %c0_43 = arith.constant 0 : index
    %49 = vector.load %arg20[%c0_42, %c0_43] : memref<1x16xf32, #tpu.memory_space<vmem>>, vector<1x16xf32>
    %50 = vector.shape_cast %49 : vector<1x16xf32> to vector<1x16xf32>
    %51 = vector.broadcast %50 : vector<1x16xf32> to vector<12x16xf32>
    %cst_44 = arith.constant dense<0.000000e+00> : vector<24x16xf32>
    %52 = tpu.matmul %30, %14, %cst_44 {dimension_numbers = #tpu.dot_dimension_numbers<[1], [0], [0], [1], [0, 0, 1, 1], [], []>} : vector<24x12xf32>, vector<12x16xf32>, vector<24x16xf32> -> vector<24x16xf32>
    %cst_45 = arith.constant dense<0.000000e+00> : vector<24x16xf32>
    %53 = tpu.matmul %31, %14, %cst_45 {dimension_numbers = #tpu.dot_dimension_numbers<[1], [0], [0], [1], [0, 0, 1, 1], [], []>} : vector<24x12xf32>, vector<12x16xf32>, vector<24x16xf32> -> vector<24x16xf32>
    %cst_46 = arith.constant dense<0.000000e+00> : vector<12x12xf32>
    %54 = tpu.matmul %32, %30, %cst_46 {dimension_numbers = #tpu.dot_dimension_numbers<[1], [0], [0], [1], [0, 0, 1, 1], [], []>} : vector<12x24xf32>, vector<24x12xf32>, vector<12x12xf32> -> vector<12x12xf32>
    %cst_47 = arith.constant dense<0.000000e+00> : vector<12x16xf32>
    %55 = tpu.matmul %32, %52, %cst_47 {dimension_numbers = #tpu.dot_dimension_numbers<[1], [0], [0], [1], [0, 0, 1, 1], [], []>} : vector<12x24xf32>, vector<24x16xf32>, vector<12x16xf32> -> vector<12x16xf32>
    %cst_48 = arith.constant dense<0.000000e+00> : vector<24x16xf32>
    %56 = tpu.matmul %52, %34, %cst_48 {dimension_numbers = #tpu.dot_dimension_numbers<[1], [0], [0], [1], [0, 0, 1, 1], [], []>} : vector<24x16xf32>, vector<16x16xf32>, vector<24x16xf32> -> vector<24x16xf32>
    %cst_49 = arith.constant dense<0.000000e+00> : vector<24x16xf32>
    %57 = tpu.matmul %29, %36, %cst_49 {dimension_numbers = #tpu.dot_dimension_numbers<[1], [0], [0], [1], [0, 0, 1, 1], [], []>} : vector<24x16xf32>, vector<16x16xf32>, vector<24x16xf32> -> vector<24x16xf32>
    %58 = arith.addf %56, %57 : vector<24x16xf32>
    %cst_50 = arith.constant dense<0.000000e+00> : vector<24x16xf32>
    %59 = tpu.matmul %53, %38, %cst_50 {dimension_numbers = #tpu.dot_dimension_numbers<[1], [0], [0], [1], [0, 0, 1, 1], [], []>} : vector<24x16xf32>, vector<16x16xf32>, vector<24x16xf32> -> vector<24x16xf32>
    %60 = arith.addf %58, %59 : vector<24x16xf32>
    %c0_51 = arith.constant 0 : index
    %c0_52 = arith.constant 0 : index
    %61 = vector.load %arg14[%c0_51, %c0_52] : memref<1x16xf32, #tpu.memory_space<vmem>>, vector<1x16xf32>
    %62 = vector.shape_cast %61 : vector<1x16xf32> to vector<1x16xf32>
    %63 = vector.broadcast %62 : vector<1x16xf32> to vector<24x16xf32>
    %64 = arith.addf %60, %63 : vector<24x16xf32>
    %cst_53 = arith.constant dense<0.000000e+00> : vector<12x16xf32>
    %65 = tpu.matmul %55, %41, %cst_53 {dimension_numbers = #tpu.dot_dimension_numbers<[1], [0], [0], [1], [0, 0, 1, 1], [], []>} : vector<12x16xf32>, vector<16x16xf32>, vector<12x16xf32> -> vector<12x16xf32>
    %c0_54 = arith.constant 0 : index
    %c0_55 = arith.constant 0 : index
    %66 = vector.load %arg18[%c0_54, %c0_55] : memref<1x16xf32, #tpu.memory_space<vmem>>, vector<1x16xf32>
    %67 = vector.shape_cast %66 : vector<1x16xf32> to vector<1x16xf32>
    %68 = vector.broadcast %67 : vector<1x16xf32> to vector<12x16xf32>
    %69 = arith.addf %65, %68 : vector<12x16xf32>
    %cst_56 = arith.constant dense<0.000000e+00> : vector<24x16xf32>
    %70 = tpu.matmul %30, %14, %cst_56 {dimension_numbers = #tpu.dot_dimension_numbers<[1], [0], [0], [1], [0, 0, 1, 1], [], []>} : vector<24x12xf32>, vector<12x16xf32>, vector<24x16xf32> -> vector<24x16xf32>
    %cst_57 = arith.constant dense<0.000000e+00> : vector<24x16xf32>
    %71 = tpu.matmul %31, %14, %cst_57 {dimension_numbers = #tpu.dot_dimension_numbers<[1], [0], [0], [1], [0, 0, 1, 1], [], []>} : vector<24x12xf32>, vector<12x16xf32>, vector<24x16xf32> -> vector<24x16xf32>
    %cst_58 = arith.constant dense<0.000000e+00> : vector<24x16xf32>
    %72 = tpu.matmul %70, %35, %cst_58 {dimension_numbers = #tpu.dot_dimension_numbers<[1], [0], [0], [1], [0, 0, 1, 1], [], []>} : vector<24x16xf32>, vector<16x16xf32>, vector<24x16xf32> -> vector<24x16xf32>
    %73 = arith.addf %64, %72 : vector<24x16xf32>
    %cst_59 = arith.constant dense<0.000000e+00> : vector<24x16xf32>
    %74 = tpu.matmul %29, %37, %cst_59 {dimension_numbers = #tpu.dot_dimension_numbers<[1], [0], [0], [1], [0, 0, 1, 1], [], []>} : vector<24x16xf32>, vector<16x16xf32>, vector<24x16xf32> -> vector<24x16xf32>
    %75 = arith.addf %73, %74 : vector<24x16xf32>
    %cst_60 = arith.constant dense<0.000000e+00> : vector<24x16xf32>
    %76 = tpu.matmul %71, %39, %cst_60 {dimension_numbers = #tpu.dot_dimension_numbers<[1], [0], [0], [1], [0, 0, 1, 1], [], []>} : vector<24x16xf32>, vector<16x16xf32>, vector<24x16xf32> -> vector<24x16xf32>
    %77 = arith.addf %75, %76 : vector<24x16xf32>
    %cst_61 = arith.constant 0.000000e+00 : f32
    %78 = vector.broadcast %cst_61 : f32 to vector<24x16xf32>
    %79 = arith.maximumf %77, %78 : vector<24x16xf32>
    %cst_62 = arith.constant dense<0.000000e+00> : vector<24x16xf32>
    %80 = tpu.matmul %79, %44, %cst_62 {dimension_numbers = #tpu.dot_dimension_numbers<[1], [0], [0], [1], [0, 0, 1, 1], [], []>} : vector<24x16xf32>, vector<16x16xf32>, vector<24x16xf32> -> vector<24x16xf32>
    %81 = arith.addf %80, %48 : vector<24x16xf32>
    %cst_63 = arith.constant 0.000000e+00 : f32
    %82 = vector.broadcast %cst_63 : f32 to vector<24x16xf32>
    %83 = arith.maximumf %81, %82 : vector<24x16xf32>
    %cst_64 = arith.constant dense<0.000000e+00> : vector<12x16xf32>
    %84 = tpu.matmul %32, %83, %cst_64 {dimension_numbers = #tpu.dot_dimension_numbers<[1], [0], [0], [1], [0, 0, 1, 1], [], []>} : vector<12x24xf32>, vector<24x16xf32>, vector<12x16xf32> -> vector<12x16xf32>
    %cst_65 = arith.constant dense<0.000000e+00> : vector<12x16xf32>
    %85 = tpu.matmul %54, %14, %cst_65 {dimension_numbers = #tpu.dot_dimension_numbers<[1], [0], [0], [1], [0, 0, 1, 1], [], []>} : vector<12x12xf32>, vector<12x16xf32>, vector<12x16xf32> -> vector<12x16xf32>
    %cst_66 = arith.constant dense<0.000000e+00> : vector<12x16xf32>
    %86 = tpu.matmul %85, %42, %cst_66 {dimension_numbers = #tpu.dot_dimension_numbers<[1], [0], [0], [1], [0, 0, 1, 1], [], []>} : vector<12x16xf32>, vector<16x16xf32>, vector<12x16xf32> -> vector<12x16xf32>
    %87 = arith.addf %69, %86 : vector<12x16xf32>
    %cst_67 = arith.constant dense<0.000000e+00> : vector<12x16xf32>
    %88 = tpu.matmul %84, %43, %cst_67 {dimension_numbers = #tpu.dot_dimension_numbers<[1], [0], [0], [1], [0, 0, 1, 1], [], []>} : vector<12x16xf32>, vector<16x16xf32>, vector<12x16xf32> -> vector<12x16xf32>
    %89 = arith.addf %87, %88 : vector<12x16xf32>
    %cst_68 = arith.constant 0.000000e+00 : f32
    %90 = vector.broadcast %cst_68 : f32 to vector<12x16xf32>
    %91 = arith.maximumf %89, %90 : vector<12x16xf32>
    %cst_69 = arith.constant dense<0.000000e+00> : vector<12x16xf32>
    %92 = tpu.matmul %91, %45, %cst_69 {dimension_numbers = #tpu.dot_dimension_numbers<[1], [0], [0], [1], [0, 0, 1, 1], [], []>} : vector<12x16xf32>, vector<16x16xf32>, vector<12x16xf32> -> vector<12x16xf32>
    %93 = arith.addf %92, %51 : vector<12x16xf32>
    %cst_70 = arith.constant 0.000000e+00 : f32
    %94 = vector.broadcast %cst_70 : f32 to vector<12x16xf32>
    %95 = arith.maximumf %93, %94 : vector<12x16xf32>
    %cst_71 = arith.constant dense<0.000000e+00> : vector<24x16xf32>
    %96 = tpu.matmul %30, %95, %cst_71 {dimension_numbers = #tpu.dot_dimension_numbers<[1], [0], [0], [1], [0, 0, 1, 1], [], []>} : vector<24x12xf32>, vector<12x16xf32>, vector<24x16xf32> -> vector<24x16xf32>
    %cst_72 = arith.constant dense<0.000000e+00> : vector<24x16xf32>
    %97 = tpu.matmul %31, %95, %cst_72 {dimension_numbers = #tpu.dot_dimension_numbers<[1], [0], [0], [1], [0, 0, 1, 1], [], []>} : vector<24x12xf32>, vector<12x16xf32>, vector<24x16xf32> -> vector<24x16xf32>
    %cst_73 = arith.constant dense<0.000000e+00> : vector<24x16xf32>
    %98 = tpu.matmul %96, %35, %cst_73 {dimension_numbers = #tpu.dot_dimension_numbers<[1], [0], [0], [1], [0, 0, 1, 1], [], []>} : vector<24x16xf32>, vector<16x16xf32>, vector<24x16xf32> -> vector<24x16xf32>
    %99 = arith.addf %64, %98 : vector<24x16xf32>
    %cst_74 = arith.constant dense<0.000000e+00> : vector<24x16xf32>
    %100 = tpu.matmul %83, %37, %cst_74 {dimension_numbers = #tpu.dot_dimension_numbers<[1], [0], [0], [1], [0, 0, 1, 1], [], []>} : vector<24x16xf32>, vector<16x16xf32>, vector<24x16xf32> -> vector<24x16xf32>
    %101 = arith.addf %99, %100 : vector<24x16xf32>
    %cst_75 = arith.constant dense<0.000000e+00> : vector<24x16xf32>
    %102 = tpu.matmul %97, %39, %cst_75 {dimension_numbers = #tpu.dot_dimension_numbers<[1], [0], [0], [1], [0, 0, 1, 1], [], []>} : vector<24x16xf32>, vector<16x16xf32>, vector<24x16xf32> -> vector<24x16xf32>
    %103 = arith.addf %101, %102 : vector<24x16xf32>
    %cst_76 = arith.constant 0.000000e+00 : f32
    %104 = vector.broadcast %cst_76 : f32 to vector<24x16xf32>
    %105 = arith.maximumf %103, %104 : vector<24x16xf32>
    %cst_77 = arith.constant dense<0.000000e+00> : vector<24x16xf32>
    %106 = tpu.matmul %105, %44, %cst_77 {dimension_numbers = #tpu.dot_dimension_numbers<[1], [0], [0], [1], [0, 0, 1, 1], [], []>} : vector<24x16xf32>, vector<16x16xf32>, vector<24x16xf32> -> vector<24x16xf32>
    %107 = arith.addf %106, %48 : vector<24x16xf32>
    %cst_78 = arith.constant 0.000000e+00 : f32
    %108 = vector.broadcast %cst_78 : f32 to vector<24x16xf32>
    %109 = arith.maximumf %107, %108 : vector<24x16xf32>
    %cst_79 = arith.constant dense<0.000000e+00> : vector<12x16xf32>
    %110 = tpu.matmul %32, %109, %cst_79 {dimension_numbers = #tpu.dot_dimension_numbers<[1], [0], [0], [1], [0, 0, 1, 1], [], []>} : vector<12x24xf32>, vector<24x16xf32>, vector<12x16xf32> -> vector<12x16xf32>
    %cst_80 = arith.constant dense<0.000000e+00> : vector<12x16xf32>
    %111 = tpu.matmul %54, %95, %cst_80 {dimension_numbers = #tpu.dot_dimension_numbers<[1], [0], [0], [1], [0, 0, 1, 1], [], []>} : vector<12x12xf32>, vector<12x16xf32>, vector<12x16xf32> -> vector<12x16xf32>
    %cst_81 = arith.constant dense<0.000000e+00> : vector<12x16xf32>
    %112 = tpu.matmul %111, %42, %cst_81 {dimension_numbers = #tpu.dot_dimension_numbers<[1], [0], [0], [1], [0, 0, 1, 1], [], []>} : vector<12x16xf32>, vector<16x16xf32>, vector<12x16xf32> -> vector<12x16xf32>
    %113 = arith.addf %69, %112 : vector<12x16xf32>
    %cst_82 = arith.constant dense<0.000000e+00> : vector<12x16xf32>
    %114 = tpu.matmul %110, %43, %cst_82 {dimension_numbers = #tpu.dot_dimension_numbers<[1], [0], [0], [1], [0, 0, 1, 1], [], []>} : vector<12x16xf32>, vector<16x16xf32>, vector<12x16xf32> -> vector<12x16xf32>
    %115 = arith.addf %113, %114 : vector<12x16xf32>
    %cst_83 = arith.constant 0.000000e+00 : f32
    %116 = vector.broadcast %cst_83 : f32 to vector<12x16xf32>
    %117 = arith.maximumf %115, %116 : vector<12x16xf32>
    %cst_84 = arith.constant dense<0.000000e+00> : vector<12x16xf32>
    %118 = tpu.matmul %117, %45, %cst_84 {dimension_numbers = #tpu.dot_dimension_numbers<[1], [0], [0], [1], [0, 0, 1, 1], [], []>} : vector<12x16xf32>, vector<16x16xf32>, vector<12x16xf32> -> vector<12x16xf32>
    %119 = arith.addf %118, %51 : vector<12x16xf32>
    %cst_85 = arith.constant 0.000000e+00 : f32
    %120 = vector.broadcast %cst_85 : f32 to vector<12x16xf32>
    %121 = arith.maximumf %119, %120 : vector<12x16xf32>
    %cst_86 = arith.constant dense<0.000000e+00> : vector<24x16xf32>
    %122 = tpu.matmul %30, %121, %cst_86 {dimension_numbers = #tpu.dot_dimension_numbers<[1], [0], [0], [1], [0, 0, 1, 1], [], []>} : vector<24x12xf32>, vector<12x16xf32>, vector<24x16xf32> -> vector<24x16xf32>
    %cst_87 = arith.constant dense<0.000000e+00> : vector<24x16xf32>
    %123 = tpu.matmul %31, %121, %cst_87 {dimension_numbers = #tpu.dot_dimension_numbers<[1], [0], [0], [1], [0, 0, 1, 1], [], []>} : vector<24x12xf32>, vector<12x16xf32>, vector<24x16xf32> -> vector<24x16xf32>
    %cst_88 = arith.constant dense<0.000000e+00> : vector<24x16xf32>
    %124 = tpu.matmul %122, %35, %cst_88 {dimension_numbers = #tpu.dot_dimension_numbers<[1], [0], [0], [1], [0, 0, 1, 1], [], []>} : vector<24x16xf32>, vector<16x16xf32>, vector<24x16xf32> -> vector<24x16xf32>
    %125 = arith.addf %64, %124 : vector<24x16xf32>
    %cst_89 = arith.constant dense<0.000000e+00> : vector<24x16xf32>
    %126 = tpu.matmul %109, %37, %cst_89 {dimension_numbers = #tpu.dot_dimension_numbers<[1], [0], [0], [1], [0, 0, 1, 1], [], []>} : vector<24x16xf32>, vector<16x16xf32>, vector<24x16xf32> -> vector<24x16xf32>
    %127 = arith.addf %125, %126 : vector<24x16xf32>
    %cst_90 = arith.constant dense<0.000000e+00> : vector<24x16xf32>
    %128 = tpu.matmul %123, %39, %cst_90 {dimension_numbers = #tpu.dot_dimension_numbers<[1], [0], [0], [1], [0, 0, 1, 1], [], []>} : vector<24x16xf32>, vector<16x16xf32>, vector<24x16xf32> -> vector<24x16xf32>
    %129 = arith.addf %127, %128 : vector<24x16xf32>
    %cst_91 = arith.constant 0.000000e+00 : f32
    %130 = vector.broadcast %cst_91 : f32 to vector<24x16xf32>
    %131 = arith.maximumf %129, %130 : vector<24x16xf32>
    %cst_92 = arith.constant dense<0.000000e+00> : vector<24x16xf32>
    %132 = tpu.matmul %131, %44, %cst_92 {dimension_numbers = #tpu.dot_dimension_numbers<[1], [0], [0], [1], [0, 0, 1, 1], [], []>} : vector<24x16xf32>, vector<16x16xf32>, vector<24x16xf32> -> vector<24x16xf32>
    %133 = arith.addf %132, %48 : vector<24x16xf32>
    %cst_93 = arith.constant 0.000000e+00 : f32
    %134 = vector.broadcast %cst_93 : f32 to vector<24x16xf32>
    %135 = arith.maximumf %133, %134 : vector<24x16xf32>
    %cst_94 = arith.constant dense<0.000000e+00> : vector<12x16xf32>
    %136 = tpu.matmul %32, %135, %cst_94 {dimension_numbers = #tpu.dot_dimension_numbers<[1], [0], [0], [1], [0, 0, 1, 1], [], []>} : vector<12x24xf32>, vector<24x16xf32>, vector<12x16xf32> -> vector<12x16xf32>
    %cst_95 = arith.constant dense<0.000000e+00> : vector<12x16xf32>
    %137 = tpu.matmul %54, %121, %cst_95 {dimension_numbers = #tpu.dot_dimension_numbers<[1], [0], [0], [1], [0, 0, 1, 1], [], []>} : vector<12x12xf32>, vector<12x16xf32>, vector<12x16xf32> -> vector<12x16xf32>
    %cst_96 = arith.constant dense<0.000000e+00> : vector<12x16xf32>
    %138 = tpu.matmul %137, %42, %cst_96 {dimension_numbers = #tpu.dot_dimension_numbers<[1], [0], [0], [1], [0, 0, 1, 1], [], []>} : vector<12x16xf32>, vector<16x16xf32>, vector<12x16xf32> -> vector<12x16xf32>
    %139 = arith.addf %69, %138 : vector<12x16xf32>
    %cst_97 = arith.constant dense<0.000000e+00> : vector<12x16xf32>
    %140 = tpu.matmul %136, %43, %cst_97 {dimension_numbers = #tpu.dot_dimension_numbers<[1], [0], [0], [1], [0, 0, 1, 1], [], []>} : vector<12x16xf32>, vector<16x16xf32>, vector<12x16xf32> -> vector<12x16xf32>
    %141 = arith.addf %139, %140 : vector<12x16xf32>
    %cst_98 = arith.constant 0.000000e+00 : f32
    %142 = vector.broadcast %cst_98 : f32 to vector<12x16xf32>
    %143 = arith.maximumf %141, %142 : vector<12x16xf32>
    %cst_99 = arith.constant dense<0.000000e+00> : vector<12x16xf32>
    %144 = tpu.matmul %143, %45, %cst_99 {dimension_numbers = #tpu.dot_dimension_numbers<[1], [0], [0], [1], [0, 0, 1, 1], [], []>} : vector<12x16xf32>, vector<16x16xf32>, vector<12x16xf32> -> vector<12x16xf32>
    %145 = arith.addf %144, %51 : vector<12x16xf32>
    %cst_100 = arith.constant 0.000000e+00 : f32
    %146 = vector.broadcast %cst_100 : f32 to vector<12x16xf32>
    %147 = arith.maximumf %145, %146 : vector<12x16xf32>
    %cst_101 = arith.constant dense<0.000000e+00> : vector<24x16xf32>
    %148 = tpu.matmul %30, %147, %cst_101 {dimension_numbers = #tpu.dot_dimension_numbers<[1], [0], [0], [1], [0, 0, 1, 1], [], []>} : vector<24x12xf32>, vector<12x16xf32>, vector<24x16xf32> -> vector<24x16xf32>
    %cst_102 = arith.constant dense<0.000000e+00> : vector<24x16xf32>
    %149 = tpu.matmul %31, %147, %cst_102 {dimension_numbers = #tpu.dot_dimension_numbers<[1], [0], [0], [1], [0, 0, 1, 1], [], []>} : vector<24x12xf32>, vector<12x16xf32>, vector<24x16xf32> -> vector<24x16xf32>
    %cst_103 = arith.constant dense<0.000000e+00> : vector<24x16xf32>
    %150 = tpu.matmul %148, %35, %cst_103 {dimension_numbers = #tpu.dot_dimension_numbers<[1], [0], [0], [1], [0, 0, 1, 1], [], []>} : vector<24x16xf32>, vector<16x16xf32>, vector<24x16xf32> -> vector<24x16xf32>
    %151 = arith.addf %64, %150 : vector<24x16xf32>
    %cst_104 = arith.constant dense<0.000000e+00> : vector<24x16xf32>
    %152 = tpu.matmul %135, %37, %cst_104 {dimension_numbers = #tpu.dot_dimension_numbers<[1], [0], [0], [1], [0, 0, 1, 1], [], []>} : vector<24x16xf32>, vector<16x16xf32>, vector<24x16xf32> -> vector<24x16xf32>
    %153 = arith.addf %151, %152 : vector<24x16xf32>
    %cst_105 = arith.constant dense<0.000000e+00> : vector<24x16xf32>
    %154 = tpu.matmul %149, %39, %cst_105 {dimension_numbers = #tpu.dot_dimension_numbers<[1], [0], [0], [1], [0, 0, 1, 1], [], []>} : vector<24x16xf32>, vector<16x16xf32>, vector<24x16xf32> -> vector<24x16xf32>
    %155 = arith.addf %153, %154 : vector<24x16xf32>
    %cst_106 = arith.constant 0.000000e+00 : f32
    %156 = vector.broadcast %cst_106 : f32 to vector<24x16xf32>
    %157 = arith.maximumf %155, %156 : vector<24x16xf32>
    %cst_107 = arith.constant dense<0.000000e+00> : vector<24x16xf32>
    %158 = tpu.matmul %157, %44, %cst_107 {dimension_numbers = #tpu.dot_dimension_numbers<[1], [0], [0], [1], [0, 0, 1, 1], [], []>} : vector<24x16xf32>, vector<16x16xf32>, vector<24x16xf32> -> vector<24x16xf32>
    %159 = arith.addf %158, %48 : vector<24x16xf32>
    %cst_108 = arith.constant 0.000000e+00 : f32
    %160 = vector.broadcast %cst_108 : f32 to vector<24x16xf32>
    %161 = arith.maximumf %159, %160 : vector<24x16xf32>
    %cst_109 = arith.constant dense<0.000000e+00> : vector<12x16xf32>
    %162 = tpu.matmul %32, %161, %cst_109 {dimension_numbers = #tpu.dot_dimension_numbers<[1], [0], [0], [1], [0, 0, 1, 1], [], []>} : vector<12x24xf32>, vector<24x16xf32>, vector<12x16xf32> -> vector<12x16xf32>
    %cst_110 = arith.constant dense<0.000000e+00> : vector<12x16xf32>
    %163 = tpu.matmul %54, %147, %cst_110 {dimension_numbers = #tpu.dot_dimension_numbers<[1], [0], [0], [1], [0, 0, 1, 1], [], []>} : vector<12x12xf32>, vector<12x16xf32>, vector<12x16xf32> -> vector<12x16xf32>
    %cst_111 = arith.constant dense<0.000000e+00> : vector<12x16xf32>
    %164 = tpu.matmul %163, %42, %cst_111 {dimension_numbers = #tpu.dot_dimension_numbers<[1], [0], [0], [1], [0, 0, 1, 1], [], []>} : vector<12x16xf32>, vector<16x16xf32>, vector<12x16xf32> -> vector<12x16xf32>
    %165 = arith.addf %69, %164 : vector<12x16xf32>
    %cst_112 = arith.constant dense<0.000000e+00> : vector<12x16xf32>
    %166 = tpu.matmul %162, %43, %cst_112 {dimension_numbers = #tpu.dot_dimension_numbers<[1], [0], [0], [1], [0, 0, 1, 1], [], []>} : vector<12x16xf32>, vector<16x16xf32>, vector<12x16xf32> -> vector<12x16xf32>
    %167 = arith.addf %165, %166 : vector<12x16xf32>
    %cst_113 = arith.constant 0.000000e+00 : f32
    %168 = vector.broadcast %cst_113 : f32 to vector<12x16xf32>
    %169 = arith.maximumf %167, %168 : vector<12x16xf32>
    %cst_114 = arith.constant dense<0.000000e+00> : vector<12x16xf32>
    %170 = tpu.matmul %169, %45, %cst_114 {dimension_numbers = #tpu.dot_dimension_numbers<[1], [0], [0], [1], [0, 0, 1, 1], [], []>} : vector<12x16xf32>, vector<16x16xf32>, vector<12x16xf32> -> vector<12x16xf32>
    %171 = arith.addf %170, %51 : vector<12x16xf32>
    %cst_115 = arith.constant 0.000000e+00 : f32
    %172 = vector.broadcast %cst_115 : f32 to vector<12x16xf32>
    %173 = arith.maximumf %171, %172 : vector<12x16xf32>
    %cst_116 = arith.constant dense<0.000000e+00> : vector<24x16xf32>
    %174 = tpu.matmul %30, %173, %cst_116 {dimension_numbers = #tpu.dot_dimension_numbers<[1], [0], [0], [1], [0, 0, 1, 1], [], []>} : vector<24x12xf32>, vector<12x16xf32>, vector<24x16xf32> -> vector<24x16xf32>
    %cst_117 = arith.constant dense<0.000000e+00> : vector<24x16xf32>
    %175 = tpu.matmul %31, %173, %cst_117 {dimension_numbers = #tpu.dot_dimension_numbers<[1], [0], [0], [1], [0, 0, 1, 1], [], []>} : vector<24x12xf32>, vector<12x16xf32>, vector<24x16xf32> -> vector<24x16xf32>
    %cst_118 = arith.constant dense<0.000000e+00> : vector<24x16xf32>
    %176 = tpu.matmul %174, %35, %cst_118 {dimension_numbers = #tpu.dot_dimension_numbers<[1], [0], [0], [1], [0, 0, 1, 1], [], []>} : vector<24x16xf32>, vector<16x16xf32>, vector<24x16xf32> -> vector<24x16xf32>
    %177 = arith.addf %64, %176 : vector<24x16xf32>
    %cst_119 = arith.constant dense<0.000000e+00> : vector<24x16xf32>
    %178 = tpu.matmul %161, %37, %cst_119 {dimension_numbers = #tpu.dot_dimension_numbers<[1], [0], [0], [1], [0, 0, 1, 1], [], []>} : vector<24x16xf32>, vector<16x16xf32>, vector<24x16xf32> -> vector<24x16xf32>
    %179 = arith.addf %177, %178 : vector<24x16xf32>
    %cst_120 = arith.constant dense<0.000000e+00> : vector<24x16xf32>
    %180 = tpu.matmul %175, %39, %cst_120 {dimension_numbers = #tpu.dot_dimension_numbers<[1], [0], [0], [1], [0, 0, 1, 1], [], []>} : vector<24x16xf32>, vector<16x16xf32>, vector<24x16xf32> -> vector<24x16xf32>
    %181 = arith.addf %179, %180 : vector<24x16xf32>
    %cst_121 = arith.constant 0.000000e+00 : f32
    %182 = vector.broadcast %cst_121 : f32 to vector<24x16xf32>
    %183 = arith.maximumf %181, %182 : vector<24x16xf32>
    %cst_122 = arith.constant dense<0.000000e+00> : vector<24x16xf32>
    %184 = tpu.matmul %183, %44, %cst_122 {dimension_numbers = #tpu.dot_dimension_numbers<[1], [0], [0], [1], [0, 0, 1, 1], [], []>} : vector<24x16xf32>, vector<16x16xf32>, vector<24x16xf32> -> vector<24x16xf32>
    %185 = arith.addf %184, %48 : vector<24x16xf32>
    %cst_123 = arith.constant 0.000000e+00 : f32
    %186 = vector.broadcast %cst_123 : f32 to vector<24x16xf32>
    %187 = arith.maximumf %185, %186 : vector<24x16xf32>
    %cst_124 = arith.constant dense<0.000000e+00> : vector<12x16xf32>
    %188 = tpu.matmul %32, %187, %cst_124 {dimension_numbers = #tpu.dot_dimension_numbers<[1], [0], [0], [1], [0, 0, 1, 1], [], []>} : vector<12x24xf32>, vector<24x16xf32>, vector<12x16xf32> -> vector<12x16xf32>
    %cst_125 = arith.constant dense<0.000000e+00> : vector<12x16xf32>
    %189 = tpu.matmul %54, %173, %cst_125 {dimension_numbers = #tpu.dot_dimension_numbers<[1], [0], [0], [1], [0, 0, 1, 1], [], []>} : vector<12x12xf32>, vector<12x16xf32>, vector<12x16xf32> -> vector<12x16xf32>
    %cst_126 = arith.constant dense<0.000000e+00> : vector<12x16xf32>
    %190 = tpu.matmul %189, %42, %cst_126 {dimension_numbers = #tpu.dot_dimension_numbers<[1], [0], [0], [1], [0, 0, 1, 1], [], []>} : vector<12x16xf32>, vector<16x16xf32>, vector<12x16xf32> -> vector<12x16xf32>
    %191 = arith.addf %69, %190 : vector<12x16xf32>
    %cst_127 = arith.constant dense<0.000000e+00> : vector<12x16xf32>
    %192 = tpu.matmul %188, %43, %cst_127 {dimension_numbers = #tpu.dot_dimension_numbers<[1], [0], [0], [1], [0, 0, 1, 1], [], []>} : vector<12x16xf32>, vector<16x16xf32>, vector<12x16xf32> -> vector<12x16xf32>
    %193 = arith.addf %191, %192 : vector<12x16xf32>
    %cst_128 = arith.constant 0.000000e+00 : f32
    %194 = vector.broadcast %cst_128 : f32 to vector<12x16xf32>
    %195 = arith.maximumf %193, %194 : vector<12x16xf32>
    %cst_129 = arith.constant dense<0.000000e+00> : vector<12x16xf32>
    %196 = tpu.matmul %195, %45, %cst_129 {dimension_numbers = #tpu.dot_dimension_numbers<[1], [0], [0], [1], [0, 0, 1, 1], [], []>} : vector<12x16xf32>, vector<16x16xf32>, vector<12x16xf32> -> vector<12x16xf32>
    %197 = arith.addf %196, %51 : vector<12x16xf32>
    %cst_130 = arith.constant 0.000000e+00 : f32
    %198 = vector.broadcast %cst_130 : f32 to vector<12x16xf32>
    %199 = arith.maximumf %197, %198 : vector<12x16xf32>
    %c0_131 = arith.constant 0 : index
    %c0_132 = arith.constant 0 : index
    %200 = vector.load %arg21[%c0_131, %c0_132] : memref<16x16xf32, #tpu.memory_space<vmem>>, vector<16x16xf32>
    %cst_133 = arith.constant dense<0.000000e+00> : vector<12x16xf32>
    %201 = tpu.matmul %199, %200, %cst_133 {dimension_numbers = #tpu.dot_dimension_numbers<[1], [0], [0], [1], [0, 0, 1, 1], [], []>} : vector<12x16xf32>, vector<16x16xf32>, vector<12x16xf32> -> vector<12x16xf32>
    %c0_134 = arith.constant 0 : index
    %c0_135 = arith.constant 0 : index
    %202 = vector.load %arg22[%c0_134, %c0_135] : memref<1x16xf32, #tpu.memory_space<vmem>>, vector<1x16xf32>
    %203 = vector.broadcast %202 : vector<1x16xf32> to vector<12x16xf32>
    %204 = arith.addf %201, %203 : vector<12x16xf32>
    %cst_136 = arith.constant 0.000000e+00 : f32
    %205 = vector.broadcast %cst_136 : f32 to vector<12x16xf32>
    %206 = arith.maximumf %204, %205 : vector<12x16xf32>
    %c0_137 = arith.constant 0 : index
    %c0_138 = arith.constant 0 : index
    %207 = vector.load %arg23[%c0_137, %c0_138] : memref<16x16xf32, #tpu.memory_space<vmem>>, vector<16x16xf32>
    %cst_139 = arith.constant dense<0.000000e+00> : vector<12x16xf32>
    %208 = tpu.matmul %206, %207, %cst_139 {dimension_numbers = #tpu.dot_dimension_numbers<[1], [0], [0], [1], [0, 0, 1, 1], [], []>} : vector<12x16xf32>, vector<16x16xf32>, vector<12x16xf32> -> vector<12x16xf32>
    %c0_140 = arith.constant 0 : index
    %c0_141 = arith.constant 0 : index
    %209 = vector.load %arg24[%c0_140, %c0_141] : memref<1x16xf32, #tpu.memory_space<vmem>>, vector<1x16xf32>
    %210 = vector.broadcast %209 : vector<1x16xf32> to vector<12x16xf32>
    %211 = arith.addf %208, %210 : vector<12x16xf32>
    %cst_142 = arith.constant 0.000000e+00 : f32
    %212 = vector.broadcast %cst_142 : f32 to vector<12x16xf32>
    %213 = arith.maximumf %211, %212 : vector<12x16xf32>
    %c0_143 = arith.constant 0 : index
    %c0_144 = arith.constant 0 : index
    %214 = vector.load %arg25[%c0_143, %c0_144] : memref<16x128xf32, #tpu.memory_space<vmem>>, vector<16x128xf32>
    %cst_145 = arith.constant dense<0.000000e+00> : vector<12x128xf32>
    %215 = tpu.matmul %213, %214, %cst_145 {dimension_numbers = #tpu.dot_dimension_numbers<[1], [0], [0], [1], [0, 0, 1, 1], [], []>} : vector<12x16xf32>, vector<16x128xf32>, vector<12x128xf32> -> vector<12x128xf32>
    %c0_146 = arith.constant 0 : index
    %c0_147 = arith.constant 0 : index
    %216 = vector.load %arg26[%c0_146, %c0_147] : memref<1x128xf32, #tpu.memory_space<vmem>>, vector<1x128xf32>
    %217 = vector.broadcast %216 : vector<1x128xf32> to vector<12x128xf32>
    %218 = arith.addf %215, %217 : vector<12x128xf32>
    %c0_148 = arith.constant 0 : index
    %c0_149 = arith.constant 0 : index
    %219 = vector.load %arg33[%c0_148, %c0_149] : memref<12x128xf32, #tpu.memory_space<vmem>>, vector<12x128xf32>
    tpu.vector_store %arg33[%c0_148, %c0_149], %218 {strides = array<i32>} : memref<12x128xf32, #tpu.memory_space<vmem>>, vector<12x128xf32>,
    %c0_150 = arith.constant 0 : index
    %c0_151 = arith.constant 0 : index
    %220 = vector.load %arg27[%c0_150, %c0_151] : memref<16x16xf32, #tpu.memory_space<vmem>>, vector<16x16xf32>
    %cst_152 = arith.constant dense<0.000000e+00> : vector<24x16xf32>
    %221 = tpu.matmul %187, %220, %cst_152 {dimension_numbers = #tpu.dot_dimension_numbers<[1], [0], [0], [1], [0, 0, 1, 1], [], []>} : vector<24x16xf32>, vector<16x16xf32>, vector<24x16xf32> -> vector<24x16xf32>
    %c0_153 = arith.constant 0 : index
    %c0_154 = arith.constant 0 : index
    %222 = vector.load %arg28[%c0_153, %c0_154] : memref<1x16xf32, #tpu.memory_space<vmem>>, vector<1x16xf32>
    %223 = vector.broadcast %222 : vector<1x16xf32> to vector<24x16xf32>
    %224 = arith.addf %221, %223 : vector<24x16xf32>
    %cst_155 = arith.constant 0.000000e+00 : f32
    %225 = vector.broadcast %cst_155 : f32 to vector<24x16xf32>
    %226 = arith.maximumf %224, %225 : vector<24x16xf32>
    %c0_156 = arith.constant 0 : index
    %c0_157 = arith.constant 0 : index
    %227 = vector.load %arg29[%c0_156, %c0_157] : memref<16x16xf32, #tpu.memory_space<vmem>>, vector<16x16xf32>
    %cst_158 = arith.constant dense<0.000000e+00> : vector<24x16xf32>
    %228 = tpu.matmul %226, %227, %cst_158 {dimension_numbers = #tpu.dot_dimension_numbers<[1], [0], [0], [1], [0, 0, 1, 1], [], []>} : vector<24x16xf32>, vector<16x16xf32>, vector<24x16xf32> -> vector<24x16xf32>
    %c0_159 = arith.constant 0 : index
    %c0_160 = arith.constant 0 : index
    %229 = vector.load %arg30[%c0_159, %c0_160] : memref<1x16xf32, #tpu.memory_space<vmem>>, vector<1x16xf32>
    %230 = vector.broadcast %229 : vector<1x16xf32> to vector<24x16xf32>
    %231 = arith.addf %228, %230 : vector<24x16xf32>
    %cst_161 = arith.constant 0.000000e+00 : f32
    %232 = vector.broadcast %cst_161 : f32 to vector<24x16xf32>
    %233 = arith.maximumf %231, %232 : vector<24x16xf32>
    %c0_162 = arith.constant 0 : index
    %c0_163 = arith.constant 0 : index
    %234 = vector.load %arg31[%c0_162, %c0_163] : memref<16x128xf32, #tpu.memory_space<vmem>>, vector<16x128xf32>
    %cst_164 = arith.constant dense<0.000000e+00> : vector<24x128xf32>
    %235 = tpu.matmul %233, %234, %cst_164 {dimension_numbers = #tpu.dot_dimension_numbers<[1], [0], [0], [1], [0, 0, 1, 1], [], []>} : vector<24x16xf32>, vector<16x128xf32>, vector<24x128xf32> -> vector<24x128xf32>
    %c0_165 = arith.constant 0 : index
    %c0_166 = arith.constant 0 : index
    %236 = vector.load %arg32[%c0_165, %c0_166] : memref<1x128xf32, #tpu.memory_space<vmem>>, vector<1x128xf32>
    %237 = vector.broadcast %236 : vector<1x128xf32> to vector<24x128xf32>
    %238 = arith.addf %235, %237 : vector<24x128xf32>
    %c0_167 = arith.constant 0 : index
    %c0_168 = arith.constant 0 : index
    %239 = vector.load %arg34[%c0_167, %c0_168] : memref<24x128xf32, #tpu.memory_space<vmem>>, vector<24x128xf32>
    tpu.vector_store %arg34[%c0_167, %c0_168], %238 {strides = array<i32>} : memref<24x128xf32, #tpu.memory_space<vmem>>, vector<24x128xf32>,
    return
  }
}

</mosaic_0001>

<llo_original>
// kernel: kgcn_forward.1
$region0: #{kgcn_forward.1}
  #allocation0 [shape = 'u32[]', space=smem, size = 0x4, offset = 0x4, fixed_abs, tag = 'smem constant byte address 0x4 - core index']
  #allocation1 [shape = 'u32[144,128]{1,0:T(1,128)}', space=vmem, size = 0x12000, scoped, tag = 'internal scratch']
  %s0 = inlined_call_operand.smem [shape: u32[35], index: -1, kind: input, shape index: {}]
  %s1 = sld [smem:[%s0]]
  %s2 = scalar_lea.smem %s0, 1
  %s3 = sld [smem:[%s2]]
  %s4 = scalar_lea.smem %s0, 2
  %s5 = sld [smem:[%s4]]
  %s6 = scalar_lea.smem %s0, 3
  %s7 = sld [smem:[%s6]]
  %s8 = scalar_lea.smem %s0, 4
  %s9 = sld [smem:[%s8]]
  %s10 = scalar_lea.smem %s0, 5
  %s11 = sld [smem:[%s10]]
  %s12 = scalar_lea.smem %s0, 6
  %s13 = sld [smem:[%s12]]
  %s14 = scalar_lea.smem %s0, 7
  %s15 = sld [smem:[%s14]]
  %s16 = scalar_lea.smem %s0, 8
  %s17 = sld [smem:[%s16]]
  %s18 = scalar_lea.smem %s0, 9
  %s19 = sld [smem:[%s18]]
  %s20 = scalar_lea.smem %s0, 10
  %s21 = sld [smem:[%s20]]
  %s22 = scalar_lea.smem %s0, 11
  %s23 = sld [smem:[%s22]]
  %s24 = scalar_lea.smem %s0, 12
  %s25 = sld [smem:[%s24]]
  %s26 = scalar_lea.smem %s0, 13
  %s27 = sld [smem:[%s26]]
  %s28 = scalar_lea.smem %s0, 14
  %s29 = sld [smem:[%s28]]
  %s30 = scalar_lea.smem %s0, 15
  %s31 = sld [smem:[%s30]]
  %s32 = scalar_lea.smem %s0, 16
  %s33 = sld [smem:[%s32]]
  %s34 = scalar_lea.smem %s0, 17
  %s35 = sld [smem:[%s34]]
  %s36 = scalar_lea.smem %s0, 18
  %s37 = sld [smem:[%s36]]
  %s38 = scalar_lea.smem %s0, 19
  %s39 = sld [smem:[%s38]]
  %s40 = scalar_lea.smem %s0, 20
  %s41 = sld [smem:[%s40]]
  %s42 = scalar_lea.smem %s0, 21
  %s43 = sld [smem:[%s42]]
  %s44 = scalar_lea.smem %s0, 22
  %s45 = sld [smem:[%s44]]
  %s46 = scalar_lea.smem %s0, 23
  %s47 = sld [smem:[%s46]]
  %s48 = scalar_lea.smem %s0, 24
  %s49 = sld [smem:[%s48]]
  %s50 = scalar_lea.smem %s0, 25
  %s51 = sld [smem:[%s50]]
  %s52 = scalar_lea.smem %s0, 26
  %s53 = sld [smem:[%s52]]
  %s54 = scalar_lea.smem %s0, 27
  %s55 = sld [smem:[%s54]]
  %s56 = scalar_lea.smem %s0, 28
  %s57 = sld [smem:[%s56]]
  %s58 = scalar_lea.smem %s0, 29
  %s59 = sld [smem:[%s58]]
  %s60 = scalar_lea.smem %s0, 30
  %s61 = sld [smem:[%s60]]
  %s62 = scalar_lea.smem %s0, 31
  %s63 = sld [smem:[%s62]]
  %s64 = scalar_lea.smem %s0, 32
  %s65 = sld [smem:[%s64]]
  %s66 = scalar_lea.smem %s0, 33
  %s67 = sld [smem:[%s66]]
  %s68 = scalar_lea.smem %s0, 34
  %s69 = sld [smem:[%s68]]
  %70 = xla_tuple %s67, %s69
  %s71 = sld [smem:[#allocation0]]
  $region150: #{kgcn_forward.1} parent=0
    _
  %s73 = ssub.s32 1, %s71
  %s74 = scalar_select 0, %s73, %s71
  // Predicated region
  $region2: #{kgcn_forward.1} parent=0 // pred_check
    _
  $region3: #{kgcn_forward.1} parent=0 // pred_check_branch
    %76 = sbr.rel (0) target = $region5
  $region4: #{kgcn_forward.1} parent=0 // pred_region
    _
  $region5: #{kgcn_forward.1} parent=0 // pred_fallthru
    _
  // Predicated region
  $region6: #{kgcn_forward.1} parent=0 // pred_check
    _
  $region7: #{kgcn_forward.1} parent=0 // pred_check_branch
    %78 = sbr.rel (0) target = $region9
  $region8: #{kgcn_forward.1} parent=0 // pred_region
    _
  $region9: #{kgcn_forward.1} parent=0 // pred_fallthru
    _
  // Predicated region
  $region10: #{kgcn_forward.1} parent=0 // pred_check
    _
  $region11: #{kgcn_forward.1} parent=0 // pred_check_branch
    %80 = sbr.rel (0) target = $region13
  $region12: #{kgcn_forward.1} parent=0 // pred_region
    _
  $region13: #{kgcn_forward.1} parent=0 // pred_fallthru
    _
  // Predicated region
  $region14: #{kgcn_forward.1} parent=0 // pred_check
    _
  $region15: #{kgcn_forward.1} parent=0 // pred_check_branch
    %82 = sbr.rel (0) target = $region17
  $region16: #{kgcn_forward.1} parent=0 // pred_region
    _
  $region17: #{kgcn_forward.1} parent=0 // pred_fallthru
    _
  // Predicated region
  $region18: #{kgcn_forward.1} parent=0 // pred_check
    _
  $region19: #{kgcn_forward.1} parent=0 // pred_check_branch
    %84 = sbr.rel (0) target = $region21
  $region20: #{kgcn_forward.1} parent=0 // pred_region
    _
  $region21: #{kgcn_forward.1} parent=0 // pred_fallthru
    _
  // Predicated region
  $region22: #{kgcn_forward.1} parent=0 // pred_check
    _
  $region23: #{kgcn_forward.1} parent=0 // pred_check_branch
    %86 = sbr.rel (0) target = $region25
  $region24: #{kgcn_forward.1} parent=0 // pred_region
    _
  $region25: #{kgcn_forward.1} parent=0 // pred_fallthru
    _
  // Predicated region
  $region26: #{kgcn_forward.1} parent=0 // pred_check
    _
  $region27: #{kgcn_forward.1} parent=0 // pred_check_branch
    %88 = sbr.rel (0) target = $region29
  $region28: #{kgcn_forward.1} parent=0 // pred_region
    _
  $region29: #{kgcn_forward.1} parent=0 // pred_fallthru
    _
  // Predicated region
  $region30: #{kgcn_forward.1} parent=0 // pred_check
    _
  $region31: #{kgcn_forward.1} parent=0 // pred_check_branch
    %90 = sbr.rel (0) target = $region33
  $region32: #{kgcn_forward.1} parent=0 // pred_region
    _
  $region33: #{kgcn_forward.1} parent=0 // pred_fallthru
    _
  // Predicated region
  $region34: #{kgcn_forward.1} parent=0 // pred_check
    _
  $region35: #{kgcn_forward.1} parent=0 // pred_check_branch
    %92 = sbr.rel (0) target = $region37
  $region36: #{kgcn_forward.1} parent=0 // pred_region
    _
  $region37: #{kgcn_forward.1} parent=0 // pred_fallthru
    _
  // Predicated region
  $region38: #{kgcn_forward.1} parent=0 // pred_check
    _
  $region39: #{kgcn_forward.1} parent=0 // pred_check_branch
    %94 = sbr.rel (0) target = $region41
  $region40: #{kgcn_forward.1} parent=0 // pred_region
    _
  $region41: #{kgcn_forward.1} parent=0 // pred_fallthru
    _
  // Predicated region
  $region42: #{kgcn_forward.1} parent=0 // pred_check
    _
  $region43: #{kgcn_forward.1} parent=0 // pred_check_branch
    %96 = sbr.rel (0) target = $region45
  $region44: #{kgcn_forward.1} parent=0 // pred_region
    _
  $region45: #{kgcn_forward.1} parent=0 // pred_fallthru
    _
  // Predicated region
  $region46: #{kgcn_forward.1} parent=0 // pred_check
    _
  $region47: #{kgcn_forward.1} parent=0 // pred_check_branch
    %98 = sbr.rel (0) target = $region49
  $region48: #{kgcn_forward.1} parent=0 // pred_region
    _
  $region49: #{kgcn_forward.1} parent=0 // pred_fallthru
    _
  // Predicated region
  $region50: #{kgcn_forward.1} parent=0 // pred_check
    _
  $region51: #{kgcn_forward.1} parent=0 // pred_check_branch
    %100 = sbr.rel (0) target = $region53
  $region52: #{kgcn_forward.1} parent=0 // pred_region
    _
  $region53: #{kgcn_forward.1} parent=0 // pred_fallthru
    _
  // Predicated region
  $region54: #{kgcn_forward.1} parent=0 // pred_check
    _
  $region55: #{kgcn_forward.1} parent=0 // pred_check_branch
    %102 = sbr.rel (0) target = $region57
  $region56: #{kgcn_forward.1} parent=0 // pred_region
    _
  $region57: #{kgcn_forward.1} parent=0 // pred_fallthru
    _
  // Predicated region
  $region58: #{kgcn_forward.1} parent=0 // pred_check
    _
  $region59: #{kgcn_forward.1} parent=0 // pred_check_branch
    %104 = sbr.rel (0) target = $region61
  $region60: #{kgcn_forward.1} parent=0 // pred_region
    _
  $region61: #{kgcn_forward.1} parent=0 // pred_fallthru
    _
  // Predicated region
  $region62: #{kgcn_forward.1} parent=0 // pred_check
    _
  $region63: #{kgcn_forward.1} parent=0 // pred_check_branch
    %106 = sbr.rel (0) target = $region65
  $region64: #{kgcn_forward.1} parent=0 // pred_region
    _
  $region65: #{kgcn_forward.1} parent=0 // pred_fallthru
    _
  // Predicated region
  $region66: #{kgcn_forward.1} parent=0 // pred_check
    _
  $region67: #{kgcn_forward.1} parent=0 // pred_check_branch
    %108 = sbr.rel (0) target = $region69
  $region68: #{kgcn_forward.1} parent=0 // pred_region
    _
  $region69: #{kgcn_forward.1} parent=0 // pred_fallthru
    _
  // Predicated region
  $region70: #{kgcn_forward.1} parent=0 // pred_check
    _
  $region71: #{kgcn_forward.1} parent=0 // pred_check_branch
    %110 = sbr.rel (0) target = $region73
  $region72: #{kgcn_forward.1} parent=0 // pred_region
    _
  $region73: #{kgcn_forward.1} parent=0 // pred_fallthru
    _
  // Predicated region
  $region74: #{kgcn_forward.1} parent=0 // pred_check
    _
  $region75: #{kgcn_forward.1} parent=0 // pred_check_branch
    %112 = sbr.rel (0) target = $region77
  $region76: #{kgcn_forward.1} parent=0 // pred_region
    _
  $region77: #{kgcn_forward.1} parent=0 // pred_fallthru
    _
  // Predicated region
  $region78: #{kgcn_forward.1} parent=0 // pred_check
    _
  $region79: #{kgcn_forward.1} parent=0 // pred_check_branch
    %114 = sbr.rel (0) target = $region81
  $region80: #{kgcn_forward.1} parent=0 // pred_region
    _
  $region81: #{kgcn_forward.1} parent=0 // pred_fallthru
    _
  // Predicated region
  $region82: #{kgcn_forward.1} parent=0 // pred_check
    _
  $region83: #{kgcn_forward.1} parent=0 // pred_check_branch
    %116 = sbr.rel (0) target = $region85
  $region84: #{kgcn_forward.1} parent=0 // pred_region
    _
  $region85: #{kgcn_forward.1} parent=0 // pred_fallthru
    _
  // Predicated region
  $region86: #{kgcn_forward.1} parent=0 // pred_check
    _
  $region87: #{kgcn_forward.1} parent=0 // pred_check_branch
    %118 = sbr.rel (0) target = $region89
  $region88: #{kgcn_forward.1} parent=0 // pred_region
    _
  $region89: #{kgcn_forward.1} parent=0 // pred_fallthru
    _
  // Predicated region
  $region90: #{kgcn_forward.1} parent=0 // pred_check
    _
  $region91: #{kgcn_forward.1} parent=0 // pred_check_branch
    %120 = sbr.rel (0) target = $region93
  $region92: #{kgcn_forward.1} parent=0 // pred_region
    _
  $region93: #{kgcn_forward.1} parent=0 // pred_fallthru
    _
  // Predicated region
  $region94: #{kgcn_forward.1} parent=0 // pred_check
    _
  $region95: #{kgcn_forward.1} parent=0 // pred_check_branch
    %122 = sbr.rel (0) target = $region97
  $region96: #{kgcn_forward.1} parent=0 // pred_region
    _
  $region97: #{kgcn_forward.1} parent=0 // pred_fallthru
    _
  // Predicated region
  $region98: #{kgcn_forward.1} parent=0 // pred_check
    _
  $region99: #{kgcn_forward.1} parent=0 // pred_check_branch
    %124 = sbr.rel (0) target = $region101
  $region100: #{kgcn_forward.1} parent=0 // pred_region
    _
  $region101: #{kgcn_forward.1} parent=0 // pred_fallthru
    _
  // Predicated region
  $region102: #{kgcn_forward.1} parent=0 // pred_check
    _
  $region103: #{kgcn_forward.1} parent=0 // pred_check_branch
    %126 = sbr.rel (0) target = $region105
  $region104: #{kgcn_forward.1} parent=0 // pred_region
    _
  $region105: #{kgcn_forward.1} parent=0 // pred_fallthru
    _
  // Predicated region
  $region106: #{kgcn_forward.1} parent=0 // pred_check
    _
  $region107: #{kgcn_forward.1} parent=0 // pred_check_branch
    %128 = sbr.rel (0) target = $region109
  $region108: #{kgcn_forward.1} parent=0 // pred_region
    _
  $region109: #{kgcn_forward.1} parent=0 // pred_fallthru
    _
  // Predicated region
  $region110: #{kgcn_forward.1} parent=0 // pred_check
    _
  $region111: #{kgcn_forward.1} parent=0 // pred_check_branch
    %130 = sbr.rel (0) target = $region113
  $region112: #{kgcn_forward.1} parent=0 // pred_region
    _
  $region113: #{kgcn_forward.1} parent=0 // pred_fallthru
    _
  // Predicated region
  $region114: #{kgcn_forward.1} parent=0 // pred_check
    _
  $region115: #{kgcn_forward.1} parent=0 // pred_check_branch
    %132 = sbr.rel (0) target = $region117
  $region116: #{kgcn_forward.1} parent=0 // pred_region
    _
  $region117: #{kgcn_forward.1} parent=0 // pred_fallthru
    _
  // Predicated region
  $region118: #{kgcn_forward.1} parent=0 // pred_check
    _
  $region119: #{kgcn_forward.1} parent=0 // pred_check_branch
    %134 = sbr.rel (0) target = $region121
  $region120: #{kgcn_forward.1} parent=0 // pred_region
    _
  $region121: #{kgcn_forward.1} parent=0 // pred_fallthru
    _
  // Predicated region
  $region122: #{kgcn_forward.1} parent=0 // pred_check
    _
  $region123: #{kgcn_forward.1} parent=0 // pred_check_branch
    %136 = sbr.rel (0) target = $region125
  $region124: #{kgcn_forward.1} parent=0 // pred_region
    _
  $region125: #{kgcn_forward.1} parent=0 // pred_fallthru
    _
  // Predicated region
  $region126: #{kgcn_forward.1} parent=0 // pred_check
    _
  $region127: #{kgcn_forward.1} parent=0 // pred_check_branch
    %138 = sbr.rel (0) target = $region129
  $region128: #{kgcn_forward.1} parent=0 // pred_region
    _
  $region129: #{kgcn_forward.1} parent=0 // pred_fallthru
    _
  // Predicated region
  $region130: #{kgcn_forward.1} parent=0 // pred_check
    _
  $region131: #{kgcn_forward.1} parent=0 // pred_check_branch
    %140 = sbr.rel (0) target = $region133
  $region132: #{kgcn_forward.1} parent=0 // pred_region
    _
  $region133: #{kgcn_forward.1} parent=0 // pred_fallthru
    _
  %v141 = vld [vmem:[%s1] sm:$0xff]
  %v142 = vld [vmem:[%s1 + $0x8] sm:$0xf]
  %v143 = vld [vmem:[%s11] sm:$0x7f]
  %v144 = vld [vmem:[%s13] sm:$0x1]
  %v146 = vlaneseq
  %v147 = vshrl.u32 %v146, 7
  %v148 = vsub.s32 0, %v147
  %v149 = vrot.slane %v144, %v148
  %vm151 = vcmask 56320
  %v153 = vsel %vm151, %v141, 0
  %v156 = vsel %vm151, %v142, 0
  %vm158 = vcmask 1046528
  %v160 = vsel %vm158, %v143, 0
  %162 = vmatprep.subr.mxu0 0.0
  %163 = vmatpush1.msra.mxu0 0.0
  %164 = vmatprep.subr.mxu0 0.0
  %165 = vmatpush1.msra.mxu0 0.0
  %166 = vmatprep.subr.mxu0 0.0
  %167 = vmatpush1.msra.mxu0 0.0
  %168 = vmatprep.subr.mxu0 0.0
  %169 = vmatpush1.msra.mxu0 0.0
  %170 = vmatprep.subr.mxu0 0.0
  %171 = vmatpush1.msra.mxu0 0.0
  %172 = vmatprep.subr.mxu0 0.0
  %173 = vmatpush1.msra.mxu0 0.0
  %174 = vmatprep.subr.mxu0 0.0
  %175 = vmatpush1.msra.mxu0 0.0
  %176 = vmatprep.subr.mxu0 0.0
  %177 = vmatpush1.msra.mxu0 0.0
  %178 = vmatprep.subr.mxu0 0.0
  %179 = vmatpush1.msra.mxu0 0.0
  %180 = vmatprep.subr.mxu0 0.0
  %181 = vmatpush1.msra.mxu0 0.0
  %182 = vmatprep.subr.mxu0 0.0
  %183 = vmatpush1.msra.mxu0 0.0
  %184 = vmatprep.subr.mxu0 0.0
  %185 = vmatpush1.msra.mxu0 0.0
  %186 = vmatprep.subr.mxu0 0.0
  %187 = vmatpush1.msra.mxu0 0.0
  %188 = vmatprep.subr.mxu0 0.0
  %189 = vmatpush1.msra.mxu0 0.0
  %190 = vmatprep.subr.mxu0 0.0
  %191 = vmatpush1.msra.mxu0 0.0
  %192 = vmatprep.subr.mxu0 0.0
  %193 = vmatpush1.msra.mxu0 %v160
  %194 = vmatprep.subr.mxu0 0.0
  %195 = vmatpush2.msra.mxu0 0.0
  %196 = vmatprep.subr.mxu0 0.0
  %197 = vmatpush2.msra.mxu0 0.0
  %198 = vmatprep.subr.mxu0 0.0
  %199 = vmatpush2.msra.mxu0 0.0
  %200 = vmatprep.subr.mxu0 0.0
  %201 = vmatpush2.msra.mxu0 0.0
  %202 = vmatprep.subr.mxu0 0.0
  %203 = vmatpush2.msra.mxu0 0.0
  %204 = vmatprep.subr.mxu0 0.0
  %205 = vmatpush2.msra.mxu0 0.0
  %206 = vmatprep.subr.mxu0 0.0
  %207 = vmatpush2.msra.mxu0 0.0
  %208 = vmatprep.subr.mxu0 0.0
  %209 = vmatpush2.msra.mxu0 0.0
  %210 = vmatprep.subr.mxu0 0.0
  %211 = vmatpush2.msra.mxu0 0.0
  %212 = vmatprep.subr.mxu0 0.0
  %213 = vmatpush2.msra.mxu0 0.0
  %214 = vmatprep.subr.mxu0 0.0
  %215 = vmatpush2.msra.mxu0 0.0
  %216 = vmatprep.subr.mxu0 0.0
  %217 = vmatpush2.msra.mxu0 0.0
  %218 = vmatprep.subr.mxu0 0.0
  %219 = vmatpush2.msra.mxu0 0.0
  %220 = vmatprep.subr.mxu0 0.0
  %221 = vmatpush2.msra.mxu0 0.0
  %222 = vmatprep.subr.mxu0 0.0
  %223 = vmatpush2.msra.mxu0 0.0
  %224 = vmatprep.subr.mxu0 0.0
  %225 = vmatpush2.msra.mxu0 0.0
  %226 = vmatprep.mubr.f32.mxu0 0.0
  %227 = vmatmul.mubr.f32.gmra.mxu0 %v153
  %v228 = vpop.f32.mrf.mxu0
  %v229 = vadd.f32 %v149, %v228
  %v230 = vpop.f32.mrf.mxu0
  %231 = vmatprep.mubr.f32.mxu0 0.0
  %232 = vmatmul.mubr.f32.gmra.mxu0 %v156
  %v233 = vpop.f32.mrf.mxu0
  %v234 = vadd.f32 %v149, %v233
  %v235 = vpop.f32.mrf.mxu0
  %236 = vdwg.mxu0
  %v237 = vmax.f32 %v229, 0.0
  %v238 = vmax.f32 %v234, 0.0
  %v239 = vld [vmem:[%s15] sm:$0xff]
  %v240 = vld [vmem:[%s15 + $0x8] sm:$0xff]
  %v241 = vld [vmem:[%s17] sm:$0x1]
  %v243 = vlaneseq
  %v244 = vshrl.u32 %v243, 7
  %v245 = vsub.s32 0, %v244
  %v246 = vrot.slane %v241, %v245
  %vm248 = vcmask 130048
  %v250 = vsel %vm248, %v237, 0
  %v253 = vsel %vm248, %v238, 0
  %255 = vmatprep.subr.mxu0 0.0
  %256 = vmatpush1.msra.mxu0 0.0
  %257 = vmatprep.subr.mxu0 0.0
  %258 = vmatpush1.msra.mxu0 0.0
  %259 = vmatprep.subr.mxu0 0.0
  %260 = vmatpush1.msra.mxu0 0.0
  %261 = vmatprep.subr.mxu0 0.0
  %262 = vmatpush1.msra.mxu0 0.0
  %263 = vmatprep.subr.mxu0 0.0
  %264 = vmatpush1.msra.mxu0 0.0
  %265 = vmatprep.subr.mxu0 0.0
  %266 = vmatpush1.msra.mxu0 0.0
  %267 = vmatprep.subr.mxu0 0.0
  %268 = vmatpush1.msra.mxu0 0.0
  %269 = vmatprep.subr.mxu0 0.0
  %270 = vmatpush1.msra.mxu0 0.0
  %271 = vmatprep.subr.mxu0 0.0
  %272 = vmatpush1.msra.mxu0 0.0
  %273 = vmatprep.subr.mxu0 0.0
  %274 = vmatpush1.msra.mxu0 0.0
  %275 = vmatprep.subr.mxu0 0.0
  %276 = vmatpush1.msra.mxu0 0.0
  %277 = vmatprep.subr.mxu0 0.0
  %278 = vmatpush1.msra.mxu0 0.0
  %279 = vmatprep.subr.mxu0 0.0
  %280 = vmatpush1.msra.mxu0 0.0
  %281 = vmatprep.subr.mxu0 0.0
  %282 = vmatpush1.msra.mxu0 0.0
  %283 = vmatprep.subr.mxu0 0.0
  %284 = vmatpush1.msra.mxu0 %v240
  %285 = vmatprep.subr.mxu0 0.0
  %286 = vmatpush1.msra.mxu0 %v239
  %287 = vmatprep.subr.mxu0 0.0
  %288 = vmatpush2.msra.mxu0 0.0
  %289 = vmatprep.subr.mxu0 0.0
  %290 = vmatpush2.msra.mxu0 0.0
  %291 = vmatprep.subr.mxu0 0.0
  %292 = vmatpush2.msra.mxu0 0.0
  %293 = vmatprep.subr.mxu0 0.0
  %294 = vmatpush2.msra.mxu0 0.0
  %295 = vmatprep.subr.mxu0 0.0
  %296 = vmatpush2.msra.mxu0 0.0
  %297 = vmatprep.subr.mxu0 0.0
  %298 = vmatpush2.msra.mxu0 0.0
  %299 = vmatprep.subr.mxu0 0.0
  %300 = vmatpush2.msra.mxu0 0.0
  %301 = vmatprep.subr.mxu0 0.0
  %302 = vmatpush2.msra.mxu0 0.0
  %303 = vmatprep.subr.mxu0 0.0
  %304 = vmatpush2.msra.mxu0 0.0
  %305 = vmatprep.subr.mxu0 0.0
  %306 = vmatpush2.msra.mxu0 0.0
  %307 = vmatprep.subr.mxu0 0.0
  %308 = vmatpush2.msra.mxu0 0.0
  %309 = vmatprep.subr.mxu0 0.0
  %310 = vmatpush2.msra.mxu0 0.0
  %311 = vmatprep.subr.mxu0 0.0
  %312 = vmatpush2.msra.mxu0 0.0
  %313 = vmatprep.subr.mxu0 0.0
  %314 = vmatpush2.msra.mxu0 0.0
  %315 = vmatprep.subr.mxu0 0.0
  %316 = vmatpush2.msra.mxu0 0.0
  %317 = vmatprep.subr.mxu0 0.0
  %318 = vmatpush2.msra.mxu0 0.0
  %319 = vmatprep.mubr.f32.mxu0 0.0
  %320 = vmatmul.mubr.f32.gmra.mxu0 %v250
  %v321 = vpop.f32.mrf.mxu0
  %v322 = vadd.f32 %v246, %v321
  %v323 = vpop.f32.mrf.mxu0
  %324 = vmatprep.mubr.f32.mxu0 0.0
  %325 = vmatmul.mubr.f32.gmra.mxu0 %v253
  %v326 = vpop.f32.mrf.mxu0
  %v327 = vadd.f32 %v246, %v326
  %v328 = vpop.f32.mrf.mxu0
  %329 = vdwg.mxu0
  %v330 = vmax.f32 %v322, 0.0
  %v331 = vmax.f32 %v327, 0.0
  %v332 = vld [vmem:[%s3] sm:$0xff]
  %v333 = vld [vmem:[%s3 + $0x8] sm:$0xff]
  %v334 = vld [vmem:[%s3 + $0x10] sm:$0xff]
  %v335 = vld [vmem:[%s19] sm:$0x1f]
  %v336 = vld [vmem:[%s21] sm:$0x1]
  %v338 = vlaneseq
  %v339 = vshrl.u32 %v338, 7
  %v340 = vsub.s32 0, %v339
  %v341 = vrot.slane %v336, %v340
  %vm343 = vcmask 39936
  %v345 = vsel %vm343, %v332, 0
  %v348 = vsel %vm343, %v333, 0
  %v351 = vsel %vm343, %v334, 0
  %vm353 = vcmask 1044480
  %v355 = vsel %vm353, %v335, 0
  %357 = vmatprep.subr.mxu0 0.0
  %358 = vmatpush1.msra.mxu0 0.0
  %359 = vmatprep.subr.mxu0 0.0
  %360 = vmatpush1.msra.mxu0 0.0
  %361 = vmatprep.subr.mxu0 0.0
  %362 = vmatpush1.msra.mxu0 0.0
  %363 = vmatprep.subr.mxu0 0.0
  %364 = vmatpush1.msra.mxu0 0.0
  %365 = vmatprep.subr.mxu0 0.0
  %366 = vmatpush1.msra.mxu0 0.0
  %367 = vmatprep.subr.mxu0 0.0
  %368 = vmatpush1.msra.mxu0 0.0
  %369 = vmatprep.subr.mxu0 0.0
  %370 = vmatpush1.msra.mxu0 0.0
  %371 = vmatprep.subr.mxu0 0.0
  %372 = vmatpush1.msra.mxu0 0.0
  %373 = vmatprep.subr.mxu0 0.0
  %374 = vmatpush1.msra.mxu0 0.0
  %375 = vmatprep.subr.mxu0 0.0
  %376 = vmatpush1.msra.mxu0 0.0
  %377 = vmatprep.subr.mxu0 0.0
  %378 = vmatpush1.msra.mxu0 0.0
  %379 = vmatprep.subr.mxu0 0.0
  %380 = vmatpush1.msra.mxu0 0.0
  %381 = vmatprep.subr.mxu0 0.0
  %382 = vmatpush1.msra.mxu0 0.0
  %383 = vmatprep.subr.mxu0 0.0
  %384 = vmatpush1.msra.mxu0 0.0
  %385 = vmatprep.subr.mxu0 0.0
  %386 = vmatpush1.msra.mxu0 0.0
  %387 = vmatprep.subr.mxu0 0.0
  %388 = vmatpush1.msra.mxu0 %v355
  %389 = vmatprep.subr.mxu0 0.0
  %390 = vmatpush2.msra.mxu0 0.0
  %391 = vmatprep.subr.mxu0 0.0
  %392 = vmatpush2.msra.mxu0 0.0
  %393 = vmatprep.subr.mxu0 0.0
  %394 = vmatpush2.msra.mxu0 0.0
  %395 = vmatprep.subr.mxu0 0.0
  %396 = vmatpush2.msra.mxu0 0.0
  %397 = vmatprep.subr.mxu0 0.0
  %398 = vmatpush2.msra.mxu0 0.0
  %399 = vmatprep.subr.mxu0 0.0
  %400 = vmatpush2.msra.mxu0 0.0
  %401 = vmatprep.subr.mxu0 0.0
  %402 = vmatpush2.msra.mxu0 0.0
  %403 = vmatprep.subr.mxu0 0.0
  %404 = vmatpush2.msra.mxu0 0.0
  %405 = vmatprep.subr.mxu0 0.0
  %406 = vmatpush2.msra.mxu0 0.0
  %407 = vmatprep.subr.mxu0 0.0
  %408 = vmatpush2.msra.mxu0 0.0
  %409 = vmatprep.subr.mxu0 0.0
  %410 = vmatpush2.msra.mxu0 0.0
  %411 = vmatprep.subr.mxu0 0.0
  %412 = vmatpush2.msra.mxu0 0.0
  %413 = vmatprep.subr.mxu0 0.0
  %414 = vmatpush2.msra.mxu0 0.0
  %415 = vmatprep.subr.mxu0 0.0
  %416 = vmatpush2.msra.mxu0 0.0
  %417 = vmatprep.subr.mxu0 0.0
  %418 = vmatpush2.msra.mxu0 0.0
  %419 = vmatprep.subr.mxu0 0.0
  %420 = vmatpush2.msra.mxu0 0.0
  %421 = vmatprep.mubr.f32.mxu0 0.0
  %422 = vmatmul.mubr.f32.gmra.mxu0 %v345
  %v423 = vpop.f32.mrf.mxu0
  %v424 = vadd.f32 %v341, %v423
  %v425 = vpop.f32.mrf.mxu0
  %426 = vmatprep.mubr.f32.mxu0 0.0
  %427 = vmatmul.mubr.f32.gmra.mxu0 %v348
  %v428 = vpop.f32.mrf.mxu0
  %v429 = vadd.f32 %v341, %v428
  %v430 = vpop.f32.mrf.mxu0
  %431 = vmatprep.mubr.f32.mxu0 0.0
  %432 = vmatmul.mubr.f32.gmra.mxu0 %v351
  %v433 = vpop.f32.mrf.mxu0
  %v434 = vadd.f32 %v341, %v433
  %v435 = vpop.f32.mrf.mxu0
  %436 = vdwg.mxu0
  %v437 = vmax.f32 %v424, 0.0
  %v438 = vmax.f32 %v429, 0.0
  %v439 = vmax.f32 %v434, 0.0
  %v440 = vld [vmem:[%s23] sm:$0xff]
  %v441 = vld [vmem:[%s23 + $0x8] sm:$0xff]
  %v442 = vld [vmem:[%s25] sm:$0x1]
  %v444 = vlaneseq
  %v445 = vshrl.u32 %v444, 7
  %v446 = vsub.s32 0, %v445
  %v447 = vrot.slane %v442, %v446
  %v450 = vsel %vm248, %v437, 0
  %v453 = vsel %vm248, %v438, 0
  %v456 = vsel %vm248, %v439, 0
  %458 = vmatprep.subr.mxu0 0.0
  %459 = vmatpush1.msra.mxu0 0.0
  %460 = vmatprep.subr.mxu0 0.0
  %461 = vmatpush1.msra.mxu0 0.0
  %462 = vmatprep.subr.mxu0 0.0
  %463 = vmatpush1.msra.mxu0 0.0
  %464 = vmatprep.subr.mxu0 0.0
  %465 = vmatpush1.msra.mxu0 0.0
  %466 = vmatprep.subr.mxu0 0.0
  %467 = vmatpush1.msra.mxu0 0.0
  %468 = vmatprep.subr.mxu0 0.0
  %469 = vmatpush1.msra.mxu0 0.0
  %470 = vmatprep.subr.mxu0 0.0
  %471 = vmatpush1.msra.mxu0 0.0
  %472 = vmatprep.subr.mxu0 0.0
  %473 = vmatpush1.msra.mxu0 0.0
  %474 = vmatprep.subr.mxu0 0.0
  %475 = vmatpush1.msra.mxu0 0.0
  %476 = vmatprep.subr.mxu0 0.0
  %477 = vmatpush1.msra.mxu0 0.0
  %478 = vmatprep.subr.mxu0 0.0
  %479 = vmatpush1.msra.mxu0 0.0
  %480 = vmatprep.subr.mxu0 0.0
  %481 = vmatpush1.msra.mxu0 0.0
  %482 = vmatprep.subr.mxu0 0.0
  %483 = vmatpush1.msra.mxu0 0.0
  %484 = vmatprep.subr.mxu0 0.0
  %485 = vmatpush1.msra.mxu0 0.0
  %486 = vmatprep.subr.mxu0 0.0
  %487 = vmatpush1.msra.mxu0 %v441
  %488 = vmatprep.subr.mxu0 0.0
  %489 = vmatpush1.msra.mxu0 %v440
  %490 = vmatprep.subr.mxu0 0.0
  %491 = vmatpush2.msra.mxu0 0.0
  %492 = vmatprep.subr.mxu0 0.0
  %493 = vmatpush2.msra.mxu0 0.0
  %494 = vmatprep.subr.mxu0 0.0
  %495 = vmatpush2.msra.mxu0 0.0
  %496 = vmatprep.subr.mxu0 0.0
  %497 = vmatpush2.msra.mxu0 0.0
  %498 = vmatprep.subr.mxu0 0.0
  %499 = vmatpush2.msra.mxu0 0.0
  %500 = vmatprep.subr.mxu0 0.0
  %501 = vmatpush2.msra.mxu0 0.0
  %502 = vmatprep.subr.mxu0 0.0
  %503 = vmatpush2.msra.mxu0 0.0
  %504 = vmatprep.subr.mxu0 0.0
  %505 = vmatpush2.msra.mxu0 0.0
  %506 = vmatprep.subr.mxu0 0.0
  %507 = vmatpush2.msra.mxu0 0.0
  %508 = vmatprep.subr.mxu0 0.0
  %509 = vmatpush2.msra.mxu0 0.0
  %510 = vmatprep.subr.mxu0 0.0
  %511 = vmatpush2.msra.mxu0 0.0
  %512 = vmatprep.subr.mxu0 0.0
  %513 = vmatpush2.msra.mxu0 0.0
  %514 = vmatprep.subr.mxu0 0.0
  %515 = vmatpush2.msra.mxu0 0.0
  %516 = vmatprep.subr.mxu0 0.0
  %517 = vmatpush2.msra.mxu0 0.0
  %518 = vmatprep.subr.mxu0 0.0
  %519 = vmatpush2.msra.mxu0 0.0
  %520 = vmatprep.subr.mxu0 0.0
  %521 = vmatpush2.msra.mxu0 0.0
  %522 = vmatprep.mubr.f32.mxu0 0.0
  %523 = vmatmul.mubr.f32.gmra.mxu0 %v450
  %v524 = vpop.f32.mrf.mxu0
  %v525 = vadd.f32 %v447, %v524
  %v526 = vpop.f32.mrf.mxu0
  %527 = vmatprep.mubr.f32.mxu0 0.0
  %528 = vmatmul.mubr.f32.gmra.mxu0 %v453
  %v529 = vpop.f32.mrf.mxu0
  %v530 = vadd.f32 %v447, %v529
  %v531 = vpop.f32.mrf.mxu0
  %532 = vmatprep.mubr.f32.mxu0 0.0
  %533 = vmatmul.mubr.f32.gmra.mxu0 %v456
  %v534 = vpop.f32.mrf.mxu0
  %v535 = vadd.f32 %v447, %v534
  %v536 = vpop.f32.mrf.mxu0
  %537 = vdwg.mxu0
  %v538 = vmax.f32 %v525, 0.0
  %v539 = vmax.f32 %v530, 0.0
  %v540 = vmax.f32 %v535, 0.0
  %v541 = vld [vmem:[%s5] sm:$0xff]
  %v542 = vld [vmem:[%s5 + $0x8] sm:$0xff]
  %v543 = vld [vmem:[%s5 + $0x10] sm:$0xff]
  %v544 = vld [vmem:[%s7] sm:$0xff]
  %v545 = vld [vmem:[%s7 + $0x8] sm:$0xff]
  %v546 = vld [vmem:[%s7 + $0x10] sm:$0xff]
  %v547 = vld [vmem:[%s9] sm:$0xff]
  %v548 = vld [vmem:[%s9 + $0x8] sm:$0xf]
  %v549 = vld [vmem:[%s27] sm:$0xff]
  %v550 = vld [vmem:[%s27 + $0x8] sm:$0xff]
  %v551 = vld [vmem:[%s27 + $0x10] sm:$0xff]
  %v552 = vld [vmem:[%s27 + $0x18] sm:$0xff]
  %v553 = vld [vmem:[%s27 + $0x20] sm:$0xff]
  %v554 = vld [vmem:[%s27 + $0x28] sm:$0xff]
  %v555 = vld [vmem:[%s27 + $0x30] sm:$0xff]
  %v556 = vld [vmem:[%s27 + $0x38] sm:$0xff]
  %v557 = vld [vmem:[%s27 + $0x40] sm:$0xff]
  %v558 = vld [vmem:[%s27 + $0x48] sm:$0xff]
  %v559 = vld [vmem:[%s27 + $0x50] sm:$0xff]
  %v560 = vld [vmem:[%s27 + $0x58] sm:$0xff]
  %v561 = vld [vmem:[%s35] sm:$0xff]
  %v562 = vld [vmem:[%s35 + $0x8] sm:$0xff]
  %v563 = vld [vmem:[%s35 + $0x10] sm:$0xff]
  %v564 = vld [vmem:[%s35 + $0x18] sm:$0xff]
  %v565 = vld [vmem:[%s35 + $0x20] sm:$0xff]
  %v566 = vld [vmem:[%s35 + $0x28] sm:$0xff]
  %v567 = vld [vmem:[%s31] sm:$0xff]
  %v568 = vld [vmem:[%s31 + $0x8] sm:$0xff]
  %v569 = vld [vmem:[%s39] sm:$0xff]
  %v570 = vld [vmem:[%s39 + $0x8] sm:$0xff]
  %v571 = vld [vmem:[%s33] sm:$0x1]
  %v573 = vlaneseq
  %v574 = vshrl.u32 %v573, 7
  %v575 = vsub.s32 0, %v574
  %v576 = vrot.slane %v571, %v575
  %v578 = vld [vmem:[%s41] sm:$0x1]
  %v580 = vlaneseq
  %v581 = vshrl.u32 %v580, 7
  %v582 = vsub.s32 0, %v581
  %v583 = vrot.slane %v578, %v582
  %vm585 = vcmask 97280
  %v587 = vsel %vm585, %v541, 0
  %v590 = vsel %vm585, %v542, 0
  %v593 = vsel %vm585, %v543, 0
  %vm595 = vcmask 1043456
  %v597 = vsel %vm595, %v331, 0
  %599 = vmatprep.subr.mxu0 0.0
  %600 = vmatpush1.msra.mxu0 0.0
  %601 = vmatprep.subr.mxu0 0.0
  %602 = vmatpush1.msra.mxu0 0.0
  %603 = vmatprep.subr.mxu0 0.0
  %604 = vmatpush1.msra.mxu0 0.0
  %605 = vmatprep.subr.mxu0 0.0
  %606 = vmatpush1.msra.mxu0 0.0
  %607 = vmatprep.subr.mxu0 0.0
  %608 = vmatpush1.msra.mxu0 0.0
  %609 = vmatprep.subr.mxu0 0.0
  %610 = vmatpush1.msra.mxu0 0.0
  %611 = vmatprep.subr.mxu0 0.0
  %612 = vmatpush1.msra.mxu0 0.0
  %613 = vmatprep.subr.mxu0 0.0
  %614 = vmatpush1.msra.mxu0 0.0
  %615 = vmatprep.subr.mxu0 0.0
  %616 = vmatpush1.msra.mxu0 0.0
  %617 = vmatprep.subr.mxu0 0.0
  %618 = vmatpush1.msra.mxu0 0.0
  %619 = vmatprep.subr.mxu0 0.0
  %620 = vmatpush1.msra.mxu0 0.0
  %621 = vmatprep.subr.mxu0 0.0
  %622 = vmatpush1.msra.mxu0 0.0
  %623 = vmatprep.subr.mxu0 0.0
  %624 = vmatpush1.msra.mxu0 0.0
  %625 = vmatprep.subr.mxu0 0.0
  %626 = vmatpush1.msra.mxu0 0.0
  %627 = vmatprep.subr.mxu0 0.0
  %628 = vmatpush1.msra.mxu0 %v597
  %629 = vmatprep.subr.mxu0 0.0
  %630 = vmatpush1.msra.mxu0 %v330
  %631 = vmatprep.subr.mxu0 0.0
  %632 = vmatpush2.msra.mxu0 0.0
  %633 = vmatprep.subr.mxu0 0.0
  %634 = vmatpush2.msra.mxu0 0.0
  %635 = vmatprep.subr.mxu0 0.0
  %636 = vmatpush2.msra.mxu0 0.0
  %637 = vmatprep.subr.mxu0 0.0
  %638 = vmatpush2.msra.mxu0 0.0
  %639 = vmatprep.subr.mxu0 0.0
  %640 = vmatpush2.msra.mxu0 0.0
  %641 = vmatprep.subr.mxu0 0.0
  %642 = vmatpush2.msra.mxu0 0.0
  %643 = vmatprep.subr.mxu0 0.0
  %644 = vmatpush2.msra.mxu0 0.0
  %645 = vmatprep.subr.mxu0 0.0
  %646 = vmatpush2.msra.mxu0 0.0
  %647 = vmatprep.subr.mxu0 0.0
  %648 = vmatpush2.msra.mxu0 0.0
  %649 = vmatprep.subr.mxu0 0.0
  %650 = vmatpush2.msra.mxu0 0.0
  %651 = vmatprep.subr.mxu0 0.0
  %652 = vmatpush2.msra.mxu0 0.0
  %653 = vmatprep.subr.mxu0 0.0
  %654 = vmatpush2.msra.mxu0 0.0
  %655 = vmatprep.subr.mxu0 0.0
  %656 = vmatpush2.msra.mxu0 0.0
  %657 = vmatprep.subr.mxu0 0.0
  %658 = vmatpush2.msra.mxu0 0.0
  %659 = vmatprep.subr.mxu0 0.0
  %660 = vmatpush2.msra.mxu0 0.0
  %661 = vmatprep.subr.mxu0 0.0
  %662 = vmatpush2.msra.mxu0 0.0
  %663 = vmatprep.mubr.f32.mxu0 0.0
  %664 = vmatmul.mubr.f32.gmra.mxu0 %v587
  %v665 = vpop.f32.mrf.mxu0
  %v666 = vadd.f32 0.0, %v665
  %v667 = vpop.f32.mrf.mxu0
  %668 = vmatprep.mubr.f32.mxu0 0.0
  %669 = vmatmul.mubr.f32.gmra.mxu0 %v590
  %v670 = vpop.f32.mrf.mxu0
  %v671 = vadd.f32 0.0, %v670
  %v672 = vpop.f32.mrf.mxu0
  %673 = vmatprep.mubr.f32.mxu0 0.0
  %674 = vmatmul.mubr.f32.gmra.mxu0 %v593
  %v675 = vpop.f32.mrf.mxu0
  %v676 = vadd.f32 0.0, %v675
  %v677 = vpop.f32.mrf.mxu0
  %678 = vdwg.mxu0
  %v680 = vsel %vm585, %v544, 0
  %v683 = vsel %vm585, %v545, 0
  %v686 = vsel %vm585, %v546, 0
  %688 = vmatprep.subr.mxu0 0.0
  %689 = vmatpush1.msra.mxu0 0.0
  %690 = vmatprep.subr.mxu0 0.0
  %691 = vmatpush1.msra.mxu0 0.0
  %692 = vmatprep.subr.mxu0 0.0
  %693 = vmatpush1.msra.mxu0 0.0
  %694 = vmatprep.subr.mxu0 0.0
  %695 = vmatpush1.msra.mxu0 0.0
  %696 = vmatprep.subr.mxu0 0.0
  %697 = vmatpush1.msra.mxu0 0.0
  %698 = vmatprep.subr.mxu0 0.0
  %699 = vmatpush1.msra.mxu0 0.0
  %700 = vmatprep.subr.mxu0 0.0
  %701 = vmatpush1.msra.mxu0 0.0
  %702 = vmatprep.subr.mxu0 0.0
  %703 = vmatpush1.msra.mxu0 0.0
  %704 = vmatprep.subr.mxu0 0.0
  %705 = vmatpush1.msra.mxu0 0.0
  %706 = vmatprep.subr.mxu0 0.0
  %707 = vmatpush1.msra.mxu0 0.0
  %708 = vmatprep.subr.mxu0 0.0
  %709 = vmatpush1.msra.mxu0 0.0
  %710 = vmatprep.subr.mxu0 0.0
  %711 = vmatpush1.msra.mxu0 0.0
  %712 = vmatprep.subr.mxu0 0.0
  %713 = vmatpush1.msra.mxu0 0.0
  %714 = vmatprep.subr.mxu0 0.0
  %715 = vmatpush1.msra.mxu0 0.0
  %716 = vmatprep.subr.mxu0 0.0
  %717 = vmatpush1.msra.mxu0 %v597
  %718 = vmatprep.subr.mxu0 0.0
  %719 = vmatpush1.msra.mxu0 %v330
  %720 = vmatprep.subr.mxu0 0.0
  %721 = vmatpush2.msra.mxu0 0.0
  %722 = vmatprep.subr.mxu0 0.0
  %723 = vmatpush2.msra.mxu0 0.0
  %724 = vmatprep.subr.mxu0 0.0
  %725 = vmatpush2.msra.mxu0 0.0
  %726 = vmatprep.subr.mxu0 0.0
  %727 = vmatpush2.msra.mxu0 0.0
  %728 = vmatprep.subr.mxu0 0.0
  %729 = vmatpush2.msra.mxu0 0.0
  %730 = vmatprep.subr.mxu0 0.0
  %731 = vmatpush2.msra.mxu0 0.0
  %732 = vmatprep.subr.mxu0 0.0
  %733 = vmatpush2.msra.mxu0 0.0
  %734 = vmatprep.subr.mxu0 0.0
  %735 = vmatpush2.msra.mxu0 0.0
  %736 = vmatprep.subr.mxu0 0.0
  %737 = vmatpush2.msra.mxu0 0.0
  %738 = vmatprep.subr.mxu0 0.0
  %739 = vmatpush2.msra.mxu0 0.0
  %740 = vmatprep.subr.mxu0 0.0
  %741 = vmatpush2.msra.mxu0 0.0
  %742 = vmatprep.subr.mxu0 0.0
  %743 = vmatpush2.msra.mxu0 0.0
  %744 = vmatprep.subr.mxu0 0.0
  %745 = vmatpush2.msra.mxu0 0.0
  %746 = vmatprep.subr.mxu0 0.0
  %747 = vmatpush2.msra.mxu0 0.0
  %748 = vmatprep.subr.mxu0 0.0
  %749 = vmatpush2.msra.mxu0 0.0
  %750 = vmatprep.subr.mxu0 0.0
  %751 = vmatpush2.msra.mxu0 0.0
  %752 = vmatprep.mubr.f32.mxu0 0.0
  %753 = vmatmul.mubr.f32.gmra.mxu0 %v680
  %v754 = vpop.f32.mrf.mxu0
  %v755 = vadd.f32 0.0, %v754
  %v756 = vpop.f32.mrf.mxu0
  %757 = vmatprep.mubr.f32.mxu0 0.0
  %758 = vmatmul.mubr.f32.gmra.mxu0 %v683
  %v759 = vpop.f32.mrf.mxu0
  %v760 = vadd.f32 0.0, %v759
  %v761 = vpop.f32.mrf.mxu0
  %762 = vmatprep.mubr.f32.mxu0 0.0
  %763 = vmatmul.mubr.f32.gmra.mxu0 %v686
  %v764 = vpop.f32.mrf.mxu0
  %v765 = vadd.f32 0.0, %v764
  %v766 = vpop.f32.mrf.mxu0
  %767 = vdwg.mxu0
  %vm768 = vcmask 195584
  %v770 = vsel %vm768, %v547, 0
  %v773 = vsel %vm768, %v548, 0
  %775 = vmatprep.subr.mxu0 0.0
  %776 = vmatpush1.msra.mxu0 0.0
  %777 = vmatprep.subr.mxu0 0.0
  %778 = vmatpush1.msra.mxu0 0.0
  %779 = vmatprep.subr.mxu0 0.0
  %780 = vmatpush1.msra.mxu0 0.0
  %781 = vmatprep.subr.mxu0 0.0
  %782 = vmatpush1.msra.mxu0 0.0
  %783 = vmatprep.subr.mxu0 0.0
  %784 = vmatpush1.msra.mxu0 0.0
  %785 = vmatprep.subr.mxu0 0.0
  %786 = vmatpush1.msra.mxu0 0.0
  %787 = vmatprep.subr.mxu0 0.0
  %788 = vmatpush1.msra.mxu0 0.0
  %789 = vmatprep.subr.mxu0 0.0
  %790 = vmatpush1.msra.mxu0 0.0
  %791 = vmatprep.subr.mxu0 0.0
  %792 = vmatpush1.msra.mxu0 0.0
  %793 = vmatprep.subr.mxu0 0.0
  %794 = vmatpush1.msra.mxu0 0.0
  %795 = vmatprep.subr.mxu0 0.0
  %796 = vmatpush1.msra.mxu0 0.0
  %797 = vmatprep.subr.mxu0 0.0
  %798 = vmatpush1.msra.mxu0 0.0
  %799 = vmatprep.subr.mxu0 0.0
  %800 = vmatpush1.msra.mxu0 0.0
  %801 = vmatprep.subr.mxu0 0.0
  %802 = vmatpush1.msra.mxu0 %v543
  %803 = vmatprep.subr.mxu0 0.0
  %804 = vmatpush1.msra.mxu0 %v542
  %805 = vmatprep.subr.mxu0 0.0
  %806 = vmatpush1.msra.mxu0 %v541
  %807 = vmatprep.subr.mxu0 0.0
  %808 = vmatpush2.msra.mxu0 0.0
  %809 = vmatprep.subr.mxu0 0.0
  %810 = vmatpush2.msra.mxu0 0.0
  %811 = vmatprep.subr.mxu0 0.0
  %812 = vmatpush2.msra.mxu0 0.0
  %813 = vmatprep.subr.mxu0 0.0
  %814 = vmatpush2.msra.mxu0 0.0
  %815 = vmatprep.subr.mxu0 0.0
  %816 = vmatpush2.msra.mxu0 0.0
  %817 = vmatprep.subr.mxu0 0.0
  %818 = vmatpush2.msra.mxu0 0.0
  %819 = vmatprep.subr.mxu0 0.0
  %820 = vmatpush2.msra.mxu0 0.0
  %821 = vmatprep.subr.mxu0 0.0
  %822 = vmatpush2.msra.mxu0 0.0
  %823 = vmatprep.subr.mxu0 0.0
  %824 = vmatpush2.msra.mxu0 0.0
  %825 = vmatprep.subr.mxu0 0.0
  %826 = vmatpush2.msra.mxu0 0.0
  %827 = vmatprep.subr.mxu0 0.0
  %828 = vmatpush2.msra.mxu0 0.0
  %829 = vmatprep.subr.mxu0 0.0
  %830 = vmatpush2.msra.mxu0 0.0
  %831 = vmatprep.subr.mxu0 0.0
  %832 = vmatpush2.msra.mxu0 0.0
  %833 = vmatprep.subr.mxu0 0.0
  %834 = vmatpush2.msra.mxu0 0.0
  %835 = vmatprep.subr.mxu0 0.0
  %836 = vmatpush2.msra.mxu0 0.0
  %837 = vmatprep.subr.mxu0 0.0
  %838 = vmatpush2.msra.mxu0 0.0
  %839 = vmatprep.mubr.f32.mxu0 0.0
  %840 = vmatmul.mubr.f32.gmra.mxu0 %v770
  %v841 = vpop.f32.mrf.mxu0
  %v842 = vadd.f32 0.0, %v841
  %v843 = vpop.f32.mrf.mxu0
  %844 = vmatprep.mubr.f32.mxu0 0.0
  %845 = vmatmul.mubr.f32.gmra.mxu0 %v773
  %v846 = vpop.f32.mrf.mxu0
  %v847 = vadd.f32 0.0, %v846
  %v848 = vpop.f32.mrf.mxu0
  %849 = vdwg.mxu0
  %850 = vmatprep.subr.mxu0 0.0
  %851 = vmatpush1.msra.mxu0 0.0
  %852 = vmatprep.subr.mxu0 0.0
  %853 = vmatpush1.msra.mxu0 0.0
  %854 = vmatprep.subr.mxu0 0.0
  %855 = vmatpush1.msra.mxu0 0.0
  %856 = vmatprep.subr.mxu0 0.0
  %857 = vmatpush1.msra.mxu0 0.0
  %858 = vmatprep.subr.mxu0 0.0
  %859 = vmatpush1.msra.mxu0 0.0
  %860 = vmatprep.subr.mxu0 0.0
  %861 = vmatpush1.msra.mxu0 0.0
  %862 = vmatprep.subr.mxu0 0.0
  %863 = vmatpush1.msra.mxu0 0.0
  %864 = vmatprep.subr.mxu0 0.0
  %865 = vmatpush1.msra.mxu0 0.0
  %866 = vmatprep.subr.mxu0 0.0
  %867 = vmatpush1.msra.mxu0 0.0
  %868 = vmatprep.subr.mxu0 0.0
  %869 = vmatpush1.msra.mxu0 0.0
  %870 = vmatprep.subr.mxu0 0.0
  %871 = vmatpush1.msra.mxu0 0.0
  %872 = vmatprep.subr.mxu0 0.0
  %873 = vmatpush1.msra.mxu0 0.0
  %874 = vmatprep.subr.mxu0 0.0
  %875 = vmatpush1.msra.mxu0 0.0
  %876 = vmatprep.subr.mxu0 0.0
  %877 = vmatpush1.msra.mxu0 %v676
  %878 = vmatprep.subr.mxu0 0.0
  %879 = vmatpush1.msra.mxu0 %v671
  %880 = vmatprep.subr.mxu0 0.0
  %881 = vmatpush1.msra.mxu0 %v666
  %882 = vmatprep.subr.mxu0 0.0
  %883 = vmatpush2.msra.mxu0 0.0
  %884 = vmatprep.subr.mxu0 0.0
  %885 = vmatpush2.msra.mxu0 0.0
  %886 = vmatprep.subr.mxu0 0.0
  %887 = vmatpush2.msra.mxu0 0.0
  %888 = vmatprep.subr.mxu0 0.0
  %889 = vmatpush2.msra.mxu0 0.0
  %890 = vmatprep.subr.mxu0 0.0
  %891 = vmatpush2.msra.mxu0 0.0
  %892 = vmatprep.subr.mxu0 0.0
  %893 = vmatpush2.msra.mxu0 0.0
  %894 = vmatprep.subr.mxu0 0.0
  %895 = vmatpush2.msra.mxu0 0.0
  %896 = vmatprep.subr.mxu0 0.0
  %897 = vmatpush2.msra.mxu0 0.0
  %898 = vmatprep.subr.mxu0 0.0
  %899 = vmatpush2.msra.mxu0 0.0
  %900 = vmatprep.subr.mxu0 0.0
  %901 = vmatpush2.msra.mxu0 0.0
  %902 = vmatprep.subr.mxu0 0.0
  %903 = vmatpush2.msra.mxu0 0.0
  %904 = vmatprep.subr.mxu0 0.0
  %905 = vmatpush2.msra.mxu0 0.0
  %906 = vmatprep.subr.mxu0 0.0
  %907 = vmatpush2.msra.mxu0 0.0
  %908 = vmatprep.subr.mxu0 0.0
  %909 = vmatpush2.msra.mxu0 0.0
  %910 = vmatprep.subr.mxu0 0.0
  %911 = vmatpush2.msra.mxu0 0.0
  %912 = vmatprep.subr.mxu0 0.0
  %913 = vmatpush2.msra.mxu0 0.0
  %914 = vmatprep.mubr.f32.mxu0 0.0
  %915 = vmatmul.mubr.f32.gmra.mxu0 %v770
  %v916 = vpop.f32.mrf.mxu0
  %v917 = vadd.f32 0.0, %v916
  %v918 = vpop.f32.mrf.mxu0
  %919 = vmatprep.mubr.f32.mxu0 0.0
  %920 = vmatmul.mubr.f32.gmra.mxu0 %v773
  %v921 = vpop.f32.mrf.mxu0
  %v922 = vadd.f32 0.0, %v921
  %v923 = vpop.f32.mrf.mxu0
  %924 = vdwg.mxu0
  %v926 = vsel %vm248, %v538, 0
  %v929 = vsel %vm248, %v539, 0
  %v932 = vsel %vm248, %v540, 0
  %934 = vmatprep.subr.mxu0 0.0
  %935 = vmatpush1.msra.mxu0 0.0
  %936 = vmatprep.subr.mxu0 0.0
  %937 = vmatpush1.msra.mxu0 0.0
  %938 = vmatprep.subr.mxu0 0.0
  %939 = vmatpush1.msra.mxu0 0.0
  %940 = vmatprep.subr.mxu0 0.0
  %941 = vmatpush1.msra.mxu0 0.0
  %942 = vmatprep.subr.mxu0 0.0
  %943 = vmatpush1.msra.mxu0 0.0
  %944 = vmatprep.subr.mxu0 0.0
  %945 = vmatpush1.msra.mxu0 0.0
  %946 = vmatprep.subr.mxu0 0.0
  %947 = vmatpush1.msra.mxu0 0.0
  %948 = vmatprep.subr.mxu0 0.0
  %949 = vmatpush1.msra.mxu0 0.0
  %950 = vmatprep.subr.mxu0 0.0
  %951 = vmatpush1.msra.mxu0 0.0
  %952 = vmatprep.subr.mxu0 0.0
  %953 = vmatpush1.msra.mxu0 0.0
  %954 = vmatprep.subr.mxu0 0.0
  %955 = vmatpush1.msra.mxu0 0.0
  %956 = vmatprep.subr.mxu0 0.0
  %957 = vmatpush1.msra.mxu0 0.0
  %958 = vmatprep.subr.mxu0 0.0
  %959 = vmatpush1.msra.mxu0 0.0
  %960 = vmatprep.subr.mxu0 0.0
  %961 = vmatpush1.msra.mxu0 0.0
  %962 = vmatprep.subr.mxu0 0.0
  %963 = vmatpush1.msra.mxu0 %v554
  %964 = vmatprep.subr.mxu0 0.0
  %965 = vmatpush1.msra.mxu0 %v553
  %966 = vmatprep.subr.mxu0 0.0
  %967 = vmatpush2.msra.mxu0 0.0
  %968 = vmatprep.subr.mxu0 0.0
  %969 = vmatpush2.msra.mxu0 0.0
  %970 = vmatprep.subr.mxu0 0.0
  %971 = vmatpush2.msra.mxu0 0.0
  %972 = vmatprep.subr.mxu0 0.0
  %973 = vmatpush2.msra.mxu0 0.0
  %974 = vmatprep.subr.mxu0 0.0
  %975 = vmatpush2.msra.mxu0 0.0
  %976 = vmatprep.subr.mxu0 0.0
  %977 = vmatpush2.msra.mxu0 0.0
  %978 = vmatprep.subr.mxu0 0.0
  %979 = vmatpush2.msra.mxu0 0.0
  %980 = vmatprep.subr.mxu0 0.0
  %981 = vmatpush2.msra.mxu0 0.0
  %982 = vmatprep.subr.mxu0 0.0
  %983 = vmatpush2.msra.mxu0 0.0
  %984 = vmatprep.subr.mxu0 0.0
  %985 = vmatpush2.msra.mxu0 0.0
  %986 = vmatprep.subr.mxu0 0.0
  %987 = vmatpush2.msra.mxu0 0.0
  %988 = vmatprep.subr.mxu0 0.0
  %989 = vmatpush2.msra.mxu0 0.0
  %990 = vmatprep.subr.mxu0 0.0
  %991 = vmatpush2.msra.mxu0 0.0
  %992 = vmatprep.subr.mxu0 0.0
  %993 = vmatpush2.msra.mxu0 0.0
  %994 = vmatprep.subr.mxu0 0.0
  %995 = vmatpush2.msra.mxu0 0.0
  %996 = vmatprep.subr.mxu0 0.0
  %997 = vmatpush2.msra.mxu0 0.0
  %998 = vmatprep.mubr.f32.mxu0 0.0
  %999 = vmatmul.mubr.f32.gmra.mxu0 %v926
  %v1000 = vpop.f32.mrf.mxu0
  %v1001 = vadd.f32 0.0, %v1000
  %v1002 = vpop.f32.mrf.mxu0
  %1003 = vmatprep.mubr.f32.mxu0 0.0
  %1004 = vmatmul.mubr.f32.gmra.mxu0 %v929
  %v1005 = vpop.f32.mrf.mxu0
  %v1006 = vadd.f32 0.0, %v1005
  %v1007 = vpop.f32.mrf.mxu0
  %1008 = vmatprep.mubr.f32.mxu0 0.0
  %1009 = vmatmul.mubr.f32.gmra.mxu0 %v932
  %v1010 = vpop.f32.mrf.mxu0
  %v1011 = vadd.f32 0.0, %v1010
  %v1012 = vpop.f32.mrf.mxu0
  %1013 = vdwg.mxu0
  %v1015 = vsel %vm248, %v666, 0
  %v1018 = vsel %vm248, %v671, 0
  %v1021 = vsel %vm248, %v676, 0
  %1023 = vmatprep.subr.mxu0 0.0
  %1024 = vmatpush1.msra.mxu0 0.0
  %1025 = vmatprep.subr.mxu0 0.0
  %1026 = vmatpush1.msra.mxu0 0.0
  %1027 = vmatprep.subr.mxu0 0.0
  %1028 = vmatpush1.msra.mxu0 0.0
  %1029 = vmatprep.subr.mxu0 0.0
  %1030 = vmatpush1.msra.mxu0 0.0
  %1031 = vmatprep.subr.mxu0 0.0
  %1032 = vmatpush1.msra.mxu0 0.0
  %1033 = vmatprep.subr.mxu0 0.0
  %1034 = vmatpush1.msra.mxu0 0.0
  %1035 = vmatprep.subr.mxu0 0.0
  %1036 = vmatpush1.msra.mxu0 0.0
  %1037 = vmatprep.subr.mxu0 0.0
  %1038 = vmatpush1.msra.mxu0 0.0
  %1039 = vmatprep.subr.mxu0 0.0
  %1040 = vmatpush1.msra.mxu0 0.0
  %1041 = vmatprep.subr.mxu0 0.0
  %1042 = vmatpush1.msra.mxu0 0.0
  %1043 = vmatprep.subr.mxu0 0.0
  %1044 = vmatpush1.msra.mxu0 0.0
  %1045 = vmatprep.subr.mxu0 0.0
  %1046 = vmatpush1.msra.mxu0 0.0
  %1047 = vmatprep.subr.mxu0 0.0
  %1048 = vmatpush1.msra.mxu0 0.0
  %1049 = vmatprep.subr.mxu0 0.0
  %1050 = vmatpush1.msra.mxu0 0.0
  %1051 = vmatprep.subr.mxu0 0.0
  %1052 = vmatpush1.msra.mxu0 %v550
  %1053 = vmatprep.subr.mxu0 0.0
  %1054 = vmatpush1.msra.mxu0 %v549
  %1055 = vmatprep.subr.mxu0 0.0
  %1056 = vmatpush2.msra.mxu0 0.0
  %1057 = vmatprep.subr.mxu0 0.0
  %1058 = vmatpush2.msra.mxu0 0.0
  %1059 = vmatprep.subr.mxu0 0.0
  %1060 = vmatpush2.msra.mxu0 0.0
  %1061 = vmatprep.subr.mxu0 0.0
  %1062 = vmatpush2.msra.mxu0 0.0
  %1063 = vmatprep.subr.mxu0 0.0
  %1064 = vmatpush2.msra.mxu0 0.0
  %1065 = vmatprep.subr.mxu0 0.0
  %1066 = vmatpush2.msra.mxu0 0.0
  %1067 = vmatprep.subr.mxu0 0.0
  %1068 = vmatpush2.msra.mxu0 0.0
  %1069 = vmatprep.subr.mxu0 0.0
  %1070 = vmatpush2.msra.mxu0 0.0
  %1071 = vmatprep.subr.mxu0 0.0
  %1072 = vmatpush2.msra.mxu0 0.0
  %1073 = vmatprep.subr.mxu0 0.0
  %1074 = vmatpush2.msra.mxu0 0.0
  %1075 = vmatprep.subr.mxu0 0.0
  %1076 = vmatpush2.msra.mxu0 0.0
  %1077 = vmatprep.subr.mxu0 0.0
  %1078 = vmatpush2.msra.mxu0 0.0
  %1079 = vmatprep.subr.mxu0 0.0
  %1080 = vmatpush2.msra.mxu0 0.0
  %1081 = vmatprep.subr.mxu0 0.0
  %1082 = vmatpush2.msra.mxu0 0.0
  %1083 = vmatprep.subr.mxu0 0.0
  %1084 = vmatpush2.msra.mxu0 0.0
  %1085 = vmatprep.subr.mxu0 0.0
  %1086 = vmatpush2.msra.mxu0 0.0
  %1087 = vmatprep.mubr.f32.mxu0 0.0
  %1088 = vmatmul.mubr.f32.gmra.mxu0 %v1015
  %v1089 = vpop.f32.mrf.mxu0
  %v1090 = vadd.f32 %v1001, %v1089
  %v1091 = vpop.f32.mrf.mxu0
  %1092 = vmatprep.mubr.f32.mxu0 0.0
  %1093 = vmatmul.mubr.f32.gmra.mxu0 %v1018
  %v1094 = vpop.f32.mrf.mxu0
  %v1095 = vadd.f32 %v1006, %v1094
  %v1096 = vpop.f32.mrf.mxu0
  %1097 = vmatprep.mubr.f32.mxu0 0.0
  %1098 = vmatmul.mubr.f32.gmra.mxu0 %v1021
  %v1099 = vpop.f32.mrf.mxu0
  %v1100 = vadd.f32 %v1011, %v1099
  %v1101 = vpop.f32.mrf.mxu0
  %1102 = vdwg.mxu0
  %v1104 = vsel %vm248, %v755, 0
  %v1107 = vsel %vm248, %v760, 0
  %v1110 = vsel %vm248, %v765, 0
  %1112 = vmatprep.subr.mxu0 0.0
  %1113 = vmatpush1.msra.mxu0 0.0
  %1114 = vmatprep.subr.mxu0 0.0
  %1115 = vmatpush1.msra.mxu0 0.0
  %1116 = vmatprep.subr.mxu0 0.0
  %1117 = vmatpush1.msra.mxu0 0.0
  %1118 = vmatprep.subr.mxu0 0.0
  %1119 = vmatpush1.msra.mxu0 0.0
  %1120 = vmatprep.subr.mxu0 0.0
  %1121 = vmatpush1.msra.mxu0 0.0
  %1122 = vmatprep.subr.mxu0 0.0
  %1123 = vmatpush1.msra.mxu0 0.0
  %1124 = vmatprep.subr.mxu0 0.0
  %1125 = vmatpush1.msra.mxu0 0.0
  %1126 = vmatprep.subr.mxu0 0.0
  %1127 = vmatpush1.msra.mxu0 0.0
  %1128 = vmatprep.subr.mxu0 0.0
  %1129 = vmatpush1.msra.mxu0 0.0
  %1130 = vmatprep.subr.mxu0 0.0
  %1131 = vmatpush1.msra.mxu0 0.0
  %1132 = vmatprep.subr.mxu0 0.0
  %1133 = vmatpush1.msra.mxu0 0.0
  %1134 = vmatprep.subr.mxu0 0.0
  %1135 = vmatpush1.msra.mxu0 0.0
  %1136 = vmatprep.subr.mxu0 0.0
  %1137 = vmatpush1.msra.mxu0 0.0
  %1138 = vmatprep.subr.mxu0 0.0
  %1139 = vmatpush1.msra.mxu0 0.0
  %1140 = vmatprep.subr.mxu0 0.0
  %1141 = vmatpush1.msra.mxu0 %v558
  %1142 = vmatprep.subr.mxu0 0.0
  %1143 = vmatpush1.msra.mxu0 %v557
  %1144 = vmatprep.subr.mxu0 0.0
  %1145 = vmatpush2.msra.mxu0 0.0
  %1146 = vmatprep.subr.mxu0 0.0
  %1147 = vmatpush2.msra.mxu0 0.0
  %1148 = vmatprep.subr.mxu0 0.0
  %1149 = vmatpush2.msra.mxu0 0.0
  %1150 = vmatprep.subr.mxu0 0.0
  %1151 = vmatpush2.msra.mxu0 0.0
  %1152 = vmatprep.subr.mxu0 0.0
  %1153 = vmatpush2.msra.mxu0 0.0
  %1154 = vmatprep.subr.mxu0 0.0
  %1155 = vmatpush2.msra.mxu0 0.0
  %1156 = vmatprep.subr.mxu0 0.0
  %1157 = vmatpush2.msra.mxu0 0.0
  %1158 = vmatprep.subr.mxu0 0.0
  %1159 = vmatpush2.msra.mxu0 0.0
  %1160 = vmatprep.subr.mxu0 0.0
  %1161 = vmatpush2.msra.mxu0 0.0
  %1162 = vmatprep.subr.mxu0 0.0
  %1163 = vmatpush2.msra.mxu0 0.0
  %1164 = vmatprep.subr.mxu0 0.0
  %1165 = vmatpush2.msra.mxu0 0.0
  %1166 = vmatprep.subr.mxu0 0.0
  %1167 = vmatpush2.msra.mxu0 0.0
  %1168 = vmatprep.subr.mxu0 0.0
  %1169 = vmatpush2.msra.mxu0 0.0
  %1170 = vmatprep.subr.mxu0 0.0
  %1171 = vmatpush2.msra.mxu0 0.0
  %1172 = vmatprep.subr.mxu0 0.0
  %1173 = vmatpush2.msra.mxu0 0.0
  %1174 = vmatprep.subr.mxu0 0.0
  %1175 = vmatpush2.msra.mxu0 0.0
  %1176 = vmatprep.mubr.f32.mxu0 0.0
  %1177 = vmatmul.mubr.f32.gmra.mxu0 %v1104
  %v1178 = vpop.f32.mrf.mxu0
  %v1179 = vadd.f32 0.0, %v1178
  %v1180 = vpop.f32.mrf.mxu0
  %1181 = vmatprep.mubr.f32.mxu0 0.0
  %1182 = vmatmul.mubr.f32.gmra.mxu0 %v1107
  %v1183 = vpop.f32.mrf.mxu0
  %v1184 = vadd.f32 0.0, %v1183
  %v1185 = vpop.f32.mrf.mxu0
  %1186 = vmatprep.mubr.f32.mxu0 0.0
  %1187 = vmatmul.mubr.f32.gmra.mxu0 %v1110
  %v1188 = vpop.f32.mrf.mxu0
  %v1189 = vadd.f32 0.0, %v1188
  %v1190 = vpop.f32.mrf.mxu0
  %1191 = vdwg.mxu0
  %v1192 = vadd.f32 %v1090, %v1179
  %v1193 = vadd.f32 %v1095, %v1184
  %v1194 = vadd.f32 %v1100, %v1189
  %v1195 = vld [vmem:[%s29] sm:$0x1]
  %v1197 = vlaneseq
  %v1198 = vshrl.u32 %v1197, 7
  %v1199 = vsub.s32 0, %v1198
  %v1200 = vrot.slane %v1195, %v1199
  %v1202 = vadd.f32 %v1192, %v1200
  %v1203 = vadd.f32 %v1193, %v1200
  %v1204 = vadd.f32 %v1194, %v1200
  %v1205 = vld [vmem:[%s37] sm:$0x1]
  %v1207 = vlaneseq
  %v1208 = vshrl.u32 %v1207, 7
  %v1209 = vsub.s32 0, %v1208
  %v1210 = vrot.slane %v1205, %v1209
  %v1213 = vsel %vm248, %v917, 0
  %v1216 = vsel %vm248, %v922, 0
  %1218 = vmatprep.subr.mxu0 0.0
  %1219 = vmatpush1.msra.mxu0 0.0
  %1220 = vmatprep.subr.mxu0 0.0
  %1221 = vmatpush1.msra.mxu0 0.0
  %1222 = vmatprep.subr.mxu0 0.0
  %1223 = vmatpush1.msra.mxu0 0.0
  %1224 = vmatprep.subr.mxu0 0.0
  %1225 = vmatpush1.msra.mxu0 0.0
  %1226 = vmatprep.subr.mxu0 0.0
  %1227 = vmatpush1.msra.mxu0 0.0
  %1228 = vmatprep.subr.mxu0 0.0
  %1229 = vmatpush1.msra.mxu0 0.0
  %1230 = vmatprep.subr.mxu0 0.0
  %1231 = vmatpush1.msra.mxu0 0.0
  %1232 = vmatprep.subr.mxu0 0.0
  %1233 = vmatpush1.msra.mxu0 0.0
  %1234 = vmatprep.subr.mxu0 0.0
  %1235 = vmatpush1.msra.mxu0 0.0
  %1236 = vmatprep.subr.mxu0 0.0
  %1237 = vmatpush1.msra.mxu0 0.0
  %1238 = vmatprep.subr.mxu0 0.0
  %1239 = vmatpush1.msra.mxu0 0.0
  %1240 = vmatprep.subr.mxu0 0.0
  %1241 = vmatpush1.msra.mxu0 0.0
  %1242 = vmatprep.subr.mxu0 0.0
  %1243 = vmatpush1.msra.mxu0 0.0
  %1244 = vmatprep.subr.mxu0 0.0
  %1245 = vmatpush1.msra.mxu0 0.0
  %1246 = vmatprep.subr.mxu0 0.0
  %1247 = vmatpush1.msra.mxu0 %v562
  %1248 = vmatprep.subr.mxu0 0.0
  %1249 = vmatpush1.msra.mxu0 %v561
  %1250 = vmatprep.subr.mxu0 0.0
  %1251 = vmatpush2.msra.mxu0 0.0
  %1252 = vmatprep.subr.mxu0 0.0
  %1253 = vmatpush2.msra.mxu0 0.0
  %1254 = vmatprep.subr.mxu0 0.0
  %1255 = vmatpush2.msra.mxu0 0.0
  %1256 = vmatprep.subr.mxu0 0.0
  %1257 = vmatpush2.msra.mxu0 0.0
  %1258 = vmatprep.subr.mxu0 0.0
  %1259 = vmatpush2.msra.mxu0 0.0
  %1260 = vmatprep.subr.mxu0 0.0
  %1261 = vmatpush2.msra.mxu0 0.0
  %1262 = vmatprep.subr.mxu0 0.0
  %1263 = vmatpush2.msra.mxu0 0.0
  %1264 = vmatprep.subr.mxu0 0.0
  %1265 = vmatpush2.msra.mxu0 0.0
  %1266 = vmatprep.subr.mxu0 0.0
  %1267 = vmatpush2.msra.mxu0 0.0
  %1268 = vmatprep.subr.mxu0 0.0
  %1269 = vmatpush2.msra.mxu0 0.0
  %1270 = vmatprep.subr.mxu0 0.0
  %1271 = vmatpush2.msra.mxu0 0.0
  %1272 = vmatprep.subr.mxu0 0.0
  %1273 = vmatpush2.msra.mxu0 0.0
  %1274 = vmatprep.subr.mxu0 0.0
  %1275 = vmatpush2.msra.mxu0 0.0
  %1276 = vmatprep.subr.mxu0 0.0
  %1277 = vmatpush2.msra.mxu0 0.0
  %1278 = vmatprep.subr.mxu0 0.0
  %1279 = vmatpush2.msra.mxu0 0.0
  %1280 = vmatprep.subr.mxu0 0.0
  %1281 = vmatpush2.msra.mxu0 0.0
  %1282 = vmatprep.mubr.f32.mxu0 0.0
  %1283 = vmatmul.mubr.f32.gmra.mxu0 %v1213
  %v1284 = vpop.f32.mrf.mxu0
  %v1285 = vadd.f32 %v1210, %v1284
  %v1286 = vpop.f32.mrf.mxu0
  %1287 = vmatprep.mubr.f32.mxu0 0.0
  %1288 = vmatmul.mubr.f32.gmra.mxu0 %v1216
  %v1289 = vpop.f32.mrf.mxu0
  %v1290 = vadd.f32 %v1210, %v1289
  %v1291 = vpop.f32.mrf.mxu0
  %1292 = vdwg.mxu0
  %1293 = vmatprep.subr.mxu0 0.0
  %1294 = vmatpush1.msra.mxu0 0.0
  %1295 = vmatprep.subr.mxu0 0.0
  %1296 = vmatpush1.msra.mxu0 0.0
  %1297 = vmatprep.subr.mxu0 0.0
  %1298 = vmatpush1.msra.mxu0 0.0
  %1299 = vmatprep.subr.mxu0 0.0
  %1300 = vmatpush1.msra.mxu0 0.0
  %1301 = vmatprep.subr.mxu0 0.0
  %1302 = vmatpush1.msra.mxu0 0.0
  %1303 = vmatprep.subr.mxu0 0.0
  %1304 = vmatpush1.msra.mxu0 0.0
  %1305 = vmatprep.subr.mxu0 0.0
  %1306 = vmatpush1.msra.mxu0 0.0
  %1307 = vmatprep.subr.mxu0 0.0
  %1308 = vmatpush1.msra.mxu0 0.0
  %1309 = vmatprep.subr.mxu0 0.0
  %1310 = vmatpush1.msra.mxu0 0.0
  %1311 = vmatprep.subr.mxu0 0.0
  %1312 = vmatpush1.msra.mxu0 0.0
  %1313 = vmatprep.subr.mxu0 0.0
  %1314 = vmatpush1.msra.mxu0 0.0
  %1315 = vmatprep.subr.mxu0 0.0
  %1316 = vmatpush1.msra.mxu0 0.0
  %1317 = vmatprep.subr.mxu0 0.0
  %1318 = vmatpush1.msra.mxu0 0.0
  %1319 = vmatprep.subr.mxu0 0.0
  %1320 = vmatpush1.msra.mxu0 0.0
  %1321 = vmatprep.subr.mxu0 0.0
  %1322 = vmatpush1.msra.mxu0 %v552
  %1323 = vmatprep.subr.mxu0 0.0
  %1324 = vmatpush1.msra.mxu0 %v551
  %1325 = vmatprep.subr.mxu0 0.0
  %1326 = vmatpush2.msra.mxu0 0.0
  %1327 = vmatprep.subr.mxu0 0.0
  %1328 = vmatpush2.msra.mxu0 0.0
  %1329 = vmatprep.subr.mxu0 0.0
  %1330 = vmatpush2.msra.mxu0 0.0
  %1331 = vmatprep.subr.mxu0 0.0
  %1332 = vmatpush2.msra.mxu0 0.0
  %1333 = vmatprep.subr.mxu0 0.0
  %1334 = vmatpush2.msra.mxu0 0.0
  %1335 = vmatprep.subr.mxu0 0.0
  %1336 = vmatpush2.msra.mxu0 0.0
  %1337 = vmatprep.subr.mxu0 0.0
  %1338 = vmatpush2.msra.mxu0 0.0
  %1339 = vmatprep.subr.mxu0 0.0
  %1340 = vmatpush2.msra.mxu0 0.0
  %1341 = vmatprep.subr.mxu0 0.0
  %1342 = vmatpush2.msra.mxu0 0.0
  %1343 = vmatprep.subr.mxu0 0.0
  %1344 = vmatpush2.msra.mxu0 0.0
  %1345 = vmatprep.subr.mxu0 0.0
  %1346 = vmatpush2.msra.mxu0 0.0
  %1347 = vmatprep.subr.mxu0 0.0
  %1348 = vmatpush2.msra.mxu0 0.0
  %1349 = vmatprep.subr.mxu0 0.0
  %1350 = vmatpush2.msra.mxu0 0.0
  %1351 = vmatprep.subr.mxu0 0.0
  %1352 = vmatpush2.msra.mxu0 0.0
  %1353 = vmatprep.subr.mxu0 0.0
  %1354 = vmatpush2.msra.mxu0 0.0
  %1355 = vmatprep.subr.mxu0 0.0
  %1356 = vmatpush2.msra.mxu0 0.0
  %1357 = vmatprep.mubr.f32.mxu0 0.0
  %1358 = vmatmul.mubr.f32.gmra.mxu0 %v1015
  %v1359 = vpop.f32.mrf.mxu0
  %v1360 = vadd.f32 0.0, %v1359
  %v1361 = vpop.f32.mrf.mxu0
  %1362 = vmatprep.mubr.f32.mxu0 0.0
  %1363 = vmatmul.mubr.f32.gmra.mxu0 %v1018
  %v1364 = vpop.f32.mrf.mxu0
  %v1365 = vadd.f32 0.0, %v1364
  %v1366 = vpop.f32.mrf.mxu0
  %1367 = vmatprep.mubr.f32.mxu0 0.0
  %1368 = vmatmul.mubr.f32.gmra.mxu0 %v1021
  %v1369 = vpop.f32.mrf.mxu0
  %v1370 = vadd.f32 0.0, %v1369
  %v1371 = vpop.f32.mrf.mxu0
  %1372 = vdwg.mxu0
  %v1373 = vadd.f32 %v1202, %v1360
  %v1374 = vadd.f32 %v1203, %v1365
  %v1375 = vadd.f32 %v1204, %v1370
  %1376 = vmatprep.subr.mxu0 0.0
  %1377 = vmatpush1.msra.mxu0 0.0
  %1378 = vmatprep.subr.mxu0 0.0
  %1379 = vmatpush1.msra.mxu0 0.0
  %1380 = vmatprep.subr.mxu0 0.0
  %1381 = vmatpush1.msra.mxu0 0.0
  %1382 = vmatprep.subr.mxu0 0.0
  %1383 = vmatpush1.msra.mxu0 0.0
  %1384 = vmatprep.subr.mxu0 0.0
  %1385 = vmatpush1.msra.mxu0 0.0
  %1386 = vmatprep.subr.mxu0 0.0
  %1387 = vmatpush1.msra.mxu0 0.0
  %1388 = vmatprep.subr.mxu0 0.0
  %1389 = vmatpush1.msra.mxu0 0.0
  %1390 = vmatprep.subr.mxu0 0.0
  %1391 = vmatpush1.msra.mxu0 0.0
  %1392 = vmatprep.subr.mxu0 0.0
  %1393 = vmatpush1.msra.mxu0 0.0
  %1394 = vmatprep.subr.mxu0 0.0
  %1395 = vmatpush1.msra.mxu0 0.0
  %1396 = vmatprep.subr.mxu0 0.0
  %1397 = vmatpush1.msra.mxu0 0.0
  %1398 = vmatprep.subr.mxu0 0.0
  %1399 = vmatpush1.msra.mxu0 0.0
  %1400 = vmatprep.subr.mxu0 0.0
  %1401 = vmatpush1.msra.mxu0 0.0
  %1402 = vmatprep.subr.mxu0 0.0
  %1403 = vmatpush1.msra.mxu0 0.0
  %1404 = vmatprep.subr.mxu0 0.0
  %1405 = vmatpush1.msra.mxu0 %v556
  %1406 = vmatprep.subr.mxu0 0.0
  %1407 = vmatpush1.msra.mxu0 %v555
  %1408 = vmatprep.subr.mxu0 0.0
  %1409 = vmatpush2.msra.mxu0 0.0
  %1410 = vmatprep.subr.mxu0 0.0
  %1411 = vmatpush2.msra.mxu0 0.0
  %1412 = vmatprep.subr.mxu0 0.0
  %1413 = vmatpush2.msra.mxu0 0.0
  %1414 = vmatprep.subr.mxu0 0.0
  %1415 = vmatpush2.msra.mxu0 0.0
  %1416 = vmatprep.subr.mxu0 0.0
  %1417 = vmatpush2.msra.mxu0 0.0
  %1418 = vmatprep.subr.mxu0 0.0
  %1419 = vmatpush2.msra.mxu0 0.0
  %1420 = vmatprep.subr.mxu0 0.0
  %1421 = vmatpush2.msra.mxu0 0.0
  %1422 = vmatprep.subr.mxu0 0.0
  %1423 = vmatpush2.msra.mxu0 0.0
  %1424 = vmatprep.subr.mxu0 0.0
  %1425 = vmatpush2.msra.mxu0 0.0
  %1426 = vmatprep.subr.mxu0 0.0
  %1427 = vmatpush2.msra.mxu0 0.0
  %1428 = vmatprep.subr.mxu0 0.0
  %1429 = vmatpush2.msra.mxu0 0.0
  %1430 = vmatprep.subr.mxu0 0.0
  %1431 = vmatpush2.msra.mxu0 0.0
  %1432 = vmatprep.subr.mxu0 0.0
  %1433 = vmatpush2.msra.mxu0 0.0
  %1434 = vmatprep.subr.mxu0 0.0
  %1435 = vmatpush2.msra.mxu0 0.0
  %1436 = vmatprep.subr.mxu0 0.0
  %1437 = vmatpush2.msra.mxu0 0.0
  %1438 = vmatprep.subr.mxu0 0.0
  %1439 = vmatpush2.msra.mxu0 0.0
  %1440 = vmatprep.mubr.f32.mxu0 0.0
  %1441 = vmatmul.mubr.f32.gmra.mxu0 %v926
  %v1442 = vpop.f32.mrf.mxu0
  %v1443 = vadd.f32 0.0, %v1442
  %v1444 = vpop.f32.mrf.mxu0
  %1445 = vmatprep.mubr.f32.mxu0 0.0
  %1446 = vmatmul.mubr.f32.gmra.mxu0 %v929
  %v1447 = vpop.f32.mrf.mxu0
  %v1448 = vadd.f32 0.0, %v1447
  %v1449 = vpop.f32.mrf.mxu0
  %1450 = vmatprep.mubr.f32.mxu0 0.0
  %1451 = vmatmul.mubr.f32.gmra.mxu0 %v932
  %v1452 = vpop.f32.mrf.mxu0
  %v1453 = vadd.f32 0.0, %v1452
  %v1454 = vpop.f32.mrf.mxu0
  %1455 = vdwg.mxu0
  %v1456 = vadd.f32 %v1373, %v1443
  %v1457 = vadd.f32 %v1374, %v1448
  %v1458 = vadd.f32 %v1375, %v1453
  %1459 = vmatprep.subr.mxu0 0.0
  %1460 = vmatpush1.msra.mxu0 0.0
  %1461 = vmatprep.subr.mxu0 0.0
  %1462 = vmatpush1.msra.mxu0 0.0
  %1463 = vmatprep.subr.mxu0 0.0
  %1464 = vmatpush1.msra.mxu0 0.0
  %1465 = vmatprep.subr.mxu0 0.0
  %1466 = vmatpush1.msra.mxu0 0.0
  %1467 = vmatprep.subr.mxu0 0.0
  %1468 = vmatpush1.msra.mxu0 0.0
  %1469 = vmatprep.subr.mxu0 0.0
  %1470 = vmatpush1.msra.mxu0 0.0
  %1471 = vmatprep.subr.mxu0 0.0
  %1472 = vmatpush1.msra.mxu0 0.0
  %1473 = vmatprep.subr.mxu0 0.0
  %1474 = vmatpush1.msra.mxu0 0.0
  %1475 = vmatprep.subr.mxu0 0.0
  %1476 = vmatpush1.msra.mxu0 0.0
  %1477 = vmatprep.subr.mxu0 0.0
  %1478 = vmatpush1.msra.mxu0 0.0
  %1479 = vmatprep.subr.mxu0 0.0
  %1480 = vmatpush1.msra.mxu0 0.0
  %1481 = vmatprep.subr.mxu0 0.0
  %1482 = vmatpush1.msra.mxu0 0.0
  %1483 = vmatprep.subr.mxu0 0.0
  %1484 = vmatpush1.msra.mxu0 0.0
  %1485 = vmatprep.subr.mxu0 0.0
  %1486 = vmatpush1.msra.mxu0 0.0
  %1487 = vmatprep.subr.mxu0 0.0
  %1488 = vmatpush1.msra.mxu0 %v560
  %1489 = vmatprep.subr.mxu0 0.0
  %1490 = vmatpush1.msra.mxu0 %v559
  %1491 = vmatprep.subr.mxu0 0.0
  %1492 = vmatpush2.msra.mxu0 0.0
  %1493 = vmatprep.subr.mxu0 0.0
  %1494 = vmatpush2.msra.mxu0 0.0
  %1495 = vmatprep.subr.mxu0 0.0
  %1496 = vmatpush2.msra.mxu0 0.0
  %1497 = vmatprep.subr.mxu0 0.0
  %1498 = vmatpush2.msra.mxu0 0.0
  %1499 = vmatprep.subr.mxu0 0.0
  %1500 = vmatpush2.msra.mxu0 0.0
  %1501 = vmatprep.subr.mxu0 0.0
  %1502 = vmatpush2.msra.mxu0 0.0
  %1503 = vmatprep.subr.mxu0 0.0
  %1504 = vmatpush2.msra.mxu0 0.0
  %1505 = vmatprep.subr.mxu0 0.0
  %1506 = vmatpush2.msra.mxu0 0.0
  %1507 = vmatprep.subr.mxu0 0.0
  %1508 = vmatpush2.msra.mxu0 0.0
  %1509 = vmatprep.subr.mxu0 0.0
  %1510 = vmatpush2.msra.mxu0 0.0
  %1511 = vmatprep.subr.mxu0 0.0
  %1512 = vmatpush2.msra.mxu0 0.0
  %1513 = vmatprep.subr.mxu0 0.0
  %1514 = vmatpush2.msra.mxu0 0.0
  %1515 = vmatprep.subr.mxu0 0.0
  %1516 = vmatpush2.msra.mxu0 0.0
  %1517 = vmatprep.subr.mxu0 0.0
  %1518 = vmatpush2.msra.mxu0 0.0
  %1519 = vmatprep.subr.mxu0 0.0
  %1520 = vmatpush2.msra.mxu0 0.0
  %1521 = vmatprep.subr.mxu0 0.0
  %1522 = vmatpush2.msra.mxu0 0.0
  %1523 = vmatprep.mubr.f32.mxu0 0.0
  %1524 = vmatmul.mubr.f32.gmra.mxu0 %v1104
  %v1525 = vpop.f32.mrf.mxu0
  %v1526 = vadd.f32 0.0, %v1525
  %v1527 = vpop.f32.mrf.mxu0
  %1528 = vmatprep.mubr.f32.mxu0 0.0
  %1529 = vmatmul.mubr.f32.gmra.mxu0 %v1107
  %v1530 = vpop.f32.mrf.mxu0
  %v1531 = vadd.f32 0.0, %v1530
  %v1532 = vpop.f32.mrf.mxu0
  %1533 = vmatprep.mubr.f32.mxu0 0.0
  %1534 = vmatmul.mubr.f32.gmra.mxu0 %v1110
  %v1535 = vpop.f32.mrf.mxu0
  %v1536 = vadd.f32 0.0, %v1535
  %v1537 = vpop.f32.mrf.mxu0
  %1538 = vdwg.mxu0
  %v1539 = vadd.f32 %v1456, %v1526
  %v1540 = vadd.f32 %v1457, %v1531
  %v1541 = vadd.f32 %v1458, %v1536
  %v1542 = vmax.f32 %v1539, 0.0
  %v1543 = vmax.f32 %v1540, 0.0
  %v1544 = vmax.f32 %v1541, 0.0
  %v1546 = vsel %vm248, %v1542, 0
  %v1549 = vsel %vm248, %v1543, 0
  %v1552 = vsel %vm248, %v1544, 0
  %1554 = vmatprep.subr.mxu0 0.0
  %1555 = vmatpush1.msra.mxu0 0.0
  %1556 = vmatprep.subr.mxu0 0.0
  %1557 = vmatpush1.msra.mxu0 0.0
  %1558 = vmatprep.subr.mxu0 0.0
  %1559 = vmatpush1.msra.mxu0 0.0
  %1560 = vmatprep.subr.mxu0 0.0
  %1561 = vmatpush1.msra.mxu0 0.0
  %1562 = vmatprep.subr.mxu0 0.0
  %1563 = vmatpush1.msra.mxu0 0.0
  %1564 = vmatprep.subr.mxu0 0.0
  %1565 = vmatpush1.msra.mxu0 0.0
  %1566 = vmatprep.subr.mxu0 0.0
  %1567 = vmatpush1.msra.mxu0 0.0
  %1568 = vmatprep.subr.mxu0 0.0
  %1569 = vmatpush1.msra.mxu0 0.0
  %1570 = vmatprep.subr.mxu0 0.0
  %1571 = vmatpush1.msra.mxu0 0.0
  %1572 = vmatprep.subr.mxu0 0.0
  %1573 = vmatpush1.msra.mxu0 0.0
  %1574 = vmatprep.subr.mxu0 0.0
  %1575 = vmatpush1.msra.mxu0 0.0
  %1576 = vmatprep.subr.mxu0 0.0
  %1577 = vmatpush1.msra.mxu0 0.0
  %1578 = vmatprep.subr.mxu0 0.0
  %1579 = vmatpush1.msra.mxu0 0.0
  %1580 = vmatprep.subr.mxu0 0.0
  %1581 = vmatpush1.msra.mxu0 0.0
  %1582 = vmatprep.subr.mxu0 0.0
  %1583 = vmatpush1.msra.mxu0 %v568
  %1584 = vmatprep.subr.mxu0 0.0
  %1585 = vmatpush1.msra.mxu0 %v567
  %1586 = vmatprep.subr.mxu0 0.0
  %1587 = vmatpush2.msra.mxu0 0.0
  %1588 = vmatprep.subr.mxu0 0.0
  %1589 = vmatpush2.msra.mxu0 0.0
  %1590 = vmatprep.subr.mxu0 0.0
  %1591 = vmatpush2.msra.mxu0 0.0
  %1592 = vmatprep.subr.mxu0 0.0
  %1593 = vmatpush2.msra.mxu0 0.0
  %1594 = vmatprep.subr.mxu0 0.0
  %1595 = vmatpush2.msra.mxu0 0.0
  %1596 = vmatprep.subr.mxu0 0.0
  %1597 = vmatpush2.msra.mxu0 0.0
  %1598 = vmatprep.subr.mxu0 0.0
  %1599 = vmatpush2.msra.mxu0 0.0
  %1600 = vmatprep.subr.mxu0 0.0
  %1601 = vmatpush2.msra.mxu0 0.0
  %1602 = vmatprep.subr.mxu0 0.0
  %1603 = vmatpush2.msra.mxu0 0.0
  %1604 = vmatprep.subr.mxu0 0.0
  %1605 = vmatpush2.msra.mxu0 0.0
  %1606 = vmatprep.subr.mxu0 0.0
  %1607 = vmatpush2.msra.mxu0 0.0
  %1608 = vmatprep.subr.mxu0 0.0
  %1609 = vmatpush2.msra.mxu0 0.0
  %1610 = vmatprep.subr.mxu0 0.0
  %1611 = vmatpush2.msra.mxu0 0.0
  %1612 = vmatprep.subr.mxu0 0.0
  %1613 = vmatpush2.msra.mxu0 0.0
  %1614 = vmatprep.subr.mxu0 0.0
  %1615 = vmatpush2.msra.mxu0 0.0
  %1616 = vmatprep.subr.mxu0 0.0
  %1617 = vmatpush2.msra.mxu0 0.0
  %1618 = vmatprep.mubr.f32.mxu0 0.0
  %1619 = vmatmul.mubr.f32.gmra.mxu0 %v1546
  %v1620 = vpop.f32.mrf.mxu0
  %v1621 = vadd.f32 %v576, %v1620
  %v1622 = vpop.f32.mrf.mxu0
  %1623 = vmatprep.mubr.f32.mxu0 0.0
  %1624 = vmatmul.mubr.f32.gmra.mxu0 %v1549
  %v1625 = vpop.f32.mrf.mxu0
  %v1626 = vadd.f32 %v576, %v1625
  %v1627 = vpop.f32.mrf.mxu0
  %1628 = vmatprep.mubr.f32.mxu0 0.0
  %1629 = vmatmul.mubr.f32.gmra.mxu0 %v1552
  %v1630 = vpop.f32.mrf.mxu0
  %v1631 = vadd.f32 %v576, %v1630
  %v1632 = vpop.f32.mrf.mxu0
  %1633 = vdwg.mxu0
  %v1634 = vmax.f32 %v1621, 0.0
  %v1635 = vmax.f32 %v1626, 0.0
  %v1636 = vmax.f32 %v1631, 0.0
  %1637 = vmatprep.subr.mxu0 0.0
  %1638 = vmatpush1.msra.mxu0 0.0
  %1639 = vmatprep.subr.mxu0 0.0
  %1640 = vmatpush1.msra.mxu0 0.0
  %1641 = vmatprep.subr.mxu0 0.0
  %1642 = vmatpush1.msra.mxu0 0.0
  %1643 = vmatprep.subr.mxu0 0.0
  %1644 = vmatpush1.msra.mxu0 0.0
  %1645 = vmatprep.subr.mxu0 0.0
  %1646 = vmatpush1.msra.mxu0 0.0
  %1647 = vmatprep.subr.mxu0 0.0
  %1648 = vmatpush1.msra.mxu0 0.0
  %1649 = vmatprep.subr.mxu0 0.0
  %1650 = vmatpush1.msra.mxu0 0.0
  %1651 = vmatprep.subr.mxu0 0.0
  %1652 = vmatpush1.msra.mxu0 0.0
  %1653 = vmatprep.subr.mxu0 0.0
  %1654 = vmatpush1.msra.mxu0 0.0
  %1655 = vmatprep.subr.mxu0 0.0
  %1656 = vmatpush1.msra.mxu0 0.0
  %1657 = vmatprep.subr.mxu0 0.0
  %1658 = vmatpush1.msra.mxu0 0.0
  %1659 = vmatprep.subr.mxu0 0.0
  %1660 = vmatpush1.msra.mxu0 0.0
  %1661 = vmatprep.subr.mxu0 0.0
  %1662 = vmatpush1.msra.mxu0 0.0
  %1663 = vmatprep.subr.mxu0 0.0
  %1664 = vmatpush1.msra.mxu0 %v1636
  %1665 = vmatprep.subr.mxu0 0.0
  %1666 = vmatpush1.msra.mxu0 %v1635
  %1667 = vmatprep.subr.mxu0 0.0
  %1668 = vmatpush1.msra.mxu0 %v1634
  %1669 = vmatprep.subr.mxu0 0.0
  %1670 = vmatpush2.msra.mxu0 0.0
  %1671 = vmatprep.subr.mxu0 0.0
  %1672 = vmatpush2.msra.mxu0 0.0
  %1673 = vmatprep.subr.mxu0 0.0
  %1674 = vmatpush2.msra.mxu0 0.0
  %1675 = vmatprep.subr.mxu0 0.0
  %1676 = vmatpush2.msra.mxu0 0.0
  %1677 = vmatprep.subr.mxu0 0.0
  %1678 = vmatpush2.msra.mxu0 0.0
  %1679 = vmatprep.subr.mxu0 0.0
  %1680 = vmatpush2.msra.mxu0 0.0
  %1681 = vmatprep.subr.mxu0 0.0
  %1682 = vmatpush2.msra.mxu0 0.0
  %1683 = vmatprep.subr.mxu0 0.0
  %1684 = vmatpush2.msra.mxu0 0.0
  %1685 = vmatprep.subr.mxu0 0.0
  %1686 = vmatpush2.msra.mxu0 0.0
  %1687 = vmatprep.subr.mxu0 0.0
  %1688 = vmatpush2.msra.mxu0 0.0
  %1689 = vmatprep.subr.mxu0 0.0
  %1690 = vmatpush2.msra.mxu0 0.0
  %1691 = vmatprep.subr.mxu0 0.0
  %1692 = vmatpush2.msra.mxu0 0.0
  %1693 = vmatprep.subr.mxu0 0.0
  %1694 = vmatpush2.msra.mxu0 0.0
  %1695 = vmatprep.subr.mxu0 0.0
  %1696 = vmatpush2.msra.mxu0 0.0
  %1697 = vmatprep.subr.mxu0 0.0
  %1698 = vmatpush2.msra.mxu0 0.0
  %1699 = vmatprep.subr.mxu0 0.0
  %1700 = vmatpush2.msra.mxu0 0.0
  %1701 = vmatprep.mubr.f32.mxu0 0.0
  %1702 = vmatmul.mubr.f32.gmra.mxu0 %v770
  %v1703 = vpop.f32.mrf.mxu0
  %v1704 = vadd.f32 0.0, %v1703
  %v1705 = vpop.f32.mrf.mxu0
  %1706 = vmatprep.mubr.f32.mxu0 0.0
  %1707 = vmatmul.mubr.f32.gmra.mxu0 %v773
  %v1708 = vpop.f32.mrf.mxu0
  %v1709 = vadd.f32 0.0, %v1708
  %v1710 = vpop.f32.mrf.mxu0
  %1711 = vdwg.mxu0
  %v1713 = vsel %vm585, %v842, 0
  %v1716 = vsel %vm585, %v847, 0
  %1718 = vmatprep.subr.mxu0 0.0
  %1719 = vmatpush1.msra.mxu0 0.0
  %1720 = vmatprep.subr.mxu0 0.0
  %1721 = vmatpush1.msra.mxu0 0.0
  %1722 = vmatprep.subr.mxu0 0.0
  %1723 = vmatpush1.msra.mxu0 0.0
  %1724 = vmatprep.subr.mxu0 0.0
  %1725 = vmatpush1.msra.mxu0 0.0
  %1726 = vmatprep.subr.mxu0 0.0
  %1727 = vmatpush1.msra.mxu0 0.0
  %1728 = vmatprep.subr.mxu0 0.0
  %1729 = vmatpush1.msra.mxu0 0.0
  %1730 = vmatprep.subr.mxu0 0.0
  %1731 = vmatpush1.msra.mxu0 0.0
  %1732 = vmatprep.subr.mxu0 0.0
  %1733 = vmatpush1.msra.mxu0 0.0
  %1734 = vmatprep.subr.mxu0 0.0
  %1735 = vmatpush1.msra.mxu0 0.0
  %1736 = vmatprep.subr.mxu0 0.0
  %1737 = vmatpush1.msra.mxu0 0.0
  %1738 = vmatprep.subr.mxu0 0.0
  %1739 = vmatpush1.msra.mxu0 0.0
  %1740 = vmatprep.subr.mxu0 0.0
  %1741 = vmatpush1.msra.mxu0 0.0
  %1742 = vmatprep.subr.mxu0 0.0
  %1743 = vmatpush1.msra.mxu0 0.0
  %1744 = vmatprep.subr.mxu0 0.0
  %1745 = vmatpush1.msra.mxu0 0.0
  %1746 = vmatprep.subr.mxu0 0.0
  %1747 = vmatpush1.msra.mxu0 %v597
  %1748 = vmatprep.subr.mxu0 0.0
  %1749 = vmatpush1.msra.mxu0 %v330
  %1750 = vmatprep.subr.mxu0 0.0
  %1751 = vmatpush2.msra.mxu0 0.0
  %1752 = vmatprep.subr.mxu0 0.0
  %1753 = vmatpush2.msra.mxu0 0.0
  %1754 = vmatprep.subr.mxu0 0.0
  %1755 = vmatpush2.msra.mxu0 0.0
  %1756 = vmatprep.subr.mxu0 0.0
  %1757 = vmatpush2.msra.mxu0 0.0
  %1758 = vmatprep.subr.mxu0 0.0
  %1759 = vmatpush2.msra.mxu0 0.0
  %1760 = vmatprep.subr.mxu0 0.0
  %1761 = vmatpush2.msra.mxu0 0.0
  %1762 = vmatprep.subr.mxu0 0.0
  %1763 = vmatpush2.msra.mxu0 0.0
  %1764 = vmatprep.subr.mxu0 0.0
  %1765 = vmatpush2.msra.mxu0 0.0
  %1766 = vmatprep.subr.mxu0 0.0
  %1767 = vmatpush2.msra.mxu0 0.0
  %1768 = vmatprep.subr.mxu0 0.0
  %1769 = vmatpush2.msra.mxu0 0.0
  %1770 = vmatprep.subr.mxu0 0.0
  %1771 = vmatpush2.msra.mxu0 0.0
  %1772 = vmatprep.subr.mxu0 0.0
  %1773 = vmatpush2.msra.mxu0 0.0
  %1774 = vmatprep.subr.mxu0 0.0
  %1775 = vmatpush2.msra.mxu0 0.0
  %1776 = vmatprep.subr.mxu0 0.0
  %1777 = vmatpush2.msra.mxu0 0.0
  %1778 = vmatprep.subr.mxu0 0.0
  %1779 = vmatpush2.msra.mxu0 0.0
  %1780 = vmatprep.subr.mxu0 0.0
  %1781 = vmatpush2.msra.mxu0 0.0
  %1782 = vmatprep.mubr.f32.mxu0 0.0
  %1783 = vmatmul.mubr.f32.gmra.mxu0 %v1713
  %v1784 = vpop.f32.mrf.mxu0
  %v1785 = vadd.f32 0.0, %v1784
  %v1786 = vpop.f32.mrf.mxu0
  %1787 = vmatprep.mubr.f32.mxu0 0.0
  %1788 = vmatmul.mubr.f32.gmra.mxu0 %v1716
  %v1789 = vpop.f32.mrf.mxu0
  %v1790 = vadd.f32 0.0, %v1789
  %v1791 = vpop.f32.mrf.mxu0
  %1792 = vdwg.mxu0
  %v1794 = vsel %vm248, %v1785, 0
  %v1797 = vsel %vm248, %v1790, 0
  %1799 = vmatprep.subr.mxu0 0.0
  %1800 = vmatpush1.msra.mxu0 0.0
  %1801 = vmatprep.subr.mxu0 0.0
  %1802 = vmatpush1.msra.mxu0 0.0
  %1803 = vmatprep.subr.mxu0 0.0
  %1804 = vmatpush1.msra.mxu0 0.0
  %1805 = vmatprep.subr.mxu0 0.0
  %1806 = vmatpush1.msra.mxu0 0.0
  %1807 = vmatprep.subr.mxu0 0.0
  %1808 = vmatpush1.msra.mxu0 0.0
  %1809 = vmatprep.subr.mxu0 0.0
  %1810 = vmatpush1.msra.mxu0 0.0
  %1811 = vmatprep.subr.mxu0 0.0
  %1812 = vmatpush1.msra.mxu0 0.0
  %1813 = vmatprep.subr.mxu0 0.0
  %1814 = vmatpush1.msra.mxu0 0.0
  %1815 = vmatprep.subr.mxu0 0.0
  %1816 = vmatpush1.msra.mxu0 0.0
  %1817 = vmatprep.subr.mxu0 0.0
  %1818 = vmatpush1.msra.mxu0 0.0
  %1819 = vmatprep.subr.mxu0 0.0
  %1820 = vmatpush1.msra.mxu0 0.0
  %1821 = vmatprep.subr.mxu0 0.0
  %1822 = vmatpush1.msra.mxu0 0.0
  %1823 = vmatprep.subr.mxu0 0.0
  %1824 = vmatpush1.msra.mxu0 0.0
  %1825 = vmatprep.subr.mxu0 0.0
  %1826 = vmatpush1.msra.mxu0 0.0
  %1827 = vmatprep.subr.mxu0 0.0
  %1828 = vmatpush1.msra.mxu0 %v564
  %1829 = vmatprep.subr.mxu0 0.0
  %1830 = vmatpush1.msra.mxu0 %v563
  %1831 = vmatprep.subr.mxu0 0.0
  %1832 = vmatpush2.msra.mxu0 0.0
  %1833 = vmatprep.subr.mxu0 0.0
  %1834 = vmatpush2.msra.mxu0 0.0
  %1835 = vmatprep.subr.mxu0 0.0
  %1836 = vmatpush2.msra.mxu0 0.0
  %1837 = vmatprep.subr.mxu0 0.0
  %1838 = vmatpush2.msra.mxu0 0.0
  %1839 = vmatprep.subr.mxu0 0.0
  %1840 = vmatpush2.msra.mxu0 0.0
  %1841 = vmatprep.subr.mxu0 0.0
  %1842 = vmatpush2.msra.mxu0 0.0
  %1843 = vmatprep.subr.mxu0 0.0
  %1844 = vmatpush2.msra.mxu0 0.0
  %1845 = vmatprep.subr.mxu0 0.0
  %1846 = vmatpush2.msra.mxu0 0.0
  %1847 = vmatprep.subr.mxu0 0.0
  %1848 = vmatpush2.msra.mxu0 0.0
  %1849 = vmatprep.subr.mxu0 0.0
  %1850 = vmatpush2.msra.mxu0 0.0
  %1851 = vmatprep.subr.mxu0 0.0
  %1852 = vmatpush2.msra.mxu0 0.0
  %1853 = vmatprep.subr.mxu0 0.0
  %1854 = vmatpush2.msra.mxu0 0.0
  %1855 = vmatprep.subr.mxu0 0.0
  %1856 = vmatpush2.msra.mxu0 0.0
  %1857 = vmatprep.subr.mxu0 0.0
  %1858 = vmatpush2.msra.mxu0 0.0
  %1859 = vmatprep.subr.mxu0 0.0
  %1860 = vmatpush2.msra.mxu0 0.0
  %1861 = vmatprep.subr.mxu0 0.0
  %1862 = vmatpush2.msra.mxu0 0.0
  %1863 = vmatprep.mubr.f32.mxu0 0.0
  %1864 = vmatmul.mubr.f32.gmra.mxu0 %v1794
  %v1865 = vpop.f32.mrf.mxu0
  %v1866 = vadd.f32 0.0, %v1865
  %v1867 = vpop.f32.mrf.mxu0
  %1868 = vmatprep.mubr.f32.mxu0 0.0
  %1869 = vmatmul.mubr.f32.gmra.mxu0 %v1797
  %v1870 = vpop.f32.mrf.mxu0
  %v1871 = vadd.f32 0.0, %v1870
  %v1872 = vpop.f32.mrf.mxu0
  %1873 = vdwg.mxu0
  %v1874 = vadd.f32 %v1285, %v1866
  %v1875 = vadd.f32 %v1290, %v1871
  %v1877 = vsel %vm248, %v1704, 0
  %v1880 = vsel %vm248, %v1709, 0
  %1882 = vmatprep.subr.mxu0 0.0
  %1883 = vmatpush1.msra.mxu0 0.0
  %1884 = vmatprep.subr.mxu0 0.0
  %1885 = vmatpush1.msra.mxu0 0.0
  %1886 = vmatprep.subr.mxu0 0.0
  %1887 = vmatpush1.msra.mxu0 0.0
  %1888 = vmatprep.subr.mxu0 0.0
  %1889 = vmatpush1.msra.mxu0 0.0
  %1890 = vmatprep.subr.mxu0 0.0
  %1891 = vmatpush1.msra.mxu0 0.0
  %1892 = vmatprep.subr.mxu0 0.0
  %1893 = vmatpush1.msra.mxu0 0.0
  %1894 = vmatprep.subr.mxu0 0.0
  %1895 = vmatpush1.msra.mxu0 0.0
  %1896 = vmatprep.subr.mxu0 0.0
  %1897 = vmatpush1.msra.mxu0 0.0
  %1898 = vmatprep.subr.mxu0 0.0
  %1899 = vmatpush1.msra.mxu0 0.0
  %1900 = vmatprep.subr.mxu0 0.0
  %1901 = vmatpush1.msra.mxu0 0.0
  %1902 = vmatprep.subr.mxu0 0.0
  %1903 = vmatpush1.msra.mxu0 0.0
  %1904 = vmatprep.subr.mxu0 0.0
  %1905 = vmatpush1.msra.mxu0 0.0
  %1906 = vmatprep.subr.mxu0 0.0
  %1907 = vmatpush1.msra.mxu0 0.0
  %1908 = vmatprep.subr.mxu0 0.0
  %1909 = vmatpush1.msra.mxu0 0.0
  %1910 = vmatprep.subr.mxu0 0.0
  %1911 = vmatpush1.msra.mxu0 %v566
  %1912 = vmatprep.subr.mxu0 0.0
  %1913 = vmatpush1.msra.mxu0 %v565
  %1914 = vmatprep.subr.mxu0 0.0
  %1915 = vmatpush2.msra.mxu0 0.0
  %1916 = vmatprep.subr.mxu0 0.0
  %1917 = vmatpush2.msra.mxu0 0.0
  %1918 = vmatprep.subr.mxu0 0.0
  %1919 = vmatpush2.msra.mxu0 0.0
  %1920 = vmatprep.subr.mxu0 0.0
  %1921 = vmatpush2.msra.mxu0 0.0
  %1922 = vmatprep.subr.mxu0 0.0
  %1923 = vmatpush2.msra.mxu0 0.0
  %1924 = vmatprep.subr.mxu0 0.0
  %1925 = vmatpush2.msra.mxu0 0.0
  %1926 = vmatprep.subr.mxu0 0.0
  %1927 = vmatpush2.msra.mxu0 0.0
  %1928 = vmatprep.subr.mxu0 0.0
  %1929 = vmatpush2.msra.mxu0 0.0
  %1930 = vmatprep.subr.mxu0 0.0
  %1931 = vmatpush2.msra.mxu0 0.0
  %1932 = vmatprep.subr.mxu0 0.0
  %1933 = vmatpush2.msra.mxu0 0.0
  %1934 = vmatprep.subr.mxu0 0.0
  %1935 = vmatpush2.msra.mxu0 0.0
  %1936 = vmatprep.subr.mxu0 0.0
  %1937 = vmatpush2.msra.mxu0 0.0
  %1938 = vmatprep.subr.mxu0 0.0
  %1939 = vmatpush2.msra.mxu0 0.0
  %1940 = vmatprep.subr.mxu0 0.0
  %1941 = vmatpush2.msra.mxu0 0.0
  %1942 = vmatprep.subr.mxu0 0.0
  %1943 = vmatpush2.msra.mxu0 0.0
  %1944 = vmatprep.subr.mxu0 0.0
  %1945 = vmatpush2.msra.mxu0 0.0
  %1946 = vmatprep.mubr.f32.mxu0 0.0
  %1947 = vmatmul.mubr.f32.gmra.mxu0 %v1877
  %v1948 = vpop.f32.mrf.mxu0
  %v1949 = vadd.f32 0.0, %v1948
  %v1950 = vpop.f32.mrf.mxu0
  %1951 = vmatprep.mubr.f32.mxu0 0.0
  %1952 = vmatmul.mubr.f32.gmra.mxu0 %v1880
  %v1953 = vpop.f32.mrf.mxu0
  %v1954 = vadd.f32 0.0, %v1953
  %v1955 = vpop.f32.mrf.mxu0
  %1956 = vdwg.mxu0
  %v1957 = vadd.f32 %v1874, %v1949
  %v1958 = vadd.f32 %v1875, %v1954
  %v1959 = vmax.f32 %v1957, 0.0
  %v1960 = vmax.f32 %v1958, 0.0
  %v1962 = vsel %vm248, %v1959, 0
  %v1965 = vsel %vm248, %v1960, 0
  %1967 = vmatprep.subr.mxu0 0.0
  %1968 = vmatpush1.msra.mxu0 0.0
  %1969 = vmatprep.subr.mxu0 0.0
  %1970 = vmatpush1.msra.mxu0 0.0
  %1971 = vmatprep.subr.mxu0 0.0
  %1972 = vmatpush1.msra.mxu0 0.0
  %1973 = vmatprep.subr.mxu0 0.0
  %1974 = vmatpush1.msra.mxu0 0.0
  %1975 = vmatprep.subr.mxu0 0.0
  %1976 = vmatpush1.msra.mxu0 0.0
  %1977 = vmatprep.subr.mxu0 0.0
  %1978 = vmatpush1.msra.mxu0 0.0
  %1979 = vmatprep.subr.mxu0 0.0
  %1980 = vmatpush1.msra.mxu0 0.0
  %1981 = vmatprep.subr.mxu0 0.0
  %1982 = vmatpush1.msra.mxu0 0.0
  %1983 = vmatprep.subr.mxu0 0.0
  %1984 = vmatpush1.msra.mxu0 0.0
  %1985 = vmatprep.subr.mxu0 0.0
  %1986 = vmatpush1.msra.mxu0 0.0
  %1987 = vmatprep.subr.mxu0 0.0
  %1988 = vmatpush1.msra.mxu0 0.0
  %1989 = vmatprep.subr.mxu0 0.0
  %1990 = vmatpush1.msra.mxu0 0.0
  %1991 = vmatprep.subr.mxu0 0.0
  %1992 = vmatpush1.msra.mxu0 0.0
  %1993 = vmatprep.subr.mxu0 0.0
  %1994 = vmatpush1.msra.mxu0 0.0
  %1995 = vmatprep.subr.mxu0 0.0
  %1996 = vmatpush1.msra.mxu0 %v570
  %1997 = vmatprep.subr.mxu0 0.0
  %1998 = vmatpush1.msra.mxu0 %v569
  %1999 = vmatprep.subr.mxu0 0.0
  %2000 = vmatpush2.msra.mxu0 0.0
  %2001 = vmatprep.subr.mxu0 0.0
  %2002 = vmatpush2.msra.mxu0 0.0
  %2003 = vmatprep.subr.mxu0 0.0
  %2004 = vmatpush2.msra.mxu0 0.0
  %2005 = vmatprep.subr.mxu0 0.0
  %2006 = vmatpush2.msra.mxu0 0.0
  %2007 = vmatprep.subr.mxu0 0.0
  %2008 = vmatpush2.msra.mxu0 0.0
  %2009 = vmatprep.subr.mxu0 0.0
  %2010 = vmatpush2.msra.mxu0 0.0
  %2011 = vmatprep.subr.mxu0 0.0
  %2012 = vmatpush2.msra.mxu0 0.0
  %2013 = vmatprep.subr.mxu0 0.0
  %2014 = vmatpush2.msra.mxu0 0.0
  %2015 = vmatprep.subr.mxu0 0.0
  %2016 = vmatpush2.msra.mxu0 0.0
  %2017 = vmatprep.subr.mxu0 0.0
  %2018 = vmatpush2.msra.mxu0 0.0
  %2019 = vmatprep.subr.mxu0 0.0
  %2020 = vmatpush2.msra.mxu0 0.0
  %2021 = vmatprep.subr.mxu0 0.0
  %2022 = vmatpush2.msra.mxu0 0.0
  %2023 = vmatprep.subr.mxu0 0.0
  %2024 = vmatpush2.msra.mxu0 0.0
  %2025 = vmatprep.subr.mxu0 0.0
  %2026 = vmatpush2.msra.mxu0 0.0
  %2027 = vmatprep.subr.mxu0 0.0
  %2028 = vmatpush2.msra.mxu0 0.0
  %2029 = vmatprep.subr.mxu0 0.0
  %2030 = vmatpush2.msra.mxu0 0.0
  %2031 = vmatprep.mubr.f32.mxu0 0.0
  %2032 = vmatmul.mubr.f32.gmra.mxu0 %v1962
  %v2033 = vpop.f32.mrf.mxu0
  %v2034 = vadd.f32 %v583, %v2033
  %v2035 = vpop.f32.mrf.mxu0
  %2036 = vmatprep.mubr.f32.mxu0 0.0
  %2037 = vmatmul.mubr.f32.gmra.mxu0 %v1965
  %v2038 = vpop.f32.mrf.mxu0
  %v2039 = vadd.f32 %v583, %v2038
  %v2040 = vpop.f32.mrf.mxu0
  %2041 = vdwg.mxu0
  %v2042 = vmax.f32 %v2034, 0.0
  %v2043 = vmax.f32 %v2039, 0.0
  %v2045 = vsel %vm595, %v2043, 0
  %2047 = vmatprep.subr.mxu0 0.0
  %2048 = vmatpush1.msra.mxu0 0.0
  %2049 = vmatprep.subr.mxu0 0.0
  %2050 = vmatpush1.msra.mxu0 0.0
  %2051 = vmatprep.subr.mxu0 0.0
  %2052 = vmatpush1.msra.mxu0 0.0
  %2053 = vmatprep.subr.mxu0 0.0
  %2054 = vmatpush1.msra.mxu0 0.0
  %2055 = vmatprep.subr.mxu0 0.0
  %2056 = vmatpush1.msra.mxu0 0.0
  %2057 = vmatprep.subr.mxu0 0.0
  %2058 = vmatpush1.msra.mxu0 0.0
  %2059 = vmatprep.subr.mxu0 0.0
  %2060 = vmatpush1.msra.mxu0 0.0
  %2061 = vmatprep.subr.mxu0 0.0
  %2062 = vmatpush1.msra.mxu0 0.0
  %2063 = vmatprep.subr.mxu0 0.0
  %2064 = vmatpush1.msra.mxu0 0.0
  %2065 = vmatprep.subr.mxu0 0.0
  %2066 = vmatpush1.msra.mxu0 0.0
  %2067 = vmatprep.subr.mxu0 0.0
  %2068 = vmatpush1.msra.mxu0 0.0
  %2069 = vmatprep.subr.mxu0 0.0
  %2070 = vmatpush1.msra.mxu0 0.0
  %2071 = vmatprep.subr.mxu0 0.0
  %2072 = vmatpush1.msra.mxu0 0.0
  %2073 = vmatprep.subr.mxu0 0.0
  %2074 = vmatpush1.msra.mxu0 0.0
  %2075 = vmatprep.subr.mxu0 0.0
  %2076 = vmatpush1.msra.mxu0 %v2045
  %2077 = vmatprep.subr.mxu0 0.0
  %2078 = vmatpush1.msra.mxu0 %v2042
  %2079 = vmatprep.subr.mxu0 0.0
  %2080 = vmatpush2.msra.mxu0 0.0
  %2081 = vmatprep.subr.mxu0 0.0
  %2082 = vmatpush2.msra.mxu0 0.0
  %2083 = vmatprep.subr.mxu0 0.0
  %2084 = vmatpush2.msra.mxu0 0.0
  %2085 = vmatprep.subr.mxu0 0.0
  %2086 = vmatpush2.msra.mxu0 0.0
  %2087 = vmatprep.subr.mxu0 0.0
  %2088 = vmatpush2.msra.mxu0 0.0
  %2089 = vmatprep.subr.mxu0 0.0
  %2090 = vmatpush2.msra.mxu0 0.0
  %2091 = vmatprep.subr.mxu0 0.0
  %2092 = vmatpush2.msra.mxu0 0.0
  %2093 = vmatprep.subr.mxu0 0.0
  %2094 = vmatpush2.msra.mxu0 0.0
  %2095 = vmatprep.subr.mxu0 0.0
  %2096 = vmatpush2.msra.mxu0 0.0
  %2097 = vmatprep.subr.mxu0 0.0
  %2098 = vmatpush2.msra.mxu0 0.0
  %2099 = vmatprep.subr.mxu0 0.0
  %2100 = vmatpush2.msra.mxu0 0.0
  %2101 = vmatprep.subr.mxu0 0.0
  %2102 = vmatpush2.msra.mxu0 0.0
  %2103 = vmatprep.subr.mxu0 0.0
  %2104 = vmatpush2.msra.mxu0 0.0
  %2105 = vmatprep.subr.mxu0 0.0
  %2106 = vmatpush2.msra.mxu0 0.0
  %2107 = vmatprep.subr.mxu0 0.0
  %2108 = vmatpush2.msra.mxu0 0.0
  %2109 = vmatprep.subr.mxu0 0.0
  %2110 = vmatpush2.msra.mxu0 0.0
  %2111 = vmatprep.mubr.f32.mxu0 0.0
  %2112 = vmatmul.mubr.f32.gmra.mxu0 %v587
  %v2113 = vpop.f32.mrf.mxu0
  %v2114 = vadd.f32 0.0, %v2113
  %v2115 = vpop.f32.mrf.mxu0
  %2116 = vmatprep.mubr.f32.mxu0 0.0
  %2117 = vmatmul.mubr.f32.gmra.mxu0 %v590
  %v2118 = vpop.f32.mrf.mxu0
  %v2119 = vadd.f32 0.0, %v2118
  %v2120 = vpop.f32.mrf.mxu0
  %2121 = vmatprep.mubr.f32.mxu0 0.0
  %2122 = vmatmul.mubr.f32.gmra.mxu0 %v593
  %v2123 = vpop.f32.mrf.mxu0
  %v2124 = vadd.f32 0.0, %v2123
  %v2125 = vpop.f32.mrf.mxu0
  %2126 = vdwg.mxu0
  %2127 = vmatprep.subr.mxu0 0.0
  %2128 = vmatpush1.msra.mxu0 0.0
  %2129 = vmatprep.subr.mxu0 0.0
  %2130 = vmatpush1.msra.mxu0 0.0
  %2131 = vmatprep.subr.mxu0 0.0
  %2132 = vmatpush1.msra.mxu0 0.0
  %2133 = vmatprep.subr.mxu0 0.0
  %2134 = vmatpush1.msra.mxu0 0.0
  %2135 = vmatprep.subr.mxu0 0.0
  %2136 = vmatpush1.msra.mxu0 0.0
  %2137 = vmatprep.subr.mxu0 0.0
  %2138 = vmatpush1.msra.mxu0 0.0
  %2139 = vmatprep.subr.mxu0 0.0
  %2140 = vmatpush1.msra.mxu0 0.0
  %2141 = vmatprep.subr.mxu0 0.0
  %2142 = vmatpush1.msra.mxu0 0.0
  %2143 = vmatprep.subr.mxu0 0.0
  %2144 = vmatpush1.msra.mxu0 0.0
  %2145 = vmatprep.subr.mxu0 0.0
  %2146 = vmatpush1.msra.mxu0 0.0
  %2147 = vmatprep.subr.mxu0 0.0
  %2148 = vmatpush1.msra.mxu0 0.0
  %2149 = vmatprep.subr.mxu0 0.0
  %2150 = vmatpush1.msra.mxu0 0.0
  %2151 = vmatprep.subr.mxu0 0.0
  %2152 = vmatpush1.msra.mxu0 0.0
  %2153 = vmatprep.subr.mxu0 0.0
  %2154 = vmatpush1.msra.mxu0 0.0
  %2155 = vmatprep.subr.mxu0 0.0
  %2156 = vmatpush1.msra.mxu0 %v2045
  %2157 = vmatprep.subr.mxu0 0.0
  %2158 = vmatpush1.msra.mxu0 %v2042
  %2159 = vmatprep.subr.mxu0 0.0
  %2160 = vmatpush2.msra.mxu0 0.0
  %2161 = vmatprep.subr.mxu0 0.0
  %2162 = vmatpush2.msra.mxu0 0.0
  %2163 = vmatprep.subr.mxu0 0.0
  %2164 = vmatpush2.msra.mxu0 0.0
  %2165 = vmatprep.subr.mxu0 0.0
  %2166 = vmatpush2.msra.mxu0 0.0
  %2167 = vmatprep.subr.mxu0 0.0
  %2168 = vmatpush2.msra.mxu0 0.0
  %2169 = vmatprep.subr.mxu0 0.0
  %2170 = vmatpush2.msra.mxu0 0.0
  %2171 = vmatprep.subr.mxu0 0.0
  %2172 = vmatpush2.msra.mxu0 0.0
  %2173 = vmatprep.subr.mxu0 0.0
  %2174 = vmatpush2.msra.mxu0 0.0
  %2175 = vmatprep.subr.mxu0 0.0
  %2176 = vmatpush2.msra.mxu0 0.0
  %2177 = vmatprep.subr.mxu0 0.0
  %2178 = vmatpush2.msra.mxu0 0.0
  %2179 = vmatprep.subr.mxu0 0.0
  %2180 = vmatpush2.msra.mxu0 0.0
  %2181 = vmatprep.subr.mxu0 0.0
  %2182 = vmatpush2.msra.mxu0 0.0
  %2183 = vmatprep.subr.mxu0 0.0
  %2184 = vmatpush2.msra.mxu0 0.0
  %2185 = vmatprep.subr.mxu0 0.0
  %2186 = vmatpush2.msra.mxu0 0.0
  %2187 = vmatprep.subr.mxu0 0.0
  %2188 = vmatpush2.msra.mxu0 0.0
  %2189 = vmatprep.subr.mxu0 0.0
  %2190 = vmatpush2.msra.mxu0 0.0
  %2191 = vmatprep.mubr.f32.mxu0 0.0
  %2192 = vmatmul.mubr.f32.gmra.mxu0 %v680
  %v2193 = vpop.f32.mrf.mxu0
  %v2194 = vadd.f32 0.0, %v2193
  %v2195 = vpop.f32.mrf.mxu0
  %2196 = vmatprep.mubr.f32.mxu0 0.0
  %2197 = vmatmul.mubr.f32.gmra.mxu0 %v683
  %v2198 = vpop.f32.mrf.mxu0
  %v2199 = vadd.f32 0.0, %v2198
  %v2200 = vpop.f32.mrf.mxu0
  %2201 = vmatprep.mubr.f32.mxu0 0.0
  %2202 = vmatmul.mubr.f32.gmra.mxu0 %v686
  %v2203 = vpop.f32.mrf.mxu0
  %v2204 = vadd.f32 0.0, %v2203
  %v2205 = vpop.f32.mrf.mxu0
  %2206 = vdwg.mxu0
  %v2208 = vsel %vm248, %v2114, 0
  %v2211 = vsel %vm248, %v2119, 0
  %v2214 = vsel %vm248, %v2124, 0
  %2216 = vmatprep.subr.mxu0 0.0
  %2217 = vmatpush1.msra.mxu0 0.0
  %2218 = vmatprep.subr.mxu0 0.0
  %2219 = vmatpush1.msra.mxu0 0.0
  %2220 = vmatprep.subr.mxu0 0.0
  %2221 = vmatpush1.msra.mxu0 0.0
  %2222 = vmatprep.subr.mxu0 0.0
  %2223 = vmatpush1.msra.mxu0 0.0
  %2224 = vmatprep.subr.mxu0 0.0
  %2225 = vmatpush1.msra.mxu0 0.0
  %2226 = vmatprep.subr.mxu0 0.0
  %2227 = vmatpush1.msra.mxu0 0.0
  %2228 = vmatprep.subr.mxu0 0.0
  %2229 = vmatpush1.msra.mxu0 0.0
  %2230 = vmatprep.subr.mxu0 0.0
  %2231 = vmatpush1.msra.mxu0 0.0
  %2232 = vmatprep.subr.mxu0 0.0
  %2233 = vmatpush1.msra.mxu0 0.0
  %2234 = vmatprep.subr.mxu0 0.0
  %2235 = vmatpush1.msra.mxu0 0.0
  %2236 = vmatprep.subr.mxu0 0.0
  %2237 = vmatpush1.msra.mxu0 0.0
  %2238 = vmatprep.subr.mxu0 0.0
  %2239 = vmatpush1.msra.mxu0 0.0
  %2240 = vmatprep.subr.mxu0 0.0
  %2241 = vmatpush1.msra.mxu0 0.0
  %2242 = vmatprep.subr.mxu0 0.0
  %2243 = vmatpush1.msra.mxu0 0.0
  %2244 = vmatprep.subr.mxu0 0.0
  %2245 = vmatpush1.msra.mxu0 %v552
  %2246 = vmatprep.subr.mxu0 0.0
  %2247 = vmatpush1.msra.mxu0 %v551
  %2248 = vmatprep.subr.mxu0 0.0
  %2249 = vmatpush2.msra.mxu0 0.0
  %2250 = vmatprep.subr.mxu0 0.0
  %2251 = vmatpush2.msra.mxu0 0.0
  %2252 = vmatprep.subr.mxu0 0.0
  %2253 = vmatpush2.msra.mxu0 0.0
  %2254 = vmatprep.subr.mxu0 0.0
  %2255 = vmatpush2.msra.mxu0 0.0
  %2256 = vmatprep.subr.mxu0 0.0
  %2257 = vmatpush2.msra.mxu0 0.0
  %2258 = vmatprep.subr.mxu0 0.0
  %2259 = vmatpush2.msra.mxu0 0.0
  %2260 = vmatprep.subr.mxu0 0.0
  %2261 = vmatpush2.msra.mxu0 0.0
  %2262 = vmatprep.subr.mxu0 0.0
  %2263 = vmatpush2.msra.mxu0 0.0
  %2264 = vmatprep.subr.mxu0 0.0
  %2265 = vmatpush2.msra.mxu0 0.0
  %2266 = vmatprep.subr.mxu0 0.0
  %2267 = vmatpush2.msra.mxu0 0.0
  %2268 = vmatprep.subr.mxu0 0.0
  %2269 = vmatpush2.msra.mxu0 0.0
  %2270 = vmatprep.subr.mxu0 0.0
  %2271 = vmatpush2.msra.mxu0 0.0
  %2272 = vmatprep.subr.mxu0 0.0
  %2273 = vmatpush2.msra.mxu0 0.0
  %2274 = vmatprep.subr.mxu0 0.0
  %2275 = vmatpush2.msra.mxu0 0.0
  %2276 = vmatprep.subr.mxu0 0.0
  %2277 = vmatpush2.msra.mxu0 0.0
  %2278 = vmatprep.subr.mxu0 0.0
  %2279 = vmatpush2.msra.mxu0 0.0
  %2280 = vmatprep.mubr.f32.mxu0 0.0
  %2281 = vmatmul.mubr.f32.gmra.mxu0 %v2208
  %v2282 = vpop.f32.mrf.mxu0
  %v2283 = vadd.f32 0.0, %v2282
  %v2284 = vpop.f32.mrf.mxu0
  %2285 = vmatprep.mubr.f32.mxu0 0.0
  %2286 = vmatmul.mubr.f32.gmra.mxu0 %v2211
  %v2287 = vpop.f32.mrf.mxu0
  %v2288 = vadd.f32 0.0, %v2287
  %v2289 = vpop.f32.mrf.mxu0
  %2290 = vmatprep.mubr.f32.mxu0 0.0
  %2291 = vmatmul.mubr.f32.gmra.mxu0 %v2214
  %v2292 = vpop.f32.mrf.mxu0
  %v2293 = vadd.f32 0.0, %v2292
  %v2294 = vpop.f32.mrf.mxu0
  %2295 = vdwg.mxu0
  %v2296 = vadd.f32 %v1202, %v2283
  %v2297 = vadd.f32 %v1203, %v2288
  %v2298 = vadd.f32 %v1204, %v2293
  %v2300 = vsel %vm248, %v1634, 0
  %v2303 = vsel %vm248, %v1635, 0
  %v2306 = vsel %vm248, %v1636, 0
  %2308 = vmatprep.subr.mxu0 0.0
  %2309 = vmatpush1.msra.mxu0 0.0
  %2310 = vmatprep.subr.mxu0 0.0
  %2311 = vmatpush1.msra.mxu0 0.0
  %2312 = vmatprep.subr.mxu0 0.0
  %2313 = vmatpush1.msra.mxu0 0.0
  %2314 = vmatprep.subr.mxu0 0.0
  %2315 = vmatpush1.msra.mxu0 0.0
  %2316 = vmatprep.subr.mxu0 0.0
  %2317 = vmatpush1.msra.mxu0 0.0
  %2318 = vmatprep.subr.mxu0 0.0
  %2319 = vmatpush1.msra.mxu0 0.0
  %2320 = vmatprep.subr.mxu0 0.0
  %2321 = vmatpush1.msra.mxu0 0.0
  %2322 = vmatprep.subr.mxu0 0.0
  %2323 = vmatpush1.msra.mxu0 0.0
  %2324 = vmatprep.subr.mxu0 0.0
  %2325 = vmatpush1.msra.mxu0 0.0
  %2326 = vmatprep.subr.mxu0 0.0
  %2327 = vmatpush1.msra.mxu0 0.0
  %2328 = vmatprep.subr.mxu0 0.0
  %2329 = vmatpush1.msra.mxu0 0.0
  %2330 = vmatprep.subr.mxu0 0.0
  %2331 = vmatpush1.msra.mxu0 0.0
  %2332 = vmatprep.subr.mxu0 0.0
  %2333 = vmatpush1.msra.mxu0 0.0
  %2334 = vmatprep.subr.mxu0 0.0
  %2335 = vmatpush1.msra.mxu0 0.0
  %2336 = vmatprep.subr.mxu0 0.0
  %2337 = vmatpush1.msra.mxu0 %v556
  %2338 = vmatprep.subr.mxu0 0.0
  %2339 = vmatpush1.msra.mxu0 %v555
  %2340 = vmatprep.subr.mxu0 0.0
  %2341 = vmatpush2.msra.mxu0 0.0
  %2342 = vmatprep.subr.mxu0 0.0
  %2343 = vmatpush2.msra.mxu0 0.0
  %2344 = vmatprep.subr.mxu0 0.0
  %2345 = vmatpush2.msra.mxu0 0.0
  %2346 = vmatprep.subr.mxu0 0.0
  %2347 = vmatpush2.msra.mxu0 0.0
  %2348 = vmatprep.subr.mxu0 0.0
  %2349 = vmatpush2.msra.mxu0 0.0
  %2350 = vmatprep.subr.mxu0 0.0
  %2351 = vmatpush2.msra.mxu0 0.0
  %2352 = vmatprep.subr.mxu0 0.0
  %2353 = vmatpush2.msra.mxu0 0.0
  %2354 = vmatprep.subr.mxu0 0.0
  %2355 = vmatpush2.msra.mxu0 0.0
  %2356 = vmatprep.subr.mxu0 0.0
  %2357 = vmatpush2.msra.mxu0 0.0
  %2358 = vmatprep.subr.mxu0 0.0
  %2359 = vmatpush2.msra.mxu0 0.0
  %2360 = vmatprep.subr.mxu0 0.0
  %2361 = vmatpush2.msra.mxu0 0.0
  %2362 = vmatprep.subr.mxu0 0.0
  %2363 = vmatpush2.msra.mxu0 0.0
  %2364 = vmatprep.subr.mxu0 0.0
  %2365 = vmatpush2.msra.mxu0 0.0
  %2366 = vmatprep.subr.mxu0 0.0
  %2367 = vmatpush2.msra.mxu0 0.0
  %2368 = vmatprep.subr.mxu0 0.0
  %2369 = vmatpush2.msra.mxu0 0.0
  %2370 = vmatprep.subr.mxu0 0.0
  %2371 = vmatpush2.msra.mxu0 0.0
  %2372 = vmatprep.mubr.f32.mxu0 0.0
  %2373 = vmatmul.mubr.f32.gmra.mxu0 %v2300
  %v2374 = vpop.f32.mrf.mxu0
  %v2375 = vadd.f32 0.0, %v2374
  %v2376 = vpop.f32.mrf.mxu0
  %2377 = vmatprep.mubr.f32.mxu0 0.0
  %2378 = vmatmul.mubr.f32.gmra.mxu0 %v2303
  %v2379 = vpop.f32.mrf.mxu0
  %v2380 = vadd.f32 0.0, %v2379
  %v2381 = vpop.f32.mrf.mxu0
  %2382 = vmatprep.mubr.f32.mxu0 0.0
  %2383 = vmatmul.mubr.f32.gmra.mxu0 %v2306
  %v2384 = vpop.f32.mrf.mxu0
  %v2385 = vadd.f32 0.0, %v2384
  %v2386 = vpop.f32.mrf.mxu0
  %2387 = vdwg.mxu0
  %v2388 = vadd.f32 %v2296, %v2375
  %v2389 = vadd.f32 %v2297, %v2380
  %v2390 = vadd.f32 %v2298, %v2385
  %v2392 = vsel %vm248, %v2194, 0
  %v2395 = vsel %vm248, %v2199, 0
  %v2398 = vsel %vm248, %v2204, 0
  %2400 = vmatprep.subr.mxu0 0.0
  %2401 = vmatpush1.msra.mxu0 0.0
  %2402 = vmatprep.subr.mxu0 0.0
  %2403 = vmatpush1.msra.mxu0 0.0
  %2404 = vmatprep.subr.mxu0 0.0
  %2405 = vmatpush1.msra.mxu0 0.0
  %2406 = vmatprep.subr.mxu0 0.0
  %2407 = vmatpush1.msra.mxu0 0.0
  %2408 = vmatprep.subr.mxu0 0.0
  %2409 = vmatpush1.msra.mxu0 0.0
  %2410 = vmatprep.subr.mxu0 0.0
  %2411 = vmatpush1.msra.mxu0 0.0
  %2412 = vmatprep.subr.mxu0 0.0
  %2413 = vmatpush1.msra.mxu0 0.0
  %2414 = vmatprep.subr.mxu0 0.0
  %2415 = vmatpush1.msra.mxu0 0.0
  %2416 = vmatprep.subr.mxu0 0.0
  %2417 = vmatpush1.msra.mxu0 0.0
  %2418 = vmatprep.subr.mxu0 0.0
  %2419 = vmatpush1.msra.mxu0 0.0
  %2420 = vmatprep.subr.mxu0 0.0
  %2421 = vmatpush1.msra.mxu0 0.0
  %2422 = vmatprep.subr.mxu0 0.0
  %2423 = vmatpush1.msra.mxu0 0.0
  %2424 = vmatprep.subr.mxu0 0.0
  %2425 = vmatpush1.msra.mxu0 0.0
  %2426 = vmatprep.subr.mxu0 0.0
  %2427 = vmatpush1.msra.mxu0 0.0
  %2428 = vmatprep.subr.mxu0 0.0
  %2429 = vmatpush1.msra.mxu0 %v560
  %2430 = vmatprep.subr.mxu0 0.0
  %2431 = vmatpush1.msra.mxu0 %v559
  %2432 = vmatprep.subr.mxu0 0.0
  %2433 = vmatpush2.msra.mxu0 0.0
  %2434 = vmatprep.subr.mxu0 0.0
  %2435 = vmatpush2.msra.mxu0 0.0
  %2436 = vmatprep.subr.mxu0 0.0
  %2437 = vmatpush2.msra.mxu0 0.0
  %2438 = vmatprep.subr.mxu0 0.0
  %2439 = vmatpush2.msra.mxu0 0.0
  %2440 = vmatprep.subr.mxu0 0.0
  %2441 = vmatpush2.msra.mxu0 0.0
  %2442 = vmatprep.subr.mxu0 0.0
  %2443 = vmatpush2.msra.mxu0 0.0
  %2444 = vmatprep.subr.mxu0 0.0
  %2445 = vmatpush2.msra.mxu0 0.0
  %2446 = vmatprep.subr.mxu0 0.0
  %2447 = vmatpush2.msra.mxu0 0.0
  %2448 = vmatprep.subr.mxu0 0.0
  %2449 = vmatpush2.msra.mxu0 0.0
  %2450 = vmatprep.subr.mxu0 0.0
  %2451 = vmatpush2.msra.mxu0 0.0
  %2452 = vmatprep.subr.mxu0 0.0
  %2453 = vmatpush2.msra.mxu0 0.0
  %2454 = vmatprep.subr.mxu0 0.0
  %2455 = vmatpush2.msra.mxu0 0.0
  %2456 = vmatprep.subr.mxu0 0.0
  %2457 = vmatpush2.msra.mxu0 0.0
  %2458 = vmatprep.subr.mxu0 0.0
  %2459 = vmatpush2.msra.mxu0 0.0
  %2460 = vmatprep.subr.mxu0 0.0
  %2461 = vmatpush2.msra.mxu0 0.0
  %2462 = vmatprep.subr.mxu0 0.0
  %2463 = vmatpush2.msra.mxu0 0.0
  %2464 = vmatprep.mubr.f32.mxu0 0.0
  %2465 = vmatmul.mubr.f32.gmra.mxu0 %v2392
  %v2466 = vpop.f32.mrf.mxu0
  %v2467 = vadd.f32 0.0, %v2466
  %v2468 = vpop.f32.mrf.mxu0
  %2469 = vmatprep.mubr.f32.mxu0 0.0
  %2470 = vmatmul.mubr.f32.gmra.mxu0 %v2395
  %v2471 = vpop.f32.mrf.mxu0
  %v2472 = vadd.f32 0.0, %v2471
  %v2473 = vpop.f32.mrf.mxu0
  %2474 = vmatprep.mubr.f32.mxu0 0.0
  %2475 = vmatmul.mubr.f32.gmra.mxu0 %v2398
  %v2476 = vpop.f32.mrf.mxu0
  %v2477 = vadd.f32 0.0, %v2476
  %v2478 = vpop.f32.mrf.mxu0
  %2479 = vdwg.mxu0
  %v2480 = vadd.f32 %v2388, %v2467
  %v2481 = vadd.f32 %v2389, %v2472
  %v2482 = vadd.f32 %v2390, %v2477
  %v2483 = vmax.f32 %v2480, 0.0
  %v2484 = vmax.f32 %v2481, 0.0
  %v2485 = vmax.f32 %v2482, 0.0
  %v2487 = vsel %vm248, %v2483, 0
  %v2490 = vsel %vm248, %v2484, 0
  %v2493 = vsel %vm248, %v2485, 0
  %2495 = vmatprep.subr.mxu0 0.0
  %2496 = vmatpush1.msra.mxu0 0.0
  %2497 = vmatprep.subr.mxu0 0.0
  %2498 = vmatpush1.msra.mxu0 0.0
  %2499 = vmatprep.subr.mxu0 0.0
  %2500 = vmatpush1.msra.mxu0 0.0
  %2501 = vmatprep.subr.mxu0 0.0
  %2502 = vmatpush1.msra.mxu0 0.0
  %2503 = vmatprep.subr.mxu0 0.0
  %2504 = vmatpush1.msra.mxu0 0.0
  %2505 = vmatprep.subr.mxu0 0.0
  %2506 = vmatpush1.msra.mxu0 0.0
  %2507 = vmatprep.subr.mxu0 0.0
  %2508 = vmatpush1.msra.mxu0 0.0
  %2509 = vmatprep.subr.mxu0 0.0
  %2510 = vmatpush1.msra.mxu0 0.0
  %2511 = vmatprep.subr.mxu0 0.0
  %2512 = vmatpush1.msra.mxu0 0.0
  %2513 = vmatprep.subr.mxu0 0.0
  %2514 = vmatpush1.msra.mxu0 0.0
  %2515 = vmatprep.subr.mxu0 0.0
  %2516 = vmatpush1.msra.mxu0 0.0
  %2517 = vmatprep.subr.mxu0 0.0
  %2518 = vmatpush1.msra.mxu0 0.0
  %2519 = vmatprep.subr.mxu0 0.0
  %2520 = vmatpush1.msra.mxu0 0.0
  %2521 = vmatprep.subr.mxu0 0.0
  %2522 = vmatpush1.msra.mxu0 0.0
  %2523 = vmatprep.subr.mxu0 0.0
  %2524 = vmatpush1.msra.mxu0 %v568
  %2525 = vmatprep.subr.mxu0 0.0
  %2526 = vmatpush1.msra.mxu0 %v567
  %2527 = vmatprep.subr.mxu0 0.0
  %2528 = vmatpush2.msra.mxu0 0.0
  %2529 = vmatprep.subr.mxu0 0.0
  %2530 = vmatpush2.msra.mxu0 0.0
  %2531 = vmatprep.subr.mxu0 0.0
  %2532 = vmatpush2.msra.mxu0 0.0
  %2533 = vmatprep.subr.mxu0 0.0
  %2534 = vmatpush2.msra.mxu0 0.0
  %2535 = vmatprep.subr.mxu0 0.0
  %2536 = vmatpush2.msra.mxu0 0.0
  %2537 = vmatprep.subr.mxu0 0.0
  %2538 = vmatpush2.msra.mxu0 0.0
  %2539 = vmatprep.subr.mxu0 0.0
  %2540 = vmatpush2.msra.mxu0 0.0
  %2541 = vmatprep.subr.mxu0 0.0
  %2542 = vmatpush2.msra.mxu0 0.0
  %2543 = vmatprep.subr.mxu0 0.0
  %2544 = vmatpush2.msra.mxu0 0.0
  %2545 = vmatprep.subr.mxu0 0.0
  %2546 = vmatpush2.msra.mxu0 0.0
  %2547 = vmatprep.subr.mxu0 0.0
  %2548 = vmatpush2.msra.mxu0 0.0
  %2549 = vmatprep.subr.mxu0 0.0
  %2550 = vmatpush2.msra.mxu0 0.0
  %2551 = vmatprep.subr.mxu0 0.0
  %2552 = vmatpush2.msra.mxu0 0.0
  %2553 = vmatprep.subr.mxu0 0.0
  %2554 = vmatpush2.msra.mxu0 0.0
  %2555 = vmatprep.subr.mxu0 0.0
  %2556 = vmatpush2.msra.mxu0 0.0
  %2557 = vmatprep.subr.mxu0 0.0
  %2558 = vmatpush2.msra.mxu0 0.0
  %2559 = vmatprep.mubr.f32.mxu0 0.0
  %2560 = vmatmul.mubr.f32.gmra.mxu0 %v2487
  %v2561 = vpop.f32.mrf.mxu0
  %v2562 = vadd.f32 %v576, %v2561
  %v2563 = vpop.f32.mrf.mxu0
  %2564 = vmatprep.mubr.f32.mxu0 0.0
  %2565 = vmatmul.mubr.f32.gmra.mxu0 %v2490
  %v2566 = vpop.f32.mrf.mxu0
  %v2567 = vadd.f32 %v576, %v2566
  %v2568 = vpop.f32.mrf.mxu0
  %2569 = vmatprep.mubr.f32.mxu0 0.0
  %2570 = vmatmul.mubr.f32.gmra.mxu0 %v2493
  %v2571 = vpop.f32.mrf.mxu0
  %v2572 = vadd.f32 %v576, %v2571
  %v2573 = vpop.f32.mrf.mxu0
  %2574 = vdwg.mxu0
  %v2575 = vmax.f32 %v2562, 0.0
  %v2576 = vmax.f32 %v2567, 0.0
  %v2577 = vmax.f32 %v2572, 0.0
  %2578 = vmatprep.subr.mxu0 0.0
  %2579 = vmatpush1.msra.mxu0 0.0
  %2580 = vmatprep.subr.mxu0 0.0
  %2581 = vmatpush1.msra.mxu0 0.0
  %2582 = vmatprep.subr.mxu0 0.0
  %2583 = vmatpush1.msra.mxu0 0.0
  %2584 = vmatprep.subr.mxu0 0.0
  %2585 = vmatpush1.msra.mxu0 0.0
  %2586 = vmatprep.subr.mxu0 0.0
  %2587 = vmatpush1.msra.mxu0 0.0
  %2588 = vmatprep.subr.mxu0 0.0
  %2589 = vmatpush1.msra.mxu0 0.0
  %2590 = vmatprep.subr.mxu0 0.0
  %2591 = vmatpush1.msra.mxu0 0.0
  %2592 = vmatprep.subr.mxu0 0.0
  %2593 = vmatpush1.msra.mxu0 0.0
  %2594 = vmatprep.subr.mxu0 0.0
  %2595 = vmatpush1.msra.mxu0 0.0
  %2596 = vmatprep.subr.mxu0 0.0
  %2597 = vmatpush1.msra.mxu0 0.0
  %2598 = vmatprep.subr.mxu0 0.0
  %2599 = vmatpush1.msra.mxu0 0.0
  %2600 = vmatprep.subr.mxu0 0.0
  %2601 = vmatpush1.msra.mxu0 0.0
  %2602 = vmatprep.subr.mxu0 0.0
  %2603 = vmatpush1.msra.mxu0 0.0
  %2604 = vmatprep.subr.mxu0 0.0
  %2605 = vmatpush1.msra.mxu0 %v2577
  %2606 = vmatprep.subr.mxu0 0.0
  %2607 = vmatpush1.msra.mxu0 %v2576
  %2608 = vmatprep.subr.mxu0 0.0
  %2609 = vmatpush1.msra.mxu0 %v2575
  %2610 = vmatprep.subr.mxu0 0.0
  %2611 = vmatpush2.msra.mxu0 0.0
  %2612 = vmatprep.subr.mxu0 0.0
  %2613 = vmatpush2.msra.mxu0 0.0
  %2614 = vmatprep.subr.mxu0 0.0
  %2615 = vmatpush2.msra.mxu0 0.0
  %2616 = vmatprep.subr.mxu0 0.0
  %2617 = vmatpush2.msra.mxu0 0.0
  %2618 = vmatprep.subr.mxu0 0.0
  %2619 = vmatpush2.msra.mxu0 0.0
  %2620 = vmatprep.subr.mxu0 0.0
  %2621 = vmatpush2.msra.mxu0 0.0
  %2622 = vmatprep.subr.mxu0 0.0
  %2623 = vmatpush2.msra.mxu0 0.0
  %2624 = vmatprep.subr.mxu0 0.0
  %2625 = vmatpush2.msra.mxu0 0.0
  %2626 = vmatprep.subr.mxu0 0.0
  %2627 = vmatpush2.msra.mxu0 0.0
  %2628 = vmatprep.subr.mxu0 0.0
  %2629 = vmatpush2.msra.mxu0 0.0
  %2630 = vmatprep.subr.mxu0 0.0
  %2631 = vmatpush2.msra.mxu0 0.0
  %2632 = vmatprep.subr.mxu0 0.0
  %2633 = vmatpush2.msra.mxu0 0.0
  %2634 = vmatprep.subr.mxu0 0.0
  %2635 = vmatpush2.msra.mxu0 0.0
  %2636 = vmatprep.subr.mxu0 0.0
  %2637 = vmatpush2.msra.mxu0 0.0
  %2638 = vmatprep.subr.mxu0 0.0
  %2639 = vmatpush2.msra.mxu0 0.0
  %2640 = vmatprep.subr.mxu0 0.0
  %2641 = vmatpush2.msra.mxu0 0.0
  %2642 = vmatprep.mubr.f32.mxu0 0.0
  %2643 = vmatmul.mubr.f32.gmra.mxu0 %v770
  %v2644 = vpop.f32.mrf.mxu0
  %v2645 = vadd.f32 0.0, %v2644
  %v2646 = vpop.f32.mrf.mxu0
  %2647 = vmatprep.mubr.f32.mxu0 0.0
  %2648 = vmatmul.mubr.f32.gmra.mxu0 %v773
  %v2649 = vpop.f32.mrf.mxu0
  %v2650 = vadd.f32 0.0, %v2649
  %v2651 = vpop.f32.mrf.mxu0
  %2652 = vdwg.mxu0
  %2653 = vmatprep.subr.mxu0 0.0
  %2654 = vmatpush1.msra.mxu0 0.0
  %2655 = vmatprep.subr.mxu0 0.0
  %2656 = vmatpush1.msra.mxu0 0.0
  %2657 = vmatprep.subr.mxu0 0.0
  %2658 = vmatpush1.msra.mxu0 0.0
  %2659 = vmatprep.subr.mxu0 0.0
  %2660 = vmatpush1.msra.mxu0 0.0
  %2661 = vmatprep.subr.mxu0 0.0
  %2662 = vmatpush1.msra.mxu0 0.0
  %2663 = vmatprep.subr.mxu0 0.0
  %2664 = vmatpush1.msra.mxu0 0.0
  %2665 = vmatprep.subr.mxu0 0.0
  %2666 = vmatpush1.msra.mxu0 0.0
  %2667 = vmatprep.subr.mxu0 0.0
  %2668 = vmatpush1.msra.mxu0 0.0
  %2669 = vmatprep.subr.mxu0 0.0
  %2670 = vmatpush1.msra.mxu0 0.0
  %2671 = vmatprep.subr.mxu0 0.0
  %2672 = vmatpush1.msra.mxu0 0.0
  %2673 = vmatprep.subr.mxu0 0.0
  %2674 = vmatpush1.msra.mxu0 0.0
  %2675 = vmatprep.subr.mxu0 0.0
  %2676 = vmatpush1.msra.mxu0 0.0
  %2677 = vmatprep.subr.mxu0 0.0
  %2678 = vmatpush1.msra.mxu0 0.0
  %2679 = vmatprep.subr.mxu0 0.0
  %2680 = vmatpush1.msra.mxu0 0.0
  %2681 = vmatprep.subr.mxu0 0.0
  %2682 = vmatpush1.msra.mxu0 %v2045
  %2683 = vmatprep.subr.mxu0 0.0
  %2684 = vmatpush1.msra.mxu0 %v2042
  %2685 = vmatprep.subr.mxu0 0.0
  %2686 = vmatpush2.msra.mxu0 0.0
  %2687 = vmatprep.subr.mxu0 0.0
  %2688 = vmatpush2.msra.mxu0 0.0
  %2689 = vmatprep.subr.mxu0 0.0
  %2690 = vmatpush2.msra.mxu0 0.0
  %2691 = vmatprep.subr.mxu0 0.0
  %2692 = vmatpush2.msra.mxu0 0.0
  %2693 = vmatprep.subr.mxu0 0.0
  %2694 = vmatpush2.msra.mxu0 0.0
  %2695 = vmatprep.subr.mxu0 0.0
  %2696 = vmatpush2.msra.mxu0 0.0
  %2697 = vmatprep.subr.mxu0 0.0
  %2698 = vmatpush2.msra.mxu0 0.0
  %2699 = vmatprep.subr.mxu0 0.0
  %2700 = vmatpush2.msra.mxu0 0.0
  %2701 = vmatprep.subr.mxu0 0.0
  %2702 = vmatpush2.msra.mxu0 0.0
  %2703 = vmatprep.subr.mxu0 0.0
  %2704 = vmatpush2.msra.mxu0 0.0
  %2705 = vmatprep.subr.mxu0 0.0
  %2706 = vmatpush2.msra.mxu0 0.0
  %2707 = vmatprep.subr.mxu0 0.0
  %2708 = vmatpush2.msra.mxu0 0.0
  %2709 = vmatprep.subr.mxu0 0.0
  %2710 = vmatpush2.msra.mxu0 0.0
  %2711 = vmatprep.subr.mxu0 0.0
  %2712 = vmatpush2.msra.mxu0 0.0
  %2713 = vmatprep.subr.mxu0 0.0
  %2714 = vmatpush2.msra.mxu0 0.0
  %2715 = vmatprep.subr.mxu0 0.0
  %2716 = vmatpush2.msra.mxu0 0.0
  %2717 = vmatprep.mubr.f32.mxu0 0.0
  %2718 = vmatmul.mubr.f32.gmra.mxu0 %v1713
  %v2719 = vpop.f32.mrf.mxu0
  %v2720 = vadd.f32 0.0, %v2719
  %v2721 = vpop.f32.mrf.mxu0
  %2722 = vmatprep.mubr.f32.mxu0 0.0
  %2723 = vmatmul.mubr.f32.gmra.mxu0 %v1716
  %v2724 = vpop.f32.mrf.mxu0
  %v2725 = vadd.f32 0.0, %v2724
  %v2726 = vpop.f32.mrf.mxu0
  %2727 = vdwg.mxu0
  %v2729 = vsel %vm248, %v2720, 0
  %v2732 = vsel %vm248, %v2725, 0
  %2734 = vmatprep.subr.mxu0 0.0
  %2735 = vmatpush1.msra.mxu0 0.0
  %2736 = vmatprep.subr.mxu0 0.0
  %2737 = vmatpush1.msra.mxu0 0.0
  %2738 = vmatprep.subr.mxu0 0.0
  %2739 = vmatpush1.msra.mxu0 0.0
  %2740 = vmatprep.subr.mxu0 0.0
  %2741 = vmatpush1.msra.mxu0 0.0
  %2742 = vmatprep.subr.mxu0 0.0
  %2743 = vmatpush1.msra.mxu0 0.0
  %2744 = vmatprep.subr.mxu0 0.0
  %2745 = vmatpush1.msra.mxu0 0.0
  %2746 = vmatprep.subr.mxu0 0.0
  %2747 = vmatpush1.msra.mxu0 0.0
  %2748 = vmatprep.subr.mxu0 0.0
  %2749 = vmatpush1.msra.mxu0 0.0
  %2750 = vmatprep.subr.mxu0 0.0
  %2751 = vmatpush1.msra.mxu0 0.0
  %2752 = vmatprep.subr.mxu0 0.0
  %2753 = vmatpush1.msra.mxu0 0.0
  %2754 = vmatprep.subr.mxu0 0.0
  %2755 = vmatpush1.msra.mxu0 0.0
  %2756 = vmatprep.subr.mxu0 0.0
  %2757 = vmatpush1.msra.mxu0 0.0
  %2758 = vmatprep.subr.mxu0 0.0
  %2759 = vmatpush1.msra.mxu0 0.0
  %2760 = vmatprep.subr.mxu0 0.0
  %2761 = vmatpush1.msra.mxu0 0.0
  %2762 = vmatprep.subr.mxu0 0.0
  %2763 = vmatpush1.msra.mxu0 %v564
  %2764 = vmatprep.subr.mxu0 0.0
  %2765 = vmatpush1.msra.mxu0 %v563
  %2766 = vmatprep.subr.mxu0 0.0
  %2767 = vmatpush2.msra.mxu0 0.0
  %2768 = vmatprep.subr.mxu0 0.0
  %2769 = vmatpush2.msra.mxu0 0.0
  %2770 = vmatprep.subr.mxu0 0.0
  %2771 = vmatpush2.msra.mxu0 0.0
  %2772 = vmatprep.subr.mxu0 0.0
  %2773 = vmatpush2.msra.mxu0 0.0
  %2774 = vmatprep.subr.mxu0 0.0
  %2775 = vmatpush2.msra.mxu0 0.0
  %2776 = vmatprep.subr.mxu0 0.0
  %2777 = vmatpush2.msra.mxu0 0.0
  %2778 = vmatprep.subr.mxu0 0.0
  %2779 = vmatpush2.msra.mxu0 0.0
  %2780 = vmatprep.subr.mxu0 0.0
  %2781 = vmatpush2.msra.mxu0 0.0
  %2782 = vmatprep.subr.mxu0 0.0
  %2783 = vmatpush2.msra.mxu0 0.0
  %2784 = vmatprep.subr.mxu0 0.0
  %2785 = vmatpush2.msra.mxu0 0.0
  %2786 = vmatprep.subr.mxu0 0.0
  %2787 = vmatpush2.msra.mxu0 0.0
  %2788 = vmatprep.subr.mxu0 0.0
  %2789 = vmatpush2.msra.mxu0 0.0
  %2790 = vmatprep.subr.mxu0 0.0
  %2791 = vmatpush2.msra.mxu0 0.0
  %2792 = vmatprep.subr.mxu0 0.0
  %2793 = vmatpush2.msra.mxu0 0.0
  %2794 = vmatprep.subr.mxu0 0.0
  %2795 = vmatpush2.msra.mxu0 0.0
  %2796 = vmatprep.subr.mxu0 0.0
  %2797 = vmatpush2.msra.mxu0 0.0
  %2798 = vmatprep.mubr.f32.mxu0 0.0
  %2799 = vmatmul.mubr.f32.gmra.mxu0 %v2729
  %v2800 = vpop.f32.mrf.mxu0
  %v2801 = vadd.f32 0.0, %v2800
  %v2802 = vpop.f32.mrf.mxu0
  %2803 = vmatprep.mubr.f32.mxu0 0.0
  %2804 = vmatmul.mubr.f32.gmra.mxu0 %v2732
  %v2805 = vpop.f32.mrf.mxu0
  %v2806 = vadd.f32 0.0, %v2805
  %v2807 = vpop.f32.mrf.mxu0
  %2808 = vdwg.mxu0
  %v2809 = vadd.f32 %v1285, %v2801
  %v2810 = vadd.f32 %v1290, %v2806
  %v2812 = vsel %vm248, %v2645, 0
  %v2815 = vsel %vm248, %v2650, 0
  %2817 = vmatprep.subr.mxu0 0.0
  %2818 = vmatpush1.msra.mxu0 0.0
  %2819 = vmatprep.subr.mxu0 0.0
  %2820 = vmatpush1.msra.mxu0 0.0
  %2821 = vmatprep.subr.mxu0 0.0
  %2822 = vmatpush1.msra.mxu0 0.0
  %2823 = vmatprep.subr.mxu0 0.0
  %2824 = vmatpush1.msra.mxu0 0.0
  %2825 = vmatprep.subr.mxu0 0.0
  %2826 = vmatpush1.msra.mxu0 0.0
  %2827 = vmatprep.subr.mxu0 0.0
  %2828 = vmatpush1.msra.mxu0 0.0
  %2829 = vmatprep.subr.mxu0 0.0
  %2830 = vmatpush1.msra.mxu0 0.0
  %2831 = vmatprep.subr.mxu0 0.0
  %2832 = vmatpush1.msra.mxu0 0.0
  %2833 = vmatprep.subr.mxu0 0.0
  %2834 = vmatpush1.msra.mxu0 0.0
  %2835 = vmatprep.subr.mxu0 0.0
  %2836 = vmatpush1.msra.mxu0 0.0
  %2837 = vmatprep.subr.mxu0 0.0
  %2838 = vmatpush1.msra.mxu0 0.0
  %2839 = vmatprep.subr.mxu0 0.0
  %2840 = vmatpush1.msra.mxu0 0.0
  %2841 = vmatprep.subr.mxu0 0.0
  %2842 = vmatpush1.msra.mxu0 0.0
  %2843 = vmatprep.subr.mxu0 0.0
  %2844 = vmatpush1.msra.mxu0 0.0
  %2845 = vmatprep.subr.mxu0 0.0
  %2846 = vmatpush1.msra.mxu0 %v566
  %2847 = vmatprep.subr.mxu0 0.0
  %2848 = vmatpush1.msra.mxu0 %v565
  %2849 = vmatprep.subr.mxu0 0.0
  %2850 = vmatpush2.msra.mxu0 0.0
  %2851 = vmatprep.subr.mxu0 0.0
  %2852 = vmatpush2.msra.mxu0 0.0
  %2853 = vmatprep.subr.mxu0 0.0
  %2854 = vmatpush2.msra.mxu0 0.0
  %2855 = vmatprep.subr.mxu0 0.0
  %2856 = vmatpush2.msra.mxu0 0.0
  %2857 = vmatprep.subr.mxu0 0.0
  %2858 = vmatpush2.msra.mxu0 0.0
  %2859 = vmatprep.subr.mxu0 0.0
  %2860 = vmatpush2.msra.mxu0 0.0
  %2861 = vmatprep.subr.mxu0 0.0
  %2862 = vmatpush2.msra.mxu0 0.0
  %2863 = vmatprep.subr.mxu0 0.0
  %2864 = vmatpush2.msra.mxu0 0.0
  %2865 = vmatprep.subr.mxu0 0.0
  %2866 = vmatpush2.msra.mxu0 0.0
  %2867 = vmatprep.subr.mxu0 0.0
  %2868 = vmatpush2.msra.mxu0 0.0
  %2869 = vmatprep.subr.mxu0 0.0
  %2870 = vmatpush2.msra.mxu0 0.0
  %2871 = vmatprep.subr.mxu0 0.0
  %2872 = vmatpush2.msra.mxu0 0.0
  %2873 = vmatprep.subr.mxu0 0.0
  %2874 = vmatpush2.msra.mxu0 0.0
  %2875 = vmatprep.subr.mxu0 0.0
  %2876 = vmatpush2.msra.mxu0 0.0
  %2877 = vmatprep.subr.mxu0 0.0
  %2878 = vmatpush2.msra.mxu0 0.0
  %2879 = vmatprep.subr.mxu0 0.0
  %2880 = vmatpush2.msra.mxu0 0.0
  %2881 = vmatprep.mubr.f32.mxu0 0.0
  %2882 = vmatmul.mubr.f32.gmra.mxu0 %v2812
  %v2883 = vpop.f32.mrf.mxu0
  %v2884 = vadd.f32 0.0, %v2883
  %v2885 = vpop.f32.mrf.mxu0
  %2886 = vmatprep.mubr.f32.mxu0 0.0
  %2887 = vmatmul.mubr.f32.gmra.mxu0 %v2815
  %v2888 = vpop.f32.mrf.mxu0
  %v2889 = vadd.f32 0.0, %v2888
  %v2890 = vpop.f32.mrf.mxu0
  %2891 = vdwg.mxu0
  %v2892 = vadd.f32 %v2809, %v2884
  %v2893 = vadd.f32 %v2810, %v2889
  %v2894 = vmax.f32 %v2892, 0.0
  %v2895 = vmax.f32 %v2893, 0.0
  %v2897 = vsel %vm248, %v2894, 0
  %v2900 = vsel %vm248, %v2895, 0
  %2902 = vmatprep.subr.mxu0 0.0
  %2903 = vmatpush1.msra.mxu0 0.0
  %2904 = vmatprep.subr.mxu0 0.0
  %2905 = vmatpush1.msra.mxu0 0.0
  %2906 = vmatprep.subr.mxu0 0.0
  %2907 = vmatpush1.msra.mxu0 0.0
  %2908 = vmatprep.subr.mxu0 0.0
  %2909 = vmatpush1.msra.mxu0 0.0
  %2910 = vmatprep.subr.mxu0 0.0
  %2911 = vmatpush1.msra.mxu0 0.0
  %2912 = vmatprep.subr.mxu0 0.0
  %2913 = vmatpush1.msra.mxu0 0.0
  %2914 = vmatprep.subr.mxu0 0.0
  %2915 = vmatpush1.msra.mxu0 0.0
  %2916 = vmatprep.subr.mxu0 0.0
  %2917 = vmatpush1.msra.mxu0 0.0
  %2918 = vmatprep.subr.mxu0 0.0
  %2919 = vmatpush1.msra.mxu0 0.0
  %2920 = vmatprep.subr.mxu0 0.0
  %2921 = vmatpush1.msra.mxu0 0.0
  %2922 = vmatprep.subr.mxu0 0.0
  %2923 = vmatpush1.msra.mxu0 0.0
  %2924 = vmatprep.subr.mxu0 0.0
  %2925 = vmatpush1.msra.mxu0 0.0
  %2926 = vmatprep.subr.mxu0 0.0
  %2927 = vmatpush1.msra.mxu0 0.0
  %2928 = vmatprep.subr.mxu0 0.0
  %2929 = vmatpush1.msra.mxu0 0.0
  %2930 = vmatprep.subr.mxu0 0.0
  %2931 = vmatpush1.msra.mxu0 %v570
  %2932 = vmatprep.subr.mxu0 0.0
  %2933 = vmatpush1.msra.mxu0 %v569
  %2934 = vmatprep.subr.mxu0 0.0
  %2935 = vmatpush2.msra.mxu0 0.0
  %2936 = vmatprep.subr.mxu0 0.0
  %2937 = vmatpush2.msra.mxu0 0.0
  %2938 = vmatprep.subr.mxu0 0.0
  %2939 = vmatpush2.msra.mxu0 0.0
  %2940 = vmatprep.subr.mxu0 0.0
  %2941 = vmatpush2.msra.mxu0 0.0
  %2942 = vmatprep.subr.mxu0 0.0
  %2943 = vmatpush2.msra.mxu0 0.0
  %2944 = vmatprep.subr.mxu0 0.0
  %2945 = vmatpush2.msra.mxu0 0.0
  %2946 = vmatprep.subr.mxu0 0.0
  %2947 = vmatpush2.msra.mxu0 0.0
  %2948 = vmatprep.subr.mxu0 0.0
  %2949 = vmatpush2.msra.mxu0 0.0
  %2950 = vmatprep.subr.mxu0 0.0
  %2951 = vmatpush2.msra.mxu0 0.0
  %2952 = vmatprep.subr.mxu0 0.0
  %2953 = vmatpush2.msra.mxu0 0.0
  %2954 = vmatprep.subr.mxu0 0.0
  %2955 = vmatpush2.msra.mxu0 0.0
  %2956 = vmatprep.subr.mxu0 0.0
  %2957 = vmatpush2.msra.mxu0 0.0
  %2958 = vmatprep.subr.mxu0 0.0
  %2959 = vmatpush2.msra.mxu0 0.0
  %2960 = vmatprep.subr.mxu0 0.0
  %2961 = vmatpush2.msra.mxu0 0.0
  %2962 = vmatprep.subr.mxu0 0.0
  %2963 = vmatpush2.msra.mxu0 0.0
  %2964 = vmatprep.subr.mxu0 0.0
  %2965 = vmatpush2.msra.mxu0 0.0
  %2966 = vmatprep.mubr.f32.mxu0 0.0
  %2967 = vmatmul.mubr.f32.gmra.mxu0 %v2897
  %v2968 = vpop.f32.mrf.mxu0
  %v2969 = vadd.f32 %v583, %v2968
  %v2970 = vpop.f32.mrf.mxu0
  %2971 = vmatprep.mubr.f32.mxu0 0.0
  %2972 = vmatmul.mubr.f32.gmra.mxu0 %v2900
  %v2973 = vpop.f32.mrf.mxu0
  %v2974 = vadd.f32 %v583, %v2973
  %v2975 = vpop.f32.mrf.mxu0
  %2976 = vdwg.mxu0
  %v2977 = vmax.f32 %v2969, 0.0
  %v2978 = vmax.f32 %v2974, 0.0
  %v2980 = vsel %vm595, %v2978, 0
  %2982 = vmatprep.subr.mxu0 0.0
  %2983 = vmatpush1.msra.mxu0 0.0
  %2984 = vmatprep.subr.mxu0 0.0
  %2985 = vmatpush1.msra.mxu0 0.0
  %2986 = vmatprep.subr.mxu0 0.0
  %2987 = vmatpush1.msra.mxu0 0.0
  %2988 = vmatprep.subr.mxu0 0.0
  %2989 = vmatpush1.msra.mxu0 0.0
  %2990 = vmatprep.subr.mxu0 0.0
  %2991 = vmatpush1.msra.mxu0 0.0
  %2992 = vmatprep.subr.mxu0 0.0
  %2993 = vmatpush1.msra.mxu0 0.0
  %2994 = vmatprep.subr.mxu0 0.0
  %2995 = vmatpush1.msra.mxu0 0.0
  %2996 = vmatprep.subr.mxu0 0.0
  %2997 = vmatpush1.msra.mxu0 0.0
  %2998 = vmatprep.subr.mxu0 0.0
  %2999 = vmatpush1.msra.mxu0 0.0
  %3000 = vmatprep.subr.mxu0 0.0
  %3001 = vmatpush1.msra.mxu0 0.0
  %3002 = vmatprep.subr.mxu0 0.0
  %3003 = vmatpush1.msra.mxu0 0.0
  %3004 = vmatprep.subr.mxu0 0.0
  %3005 = vmatpush1.msra.mxu0 0.0
  %3006 = vmatprep.subr.mxu0 0.0
  %3007 = vmatpush1.msra.mxu0 0.0
  %3008 = vmatprep.subr.mxu0 0.0
  %3009 = vmatpush1.msra.mxu0 0.0
  %3010 = vmatprep.subr.mxu0 0.0
  %3011 = vmatpush1.msra.mxu0 %v2980
  %3012 = vmatprep.subr.mxu0 0.0
  %3013 = vmatpush1.msra.mxu0 %v2977
  %3014 = vmatprep.subr.mxu0 0.0
  %3015 = vmatpush2.msra.mxu0 0.0
  %3016 = vmatprep.subr.mxu0 0.0
  %3017 = vmatpush2.msra.mxu0 0.0
  %3018 = vmatprep.subr.mxu0 0.0
  %3019 = vmatpush2.msra.mxu0 0.0
  %3020 = vmatprep.subr.mxu0 0.0
  %3021 = vmatpush2.msra.mxu0 0.0
  %3022 = vmatprep.subr.mxu0 0.0
  %3023 = vmatpush2.msra.mxu0 0.0
  %3024 = vmatprep.subr.mxu0 0.0
  %3025 = vmatpush2.msra.mxu0 0.0
  %3026 = vmatprep.subr.mxu0 0.0
  %3027 = vmatpush2.msra.mxu0 0.0
  %3028 = vmatprep.subr.mxu0 0.0
  %3029 = vmatpush2.msra.mxu0 0.0
  %3030 = vmatprep.subr.mxu0 0.0
  %3031 = vmatpush2.msra.mxu0 0.0
  %3032 = vmatprep.subr.mxu0 0.0
  %3033 = vmatpush2.msra.mxu0 0.0
  %3034 = vmatprep.subr.mxu0 0.0
  %3035 = vmatpush2.msra.mxu0 0.0
  %3036 = vmatprep.subr.mxu0 0.0
  %3037 = vmatpush2.msra.mxu0 0.0
  %3038 = vmatprep.subr.mxu0 0.0
  %3039 = vmatpush2.msra.mxu0 0.0
  %3040 = vmatprep.subr.mxu0 0.0
  %3041 = vmatpush2.msra.mxu0 0.0
  %3042 = vmatprep.subr.mxu0 0.0
  %3043 = vmatpush2.msra.mxu0 0.0
  %3044 = vmatprep.subr.mxu0 0.0
  %3045 = vmatpush2.msra.mxu0 0.0
  %3046 = vmatprep.mubr.f32.mxu0 0.0
  %3047 = vmatmul.mubr.f32.gmra.mxu0 %v587
  %v3048 = vpop.f32.mrf.mxu0
  %v3049 = vadd.f32 0.0, %v3048
  %v3050 = vpop.f32.mrf.mxu0
  %3051 = vmatprep.mubr.f32.mxu0 0.0
  %3052 = vmatmul.mubr.f32.gmra.mxu0 %v590
  %v3053 = vpop.f32.mrf.mxu0
  %v3054 = vadd.f32 0.0, %v3053
  %v3055 = vpop.f32.mrf.mxu0
  %3056 = vmatprep.mubr.f32.mxu0 0.0
  %3057 = vmatmul.mubr.f32.gmra.mxu0 %v593
  %v3058 = vpop.f32.mrf.mxu0
  %v3059 = vadd.f32 0.0, %v3058
  %v3060 = vpop.f32.mrf.mxu0
  %3061 = vdwg.mxu0
  %3062 = vmatprep.subr.mxu0 0.0
  %3063 = vmatpush1.msra.mxu0 0.0
  %3064 = vmatprep.subr.mxu0 0.0
  %3065 = vmatpush1.msra.mxu0 0.0
  %3066 = vmatprep.subr.mxu0 0.0
  %3067 = vmatpush1.msra.mxu0 0.0
  %3068 = vmatprep.subr.mxu0 0.0
  %3069 = vmatpush1.msra.mxu0 0.0
  %3070 = vmatprep.subr.mxu0 0.0
  %3071 = vmatpush1.msra.mxu0 0.0
  %3072 = vmatprep.subr.mxu0 0.0
  %3073 = vmatpush1.msra.mxu0 0.0
  %3074 = vmatprep.subr.mxu0 0.0
  %3075 = vmatpush1.msra.mxu0 0.0
  %3076 = vmatprep.subr.mxu0 0.0
  %3077 = vmatpush1.msra.mxu0 0.0
  %3078 = vmatprep.subr.mxu0 0.0
  %3079 = vmatpush1.msra.mxu0 0.0
  %3080 = vmatprep.subr.mxu0 0.0
  %3081 = vmatpush1.msra.mxu0 0.0
  %3082 = vmatprep.subr.mxu0 0.0
  %3083 = vmatpush1.msra.mxu0 0.0
  %3084 = vmatprep.subr.mxu0 0.0
  %3085 = vmatpush1.msra.mxu0 0.0
  %3086 = vmatprep.subr.mxu0 0.0
  %3087 = vmatpush1.msra.mxu0 0.0
  %3088 = vmatprep.subr.mxu0 0.0
  %3089 = vmatpush1.msra.mxu0 0.0
  %3090 = vmatprep.subr.mxu0 0.0
  %3091 = vmatpush1.msra.mxu0 %v2980
  %3092 = vmatprep.subr.mxu0 0.0
  %3093 = vmatpush1.msra.mxu0 %v2977
  %3094 = vmatprep.subr.mxu0 0.0
  %3095 = vmatpush2.msra.mxu0 0.0
  %3096 = vmatprep.subr.mxu0 0.0
  %3097 = vmatpush2.msra.mxu0 0.0
  %3098 = vmatprep.subr.mxu0 0.0
  %3099 = vmatpush2.msra.mxu0 0.0
  %3100 = vmatprep.subr.mxu0 0.0
  %3101 = vmatpush2.msra.mxu0 0.0
  %3102 = vmatprep.subr.mxu0 0.0
  %3103 = vmatpush2.msra.mxu0 0.0
  %3104 = vmatprep.subr.mxu0 0.0
  %3105 = vmatpush2.msra.mxu0 0.0
  %3106 = vmatprep.subr.mxu0 0.0
  %3107 = vmatpush2.msra.mxu0 0.0
  %3108 = vmatprep.subr.mxu0 0.0
  %3109 = vmatpush2.msra.mxu0 0.0
  %3110 = vmatprep.subr.mxu0 0.0
  %3111 = vmatpush2.msra.mxu0 0.0
  %3112 = vmatprep.subr.mxu0 0.0
  %3113 = vmatpush2.msra.mxu0 0.0
  %3114 = vmatprep.subr.mxu0 0.0
  %3115 = vmatpush2.msra.mxu0 0.0
  %3116 = vmatprep.subr.mxu0 0.0
  %3117 = vmatpush2.msra.mxu0 0.0
  %3118 = vmatprep.subr.mxu0 0.0
  %3119 = vmatpush2.msra.mxu0 0.0
  %3120 = vmatprep.subr.mxu0 0.0
  %3121 = vmatpush2.msra.mxu0 0.0
  %3122 = vmatprep.subr.mxu0 0.0
  %3123 = vmatpush2.msra.mxu0 0.0
  %3124 = vmatprep.subr.mxu0 0.0
  %3125 = vmatpush2.msra.mxu0 0.0
  %3126 = vmatprep.mubr.f32.mxu0 0.0
  %3127 = vmatmul.mubr.f32.gmra.mxu0 %v680
  %v3128 = vpop.f32.mrf.mxu0
  %v3129 = vadd.f32 0.0, %v3128
  %v3130 = vpop.f32.mrf.mxu0
  %3131 = vmatprep.mubr.f32.mxu0 0.0
  %3132 = vmatmul.mubr.f32.gmra.mxu0 %v683
  %v3133 = vpop.f32.mrf.mxu0
  %v3134 = vadd.f32 0.0, %v3133
  %v3135 = vpop.f32.mrf.mxu0
  %3136 = vmatprep.mubr.f32.mxu0 0.0
  %3137 = vmatmul.mubr.f32.gmra.mxu0 %v686
  %v3138 = vpop.f32.mrf.mxu0
  %v3139 = vadd.f32 0.0, %v3138
  %v3140 = vpop.f32.mrf.mxu0
  %3141 = vdwg.mxu0
  %v3143 = vsel %vm248, %v3049, 0
  %v3146 = vsel %vm248, %v3054, 0
  %v3149 = vsel %vm248, %v3059, 0
  %3151 = vmatprep.subr.mxu0 0.0
  %3152 = vmatpush1.msra.mxu0 0.0
  %3153 = vmatprep.subr.mxu0 0.0
  %3154 = vmatpush1.msra.mxu0 0.0
  %3155 = vmatprep.subr.mxu0 0.0
  %3156 = vmatpush1.msra.mxu0 0.0
  %3157 = vmatprep.subr.mxu0 0.0
  %3158 = vmatpush1.msra.mxu0 0.0
  %3159 = vmatprep.subr.mxu0 0.0
  %3160 = vmatpush1.msra.mxu0 0.0
  %3161 = vmatprep.subr.mxu0 0.0
  %3162 = vmatpush1.msra.mxu0 0.0
  %3163 = vmatprep.subr.mxu0 0.0
  %3164 = vmatpush1.msra.mxu0 0.0
  %3165 = vmatprep.subr.mxu0 0.0
  %3166 = vmatpush1.msra.mxu0 0.0
  %3167 = vmatprep.subr.mxu0 0.0
  %3168 = vmatpush1.msra.mxu0 0.0
  %3169 = vmatprep.subr.mxu0 0.0
  %3170 = vmatpush1.msra.mxu0 0.0
  %3171 = vmatprep.subr.mxu0 0.0
  %3172 = vmatpush1.msra.mxu0 0.0
  %3173 = vmatprep.subr.mxu0 0.0
  %3174 = vmatpush1.msra.mxu0 0.0
  %3175 = vmatprep.subr.mxu0 0.0
  %3176 = vmatpush1.msra.mxu0 0.0
  %3177 = vmatprep.subr.mxu0 0.0
  %3178 = vmatpush1.msra.mxu0 0.0
  %3179 = vmatprep.subr.mxu0 0.0
  %3180 = vmatpush1.msra.mxu0 %v552
  %3181 = vmatprep.subr.mxu0 0.0
  %3182 = vmatpush1.msra.mxu0 %v551
  %3183 = vmatprep.subr.mxu0 0.0
  %3184 = vmatpush2.msra.mxu0 0.0
  %3185 = vmatprep.subr.mxu0 0.0
  %3186 = vmatpush2.msra.mxu0 0.0
  %3187 = vmatprep.subr.mxu0 0.0
  %3188 = vmatpush2.msra.mxu0 0.0
  %3189 = vmatprep.subr.mxu0 0.0
  %3190 = vmatpush2.msra.mxu0 0.0
  %3191 = vmatprep.subr.mxu0 0.0
  %3192 = vmatpush2.msra.mxu0 0.0
  %3193 = vmatprep.subr.mxu0 0.0
  %3194 = vmatpush2.msra.mxu0 0.0
  %3195 = vmatprep.subr.mxu0 0.0
  %3196 = vmatpush2.msra.mxu0 0.0
  %3197 = vmatprep.subr.mxu0 0.0
  %3198 = vmatpush2.msra.mxu0 0.0
  %3199 = vmatprep.subr.mxu0 0.0
  %3200 = vmatpush2.msra.mxu0 0.0
  %3201 = vmatprep.subr.mxu0 0.0
  %3202 = vmatpush2.msra.mxu0 0.0
  %3203 = vmatprep.subr.mxu0 0.0
  %3204 = vmatpush2.msra.mxu0 0.0
  %3205 = vmatprep.subr.mxu0 0.0
  %3206 = vmatpush2.msra.mxu0 0.0
  %3207 = vmatprep.subr.mxu0 0.0
  %3208 = vmatpush2.msra.mxu0 0.0
  %3209 = vmatprep.subr.mxu0 0.0
  %3210 = vmatpush2.msra.mxu0 0.0
  %3211 = vmatprep.subr.mxu0 0.0
  %3212 = vmatpush2.msra.mxu0 0.0
  %3213 = vmatprep.subr.mxu0 0.0
  %3214 = vmatpush2.msra.mxu0 0.0
  %3215 = vmatprep.mubr.f32.mxu0 0.0
  %3216 = vmatmul.mubr.f32.gmra.mxu0 %v3143
  %v3217 = vpop.f32.mrf.mxu0
  %v3218 = vadd.f32 0.0, %v3217
  %v3219 = vpop.f32.mrf.mxu0
  %3220 = vmatprep.mubr.f32.mxu0 0.0
  %3221 = vmatmul.mubr.f32.gmra.mxu0 %v3146
  %v3222 = vpop.f32.mrf.mxu0
  %v3223 = vadd.f32 0.0, %v3222
  %v3224 = vpop.f32.mrf.mxu0
  %3225 = vmatprep.mubr.f32.mxu0 0.0
  %3226 = vmatmul.mubr.f32.gmra.mxu0 %v3149
  %v3227 = vpop.f32.mrf.mxu0
  %v3228 = vadd.f32 0.0, %v3227
  %v3229 = vpop.f32.mrf.mxu0
  %3230 = vdwg.mxu0
  %v3231 = vadd.f32 %v1202, %v3218
  %v3232 = vadd.f32 %v1203, %v3223
  %v3233 = vadd.f32 %v1204, %v3228
  %v3235 = vsel %vm248, %v2575, 0
  %v3238 = vsel %vm248, %v2576, 0
  %v3241 = vsel %vm248, %v2577, 0
  %3243 = vmatprep.subr.mxu0 0.0
  %3244 = vmatpush1.msra.mxu0 0.0
  %3245 = vmatprep.subr.mxu0 0.0
  %3246 = vmatpush1.msra.mxu0 0.0
  %3247 = vmatprep.subr.mxu0 0.0
  %3248 = vmatpush1.msra.mxu0 0.0
  %3249 = vmatprep.subr.mxu0 0.0
  %3250 = vmatpush1.msra.mxu0 0.0
  %3251 = vmatprep.subr.mxu0 0.0
  %3252 = vmatpush1.msra.mxu0 0.0
  %3253 = vmatprep.subr.mxu0 0.0
  %3254 = vmatpush1.msra.mxu0 0.0
  %3255 = vmatprep.subr.mxu0 0.0
  %3256 = vmatpush1.msra.mxu0 0.0
  %3257 = vmatprep.subr.mxu0 0.0
  %3258 = vmatpush1.msra.mxu0 0.0
  %3259 = vmatprep.subr.mxu0 0.0
  %3260 = vmatpush1.msra.mxu0 0.0
  %3261 = vmatprep.subr.mxu0 0.0
  %3262 = vmatpush1.msra.mxu0 0.0
  %3263 = vmatprep.subr.mxu0 0.0
  %3264 = vmatpush1.msra.mxu0 0.0
  %3265 = vmatprep.subr.mxu0 0.0
  %3266 = vmatpush1.msra.mxu0 0.0
  %3267 = vmatprep.subr.mxu0 0.0
  %3268 = vmatpush1.msra.mxu0 0.0
  %3269 = vmatprep.subr.mxu0 0.0
  %3270 = vmatpush1.msra.mxu0 0.0
  %3271 = vmatprep.subr.mxu0 0.0
  %3272 = vmatpush1.msra.mxu0 %v556
  %3273 = vmatprep.subr.mxu0 0.0
  %3274 = vmatpush1.msra.mxu0 %v555
  %3275 = vmatprep.subr.mxu0 0.0
  %3276 = vmatpush2.msra.mxu0 0.0
  %3277 = vmatprep.subr.mxu0 0.0
  %3278 = vmatpush2.msra.mxu0 0.0
  %3279 = vmatprep.subr.mxu0 0.0
  %3280 = vmatpush2.msra.mxu0 0.0
  %3281 = vmatprep.subr.mxu0 0.0
  %3282 = vmatpush2.msra.mxu0 0.0
  %3283 = vmatprep.subr.mxu0 0.0
  %3284 = vmatpush2.msra.mxu0 0.0
  %3285 = vmatprep.subr.mxu0 0.0
  %3286 = vmatpush2.msra.mxu0 0.0
  %3287 = vmatprep.subr.mxu0 0.0
  %3288 = vmatpush2.msra.mxu0 0.0
  %3289 = vmatprep.subr.mxu0 0.0
  %3290 = vmatpush2.msra.mxu0 0.0
  %3291 = vmatprep.subr.mxu0 0.0
  %3292 = vmatpush2.msra.mxu0 0.0
  %3293 = vmatprep.subr.mxu0 0.0
  %3294 = vmatpush2.msra.mxu0 0.0
  %3295 = vmatprep.subr.mxu0 0.0
  %3296 = vmatpush2.msra.mxu0 0.0
  %3297 = vmatprep.subr.mxu0 0.0
  %3298 = vmatpush2.msra.mxu0 0.0
  %3299 = vmatprep.subr.mxu0 0.0
  %3300 = vmatpush2.msra.mxu0 0.0
  %3301 = vmatprep.subr.mxu0 0.0
  %3302 = vmatpush2.msra.mxu0 0.0
  %3303 = vmatprep.subr.mxu0 0.0
  %3304 = vmatpush2.msra.mxu0 0.0
  %3305 = vmatprep.subr.mxu0 0.0
  %3306 = vmatpush2.msra.mxu0 0.0
  %3307 = vmatprep.mubr.f32.mxu0 0.0
  %3308 = vmatmul.mubr.f32.gmra.mxu0 %v3235
  %v3309 = vpop.f32.mrf.mxu0
  %v3310 = vadd.f32 0.0, %v3309
  %v3311 = vpop.f32.mrf.mxu0
  %3312 = vmatprep.mubr.f32.mxu0 0.0
  %3313 = vmatmul.mubr.f32.gmra.mxu0 %v3238
  %v3314 = vpop.f32.mrf.mxu0
  %v3315 = vadd.f32 0.0, %v3314
  %v3316 = vpop.f32.mrf.mxu0
  %3317 = vmatprep.mubr.f32.mxu0 0.0
  %3318 = vmatmul.mubr.f32.gmra.mxu0 %v3241
  %v3319 = vpop.f32.mrf.mxu0
  %v3320 = vadd.f32 0.0, %v3319
  %v3321 = vpop.f32.mrf.mxu0
  %3322 = vdwg.mxu0
  %v3323 = vadd.f32 %v3231, %v3310
  %v3324 = vadd.f32 %v3232, %v3315
  %v3325 = vadd.f32 %v3233, %v3320
  %v3327 = vsel %vm248, %v3129, 0
  %v3330 = vsel %vm248, %v3134, 0
  %v3333 = vsel %vm248, %v3139, 0
  %3335 = vmatprep.subr.mxu0 0.0
  %3336 = vmatpush1.msra.mxu0 0.0
  %3337 = vmatprep.subr.mxu0 0.0
  %3338 = vmatpush1.msra.mxu0 0.0
  %3339 = vmatprep.subr.mxu0 0.0
  %3340 = vmatpush1.msra.mxu0 0.0
  %3341 = vmatprep.subr.mxu0 0.0
  %3342 = vmatpush1.msra.mxu0 0.0
  %3343 = vmatprep.subr.mxu0 0.0
  %3344 = vmatpush1.msra.mxu0 0.0
  %3345 = vmatprep.subr.mxu0 0.0
  %3346 = vmatpush1.msra.mxu0 0.0
  %3347 = vmatprep.subr.mxu0 0.0
  %3348 = vmatpush1.msra.mxu0 0.0
  %3349 = vmatprep.subr.mxu0 0.0
  %3350 = vmatpush1.msra.mxu0 0.0
  %3351 = vmatprep.subr.mxu0 0.0
  %3352 = vmatpush1.msra.mxu0 0.0
  %3353 = vmatprep.subr.mxu0 0.0
  %3354 = vmatpush1.msra.mxu0 0.0
  %3355 = vmatprep.subr.mxu0 0.0
  %3356 = vmatpush1.msra.mxu0 0.0
  %3357 = vmatprep.subr.mxu0 0.0
  %3358 = vmatpush1.msra.mxu0 0.0
  %3359 = vmatprep.subr.mxu0 0.0
  %3360 = vmatpush1.msra.mxu0 0.0
  %3361 = vmatprep.subr.mxu0 0.0
  %3362 = vmatpush1.msra.mxu0 0.0
  %3363 = vmatprep.subr.mxu0 0.0
  %3364 = vmatpush1.msra.mxu0 %v560
  %3365 = vmatprep.subr.mxu0 0.0
  %3366 = vmatpush1.msra.mxu0 %v559
  %3367 = vmatprep.subr.mxu0 0.0
  %3368 = vmatpush2.msra.mxu0 0.0
  %3369 = vmatprep.subr.mxu0 0.0
  %3370 = vmatpush2.msra.mxu0 0.0
  %3371 = vmatprep.subr.mxu0 0.0
  %3372 = vmatpush2.msra.mxu0 0.0
  %3373 = vmatprep.subr.mxu0 0.0
  %3374 = vmatpush2.msra.mxu0 0.0
  %3375 = vmatprep.subr.mxu0 0.0
  %3376 = vmatpush2.msra.mxu0 0.0
  %3377 = vmatprep.subr.mxu0 0.0
  %3378 = vmatpush2.msra.mxu0 0.0
  %3379 = vmatprep.subr.mxu0 0.0
  %3380 = vmatpush2.msra.mxu0 0.0
  %3381 = vmatprep.subr.mxu0 0.0
  %3382 = vmatpush2.msra.mxu0 0.0
  %3383 = vmatprep.subr.mxu0 0.0
  %3384 = vmatpush2.msra.mxu0 0.0
  %3385 = vmatprep.subr.mxu0 0.0
  %3386 = vmatpush2.msra.mxu0 0.0
  %3387 = vmatprep.subr.mxu0 0.0
  %3388 = vmatpush2.msra.mxu0 0.0
  %3389 = vmatprep.subr.mxu0 0.0
  %3390 = vmatpush2.msra.mxu0 0.0
  %3391 = vmatprep.subr.mxu0 0.0
  %3392 = vmatpush2.msra.mxu0 0.0
  %3393 = vmatprep.subr.mxu0 0.0
  %3394 = vmatpush2.msra.mxu0 0.0
  %3395 = vmatprep.subr.mxu0 0.0
  %3396 = vmatpush2.msra.mxu0 0.0
  %3397 = vmatprep.subr.mxu0 0.0
  %3398 = vmatpush2.msra.mxu0 0.0
  %3399 = vmatprep.mubr.f32.mxu0 0.0
  %3400 = vmatmul.mubr.f32.gmra.mxu0 %v3327
  %v3401 = vpop.f32.mrf.mxu0
  %v3402 = vadd.f32 0.0, %v3401
  %v3403 = vpop.f32.mrf.mxu0
  %3404 = vmatprep.mubr.f32.mxu0 0.0
  %3405 = vmatmul.mubr.f32.gmra.mxu0 %v3330
  %v3406 = vpop.f32.mrf.mxu0
  %v3407 = vadd.f32 0.0, %v3406
  %v3408 = vpop.f32.mrf.mxu0
  %3409 = vmatprep.mubr.f32.mxu0 0.0
  %3410 = vmatmul.mubr.f32.gmra.mxu0 %v3333
  %v3411 = vpop.f32.mrf.mxu0
  %v3412 = vadd.f32 0.0, %v3411
  %v3413 = vpop.f32.mrf.mxu0
  %3414 = vdwg.mxu0
  %v3415 = vadd.f32 %v3323, %v3402
  %v3416 = vadd.f32 %v3324, %v3407
  %v3417 = vadd.f32 %v3325, %v3412
  %v3418 = vmax.f32 %v3415, 0.0
  %v3419 = vmax.f32 %v3416, 0.0
  %v3420 = vmax.f32 %v3417, 0.0
  %v3422 = vsel %vm248, %v3418, 0
  %v3425 = vsel %vm248, %v3419, 0
  %v3428 = vsel %vm248, %v3420, 0
  %3430 = vmatprep.subr.mxu0 0.0
  %3431 = vmatpush1.msra.mxu0 0.0
  %3432 = vmatprep.subr.mxu0 0.0
  %3433 = vmatpush1.msra.mxu0 0.0
  %3434 = vmatprep.subr.mxu0 0.0
  %3435 = vmatpush1.msra.mxu0 0.0
  %3436 = vmatprep.subr.mxu0 0.0
  %3437 = vmatpush1.msra.mxu0 0.0
  %3438 = vmatprep.subr.mxu0 0.0
  %3439 = vmatpush1.msra.mxu0 0.0
  %3440 = vmatprep.subr.mxu0 0.0
  %3441 = vmatpush1.msra.mxu0 0.0
  %3442 = vmatprep.subr.mxu0 0.0
  %3443 = vmatpush1.msra.mxu0 0.0
  %3444 = vmatprep.subr.mxu0 0.0
  %3445 = vmatpush1.msra.mxu0 0.0
  %3446 = vmatprep.subr.mxu0 0.0
  %3447 = vmatpush1.msra.mxu0 0.0
  %3448 = vmatprep.subr.mxu0 0.0
  %3449 = vmatpush1.msra.mxu0 0.0
  %3450 = vmatprep.subr.mxu0 0.0
  %3451 = vmatpush1.msra.mxu0 0.0
  %3452 = vmatprep.subr.mxu0 0.0
  %3453 = vmatpush1.msra.mxu0 0.0
  %3454 = vmatprep.subr.mxu0 0.0
  %3455 = vmatpush1.msra.mxu0 0.0
  %3456 = vmatprep.subr.mxu0 0.0
  %3457 = vmatpush1.msra.mxu0 0.0
  %3458 = vmatprep.subr.mxu0 0.0
  %3459 = vmatpush1.msra.mxu0 %v568
  %3460 = vmatprep.subr.mxu0 0.0
  %3461 = vmatpush1.msra.mxu0 %v567
  %3462 = vmatprep.subr.mxu0 0.0
  %3463 = vmatpush2.msra.mxu0 0.0
  %3464 = vmatprep.subr.mxu0 0.0
  %3465 = vmatpush2.msra.mxu0 0.0
  %3466 = vmatprep.subr.mxu0 0.0
  %3467 = vmatpush2.msra.mxu0 0.0
  %3468 = vmatprep.subr.mxu0 0.0
  %3469 = vmatpush2.msra.mxu0 0.0
  %3470 = vmatprep.subr.mxu0 0.0
  %3471 = vmatpush2.msra.mxu0 0.0
  %3472 = vmatprep.subr.mxu0 0.0
  %3473 = vmatpush2.msra.mxu0 0.0
  %3474 = vmatprep.subr.mxu0 0.0
  %3475 = vmatpush2.msra.mxu0 0.0
  %3476 = vmatprep.subr.mxu0 0.0
  %3477 = vmatpush2.msra.mxu0 0.0
  %3478 = vmatprep.subr.mxu0 0.0
  %3479 = vmatpush2.msra.mxu0 0.0
  %3480 = vmatprep.subr.mxu0 0.0
  %3481 = vmatpush2.msra.mxu0 0.0
  %3482 = vmatprep.subr.mxu0 0.0
  %3483 = vmatpush2.msra.mxu0 0.0
  %3484 = vmatprep.subr.mxu0 0.0
  %3485 = vmatpush2.msra.mxu0 0.0
  %3486 = vmatprep.subr.mxu0 0.0
  %3487 = vmatpush2.msra.mxu0 0.0
  %3488 = vmatprep.subr.mxu0 0.0
  %3489 = vmatpush2.msra.mxu0 0.0
  %3490 = vmatprep.subr.mxu0 0.0
  %3491 = vmatpush2.msra.mxu0 0.0
  %3492 = vmatprep.subr.mxu0 0.0
  %3493 = vmatpush2.msra.mxu0 0.0
  %3494 = vmatprep.mubr.f32.mxu0 0.0
  %3495 = vmatmul.mubr.f32.gmra.mxu0 %v3422
  %v3496 = vpop.f32.mrf.mxu0
  %v3497 = vadd.f32 %v576, %v3496
  %v3498 = vpop.f32.mrf.mxu0
  %3499 = vmatprep.mubr.f32.mxu0 0.0
  %3500 = vmatmul.mubr.f32.gmra.mxu0 %v3425
  %v3501 = vpop.f32.mrf.mxu0
  %v3502 = vadd.f32 %v576, %v3501
  %v3503 = vpop.f32.mrf.mxu0
  %3504 = vmatprep.mubr.f32.mxu0 0.0
  %3505 = vmatmul.mubr.f32.gmra.mxu0 %v3428
  %v3506 = vpop.f32.mrf.mxu0
  %v3507 = vadd.f32 %v576, %v3506
  %v3508 = vpop.f32.mrf.mxu0
  %3509 = vdwg.mxu0
  %v3510 = vmax.f32 %v3497, 0.0
  %v3511 = vmax.f32 %v3502, 0.0
  %v3512 = vmax.f32 %v3507, 0.0
  %3513 = vmatprep.subr.mxu0 0.0
  %3514 = vmatpush1.msra.mxu0 0.0
  %3515 = vmatprep.subr.mxu0 0.0
  %3516 = vmatpush1.msra.mxu0 0.0
  %3517 = vmatprep.subr.mxu0 0.0
  %3518 = vmatpush1.msra.mxu0 0.0
  %3519 = vmatprep.subr.mxu0 0.0
  %3520 = vmatpush1.msra.mxu0 0.0
  %3521 = vmatprep.subr.mxu0 0.0
  %3522 = vmatpush1.msra.mxu0 0.0
  %3523 = vmatprep.subr.mxu0 0.0
  %3524 = vmatpush1.msra.mxu0 0.0
  %3525 = vmatprep.subr.mxu0 0.0
  %3526 = vmatpush1.msra.mxu0 0.0
  %3527 = vmatprep.subr.mxu0 0.0
  %3528 = vmatpush1.msra.mxu0 0.0
  %3529 = vmatprep.subr.mxu0 0.0
  %3530 = vmatpush1.msra.mxu0 0.0
  %3531 = vmatprep.subr.mxu0 0.0
  %3532 = vmatpush1.msra.mxu0 0.0
  %3533 = vmatprep.subr.mxu0 0.0
  %3534 = vmatpush1.msra.mxu0 0.0
  %3535 = vmatprep.subr.mxu0 0.0
  %3536 = vmatpush1.msra.mxu0 0.0
  %3537 = vmatprep.subr.mxu0 0.0
  %3538 = vmatpush1.msra.mxu0 0.0
  %3539 = vmatprep.subr.mxu0 0.0
  %3540 = vmatpush1.msra.mxu0 %v3512
  %3541 = vmatprep.subr.mxu0 0.0
  %3542 = vmatpush1.msra.mxu0 %v3511
  %3543 = vmatprep.subr.mxu0 0.0
  %3544 = vmatpush1.msra.mxu0 %v3510
  %3545 = vmatprep.subr.mxu0 0.0
  %3546 = vmatpush2.msra.mxu0 0.0
  %3547 = vmatprep.subr.mxu0 0.0
  %3548 = vmatpush2.msra.mxu0 0.0
  %3549 = vmatprep.subr.mxu0 0.0
  %3550 = vmatpush2.msra.mxu0 0.0
  %3551 = vmatprep.subr.mxu0 0.0
  %3552 = vmatpush2.msra.mxu0 0.0
  %3553 = vmatprep.subr.mxu0 0.0
  %3554 = vmatpush2.msra.mxu0 0.0
  %3555 = vmatprep.subr.mxu0 0.0
  %3556 = vmatpush2.msra.mxu0 0.0
  %3557 = vmatprep.subr.mxu0 0.0
  %3558 = vmatpush2.msra.mxu0 0.0
  %3559 = vmatprep.subr.mxu0 0.0
  %3560 = vmatpush2.msra.mxu0 0.0
  %3561 = vmatprep.subr.mxu0 0.0
  %3562 = vmatpush2.msra.mxu0 0.0
  %3563 = vmatprep.subr.mxu0 0.0
  %3564 = vmatpush2.msra.mxu0 0.0
  %3565 = vmatprep.subr.mxu0 0.0
  %3566 = vmatpush2.msra.mxu0 0.0
  %3567 = vmatprep.subr.mxu0 0.0
  %3568 = vmatpush2.msra.mxu0 0.0
  %3569 = vmatprep.subr.mxu0 0.0
  %3570 = vmatpush2.msra.mxu0 0.0
  %3571 = vmatprep.subr.mxu0 0.0
  %3572 = vmatpush2.msra.mxu0 0.0
  %3573 = vmatprep.subr.mxu0 0.0
  %3574 = vmatpush2.msra.mxu0 0.0
  %3575 = vmatprep.subr.mxu0 0.0
  %3576 = vmatpush2.msra.mxu0 0.0
  %3577 = vmatprep.mubr.f32.mxu0 0.0
  %3578 = vmatmul.mubr.f32.gmra.mxu0 %v770
  %v3579 = vpop.f32.mrf.mxu0
  %v3580 = vadd.f32 0.0, %v3579
  %v3581 = vpop.f32.mrf.mxu0
  %3582 = vmatprep.mubr.f32.mxu0 0.0
  %3583 = vmatmul.mubr.f32.gmra.mxu0 %v773
  %v3584 = vpop.f32.mrf.mxu0
  %v3585 = vadd.f32 0.0, %v3584
  %v3586 = vpop.f32.mrf.mxu0
  %3587 = vdwg.mxu0
  %3588 = vmatprep.subr.mxu0 0.0
  %3589 = vmatpush1.msra.mxu0 0.0
  %3590 = vmatprep.subr.mxu0 0.0
  %3591 = vmatpush1.msra.mxu0 0.0
  %3592 = vmatprep.subr.mxu0 0.0
  %3593 = vmatpush1.msra.mxu0 0.0
  %3594 = vmatprep.subr.mxu0 0.0
  %3595 = vmatpush1.msra.mxu0 0.0
  %3596 = vmatprep.subr.mxu0 0.0
  %3597 = vmatpush1.msra.mxu0 0.0
  %3598 = vmatprep.subr.mxu0 0.0
  %3599 = vmatpush1.msra.mxu0 0.0
  %3600 = vmatprep.subr.mxu0 0.0
  %3601 = vmatpush1.msra.mxu0 0.0
  %3602 = vmatprep.subr.mxu0 0.0
  %3603 = vmatpush1.msra.mxu0 0.0
  %3604 = vmatprep.subr.mxu0 0.0
  %3605 = vmatpush1.msra.mxu0 0.0
  %3606 = vmatprep.subr.mxu0 0.0
  %3607 = vmatpush1.msra.mxu0 0.0
  %3608 = vmatprep.subr.mxu0 0.0
  %3609 = vmatpush1.msra.mxu0 0.0
  %3610 = vmatprep.subr.mxu0 0.0
  %3611 = vmatpush1.msra.mxu0 0.0
  %3612 = vmatprep.subr.mxu0 0.0
  %3613 = vmatpush1.msra.mxu0 0.0
  %3614 = vmatprep.subr.mxu0 0.0
  %3615 = vmatpush1.msra.mxu0 0.0
  %3616 = vmatprep.subr.mxu0 0.0
  %3617 = vmatpush1.msra.mxu0 %v2980
  %3618 = vmatprep.subr.mxu0 0.0
  %3619 = vmatpush1.msra.mxu0 %v2977
  %3620 = vmatprep.subr.mxu0 0.0
  %3621 = vmatpush2.msra.mxu0 0.0
  %3622 = vmatprep.subr.mxu0 0.0
  %3623 = vmatpush2.msra.mxu0 0.0
  %3624 = vmatprep.subr.mxu0 0.0
  %3625 = vmatpush2.msra.mxu0 0.0
  %3626 = vmatprep.subr.mxu0 0.0
  %3627 = vmatpush2.msra.mxu0 0.0
  %3628 = vmatprep.subr.mxu0 0.0
  %3629 = vmatpush2.msra.mxu0 0.0
  %3630 = vmatprep.subr.mxu0 0.0
  %3631 = vmatpush2.msra.mxu0 0.0
  %3632 = vmatprep.subr.mxu0 0.0
  %3633 = vmatpush2.msra.mxu0 0.0
  %3634 = vmatprep.subr.mxu0 0.0
  %3635 = vmatpush2.msra.mxu0 0.0
  %3636 = vmatprep.subr.mxu0 0.0
  %3637 = vmatpush2.msra.mxu0 0.0
  %3638 = vmatprep.subr.mxu0 0.0
  %3639 = vmatpush2.msra.mxu0 0.0
  %3640 = vmatprep.subr.mxu0 0.0
  %3641 = vmatpush2.msra.mxu0 0.0
  %3642 = vmatprep.subr.mxu0 0.0
  %3643 = vmatpush2.msra.mxu0 0.0
  %3644 = vmatprep.subr.mxu0 0.0
  %3645 = vmatpush2.msra.mxu0 0.0
  %3646 = vmatprep.subr.mxu0 0.0
  %3647 = vmatpush2.msra.mxu0 0.0
  %3648 = vmatprep.subr.mxu0 0.0
  %3649 = vmatpush2.msra.mxu0 0.0
  %3650 = vmatprep.subr.mxu0 0.0
  %3651 = vmatpush2.msra.mxu0 0.0
  %3652 = vmatprep.mubr.f32.mxu0 0.0
  %3653 = vmatmul.mubr.f32.gmra.mxu0 %v1713
  %v3654 = vpop.f32.mrf.mxu0
  %v3655 = vadd.f32 0.0, %v3654
  %v3656 = vpop.f32.mrf.mxu0
  %3657 = vmatprep.mubr.f32.mxu0 0.0
  %3658 = vmatmul.mubr.f32.gmra.mxu0 %v1716
  %v3659 = vpop.f32.mrf.mxu0
  %v3660 = vadd.f32 0.0, %v3659
  %v3661 = vpop.f32.mrf.mxu0
  %3662 = vdwg.mxu0
  %v3664 = vsel %vm248, %v3655, 0
  %v3667 = vsel %vm248, %v3660, 0
  %3669 = vmatprep.subr.mxu0 0.0
  %3670 = vmatpush1.msra.mxu0 0.0
  %3671 = vmatprep.subr.mxu0 0.0
  %3672 = vmatpush1.msra.mxu0 0.0
  %3673 = vmatprep.subr.mxu0 0.0
  %3674 = vmatpush1.msra.mxu0 0.0
  %3675 = vmatprep.subr.mxu0 0.0
  %3676 = vmatpush1.msra.mxu0 0.0
  %3677 = vmatprep.subr.mxu0 0.0
  %3678 = vmatpush1.msra.mxu0 0.0
  %3679 = vmatprep.subr.mxu0 0.0
  %3680 = vmatpush1.msra.mxu0 0.0
  %3681 = vmatprep.subr.mxu0 0.0
  %3682 = vmatpush1.msra.mxu0 0.0
  %3683 = vmatprep.subr.mxu0 0.0
  %3684 = vmatpush1.msra.mxu0 0.0
  %3685 = vmatprep.subr.mxu0 0.0
  %3686 = vmatpush1.msra.mxu0 0.0
  %3687 = vmatprep.subr.mxu0 0.0
  %3688 = vmatpush1.msra.mxu0 0.0
  %3689 = vmatprep.subr.mxu0 0.0
  %3690 = vmatpush1.msra.mxu0 0.0
  %3691 = vmatprep.subr.mxu0 0.0
  %3692 = vmatpush1.msra.mxu0 0.0
  %3693 = vmatprep.subr.mxu0 0.0
  %3694 = vmatpush1.msra.mxu0 0.0
  %3695 = vmatprep.subr.mxu0 0.0
  %3696 = vmatpush1.msra.mxu0 0.0
  %3697 = vmatprep.subr.mxu0 0.0
  %3698 = vmatpush1.msra.mxu0 %v564
  %3699 = vmatprep.subr.mxu0 0.0
  %3700 = vmatpush1.msra.mxu0 %v563
  %3701 = vmatprep.subr.mxu0 0.0
  %3702 = vmatpush2.msra.mxu0 0.0
  %3703 = vmatprep.subr.mxu0 0.0
  %3704 = vmatpush2.msra.mxu0 0.0
  %3705 = vmatprep.subr.mxu0 0.0
  %3706 = vmatpush2.msra.mxu0 0.0
  %3707 = vmatprep.subr.mxu0 0.0
  %3708 = vmatpush2.msra.mxu0 0.0
  %3709 = vmatprep.subr.mxu0 0.0
  %3710 = vmatpush2.msra.mxu0 0.0
  %3711 = vmatprep.subr.mxu0 0.0
  %3712 = vmatpush2.msra.mxu0 0.0
  %3713 = vmatprep.subr.mxu0 0.0
  %3714 = vmatpush2.msra.mxu0 0.0
  %3715 = vmatprep.subr.mxu0 0.0
  %3716 = vmatpush2.msra.mxu0 0.0
  %3717 = vmatprep.subr.mxu0 0.0
  %3718 = vmatpush2.msra.mxu0 0.0
  %3719 = vmatprep.subr.mxu0 0.0
  %3720 = vmatpush2.msra.mxu0 0.0
  %3721 = vmatprep.subr.mxu0 0.0
  %3722 = vmatpush2.msra.mxu0 0.0
  %3723 = vmatprep.subr.mxu0 0.0
  %3724 = vmatpush2.msra.mxu0 0.0
  %3725 = vmatprep.subr.mxu0 0.0
  %3726 = vmatpush2.msra.mxu0 0.0
  %3727 = vmatprep.subr.mxu0 0.0
  %3728 = vmatpush2.msra.mxu0 0.0
  %3729 = vmatprep.subr.mxu0 0.0
  %3730 = vmatpush2.msra.mxu0 0.0
  %3731 = vmatprep.subr.mxu0 0.0
  %3732 = vmatpush2.msra.mxu0 0.0
  %3733 = vmatprep.mubr.f32.mxu0 0.0
  %3734 = vmatmul.mubr.f32.gmra.mxu0 %v3664
  %v3735 = vpop.f32.mrf.mxu0
  %v3736 = vadd.f32 0.0, %v3735
  %v3737 = vpop.f32.mrf.mxu0
  %3738 = vmatprep.mubr.f32.mxu0 0.0
  %3739 = vmatmul.mubr.f32.gmra.mxu0 %v3667
  %v3740 = vpop.f32.mrf.mxu0
  %v3741 = vadd.f32 0.0, %v3740
  %v3742 = vpop.f32.mrf.mxu0
  %3743 = vdwg.mxu0
  %v3744 = vadd.f32 %v1285, %v3736
  %v3745 = vadd.f32 %v1290, %v3741
  %v3747 = vsel %vm248, %v3580, 0
  %v3750 = vsel %vm248, %v3585, 0
  %3752 = vmatprep.subr.mxu0 0.0
  %3753 = vmatpush1.msra.mxu0 0.0
  %3754 = vmatprep.subr.mxu0 0.0
  %3755 = vmatpush1.msra.mxu0 0.0
  %3756 = vmatprep.subr.mxu0 0.0
  %3757 = vmatpush1.msra.mxu0 0.0
  %3758 = vmatprep.subr.mxu0 0.0
  %3759 = vmatpush1.msra.mxu0 0.0
  %3760 = vmatprep.subr.mxu0 0.0
  %3761 = vmatpush1.msra.mxu0 0.0
  %3762 = vmatprep.subr.mxu0 0.0
  %3763 = vmatpush1.msra.mxu0 0.0
  %3764 = vmatprep.subr.mxu0 0.0
  %3765 = vmatpush1.msra.mxu0 0.0
  %3766 = vmatprep.subr.mxu0 0.0
  %3767 = vmatpush1.msra.mxu0 0.0
  %3768 = vmatprep.subr.mxu0 0.0
  %3769 = vmatpush1.msra.mxu0 0.0
  %3770 = vmatprep.subr.mxu0 0.0
  %3771 = vmatpush1.msra.mxu0 0.0
  %3772 = vmatprep.subr.mxu0 0.0
  %3773 = vmatpush1.msra.mxu0 0.0
  %3774 = vmatprep.subr.mxu0 0.0
  %3775 = vmatpush1.msra.mxu0 0.0
  %3776 = vmatprep.subr.mxu0 0.0
  %3777 = vmatpush1.msra.mxu0 0.0
  %3778 = vmatprep.subr.mxu0 0.0
  %3779 = vmatpush1.msra.mxu0 0.0
  %3780 = vmatprep.subr.mxu0 0.0
  %3781 = vmatpush1.msra.mxu0 %v566
  %3782 = vmatprep.subr.mxu0 0.0
  %3783 = vmatpush1.msra.mxu0 %v565
  %3784 = vmatprep.subr.mxu0 0.0
  %3785 = vmatpush2.msra.mxu0 0.0
  %3786 = vmatprep.subr.mxu0 0.0
  %3787 = vmatpush2.msra.mxu0 0.0
  %3788 = vmatprep.subr.mxu0 0.0
  %3789 = vmatpush2.msra.mxu0 0.0
  %3790 = vmatprep.subr.mxu0 0.0
  %3791 = vmatpush2.msra.mxu0 0.0
  %3792 = vmatprep.subr.mxu0 0.0
  %3793 = vmatpush2.msra.mxu0 0.0
  %3794 = vmatprep.subr.mxu0 0.0
  %3795 = vmatpush2.msra.mxu0 0.0
  %3796 = vmatprep.subr.mxu0 0.0
  %3797 = vmatpush2.msra.mxu0 0.0
  %3798 = vmatprep.subr.mxu0 0.0
  %3799 = vmatpush2.msra.mxu0 0.0
  %3800 = vmatprep.subr.mxu0 0.0
  %3801 = vmatpush2.msra.mxu0 0.0
  %3802 = vmatprep.subr.mxu0 0.0
  %3803 = vmatpush2.msra.mxu0 0.0
  %3804 = vmatprep.subr.mxu0 0.0
  %3805 = vmatpush2.msra.mxu0 0.0
  %3806 = vmatprep.subr.mxu0 0.0
  %3807 = vmatpush2.msra.mxu0 0.0
  %3808 = vmatprep.subr.mxu0 0.0
  %3809 = vmatpush2.msra.mxu0 0.0
  %3810 = vmatprep.subr.mxu0 0.0
  %3811 = vmatpush2.msra.mxu0 0.0
  %3812 = vmatprep.subr.mxu0 0.0
  %3813 = vmatpush2.msra.mxu0 0.0
  %3814 = vmatprep.subr.mxu0 0.0
  %3815 = vmatpush2.msra.mxu0 0.0
  %3816 = vmatprep.mubr.f32.mxu0 0.0
  %3817 = vmatmul.mubr.f32.gmra.mxu0 %v3747
  %v3818 = vpop.f32.mrf.mxu0
  %v3819 = vadd.f32 0.0, %v3818
  %v3820 = vpop.f32.mrf.mxu0
  %3821 = vmatprep.mubr.f32.mxu0 0.0
  %3822 = vmatmul.mubr.f32.gmra.mxu0 %v3750
  %v3823 = vpop.f32.mrf.mxu0
  %v3824 = vadd.f32 0.0, %v3823
  %v3825 = vpop.f32.mrf.mxu0
  %3826 = vdwg.mxu0
  %v3827 = vadd.f32 %v3744, %v3819
  %v3828 = vadd.f32 %v3745, %v3824
  %v3829 = vmax.f32 %v3827, 0.0
  %v3830 = vmax.f32 %v3828, 0.0
  %v3832 = vsel %vm248, %v3829, 0
  %v3835 = vsel %vm248, %v3830, 0
  %3837 = vmatprep.subr.mxu0 0.0
  %3838 = vmatpush1.msra.mxu0 0.0
  %3839 = vmatprep.subr.mxu0 0.0
  %3840 = vmatpush1.msra.mxu0 0.0
  %3841 = vmatprep.subr.mxu0 0.0
  %3842 = vmatpush1.msra.mxu0 0.0
  %3843 = vmatprep.subr.mxu0 0.0
  %3844 = vmatpush1.msra.mxu0 0.0
  %3845 = vmatprep.subr.mxu0 0.0
  %3846 = vmatpush1.msra.mxu0 0.0
  %3847 = vmatprep.subr.mxu0 0.0
  %3848 = vmatpush1.msra.mxu0 0.0
  %3849 = vmatprep.subr.mxu0 0.0
  %3850 = vmatpush1.msra.mxu0 0.0
  %3851 = vmatprep.subr.mxu0 0.0
  %3852 = vmatpush1.msra.mxu0 0.0
  %3853 = vmatprep.subr.mxu0 0.0
  %3854 = vmatpush1.msra.mxu0 0.0
  %3855 = vmatprep.subr.mxu0 0.0
  %3856 = vmatpush1.msra.mxu0 0.0
  %3857 = vmatprep.subr.mxu0 0.0
  %3858 = vmatpush1.msra.mxu0 0.0
  %3859 = vmatprep.subr.mxu0 0.0
  %3860 = vmatpush1.msra.mxu0 0.0
  %3861 = vmatprep.subr.mxu0 0.0
  %3862 = vmatpush1.msra.mxu0 0.0
  %3863 = vmatprep.subr.mxu0 0.0
  %3864 = vmatpush1.msra.mxu0 0.0
  %3865 = vmatprep.subr.mxu0 0.0
  %3866 = vmatpush1.msra.mxu0 %v570
  %3867 = vmatprep.subr.mxu0 0.0
  %3868 = vmatpush1.msra.mxu0 %v569
  %3869 = vmatprep.subr.mxu0 0.0
  %3870 = vmatpush2.msra.mxu0 0.0
  %3871 = vmatprep.subr.mxu0 0.0
  %3872 = vmatpush2.msra.mxu0 0.0
  %3873 = vmatprep.subr.mxu0 0.0
  %3874 = vmatpush2.msra.mxu0 0.0
  %3875 = vmatprep.subr.mxu0 0.0
  %3876 = vmatpush2.msra.mxu0 0.0
  %3877 = vmatprep.subr.mxu0 0.0
  %3878 = vmatpush2.msra.mxu0 0.0
  %3879 = vmatprep.subr.mxu0 0.0
  %3880 = vmatpush2.msra.mxu0 0.0
  %3881 = vmatprep.subr.mxu0 0.0
  %3882 = vmatpush2.msra.mxu0 0.0
  %3883 = vmatprep.subr.mxu0 0.0
  %3884 = vmatpush2.msra.mxu0 0.0
  %3885 = vmatprep.subr.mxu0 0.0
  %3886 = vmatpush2.msra.mxu0 0.0
  %3887 = vmatprep.subr.mxu0 0.0
  %3888 = vmatpush2.msra.mxu0 0.0
  %3889 = vmatprep.subr.mxu0 0.0
  %3890 = vmatpush2.msra.mxu0 0.0
  %3891 = vmatprep.subr.mxu0 0.0
  %3892 = vmatpush2.msra.mxu0 0.0
  %3893 = vmatprep.subr.mxu0 0.0
  %3894 = vmatpush2.msra.mxu0 0.0
  %3895 = vmatprep.subr.mxu0 0.0
  %3896 = vmatpush2.msra.mxu0 0.0
  %3897 = vmatprep.subr.mxu0 0.0
  %3898 = vmatpush2.msra.mxu0 0.0
  %3899 = vmatprep.subr.mxu0 0.0
  %3900 = vmatpush2.msra.mxu0 0.0
  %3901 = vmatprep.mubr.f32.mxu0 0.0
  %3902 = vmatmul.mubr.f32.gmra.mxu0 %v3832
  %v3903 = vpop.f32.mrf.mxu0
  %v3904 = vadd.f32 %v583, %v3903
  %v3905 = vpop.f32.mrf.mxu0
  %3906 = vmatprep.mubr.f32.mxu0 0.0
  %3907 = vmatmul.mubr.f32.gmra.mxu0 %v3835
  %v3908 = vpop.f32.mrf.mxu0
  %v3909 = vadd.f32 %v583, %v3908
  %v3910 = vpop.f32.mrf.mxu0
  %3911 = vdwg.mxu0
  %v3912 = vmax.f32 %v3904, 0.0
  %v3913 = vmax.f32 %v3909, 0.0
  %v3915 = vsel %vm595, %v3913, 0
  %3917 = vmatprep.subr.mxu0 0.0
  %3918 = vmatpush1.msra.mxu0 0.0
  %3919 = vmatprep.subr.mxu0 0.0
  %3920 = vmatpush1.msra.mxu0 0.0
  %3921 = vmatprep.subr.mxu0 0.0
  %3922 = vmatpush1.msra.mxu0 0.0
  %3923 = vmatprep.subr.mxu0 0.0
  %3924 = vmatpush1.msra.mxu0 0.0
  %3925 = vmatprep.subr.mxu0 0.0
  %3926 = vmatpush1.msra.mxu0 0.0
  %3927 = vmatprep.subr.mxu0 0.0
  %3928 = vmatpush1.msra.mxu0 0.0
  %3929 = vmatprep.subr.mxu0 0.0
  %3930 = vmatpush1.msra.mxu0 0.0
  %3931 = vmatprep.subr.mxu0 0.0
  %3932 = vmatpush1.msra.mxu0 0.0
  %3933 = vmatprep.subr.mxu0 0.0
  %3934 = vmatpush1.msra.mxu0 0.0
  %3935 = vmatprep.subr.mxu0 0.0
  %3936 = vmatpush1.msra.mxu0 0.0
  %3937 = vmatprep.subr.mxu0 0.0
  %3938 = vmatpush1.msra.mxu0 0.0
  %3939 = vmatprep.subr.mxu0 0.0
  %3940 = vmatpush1.msra.mxu0 0.0
  %3941 = vmatprep.subr.mxu0 0.0
  %3942 = vmatpush1.msra.mxu0 0.0
  %3943 = vmatprep.subr.mxu0 0.0
  %3944 = vmatpush1.msra.mxu0 0.0
  %3945 = vmatprep.subr.mxu0 0.0
  %3946 = vmatpush1.msra.mxu0 %v3915
  %3947 = vmatprep.subr.mxu0 0.0
  %3948 = vmatpush1.msra.mxu0 %v3912
  %3949 = vmatprep.subr.mxu0 0.0
  %3950 = vmatpush2.msra.mxu0 0.0
  %3951 = vmatprep.subr.mxu0 0.0
  %3952 = vmatpush2.msra.mxu0 0.0
  %3953 = vmatprep.subr.mxu0 0.0
  %3954 = vmatpush2.msra.mxu0 0.0
  %3955 = vmatprep.subr.mxu0 0.0
  %3956 = vmatpush2.msra.mxu0 0.0
  %3957 = vmatprep.subr.mxu0 0.0
  %3958 = vmatpush2.msra.mxu0 0.0
  %3959 = vmatprep.subr.mxu0 0.0
  %3960 = vmatpush2.msra.mxu0 0.0
  %3961 = vmatprep.subr.mxu0 0.0
  %3962 = vmatpush2.msra.mxu0 0.0
  %3963 = vmatprep.subr.mxu0 0.0
  %3964 = vmatpush2.msra.mxu0 0.0
  %3965 = vmatprep.subr.mxu0 0.0
  %3966 = vmatpush2.msra.mxu0 0.0
  %3967 = vmatprep.subr.mxu0 0.0
  %3968 = vmatpush2.msra.mxu0 0.0
  %3969 = vmatprep.subr.mxu0 0.0
  %3970 = vmatpush2.msra.mxu0 0.0
  %3971 = vmatprep.subr.mxu0 0.0
  %3972 = vmatpush2.msra.mxu0 0.0
  %3973 = vmatprep.subr.mxu0 0.0
  %3974 = vmatpush2.msra.mxu0 0.0
  %3975 = vmatprep.subr.mxu0 0.0
  %3976 = vmatpush2.msra.mxu0 0.0
  %3977 = vmatprep.subr.mxu0 0.0
  %3978 = vmatpush2.msra.mxu0 0.0
  %3979 = vmatprep.subr.mxu0 0.0
  %3980 = vmatpush2.msra.mxu0 0.0
  %3981 = vmatprep.mubr.f32.mxu0 0.0
  %3982 = vmatmul.mubr.f32.gmra.mxu0 %v587
  %v3983 = vpop.f32.mrf.mxu0
  %v3984 = vadd.f32 0.0, %v3983
  %v3985 = vpop.f32.mrf.mxu0
  %3986 = vmatprep.mubr.f32.mxu0 0.0
  %3987 = vmatmul.mubr.f32.gmra.mxu0 %v590
  %v3988 = vpop.f32.mrf.mxu0
  %v3989 = vadd.f32 0.0, %v3988
  %v3990 = vpop.f32.mrf.mxu0
  %3991 = vmatprep.mubr.f32.mxu0 0.0
  %3992 = vmatmul.mubr.f32.gmra.mxu0 %v593
  %v3993 = vpop.f32.mrf.mxu0
  %v3994 = vadd.f32 0.0, %v3993
  %v3995 = vpop.f32.mrf.mxu0
  %3996 = vdwg.mxu0
  %3997 = vmatprep.subr.mxu0 0.0
  %3998 = vmatpush1.msra.mxu0 0.0
  %3999 = vmatprep.subr.mxu0 0.0
  %4000 = vmatpush1.msra.mxu0 0.0
  %4001 = vmatprep.subr.mxu0 0.0
  %4002 = vmatpush1.msra.mxu0 0.0
  %4003 = vmatprep.subr.mxu0 0.0
  %4004 = vmatpush1.msra.mxu0 0.0
  %4005 = vmatprep.subr.mxu0 0.0
  %4006 = vmatpush1.msra.mxu0 0.0
  %4007 = vmatprep.subr.mxu0 0.0
  %4008 = vmatpush1.msra.mxu0 0.0
  %4009 = vmatprep.subr.mxu0 0.0
  %4010 = vmatpush1.msra.mxu0 0.0
  %4011 = vmatprep.subr.mxu0 0.0
  %4012 = vmatpush1.msra.mxu0 0.0
  %4013 = vmatprep.subr.mxu0 0.0
  %4014 = vmatpush1.msra.mxu0 0.0
  %4015 = vmatprep.subr.mxu0 0.0
  %4016 = vmatpush1.msra.mxu0 0.0
  %4017 = vmatprep.subr.mxu0 0.0
  %4018 = vmatpush1.msra.mxu0 0.0
  %4019 = vmatprep.subr.mxu0 0.0
  %4020 = vmatpush1.msra.mxu0 0.0
  %4021 = vmatprep.subr.mxu0 0.0
  %4022 = vmatpush1.msra.mxu0 0.0
  %4023 = vmatprep.subr.mxu0 0.0
  %4024 = vmatpush1.msra.mxu0 0.0
  %4025 = vmatprep.subr.mxu0 0.0
  %4026 = vmatpush1.msra.mxu0 %v3915
  %4027 = vmatprep.subr.mxu0 0.0
  %4028 = vmatpush1.msra.mxu0 %v3912
  %4029 = vmatprep.subr.mxu0 0.0
  %4030 = vmatpush2.msra.mxu0 0.0
  %4031 = vmatprep.subr.mxu0 0.0
  %4032 = vmatpush2.msra.mxu0 0.0
  %4033 = vmatprep.subr.mxu0 0.0
  %4034 = vmatpush2.msra.mxu0 0.0
  %4035 = vmatprep.subr.mxu0 0.0
  %4036 = vmatpush2.msra.mxu0 0.0
  %4037 = vmatprep.subr.mxu0 0.0
  %4038 = vmatpush2.msra.mxu0 0.0
  %4039 = vmatprep.subr.mxu0 0.0
  %4040 = vmatpush2.msra.mxu0 0.0
  %4041 = vmatprep.subr.mxu0 0.0
  %4042 = vmatpush2.msra.mxu0 0.0
  %4043 = vmatprep.subr.mxu0 0.0
  %4044 = vmatpush2.msra.mxu0 0.0
  %4045 = vmatprep.subr.mxu0 0.0
  %4046 = vmatpush2.msra.mxu0 0.0
  %4047 = vmatprep.subr.mxu0 0.0
  %4048 = vmatpush2.msra.mxu0 0.0
  %4049 = vmatprep.subr.mxu0 0.0
  %4050 = vmatpush2.msra.mxu0 0.0
  %4051 = vmatprep.subr.mxu0 0.0
  %4052 = vmatpush2.msra.mxu0 0.0
  %4053 = vmatprep.subr.mxu0 0.0
  %4054 = vmatpush2.msra.mxu0 0.0
  %4055 = vmatprep.subr.mxu0 0.0
  %4056 = vmatpush2.msra.mxu0 0.0
  %4057 = vmatprep.subr.mxu0 0.0
  %4058 = vmatpush2.msra.mxu0 0.0
  %4059 = vmatprep.subr.mxu0 0.0
  %4060 = vmatpush2.msra.mxu0 0.0
  %4061 = vmatprep.mubr.f32.mxu0 0.0
  %4062 = vmatmul.mubr.f32.gmra.mxu0 %v680
  %v4063 = vpop.f32.mrf.mxu0
  %v4064 = vadd.f32 0.0, %v4063
  %v4065 = vpop.f32.mrf.mxu0
  %4066 = vmatprep.mubr.f32.mxu0 0.0
  %4067 = vmatmul.mubr.f32.gmra.mxu0 %v683
  %v4068 = vpop.f32.mrf.mxu0
  %v4069 = vadd.f32 0.0, %v4068
  %v4070 = vpop.f32.mrf.mxu0
  %4071 = vmatprep.mubr.f32.mxu0 0.0
  %4072 = vmatmul.mubr.f32.gmra.mxu0 %v686
  %v4073 = vpop.f32.mrf.mxu0
  %v4074 = vadd.f32 0.0, %v4073
  %v4075 = vpop.f32.mrf.mxu0
  %4076 = vdwg.mxu0
  %v4078 = vsel %vm248, %v3984, 0
  %v4081 = vsel %vm248, %v3989, 0
  %v4084 = vsel %vm248, %v3994, 0
  %4086 = vmatprep.subr.mxu0 0.0
  %4087 = vmatpush1.msra.mxu0 0.0
  %4088 = vmatprep.subr.mxu0 0.0
  %4089 = vmatpush1.msra.mxu0 0.0
  %4090 = vmatprep.subr.mxu0 0.0
  %4091 = vmatpush1.msra.mxu0 0.0
  %4092 = vmatprep.subr.mxu0 0.0
  %4093 = vmatpush1.msra.mxu0 0.0
  %4094 = vmatprep.subr.mxu0 0.0
  %4095 = vmatpush1.msra.mxu0 0.0
  %4096 = vmatprep.subr.mxu0 0.0
  %4097 = vmatpush1.msra.mxu0 0.0
  %4098 = vmatprep.subr.mxu0 0.0
  %4099 = vmatpush1.msra.mxu0 0.0
  %4100 = vmatprep.subr.mxu0 0.0
  %4101 = vmatpush1.msra.mxu0 0.0
  %4102 = vmatprep.subr.mxu0 0.0
  %4103 = vmatpush1.msra.mxu0 0.0
  %4104 = vmatprep.subr.mxu0 0.0
  %4105 = vmatpush1.msra.mxu0 0.0
  %4106 = vmatprep.subr.mxu0 0.0
  %4107 = vmatpush1.msra.mxu0 0.0
  %4108 = vmatprep.subr.mxu0 0.0
  %4109 = vmatpush1.msra.mxu0 0.0
  %4110 = vmatprep.subr.mxu0 0.0
  %4111 = vmatpush1.msra.mxu0 0.0
  %4112 = vmatprep.subr.mxu0 0.0
  %4113 = vmatpush1.msra.mxu0 0.0
  %4114 = vmatprep.subr.mxu0 0.0
  %4115 = vmatpush1.msra.mxu0 %v552
  %4116 = vmatprep.subr.mxu0 0.0
  %4117 = vmatpush1.msra.mxu0 %v551
  %4118 = vmatprep.subr.mxu0 0.0
  %4119 = vmatpush2.msra.mxu0 0.0
  %4120 = vmatprep.subr.mxu0 0.0
  %4121 = vmatpush2.msra.mxu0 0.0
  %4122 = vmatprep.subr.mxu0 0.0
  %4123 = vmatpush2.msra.mxu0 0.0
  %4124 = vmatprep.subr.mxu0 0.0
  %4125 = vmatpush2.msra.mxu0 0.0
  %4126 = vmatprep.subr.mxu0 0.0
  %4127 = vmatpush2.msra.mxu0 0.0
  %4128 = vmatprep.subr.mxu0 0.0
  %4129 = vmatpush2.msra.mxu0 0.0
  %4130 = vmatprep.subr.mxu0 0.0
  %4131 = vmatpush2.msra.mxu0 0.0
  %4132 = vmatprep.subr.mxu0 0.0
  %4133 = vmatpush2.msra.mxu0 0.0
  %4134 = vmatprep.subr.mxu0 0.0
  %4135 = vmatpush2.msra.mxu0 0.0
  %4136 = vmatprep.subr.mxu0 0.0
  %4137 = vmatpush2.msra.mxu0 0.0
  %4138 = vmatprep.subr.mxu0 0.0
  %4139 = vmatpush2.msra.mxu0 0.0
  %4140 = vmatprep.subr.mxu0 0.0
  %4141 = vmatpush2.msra.mxu0 0.0
  %4142 = vmatprep.subr.mxu0 0.0
  %4143 = vmatpush2.msra.mxu0 0.0
  %4144 = vmatprep.subr.mxu0 0.0
  %4145 = vmatpush2.msra.mxu0 0.0
  %4146 = vmatprep.subr.mxu0 0.0
  %4147 = vmatpush2.msra.mxu0 0.0
  %4148 = vmatprep.subr.mxu0 0.0
  %4149 = vmatpush2.msra.mxu0 0.0
  %4150 = vmatprep.mubr.f32.mxu0 0.0
  %4151 = vmatmul.mubr.f32.gmra.mxu0 %v4078
  %v4152 = vpop.f32.mrf.mxu0
  %v4153 = vadd.f32 0.0, %v4152
  %v4154 = vpop.f32.mrf.mxu0
  %4155 = vmatprep.mubr.f32.mxu0 0.0
  %4156 = vmatmul.mubr.f32.gmra.mxu0 %v4081
  %v4157 = vpop.f32.mrf.mxu0
  %v4158 = vadd.f32 0.0, %v4157
  %v4159 = vpop.f32.mrf.mxu0
  %4160 = vmatprep.mubr.f32.mxu0 0.0
  %4161 = vmatmul.mubr.f32.gmra.mxu0 %v4084
  %v4162 = vpop.f32.mrf.mxu0
  %v4163 = vadd.f32 0.0, %v4162
  %v4164 = vpop.f32.mrf.mxu0
  %4165 = vdwg.mxu0
  %v4166 = vadd.f32 %v1202, %v4153
  %v4167 = vadd.f32 %v1203, %v4158
  %v4168 = vadd.f32 %v1204, %v4163
  %v4170 = vsel %vm248, %v3510, 0
  %v4173 = vsel %vm248, %v3511, 0
  %v4176 = vsel %vm248, %v3512, 0
  %4178 = vmatprep.subr.mxu0 0.0
  %4179 = vmatpush1.msra.mxu0 0.0
  %4180 = vmatprep.subr.mxu0 0.0
  %4181 = vmatpush1.msra.mxu0 0.0
  %4182 = vmatprep.subr.mxu0 0.0
  %4183 = vmatpush1.msra.mxu0 0.0
  %4184 = vmatprep.subr.mxu0 0.0
  %4185 = vmatpush1.msra.mxu0 0.0
  %4186 = vmatprep.subr.mxu0 0.0
  %4187 = vmatpush1.msra.mxu0 0.0
  %4188 = vmatprep.subr.mxu0 0.0
  %4189 = vmatpush1.msra.mxu0 0.0
  %4190 = vmatprep.subr.mxu0 0.0
  %4191 = vmatpush1.msra.mxu0 0.0
  %4192 = vmatprep.subr.mxu0 0.0
  %4193 = vmatpush1.msra.mxu0 0.0
  %4194 = vmatprep.subr.mxu0 0.0
  %4195 = vmatpush1.msra.mxu0 0.0
  %4196 = vmatprep.subr.mxu0 0.0
  %4197 = vmatpush1.msra.mxu0 0.0
  %4198 = vmatprep.subr.mxu0 0.0
  %4199 = vmatpush1.msra.mxu0 0.0
  %4200 = vmatprep.subr.mxu0 0.0
  %4201 = vmatpush1.msra.mxu0 0.0
  %4202 = vmatprep.subr.mxu0 0.0
  %4203 = vmatpush1.msra.mxu0 0.0
  %4204 = vmatprep.subr.mxu0 0.0
  %4205 = vmatpush1.msra.mxu0 0.0
  %4206 = vmatprep.subr.mxu0 0.0
  %4207 = vmatpush1.msra.mxu0 %v556
  %4208 = vmatprep.subr.mxu0 0.0
  %4209 = vmatpush1.msra.mxu0 %v555
  %4210 = vmatprep.subr.mxu0 0.0
  %4211 = vmatpush2.msra.mxu0 0.0
  %4212 = vmatprep.subr.mxu0 0.0
  %4213 = vmatpush2.msra.mxu0 0.0
  %4214 = vmatprep.subr.mxu0 0.0
  %4215 = vmatpush2.msra.mxu0 0.0
  %4216 = vmatprep.subr.mxu0 0.0
  %4217 = vmatpush2.msra.mxu0 0.0
  %4218 = vmatprep.subr.mxu0 0.0
  %4219 = vmatpush2.msra.mxu0 0.0
  %4220 = vmatprep.subr.mxu0 0.0
  %4221 = vmatpush2.msra.mxu0 0.0
  %4222 = vmatprep.subr.mxu0 0.0
  %4223 = vmatpush2.msra.mxu0 0.0
  %4224 = vmatprep.subr.mxu0 0.0
  %4225 = vmatpush2.msra.mxu0 0.0
  %4226 = vmatprep.subr.mxu0 0.0
  %4227 = vmatpush2.msra.mxu0 0.0
  %4228 = vmatprep.subr.mxu0 0.0
  %4229 = vmatpush2.msra.mxu0 0.0
  %4230 = vmatprep.subr.mxu0 0.0
  %4231 = vmatpush2.msra.mxu0 0.0
  %4232 = vmatprep.subr.mxu0 0.0
  %4233 = vmatpush2.msra.mxu0 0.0
  %4234 = vmatprep.subr.mxu0 0.0
  %4235 = vmatpush2.msra.mxu0 0.0
  %4236 = vmatprep.subr.mxu0 0.0
  %4237 = vmatpush2.msra.mxu0 0.0
  %4238 = vmatprep.subr.mxu0 0.0
  %4239 = vmatpush2.msra.mxu0 0.0
  %4240 = vmatprep.subr.mxu0 0.0
  %4241 = vmatpush2.msra.mxu0 0.0
  %4242 = vmatprep.mubr.f32.mxu0 0.0
  %4243 = vmatmul.mubr.f32.gmra.mxu0 %v4170
  %v4244 = vpop.f32.mrf.mxu0
  %v4245 = vadd.f32 0.0, %v4244
  %v4246 = vpop.f32.mrf.mxu0
  %4247 = vmatprep.mubr.f32.mxu0 0.0
  %4248 = vmatmul.mubr.f32.gmra.mxu0 %v4173
  %v4249 = vpop.f32.mrf.mxu0
  %v4250 = vadd.f32 0.0, %v4249
  %v4251 = vpop.f32.mrf.mxu0
  %4252 = vmatprep.mubr.f32.mxu0 0.0
  %4253 = vmatmul.mubr.f32.gmra.mxu0 %v4176
  %v4254 = vpop.f32.mrf.mxu0
  %v4255 = vadd.f32 0.0, %v4254
  %v4256 = vpop.f32.mrf.mxu0
  %4257 = vdwg.mxu0
  %v4258 = vadd.f32 %v4166, %v4245
  %v4259 = vadd.f32 %v4167, %v4250
  %v4260 = vadd.f32 %v4168, %v4255
  %v4262 = vsel %vm248, %v4064, 0
  %v4265 = vsel %vm248, %v4069, 0
  %v4268 = vsel %vm248, %v4074, 0
  %4270 = vmatprep.subr.mxu0 0.0
  %4271 = vmatpush1.msra.mxu0 0.0
  %4272 = vmatprep.subr.mxu0 0.0
  %4273 = vmatpush1.msra.mxu0 0.0
  %4274 = vmatprep.subr.mxu0 0.0
  %4275 = vmatpush1.msra.mxu0 0.0
  %4276 = vmatprep.subr.mxu0 0.0
  %4277 = vmatpush1.msra.mxu0 0.0
  %4278 = vmatprep.subr.mxu0 0.0
  %4279 = vmatpush1.msra.mxu0 0.0
  %4280 = vmatprep.subr.mxu0 0.0
  %4281 = vmatpush1.msra.mxu0 0.0
  %4282 = vmatprep.subr.mxu0 0.0
  %4283 = vmatpush1.msra.mxu0 0.0
  %4284 = vmatprep.subr.mxu0 0.0
  %4285 = vmatpush1.msra.mxu0 0.0
  %4286 = vmatprep.subr.mxu0 0.0
  %4287 = vmatpush1.msra.mxu0 0.0
  %4288 = vmatprep.subr.mxu0 0.0
  %4289 = vmatpush1.msra.mxu0 0.0
  %4290 = vmatprep.subr.mxu0 0.0
  %4291 = vmatpush1.msra.mxu0 0.0
  %4292 = vmatprep.subr.mxu0 0.0
  %4293 = vmatpush1.msra.mxu0 0.0
  %4294 = vmatprep.subr.mxu0 0.0
  %4295 = vmatpush1.msra.mxu0 0.0
  %4296 = vmatprep.subr.mxu0 0.0
  %4297 = vmatpush1.msra.mxu0 0.0
  %4298 = vmatprep.subr.mxu0 0.0
  %4299 = vmatpush1.msra.mxu0 %v560
  %4300 = vmatprep.subr.mxu0 0.0
  %4301 = vmatpush1.msra.mxu0 %v559
  %4302 = vmatprep.subr.mxu0 0.0
  %4303 = vmatpush2.msra.mxu0 0.0
  %4304 = vmatprep.subr.mxu0 0.0
  %4305 = vmatpush2.msra.mxu0 0.0
  %4306 = vmatprep.subr.mxu0 0.0
  %4307 = vmatpush2.msra.mxu0 0.0
  %4308 = vmatprep.subr.mxu0 0.0
  %4309 = vmatpush2.msra.mxu0 0.0
  %4310 = vmatprep.subr.mxu0 0.0
  %4311 = vmatpush2.msra.mxu0 0.0
  %4312 = vmatprep.subr.mxu0 0.0
  %4313 = vmatpush2.msra.mxu0 0.0
  %4314 = vmatprep.subr.mxu0 0.0
  %4315 = vmatpush2.msra.mxu0 0.0
  %4316 = vmatprep.subr.mxu0 0.0
  %4317 = vmatpush2.msra.mxu0 0.0
  %4318 = vmatprep.subr.mxu0 0.0
  %4319 = vmatpush2.msra.mxu0 0.0
  %4320 = vmatprep.subr.mxu0 0.0
  %4321 = vmatpush2.msra.mxu0 0.0
  %4322 = vmatprep.subr.mxu0 0.0
  %4323 = vmatpush2.msra.mxu0 0.0
  %4324 = vmatprep.subr.mxu0 0.0
  %4325 = vmatpush2.msra.mxu0 0.0
  %4326 = vmatprep.subr.mxu0 0.0
  %4327 = vmatpush2.msra.mxu0 0.0
  %4328 = vmatprep.subr.mxu0 0.0
  %4329 = vmatpush2.msra.mxu0 0.0
  %4330 = vmatprep.subr.mxu0 0.0
  %4331 = vmatpush2.msra.mxu0 0.0
  %4332 = vmatprep.subr.mxu0 0.0
  %4333 = vmatpush2.msra.mxu0 0.0
  %4334 = vmatprep.mubr.f32.mxu0 0.0
  %4335 = vmatmul.mubr.f32.gmra.mxu0 %v4262
  %v4336 = vpop.f32.mrf.mxu0
  %v4337 = vadd.f32 0.0, %v4336
  %v4338 = vpop.f32.mrf.mxu0
  %4339 = vmatprep.mubr.f32.mxu0 0.0
  %4340 = vmatmul.mubr.f32.gmra.mxu0 %v4265
  %v4341 = vpop.f32.mrf.mxu0
  %v4342 = vadd.f32 0.0, %v4341
  %v4343 = vpop.f32.mrf.mxu0
  %4344 = vmatprep.mubr.f32.mxu0 0.0
  %4345 = vmatmul.mubr.f32.gmra.mxu0 %v4268
  %v4346 = vpop.f32.mrf.mxu0
  %v4347 = vadd.f32 0.0, %v4346
  %v4348 = vpop.f32.mrf.mxu0
  %4349 = vdwg.mxu0
  %v4350 = vadd.f32 %v4258, %v4337
  %v4351 = vadd.f32 %v4259, %v4342
  %v4352 = vadd.f32 %v4260, %v4347
  %v4353 = vmax.f32 %v4350, 0.0
  %v4354 = vmax.f32 %v4351, 0.0
  %v4355 = vmax.f32 %v4352, 0.0
  %v4357 = vsel %vm248, %v4353, 0
  %v4360 = vsel %vm248, %v4354, 0
  %v4363 = vsel %vm248, %v4355, 0
  %4365 = vmatprep.subr.mxu0 0.0
  %4366 = vmatpush1.msra.mxu0 0.0
  %4367 = vmatprep.subr.mxu0 0.0
  %4368 = vmatpush1.msra.mxu0 0.0
  %4369 = vmatprep.subr.mxu0 0.0
  %4370 = vmatpush1.msra.mxu0 0.0
  %4371 = vmatprep.subr.mxu0 0.0
  %4372 = vmatpush1.msra.mxu0 0.0
  %4373 = vmatprep.subr.mxu0 0.0
  %4374 = vmatpush1.msra.mxu0 0.0
  %4375 = vmatprep.subr.mxu0 0.0
  %4376 = vmatpush1.msra.mxu0 0.0
  %4377 = vmatprep.subr.mxu0 0.0
  %4378 = vmatpush1.msra.mxu0 0.0
  %4379 = vmatprep.subr.mxu0 0.0
  %4380 = vmatpush1.msra.mxu0 0.0
  %4381 = vmatprep.subr.mxu0 0.0
  %4382 = vmatpush1.msra.mxu0 0.0
  %4383 = vmatprep.subr.mxu0 0.0
  %4384 = vmatpush1.msra.mxu0 0.0
  %4385 = vmatprep.subr.mxu0 0.0
  %4386 = vmatpush1.msra.mxu0 0.0
  %4387 = vmatprep.subr.mxu0 0.0
  %4388 = vmatpush1.msra.mxu0 0.0
  %4389 = vmatprep.subr.mxu0 0.0
  %4390 = vmatpush1.msra.mxu0 0.0
  %4391 = vmatprep.subr.mxu0 0.0
  %4392 = vmatpush1.msra.mxu0 0.0
  %4393 = vmatprep.subr.mxu0 0.0
  %4394 = vmatpush1.msra.mxu0 %v568
  %4395 = vmatprep.subr.mxu0 0.0
  %4396 = vmatpush1.msra.mxu0 %v567
  %4397 = vmatprep.subr.mxu0 0.0
  %4398 = vmatpush2.msra.mxu0 0.0
  %4399 = vmatprep.subr.mxu0 0.0
  %4400 = vmatpush2.msra.mxu0 0.0
  %4401 = vmatprep.subr.mxu0 0.0
  %4402 = vmatpush2.msra.mxu0 0.0
  %4403 = vmatprep.subr.mxu0 0.0
  %4404 = vmatpush2.msra.mxu0 0.0
  %4405 = vmatprep.subr.mxu0 0.0
  %4406 = vmatpush2.msra.mxu0 0.0
  %4407 = vmatprep.subr.mxu0 0.0
  %4408 = vmatpush2.msra.mxu0 0.0
  %4409 = vmatprep.subr.mxu0 0.0
  %4410 = vmatpush2.msra.mxu0 0.0
  %4411 = vmatprep.subr.mxu0 0.0
  %4412 = vmatpush2.msra.mxu0 0.0
  %4413 = vmatprep.subr.mxu0 0.0
  %4414 = vmatpush2.msra.mxu0 0.0
  %4415 = vmatprep.subr.mxu0 0.0
  %4416 = vmatpush2.msra.mxu0 0.0
  %4417 = vmatprep.subr.mxu0 0.0
  %4418 = vmatpush2.msra.mxu0 0.0
  %4419 = vmatprep.subr.mxu0 0.0
  %4420 = vmatpush2.msra.mxu0 0.0
  %4421 = vmatprep.subr.mxu0 0.0
  %4422 = vmatpush2.msra.mxu0 0.0
  %4423 = vmatprep.subr.mxu0 0.0
  %4424 = vmatpush2.msra.mxu0 0.0
  %4425 = vmatprep.subr.mxu0 0.0
  %4426 = vmatpush2.msra.mxu0 0.0
  %4427 = vmatprep.subr.mxu0 0.0
  %4428 = vmatpush2.msra.mxu0 0.0
  %4429 = vmatprep.mubr.f32.mxu0 0.0
  %4430 = vmatmul.mubr.f32.gmra.mxu0 %v4357
  %v4431 = vpop.f32.mrf.mxu0
  %v4432 = vadd.f32 %v576, %v4431
  %v4433 = vpop.f32.mrf.mxu0
  %4434 = vmatprep.mubr.f32.mxu0 0.0
  %4435 = vmatmul.mubr.f32.gmra.mxu0 %v4360
  %v4436 = vpop.f32.mrf.mxu0
  %v4437 = vadd.f32 %v576, %v4436
  %v4438 = vpop.f32.mrf.mxu0
  %4439 = vmatprep.mubr.f32.mxu0 0.0
  %4440 = vmatmul.mubr.f32.gmra.mxu0 %v4363
  %v4441 = vpop.f32.mrf.mxu0
  %v4442 = vadd.f32 %v576, %v4441
  %v4443 = vpop.f32.mrf.mxu0
  %4444 = vdwg.mxu0
  %v4445 = vmax.f32 %v4432, 0.0
  %v4446 = vmax.f32 %v4437, 0.0
  %v4447 = vmax.f32 %v4442, 0.0
  %4448 = vmatprep.subr.mxu0 0.0
  %4449 = vmatpush1.msra.mxu0 0.0
  %4450 = vmatprep.subr.mxu0 0.0
  %4451 = vmatpush1.msra.mxu0 0.0
  %4452 = vmatprep.subr.mxu0 0.0
  %4453 = vmatpush1.msra.mxu0 0.0
  %4454 = vmatprep.subr.mxu0 0.0
  %4455 = vmatpush1.msra.mxu0 0.0
  %4456 = vmatprep.subr.mxu0 0.0
  %4457 = vmatpush1.msra.mxu0 0.0
  %4458 = vmatprep.subr.mxu0 0.0
  %4459 = vmatpush1.msra.mxu0 0.0
  %4460 = vmatprep.subr.mxu0 0.0
  %4461 = vmatpush1.msra.mxu0 0.0
  %4462 = vmatprep.subr.mxu0 0.0
  %4463 = vmatpush1.msra.mxu0 0.0
  %4464 = vmatprep.subr.mxu0 0.0
  %4465 = vmatpush1.msra.mxu0 0.0
  %4466 = vmatprep.subr.mxu0 0.0
  %4467 = vmatpush1.msra.mxu0 0.0
  %4468 = vmatprep.subr.mxu0 0.0
  %4469 = vmatpush1.msra.mxu0 0.0
  %4470 = vmatprep.subr.mxu0 0.0
  %4471 = vmatpush1.msra.mxu0 0.0
  %4472 = vmatprep.subr.mxu0 0.0
  %4473 = vmatpush1.msra.mxu0 0.0
  %4474 = vmatprep.subr.mxu0 0.0
  %4475 = vmatpush1.msra.mxu0 %v4447
  %4476 = vmatprep.subr.mxu0 0.0
  %4477 = vmatpush1.msra.mxu0 %v4446
  %4478 = vmatprep.subr.mxu0 0.0
  %4479 = vmatpush1.msra.mxu0 %v4445
  %4480 = vmatprep.subr.mxu0 0.0
  %4481 = vmatpush2.msra.mxu0 0.0
  %4482 = vmatprep.subr.mxu0 0.0
  %4483 = vmatpush2.msra.mxu0 0.0
  %4484 = vmatprep.subr.mxu0 0.0
  %4485 = vmatpush2.msra.mxu0 0.0
  %4486 = vmatprep.subr.mxu0 0.0
  %4487 = vmatpush2.msra.mxu0 0.0
  %4488 = vmatprep.subr.mxu0 0.0
  %4489 = vmatpush2.msra.mxu0 0.0
  %4490 = vmatprep.subr.mxu0 0.0
  %4491 = vmatpush2.msra.mxu0 0.0
  %4492 = vmatprep.subr.mxu0 0.0
  %4493 = vmatpush2.msra.mxu0 0.0
  %4494 = vmatprep.subr.mxu0 0.0
  %4495 = vmatpush2.msra.mxu0 0.0
  %4496 = vmatprep.subr.mxu0 0.0
  %4497 = vmatpush2.msra.mxu0 0.0
  %4498 = vmatprep.subr.mxu0 0.0
  %4499 = vmatpush2.msra.mxu0 0.0
  %4500 = vmatprep.subr.mxu0 0.0
  %4501 = vmatpush2.msra.mxu0 0.0
  %4502 = vmatprep.subr.mxu0 0.0
  %4503 = vmatpush2.msra.mxu0 0.0
  %4504 = vmatprep.subr.mxu0 0.0
  %4505 = vmatpush2.msra.mxu0 0.0
  %4506 = vmatprep.subr.mxu0 0.0
  %4507 = vmatpush2.msra.mxu0 0.0
  %4508 = vmatprep.subr.mxu0 0.0
  %4509 = vmatpush2.msra.mxu0 0.0
  %4510 = vmatprep.subr.mxu0 0.0
  %4511 = vmatpush2.msra.mxu0 0.0
  %4512 = vmatprep.mubr.f32.mxu0 0.0
  %4513 = vmatmul.mubr.f32.gmra.mxu0 %v770
  %v4514 = vpop.f32.mrf.mxu0
  %v4515 = vadd.f32 0.0, %v4514
  %v4516 = vpop.f32.mrf.mxu0
  %4517 = vmatprep.mubr.f32.mxu0 0.0
  %4518 = vmatmul.mubr.f32.gmra.mxu0 %v773
  %v4519 = vpop.f32.mrf.mxu0
  %v4520 = vadd.f32 0.0, %v4519
  %v4521 = vpop.f32.mrf.mxu0
  %4522 = vdwg.mxu0
  %4523 = vmatprep.subr.mxu0 0.0
  %4524 = vmatpush1.msra.mxu0 0.0
  %4525 = vmatprep.subr.mxu0 0.0
  %4526 = vmatpush1.msra.mxu0 0.0
  %4527 = vmatprep.subr.mxu0 0.0
  %4528 = vmatpush1.msra.mxu0 0.0
  %4529 = vmatprep.subr.mxu0 0.0
  %4530 = vmatpush1.msra.mxu0 0.0
  %4531 = vmatprep.subr.mxu0 0.0
  %4532 = vmatpush1.msra.mxu0 0.0
  %4533 = vmatprep.subr.mxu0 0.0
  %4534 = vmatpush1.msra.mxu0 0.0
  %4535 = vmatprep.subr.mxu0 0.0
  %4536 = vmatpush1.msra.mxu0 0.0
  %4537 = vmatprep.subr.mxu0 0.0
  %4538 = vmatpush1.msra.mxu0 0.0
  %4539 = vmatprep.subr.mxu0 0.0
  %4540 = vmatpush1.msra.mxu0 0.0
  %4541 = vmatprep.subr.mxu0 0.0
  %4542 = vmatpush1.msra.mxu0 0.0
  %4543 = vmatprep.subr.mxu0 0.0
  %4544 = vmatpush1.msra.mxu0 0.0
  %4545 = vmatprep.subr.mxu0 0.0
  %4546 = vmatpush1.msra.mxu0 0.0
  %4547 = vmatprep.subr.mxu0 0.0
  %4548 = vmatpush1.msra.mxu0 0.0
  %4549 = vmatprep.subr.mxu0 0.0
  %4550 = vmatpush1.msra.mxu0 0.0
  %4551 = vmatprep.subr.mxu0 0.0
  %4552 = vmatpush1.msra.mxu0 %v3915
  %4553 = vmatprep.subr.mxu0 0.0
  %4554 = vmatpush1.msra.mxu0 %v3912
  %4555 = vmatprep.subr.mxu0 0.0
  %4556 = vmatpush2.msra.mxu0 0.0
  %4557 = vmatprep.subr.mxu0 0.0
  %4558 = vmatpush2.msra.mxu0 0.0
  %4559 = vmatprep.subr.mxu0 0.0
  %4560 = vmatpush2.msra.mxu0 0.0
  %4561 = vmatprep.subr.mxu0 0.0
  %4562 = vmatpush2.msra.mxu0 0.0
  %4563 = vmatprep.subr.mxu0 0.0
  %4564 = vmatpush2.msra.mxu0 0.0
  %4565 = vmatprep.subr.mxu0 0.0
  %4566 = vmatpush2.msra.mxu0 0.0
  %4567 = vmatprep.subr.mxu0 0.0
  %4568 = vmatpush2.msra.mxu0 0.0
  %4569 = vmatprep.subr.mxu0 0.0
  %4570 = vmatpush2.msra.mxu0 0.0
  %4571 = vmatprep.subr.mxu0 0.0
  %4572 = vmatpush2.msra.mxu0 0.0
  %4573 = vmatprep.subr.mxu0 0.0
  %4574 = vmatpush2.msra.mxu0 0.0
  %4575 = vmatprep.subr.mxu0 0.0
  %4576 = vmatpush2.msra.mxu0 0.0
  %4577 = vmatprep.subr.mxu0 0.0
  %4578 = vmatpush2.msra.mxu0 0.0
  %4579 = vmatprep.subr.mxu0 0.0
  %4580 = vmatpush2.msra.mxu0 0.0
  %4581 = vmatprep.subr.mxu0 0.0
  %4582 = vmatpush2.msra.mxu0 0.0
  %4583 = vmatprep.subr.mxu0 0.0
  %4584 = vmatpush2.msra.mxu0 0.0
  %4585 = vmatprep.subr.mxu0 0.0
  %4586 = vmatpush2.msra.mxu0 0.0
  %4587 = vmatprep.mubr.f32.mxu0 0.0
  %4588 = vmatmul.mubr.f32.gmra.mxu0 %v1713
  %v4589 = vpop.f32.mrf.mxu0
  %v4590 = vadd.f32 0.0, %v4589
  %v4591 = vpop.f32.mrf.mxu0
  %4592 = vmatprep.mubr.f32.mxu0 0.0
  %4593 = vmatmul.mubr.f32.gmra.mxu0 %v1716
  %v4594 = vpop.f32.mrf.mxu0
  %v4595 = vadd.f32 0.0, %v4594
  %v4596 = vpop.f32.mrf.mxu0
  %4597 = vdwg.mxu0
  %v4599 = vsel %vm248, %v4590, 0
  %v4602 = vsel %vm248, %v4595, 0
  %4604 = vmatprep.subr.mxu0 0.0
  %4605 = vmatpush1.msra.mxu0 0.0
  %4606 = vmatprep.subr.mxu0 0.0
  %4607 = vmatpush1.msra.mxu0 0.0
  %4608 = vmatprep.subr.mxu0 0.0
  %4609 = vmatpush1.msra.mxu0 0.0
  %4610 = vmatprep.subr.mxu0 0.0
  %4611 = vmatpush1.msra.mxu0 0.0
  %4612 = vmatprep.subr.mxu0 0.0
  %4613 = vmatpush1.msra.mxu0 0.0
  %4614 = vmatprep.subr.mxu0 0.0
  %4615 = vmatpush1.msra.mxu0 0.0
  %4616 = vmatprep.subr.mxu0 0.0
  %4617 = vmatpush1.msra.mxu0 0.0
  %4618 = vmatprep.subr.mxu0 0.0
  %4619 = vmatpush1.msra.mxu0 0.0
  %4620 = vmatprep.subr.mxu0 0.0
  %4621 = vmatpush1.msra.mxu0 0.0
  %4622 = vmatprep.subr.mxu0 0.0
  %4623 = vmatpush1.msra.mxu0 0.0
  %4624 = vmatprep.subr.mxu0 0.0
  %4625 = vmatpush1.msra.mxu0 0.0
  %4626 = vmatprep.subr.mxu0 0.0
  %4627 = vmatpush1.msra.mxu0 0.0
  %4628 = vmatprep.subr.mxu0 0.0
  %4629 = vmatpush1.msra.mxu0 0.0
  %4630 = vmatprep.subr.mxu0 0.0
  %4631 = vmatpush1.msra.mxu0 0.0
  %4632 = vmatprep.subr.mxu0 0.0
  %4633 = vmatpush1.msra.mxu0 %v564
  %4634 = vmatprep.subr.mxu0 0.0
  %4635 = vmatpush1.msra.mxu0 %v563
  %4636 = vmatprep.subr.mxu0 0.0
  %4637 = vmatpush2.msra.mxu0 0.0
  %4638 = vmatprep.subr.mxu0 0.0
  %4639 = vmatpush2.msra.mxu0 0.0
  %4640 = vmatprep.subr.mxu0 0.0
  %4641 = vmatpush2.msra.mxu0 0.0
  %4642 = vmatprep.subr.mxu0 0.0
  %4643 = vmatpush2.msra.mxu0 0.0
  %4644 = vmatprep.subr.mxu0 0.0
  %4645 = vmatpush2.msra.mxu0 0.0
  %4646 = vmatprep.subr.mxu0 0.0
  %4647 = vmatpush2.msra.mxu0 0.0
  %4648 = vmatprep.subr.mxu0 0.0
  %4649 = vmatpush2.msra.mxu0 0.0
  %4650 = vmatprep.subr.mxu0 0.0
  %4651 = vmatpush2.msra.mxu0 0.0
  %4652 = vmatprep.subr.mxu0 0.0
  %4653 = vmatpush2.msra.mxu0 0.0
  %4654 = vmatprep.subr.mxu0 0.0
  %4655 = vmatpush2.msra.mxu0 0.0
  %4656 = vmatprep.subr.mxu0 0.0
  %4657 = vmatpush2.msra.mxu0 0.0
  %4658 = vmatprep.subr.mxu0 0.0
  %4659 = vmatpush2.msra.mxu0 0.0
  %4660 = vmatprep.subr.mxu0 0.0
  %4661 = vmatpush2.msra.mxu0 0.0
  %4662 = vmatprep.subr.mxu0 0.0
  %4663 = vmatpush2.msra.mxu0 0.0
  %4664 = vmatprep.subr.mxu0 0.0
  %4665 = vmatpush2.msra.mxu0 0.0
  %4666 = vmatprep.subr.mxu0 0.0
  %4667 = vmatpush2.msra.mxu0 0.0
  %4668 = vmatprep.mubr.f32.mxu0 0.0
  %4669 = vmatmul.mubr.f32.gmra.mxu0 %v4599
  %v4670 = vpop.f32.mrf.mxu0
  %v4671 = vadd.f32 0.0, %v4670
  %v4672 = vpop.f32.mrf.mxu0
  %4673 = vmatprep.mubr.f32.mxu0 0.0
  %4674 = vmatmul.mubr.f32.gmra.mxu0 %v4602
  %v4675 = vpop.f32.mrf.mxu0
  %v4676 = vadd.f32 0.0, %v4675
  %v4677 = vpop.f32.mrf.mxu0
  %4678 = vdwg.mxu0
  %v4679 = vadd.f32 %v1285, %v4671
  %v4680 = vadd.f32 %v1290, %v4676
  %v4682 = vsel %vm248, %v4515, 0
  %v4685 = vsel %vm248, %v4520, 0
  %4687 = vmatprep.subr.mxu0 0.0
  %4688 = vmatpush1.msra.mxu0 0.0
  %4689 = vmatprep.subr.mxu0 0.0
  %4690 = vmatpush1.msra.mxu0 0.0
  %4691 = vmatprep.subr.mxu0 0.0
  %4692 = vmatpush1.msra.mxu0 0.0
  %4693 = vmatprep.subr.mxu0 0.0
  %4694 = vmatpush1.msra.mxu0 0.0
  %4695 = vmatprep.subr.mxu0 0.0
  %4696 = vmatpush1.msra.mxu0 0.0
  %4697 = vmatprep.subr.mxu0 0.0
  %4698 = vmatpush1.msra.mxu0 0.0
  %4699 = vmatprep.subr.mxu0 0.0
  %4700 = vmatpush1.msra.mxu0 0.0
  %4701 = vmatprep.subr.mxu0 0.0
  %4702 = vmatpush1.msra.mxu0 0.0
  %4703 = vmatprep.subr.mxu0 0.0
  %4704 = vmatpush1.msra.mxu0 0.0
  %4705 = vmatprep.subr.mxu0 0.0
  %4706 = vmatpush1.msra.mxu0 0.0
  %4707 = vmatprep.subr.mxu0 0.0
  %4708 = vmatpush1.msra.mxu0 0.0
  %4709 = vmatprep.subr.mxu0 0.0
  %4710 = vmatpush1.msra.mxu0 0.0
  %4711 = vmatprep.subr.mxu0 0.0
  %4712 = vmatpush1.msra.mxu0 0.0
  %4713 = vmatprep.subr.mxu0 0.0
  %4714 = vmatpush1.msra.mxu0 0.0
  %4715 = vmatprep.subr.mxu0 0.0
  %4716 = vmatpush1.msra.mxu0 %v566
  %4717 = vmatprep.subr.mxu0 0.0
  %4718 = vmatpush1.msra.mxu0 %v565
  %4719 = vmatprep.subr.mxu0 0.0
  %4720 = vmatpush2.msra.mxu0 0.0
  %4721 = vmatprep.subr.mxu0 0.0
  %4722 = vmatpush2.msra.mxu0 0.0
  %4723 = vmatprep.subr.mxu0 0.0
  %4724 = vmatpush2.msra.mxu0 0.0
  %4725 = vmatprep.subr.mxu0 0.0
  %4726 = vmatpush2.msra.mxu0 0.0
  %4727 = vmatprep.subr.mxu0 0.0
  %4728 = vmatpush2.msra.mxu0 0.0
  %4729 = vmatprep.subr.mxu0 0.0
  %4730 = vmatpush2.msra.mxu0 0.0
  %4731 = vmatprep.subr.mxu0 0.0
  %4732 = vmatpush2.msra.mxu0 0.0
  %4733 = vmatprep.subr.mxu0 0.0
  %4734 = vmatpush2.msra.mxu0 0.0
  %4735 = vmatprep.subr.mxu0 0.0
  %4736 = vmatpush2.msra.mxu0 0.0
  %4737 = vmatprep.subr.mxu0 0.0
  %4738 = vmatpush2.msra.mxu0 0.0
  %4739 = vmatprep.subr.mxu0 0.0
  %4740 = vmatpush2.msra.mxu0 0.0
  %4741 = vmatprep.subr.mxu0 0.0
  %4742 = vmatpush2.msra.mxu0 0.0
  %4743 = vmatprep.subr.mxu0 0.0
  %4744 = vmatpush2.msra.mxu0 0.0
  %4745 = vmatprep.subr.mxu0 0.0
  %4746 = vmatpush2.msra.mxu0 0.0
  %4747 = vmatprep.subr.mxu0 0.0
  %4748 = vmatpush2.msra.mxu0 0.0
  %4749 = vmatprep.subr.mxu0 0.0
  %4750 = vmatpush2.msra.mxu0 0.0
  %4751 = vmatprep.mubr.f32.mxu0 0.0
  %4752 = vmatmul.mubr.f32.gmra.mxu0 %v4682
  %v4753 = vpop.f32.mrf.mxu0
  %v4754 = vadd.f32 0.0, %v4753
  %v4755 = vpop.f32.mrf.mxu0
  %4756 = vmatprep.mubr.f32.mxu0 0.0
  %4757 = vmatmul.mubr.f32.gmra.mxu0 %v4685
  %v4758 = vpop.f32.mrf.mxu0
  %v4759 = vadd.f32 0.0, %v4758
  %v4760 = vpop.f32.mrf.mxu0
  %4761 = vdwg.mxu0
  %v4762 = vadd.f32 %v4679, %v4754
  %v4763 = vadd.f32 %v4680, %v4759
  %v4764 = vmax.f32 %v4762, 0.0
  %v4765 = vmax.f32 %v4763, 0.0
  %v4767 = vsel %vm248, %v4764, 0
  %v4770 = vsel %vm248, %v4765, 0
  %4772 = vmatprep.subr.mxu0 0.0
  %4773 = vmatpush1.msra.mxu0 0.0
  %4774 = vmatprep.subr.mxu0 0.0
  %4775 = vmatpush1.msra.mxu0 0.0
  %4776 = vmatprep.subr.mxu0 0.0
  %4777 = vmatpush1.msra.mxu0 0.0
  %4778 = vmatprep.subr.mxu0 0.0
  %4779 = vmatpush1.msra.mxu0 0.0
  %4780 = vmatprep.subr.mxu0 0.0
  %4781 = vmatpush1.msra.mxu0 0.0
  %4782 = vmatprep.subr.mxu0 0.0
  %4783 = vmatpush1.msra.mxu0 0.0
  %4784 = vmatprep.subr.mxu0 0.0
  %4785 = vmatpush1.msra.mxu0 0.0
  %4786 = vmatprep.subr.mxu0 0.0
  %4787 = vmatpush1.msra.mxu0 0.0
  %4788 = vmatprep.subr.mxu0 0.0
  %4789 = vmatpush1.msra.mxu0 0.0
  %4790 = vmatprep.subr.mxu0 0.0
  %4791 = vmatpush1.msra.mxu0 0.0
  %4792 = vmatprep.subr.mxu0 0.0
  %4793 = vmatpush1.msra.mxu0 0.0
  %4794 = vmatprep.subr.mxu0 0.0
  %4795 = vmatpush1.msra.mxu0 0.0
  %4796 = vmatprep.subr.mxu0 0.0
  %4797 = vmatpush1.msra.mxu0 0.0
  %4798 = vmatprep.subr.mxu0 0.0
  %4799 = vmatpush1.msra.mxu0 0.0
  %4800 = vmatprep.subr.mxu0 0.0
  %4801 = vmatpush1.msra.mxu0 %v570
  %4802 = vmatprep.subr.mxu0 0.0
  %4803 = vmatpush1.msra.mxu0 %v569
  %4804 = vmatprep.subr.mxu0 0.0
  %4805 = vmatpush2.msra.mxu0 0.0
  %4806 = vmatprep.subr.mxu0 0.0
  %4807 = vmatpush2.msra.mxu0 0.0
  %4808 = vmatprep.subr.mxu0 0.0
  %4809 = vmatpush2.msra.mxu0 0.0
  %4810 = vmatprep.subr.mxu0 0.0
  %4811 = vmatpush2.msra.mxu0 0.0
  %4812 = vmatprep.subr.mxu0 0.0
  %4813 = vmatpush2.msra.mxu0 0.0
  %4814 = vmatprep.subr.mxu0 0.0
  %4815 = vmatpush2.msra.mxu0 0.0
  %4816 = vmatprep.subr.mxu0 0.0
  %4817 = vmatpush2.msra.mxu0 0.0
  %4818 = vmatprep.subr.mxu0 0.0
  %4819 = vmatpush2.msra.mxu0 0.0
  %4820 = vmatprep.subr.mxu0 0.0
  %4821 = vmatpush2.msra.mxu0 0.0
  %4822 = vmatprep.subr.mxu0 0.0
  %4823 = vmatpush2.msra.mxu0 0.0
  %4824 = vmatprep.subr.mxu0 0.0
  %4825 = vmatpush2.msra.mxu0 0.0
  %4826 = vmatprep.subr.mxu0 0.0
  %4827 = vmatpush2.msra.mxu0 0.0
  %4828 = vmatprep.subr.mxu0 0.0
  %4829 = vmatpush2.msra.mxu0 0.0
  %4830 = vmatprep.subr.mxu0 0.0
  %4831 = vmatpush2.msra.mxu0 0.0
  %4832 = vmatprep.subr.mxu0 0.0
  %4833 = vmatpush2.msra.mxu0 0.0
  %4834 = vmatprep.subr.mxu0 0.0
  %4835 = vmatpush2.msra.mxu0 0.0
  %4836 = vmatprep.mubr.f32.mxu0 0.0
  %4837 = vmatmul.mubr.f32.gmra.mxu0 %v4767
  %v4838 = vpop.f32.mrf.mxu0
  %v4839 = vadd.f32 %v583, %v4838
  %v4840 = vpop.f32.mrf.mxu0
  %4841 = vmatprep.mubr.f32.mxu0 0.0
  %4842 = vmatmul.mubr.f32.gmra.mxu0 %v4770
  %v4843 = vpop.f32.mrf.mxu0
  %v4844 = vadd.f32 %v583, %v4843
  %v4845 = vpop.f32.mrf.mxu0
  %4846 = vdwg.mxu0
  %v4847 = vmax.f32 %v4839, 0.0
  %v4848 = vmax.f32 %v4844, 0.0
  %v4850 = vsel %vm595, %v4848, 0
  %4852 = vmatprep.subr.mxu0 0.0
  %4853 = vmatpush1.msra.mxu0 0.0
  %4854 = vmatprep.subr.mxu0 0.0
  %4855 = vmatpush1.msra.mxu0 0.0
  %4856 = vmatprep.subr.mxu0 0.0
  %4857 = vmatpush1.msra.mxu0 0.0
  %4858 = vmatprep.subr.mxu0 0.0
  %4859 = vmatpush1.msra.mxu0 0.0
  %4860 = vmatprep.subr.mxu0 0.0
  %4861 = vmatpush1.msra.mxu0 0.0
  %4862 = vmatprep.subr.mxu0 0.0
  %4863 = vmatpush1.msra.mxu0 0.0
  %4864 = vmatprep.subr.mxu0 0.0
  %4865 = vmatpush1.msra.mxu0 0.0
  %4866 = vmatprep.subr.mxu0 0.0
  %4867 = vmatpush1.msra.mxu0 0.0
  %4868 = vmatprep.subr.mxu0 0.0
  %4869 = vmatpush1.msra.mxu0 0.0
  %4870 = vmatprep.subr.mxu0 0.0
  %4871 = vmatpush1.msra.mxu0 0.0
  %4872 = vmatprep.subr.mxu0 0.0
  %4873 = vmatpush1.msra.mxu0 0.0
  %4874 = vmatprep.subr.mxu0 0.0
  %4875 = vmatpush1.msra.mxu0 0.0
  %4876 = vmatprep.subr.mxu0 0.0
  %4877 = vmatpush1.msra.mxu0 0.0
  %4878 = vmatprep.subr.mxu0 0.0
  %4879 = vmatpush1.msra.mxu0 0.0
  %4880 = vmatprep.subr.mxu0 0.0
  %4881 = vmatpush1.msra.mxu0 %v4850
  %4882 = vmatprep.subr.mxu0 0.0
  %4883 = vmatpush1.msra.mxu0 %v4847
  %4884 = vmatprep.subr.mxu0 0.0
  %4885 = vmatpush2.msra.mxu0 0.0
  %4886 = vmatprep.subr.mxu0 0.0
  %4887 = vmatpush2.msra.mxu0 0.0
  %4888 = vmatprep.subr.mxu0 0.0
  %4889 = vmatpush2.msra.mxu0 0.0
  %4890 = vmatprep.subr.mxu0 0.0
  %4891 = vmatpush2.msra.mxu0 0.0
  %4892 = vmatprep.subr.mxu0 0.0
  %4893 = vmatpush2.msra.mxu0 0.0
  %4894 = vmatprep.subr.mxu0 0.0
  %4895 = vmatpush2.msra.mxu0 0.0
  %4896 = vmatprep.subr.mxu0 0.0
  %4897 = vmatpush2.msra.mxu0 0.0
  %4898 = vmatprep.subr.mxu0 0.0
  %4899 = vmatpush2.msra.mxu0 0.0
  %4900 = vmatprep.subr.mxu0 0.0
  %4901 = vmatpush2.msra.mxu0 0.0
  %4902 = vmatprep.subr.mxu0 0.0
  %4903 = vmatpush2.msra.mxu0 0.0
  %4904 = vmatprep.subr.mxu0 0.0
  %4905 = vmatpush2.msra.mxu0 0.0
  %4906 = vmatprep.subr.mxu0 0.0
  %4907 = vmatpush2.msra.mxu0 0.0
  %4908 = vmatprep.subr.mxu0 0.0
  %4909 = vmatpush2.msra.mxu0 0.0
  %4910 = vmatprep.subr.mxu0 0.0
  %4911 = vmatpush2.msra.mxu0 0.0
  %4912 = vmatprep.subr.mxu0 0.0
  %4913 = vmatpush2.msra.mxu0 0.0
  %4914 = vmatprep.subr.mxu0 0.0
  %4915 = vmatpush2.msra.mxu0 0.0
  %4916 = vmatprep.mubr.f32.mxu0 0.0
  %4917 = vmatmul.mubr.f32.gmra.mxu0 %v587
  %v4918 = vpop.f32.mrf.mxu0
  %v4919 = vadd.f32 0.0, %v4918
  %v4920 = vpop.f32.mrf.mxu0
  %4921 = vmatprep.mubr.f32.mxu0 0.0
  %4922 = vmatmul.mubr.f32.gmra.mxu0 %v590
  %v4923 = vpop.f32.mrf.mxu0
  %v4924 = vadd.f32 0.0, %v4923
  %v4925 = vpop.f32.mrf.mxu0
  %4926 = vmatprep.mubr.f32.mxu0 0.0
  %4927 = vmatmul.mubr.f32.gmra.mxu0 %v593
  %v4928 = vpop.f32.mrf.mxu0
  %v4929 = vadd.f32 0.0, %v4928
  %v4930 = vpop.f32.mrf.mxu0
  %4931 = vdwg.mxu0
  %4932 = vmatprep.subr.mxu0 0.0
  %4933 = vmatpush1.msra.mxu0 0.0
  %4934 = vmatprep.subr.mxu0 0.0
  %4935 = vmatpush1.msra.mxu0 0.0
  %4936 = vmatprep.subr.mxu0 0.0
  %4937 = vmatpush1.msra.mxu0 0.0
  %4938 = vmatprep.subr.mxu0 0.0
  %4939 = vmatpush1.msra.mxu0 0.0
  %4940 = vmatprep.subr.mxu0 0.0
  %4941 = vmatpush1.msra.mxu0 0.0
  %4942 = vmatprep.subr.mxu0 0.0
  %4943 = vmatpush1.msra.mxu0 0.0
  %4944 = vmatprep.subr.mxu0 0.0
  %4945 = vmatpush1.msra.mxu0 0.0
  %4946 = vmatprep.subr.mxu0 0.0
  %4947 = vmatpush1.msra.mxu0 0.0
  %4948 = vmatprep.subr.mxu0 0.0
  %4949 = vmatpush1.msra.mxu0 0.0
  %4950 = vmatprep.subr.mxu0 0.0
  %4951 = vmatpush1.msra.mxu0 0.0
  %4952 = vmatprep.subr.mxu0 0.0
  %4953 = vmatpush1.msra.mxu0 0.0
  %4954 = vmatprep.subr.mxu0 0.0
  %4955 = vmatpush1.msra.mxu0 0.0
  %4956 = vmatprep.subr.mxu0 0.0
  %4957 = vmatpush1.msra.mxu0 0.0
  %4958 = vmatprep.subr.mxu0 0.0
  %4959 = vmatpush1.msra.mxu0 0.0
  %4960 = vmatprep.subr.mxu0 0.0
  %4961 = vmatpush1.msra.mxu0 %v4850
  %4962 = vmatprep.subr.mxu0 0.0
  %4963 = vmatpush1.msra.mxu0 %v4847
  %4964 = vmatprep.subr.mxu0 0.0
  %4965 = vmatpush2.msra.mxu0 0.0
  %4966 = vmatprep.subr.mxu0 0.0
  %4967 = vmatpush2.msra.mxu0 0.0
  %4968 = vmatprep.subr.mxu0 0.0
  %4969 = vmatpush2.msra.mxu0 0.0
  %4970 = vmatprep.subr.mxu0 0.0
  %4971 = vmatpush2.msra.mxu0 0.0
  %4972 = vmatprep.subr.mxu0 0.0
  %4973 = vmatpush2.msra.mxu0 0.0
  %4974 = vmatprep.subr.mxu0 0.0
  %4975 = vmatpush2.msra.mxu0 0.0
  %4976 = vmatprep.subr.mxu0 0.0
  %4977 = vmatpush2.msra.mxu0 0.0
  %4978 = vmatprep.subr.mxu0 0.0
  %4979 = vmatpush2.msra.mxu0 0.0
  %4980 = vmatprep.subr.mxu0 0.0
  %4981 = vmatpush2.msra.mxu0 0.0
  %4982 = vmatprep.subr.mxu0 0.0
  %4983 = vmatpush2.msra.mxu0 0.0
  %4984 = vmatprep.subr.mxu0 0.0
  %4985 = vmatpush2.msra.mxu0 0.0
  %4986 = vmatprep.subr.mxu0 0.0
  %4987 = vmatpush2.msra.mxu0 0.0
  %4988 = vmatprep.subr.mxu0 0.0
  %4989 = vmatpush2.msra.mxu0 0.0
  %4990 = vmatprep.subr.mxu0 0.0
  %4991 = vmatpush2.msra.mxu0 0.0
  %4992 = vmatprep.subr.mxu0 0.0
  %4993 = vmatpush2.msra.mxu0 0.0
  %4994 = vmatprep.subr.mxu0 0.0
  %4995 = vmatpush2.msra.mxu0 0.0
  %4996 = vmatprep.mubr.f32.mxu0 0.0
  %4997 = vmatmul.mubr.f32.gmra.mxu0 %v680
  %v4998 = vpop.f32.mrf.mxu0
  %v4999 = vadd.f32 0.0, %v4998
  %v5000 = vpop.f32.mrf.mxu0
  %5001 = vmatprep.mubr.f32.mxu0 0.0
  %5002 = vmatmul.mubr.f32.gmra.mxu0 %v683
  %v5003 = vpop.f32.mrf.mxu0
  %v5004 = vadd.f32 0.0, %v5003
  %v5005 = vpop.f32.mrf.mxu0
  %5006 = vmatprep.mubr.f32.mxu0 0.0
  %5007 = vmatmul.mubr.f32.gmra.mxu0 %v686
  %v5008 = vpop.f32.mrf.mxu0
  %v5009 = vadd.f32 0.0, %v5008
  %v5010 = vpop.f32.mrf.mxu0
  %5011 = vdwg.mxu0
  %v5013 = vsel %vm248, %v4919, 0
  %v5016 = vsel %vm248, %v4924, 0
  %v5019 = vsel %vm248, %v4929, 0
  %5021 = vmatprep.subr.mxu0 0.0
  %5022 = vmatpush1.msra.mxu0 0.0
  %5023 = vmatprep.subr.mxu0 0.0
  %5024 = vmatpush1.msra.mxu0 0.0
  %5025 = vmatprep.subr.mxu0 0.0
  %5026 = vmatpush1.msra.mxu0 0.0
  %5027 = vmatprep.subr.mxu0 0.0
  %5028 = vmatpush1.msra.mxu0 0.0
  %5029 = vmatprep.subr.mxu0 0.0
  %5030 = vmatpush1.msra.mxu0 0.0
  %5031 = vmatprep.subr.mxu0 0.0
  %5032 = vmatpush1.msra.mxu0 0.0
  %5033 = vmatprep.subr.mxu0 0.0
  %5034 = vmatpush1.msra.mxu0 0.0
  %5035 = vmatprep.subr.mxu0 0.0
  %5036 = vmatpush1.msra.mxu0 0.0
  %5037 = vmatprep.subr.mxu0 0.0
  %5038 = vmatpush1.msra.mxu0 0.0
  %5039 = vmatprep.subr.mxu0 0.0
  %5040 = vmatpush1.msra.mxu0 0.0
  %5041 = vmatprep.subr.mxu0 0.0
  %5042 = vmatpush1.msra.mxu0 0.0
  %5043 = vmatprep.subr.mxu0 0.0
  %5044 = vmatpush1.msra.mxu0 0.0
  %5045 = vmatprep.subr.mxu0 0.0
  %5046 = vmatpush1.msra.mxu0 0.0
  %5047 = vmatprep.subr.mxu0 0.0
  %5048 = vmatpush1.msra.mxu0 0.0
  %5049 = vmatprep.subr.mxu0 0.0
  %5050 = vmatpush1.msra.mxu0 %v552
  %5051 = vmatprep.subr.mxu0 0.0
  %5052 = vmatpush1.msra.mxu0 %v551
  %5053 = vmatprep.subr.mxu0 0.0
  %5054 = vmatpush2.msra.mxu0 0.0
  %5055 = vmatprep.subr.mxu0 0.0
  %5056 = vmatpush2.msra.mxu0 0.0
  %5057 = vmatprep.subr.mxu0 0.0
  %5058 = vmatpush2.msra.mxu0 0.0
  %5059 = vmatprep.subr.mxu0 0.0
  %5060 = vmatpush2.msra.mxu0 0.0
  %5061 = vmatprep.subr.mxu0 0.0
  %5062 = vmatpush2.msra.mxu0 0.0
  %5063 = vmatprep.subr.mxu0 0.0
  %5064 = vmatpush2.msra.mxu0 0.0
  %5065 = vmatprep.subr.mxu0 0.0
  %5066 = vmatpush2.msra.mxu0 0.0
  %5067 = vmatprep.subr.mxu0 0.0
  %5068 = vmatpush2.msra.mxu0 0.0
  %5069 = vmatprep.subr.mxu0 0.0
  %5070 = vmatpush2.msra.mxu0 0.0
  %5071 = vmatprep.subr.mxu0 0.0
  %5072 = vmatpush2.msra.mxu0 0.0
  %5073 = vmatprep.subr.mxu0 0.0
  %5074 = vmatpush2.msra.mxu0 0.0
  %5075 = vmatprep.subr.mxu0 0.0
  %5076 = vmatpush2.msra.mxu0 0.0
  %5077 = vmatprep.subr.mxu0 0.0
  %5078 = vmatpush2.msra.mxu0 0.0
  %5079 = vmatprep.subr.mxu0 0.0
  %5080 = vmatpush2.msra.mxu0 0.0
  %5081 = vmatprep.subr.mxu0 0.0
  %5082 = vmatpush2.msra.mxu0 0.0
  %5083 = vmatprep.subr.mxu0 0.0
  %5084 = vmatpush2.msra.mxu0 0.0
  %5085 = vmatprep.mubr.f32.mxu0 0.0
  %5086 = vmatmul.mubr.f32.gmra.mxu0 %v5013
  %v5087 = vpop.f32.mrf.mxu0
  %v5088 = vadd.f32 0.0, %v5087
  %v5089 = vpop.f32.mrf.mxu0
  %5090 = vmatprep.mubr.f32.mxu0 0.0
  %5091 = vmatmul.mubr.f32.gmra.mxu0 %v5016
  %v5092 = vpop.f32.mrf.mxu0
  %v5093 = vadd.f32 0.0, %v5092
  %v5094 = vpop.f32.mrf.mxu0
  %5095 = vmatprep.mubr.f32.mxu0 0.0
  %5096 = vmatmul.mubr.f32.gmra.mxu0 %v5019
  %v5097 = vpop.f32.mrf.mxu0
  %v5098 = vadd.f32 0.0, %v5097
  %v5099 = vpop.f32.mrf.mxu0
  %5100 = vdwg.mxu0
  %v5101 = vadd.f32 %v1202, %v5088
  %v5102 = vadd.f32 %v1203, %v5093
  %v5103 = vadd.f32 %v1204, %v5098
  %v5105 = vsel %vm248, %v4445, 0
  %v5108 = vsel %vm248, %v4446, 0
  %v5111 = vsel %vm248, %v4447, 0
  %5113 = vmatprep.subr.mxu0 0.0
  %5114 = vmatpush1.msra.mxu0 0.0
  %5115 = vmatprep.subr.mxu0 0.0
  %5116 = vmatpush1.msra.mxu0 0.0
  %5117 = vmatprep.subr.mxu0 0.0
  %5118 = vmatpush1.msra.mxu0 0.0
  %5119 = vmatprep.subr.mxu0 0.0
  %5120 = vmatpush1.msra.mxu0 0.0
  %5121 = vmatprep.subr.mxu0 0.0
  %5122 = vmatpush1.msra.mxu0 0.0
  %5123 = vmatprep.subr.mxu0 0.0
  %5124 = vmatpush1.msra.mxu0 0.0
  %5125 = vmatprep.subr.mxu0 0.0
  %5126 = vmatpush1.msra.mxu0 0.0
  %5127 = vmatprep.subr.mxu0 0.0
  %5128 = vmatpush1.msra.mxu0 0.0
  %5129 = vmatprep.subr.mxu0 0.0
  %5130 = vmatpush1.msra.mxu0 0.0
  %5131 = vmatprep.subr.mxu0 0.0
  %5132 = vmatpush1.msra.mxu0 0.0
  %5133 = vmatprep.subr.mxu0 0.0
  %5134 = vmatpush1.msra.mxu0 0.0
  %5135 = vmatprep.subr.mxu0 0.0
  %5136 = vmatpush1.msra.mxu0 0.0
  %5137 = vmatprep.subr.mxu0 0.0
  %5138 = vmatpush1.msra.mxu0 0.0
  %5139 = vmatprep.subr.mxu0 0.0
  %5140 = vmatpush1.msra.mxu0 0.0
  %5141 = vmatprep.subr.mxu0 0.0
  %5142 = vmatpush1.msra.mxu0 %v556
  %5143 = vmatprep.subr.mxu0 0.0
  %5144 = vmatpush1.msra.mxu0 %v555
  %5145 = vmatprep.subr.mxu0 0.0
  %5146 = vmatpush2.msra.mxu0 0.0
  %5147 = vmatprep.subr.mxu0 0.0
  %5148 = vmatpush2.msra.mxu0 0.0
  %5149 = vmatprep.subr.mxu0 0.0
  %5150 = vmatpush2.msra.mxu0 0.0
  %5151 = vmatprep.subr.mxu0 0.0
  %5152 = vmatpush2.msra.mxu0 0.0
  %5153 = vmatprep.subr.mxu0 0.0
  %5154 = vmatpush2.msra.mxu0 0.0
  %5155 = vmatprep.subr.mxu0 0.0
  %5156 = vmatpush2.msra.mxu0 0.0
  %5157 = vmatprep.subr.mxu0 0.0
  %5158 = vmatpush2.msra.mxu0 0.0
  %5159 = vmatprep.subr.mxu0 0.0
  %5160 = vmatpush2.msra.mxu0 0.0
  %5161 = vmatprep.subr.mxu0 0.0
  %5162 = vmatpush2.msra.mxu0 0.0
  %5163 = vmatprep.subr.mxu0 0.0
  %5164 = vmatpush2.msra.mxu0 0.0
  %5165 = vmatprep.subr.mxu0 0.0
  %5166 = vmatpush2.msra.mxu0 0.0
  %5167 = vmatprep.subr.mxu0 0.0
  %5168 = vmatpush2.msra.mxu0 0.0
  %5169 = vmatprep.subr.mxu0 0.0
  %5170 = vmatpush2.msra.mxu0 0.0
  %5171 = vmatprep.subr.mxu0 0.0
  %5172 = vmatpush2.msra.mxu0 0.0
  %5173 = vmatprep.subr.mxu0 0.0
  %5174 = vmatpush2.msra.mxu0 0.0
  %5175 = vmatprep.subr.mxu0 0.0
  %5176 = vmatpush2.msra.mxu0 0.0
  %5177 = vmatprep.mubr.f32.mxu0 0.0
  %5178 = vmatmul.mubr.f32.gmra.mxu0 %v5105
  %v5179 = vpop.f32.mrf.mxu0
  %v5180 = vadd.f32 0.0, %v5179
  %v5181 = vpop.f32.mrf.mxu0
  %5182 = vmatprep.mubr.f32.mxu0 0.0
  %5183 = vmatmul.mubr.f32.gmra.mxu0 %v5108
  %v5184 = vpop.f32.mrf.mxu0
  %v5185 = vadd.f32 0.0, %v5184
  %v5186 = vpop.f32.mrf.mxu0
  %5187 = vmatprep.mubr.f32.mxu0 0.0
  %5188 = vmatmul.mubr.f32.gmra.mxu0 %v5111
  %v5189 = vpop.f32.mrf.mxu0
  %v5190 = vadd.f32 0.0, %v5189
  %v5191 = vpop.f32.mrf.mxu0
  %5192 = vdwg.mxu0
  %v5193 = vadd.f32 %v5101, %v5180
  %v5194 = vadd.f32 %v5102, %v5185
  %v5195 = vadd.f32 %v5103, %v5190
  %v5197 = vsel %vm248, %v4999, 0
  %v5200 = vsel %vm248, %v5004, 0
  %v5203 = vsel %vm248, %v5009, 0
  %5205 = vmatprep.subr.mxu0 0.0
  %5206 = vmatpush1.msra.mxu0 0.0
  %5207 = vmatprep.subr.mxu0 0.0
  %5208 = vmatpush1.msra.mxu0 0.0
  %5209 = vmatprep.subr.mxu0 0.0
  %5210 = vmatpush1.msra.mxu0 0.0
  %5211 = vmatprep.subr.mxu0 0.0
  %5212 = vmatpush1.msra.mxu0 0.0
  %5213 = vmatprep.subr.mxu0 0.0
  %5214 = vmatpush1.msra.mxu0 0.0
  %5215 = vmatprep.subr.mxu0 0.0
  %5216 = vmatpush1.msra.mxu0 0.0
  %5217 = vmatprep.subr.mxu0 0.0
  %5218 = vmatpush1.msra.mxu0 0.0
  %5219 = vmatprep.subr.mxu0 0.0
  %5220 = vmatpush1.msra.mxu0 0.0
  %5221 = vmatprep.subr.mxu0 0.0
  %5222 = vmatpush1.msra.mxu0 0.0
  %5223 = vmatprep.subr.mxu0 0.0
  %5224 = vmatpush1.msra.mxu0 0.0
  %5225 = vmatprep.subr.mxu0 0.0
  %5226 = vmatpush1.msra.mxu0 0.0
  %5227 = vmatprep.subr.mxu0 0.0
  %5228 = vmatpush1.msra.mxu0 0.0
  %5229 = vmatprep.subr.mxu0 0.0
  %5230 = vmatpush1.msra.mxu0 0.0
  %5231 = vmatprep.subr.mxu0 0.0
  %5232 = vmatpush1.msra.mxu0 0.0
  %5233 = vmatprep.subr.mxu0 0.0
  %5234 = vmatpush1.msra.mxu0 %v560
  %5235 = vmatprep.subr.mxu0 0.0
  %5236 = vmatpush1.msra.mxu0 %v559
  %5237 = vmatprep.subr.mxu0 0.0
  %5238 = vmatpush2.msra.mxu0 0.0
  %5239 = vmatprep.subr.mxu0 0.0
  %5240 = vmatpush2.msra.mxu0 0.0
  %5241 = vmatprep.subr.mxu0 0.0
  %5242 = vmatpush2.msra.mxu0 0.0
  %5243 = vmatprep.subr.mxu0 0.0
  %5244 = vmatpush2.msra.mxu0 0.0
  %5245 = vmatprep.subr.mxu0 0.0
  %5246 = vmatpush2.msra.mxu0 0.0
  %5247 = vmatprep.subr.mxu0 0.0
  %5248 = vmatpush2.msra.mxu0 0.0
  %5249 = vmatprep.subr.mxu0 0.0
  %5250 = vmatpush2.msra.mxu0 0.0
  %5251 = vmatprep.subr.mxu0 0.0
  %5252 = vmatpush2.msra.mxu0 0.0
  %5253 = vmatprep.subr.mxu0 0.0
  %5254 = vmatpush2.msra.mxu0 0.0
  %5255 = vmatprep.subr.mxu0 0.0
  %5256 = vmatpush2.msra.mxu0 0.0
  %5257 = vmatprep.subr.mxu0 0.0
  %5258 = vmatpush2.msra.mxu0 0.0
  %5259 = vmatprep.subr.mxu0 0.0
  %5260 = vmatpush2.msra.mxu0 0.0
  %5261 = vmatprep.subr.mxu0 0.0
  %5262 = vmatpush2.msra.mxu0 0.0
  %5263 = vmatprep.subr.mxu0 0.0
  %5264 = vmatpush2.msra.mxu0 0.0
  %5265 = vmatprep.subr.mxu0 0.0
  %5266 = vmatpush2.msra.mxu0 0.0
  %5267 = vmatprep.subr.mxu0 0.0
  %5268 = vmatpush2.msra.mxu0 0.0
  %5269 = vmatprep.mubr.f32.mxu0 0.0
  %5270 = vmatmul.mubr.f32.gmra.mxu0 %v5197
  %v5271 = vpop.f32.mrf.mxu0
  %v5272 = vadd.f32 0.0, %v5271
  %v5273 = vpop.f32.mrf.mxu0
  %5274 = vmatprep.mubr.f32.mxu0 0.0
  %5275 = vmatmul.mubr.f32.gmra.mxu0 %v5200
  %v5276 = vpop.f32.mrf.mxu0
  %v5277 = vadd.f32 0.0, %v5276
  %v5278 = vpop.f32.mrf.mxu0
  %5279 = vmatprep.mubr.f32.mxu0 0.0
  %5280 = vmatmul.mubr.f32.gmra.mxu0 %v5203
  %v5281 = vpop.f32.mrf.mxu0
  %v5282 = vadd.f32 0.0, %v5281
  %v5283 = vpop.f32.mrf.mxu0
  %5284 = vdwg.mxu0
  %v5285 = vadd.f32 %v5193, %v5272
  %v5286 = vadd.f32 %v5194, %v5277
  %v5287 = vadd.f32 %v5195, %v5282
  %v5288 = vmax.f32 %v5285, 0.0
  %v5289 = vmax.f32 %v5286, 0.0
  %v5290 = vmax.f32 %v5287, 0.0
  %v5292 = vsel %vm248, %v5288, 0
  %v5295 = vsel %vm248, %v5289, 0
  %v5298 = vsel %vm248, %v5290, 0
  %5300 = vmatprep.subr.mxu0 0.0
  %5301 = vmatpush1.msra.mxu0 0.0
  %5302 = vmatprep.subr.mxu0 0.0
  %5303 = vmatpush1.msra.mxu0 0.0
  %5304 = vmatprep.subr.mxu0 0.0
  %5305 = vmatpush1.msra.mxu0 0.0
  %5306 = vmatprep.subr.mxu0 0.0
  %5307 = vmatpush1.msra.mxu0 0.0
  %5308 = vmatprep.subr.mxu0 0.0
  %5309 = vmatpush1.msra.mxu0 0.0
  %5310 = vmatprep.subr.mxu0 0.0
  %5311 = vmatpush1.msra.mxu0 0.0
  %5312 = vmatprep.subr.mxu0 0.0
  %5313 = vmatpush1.msra.mxu0 0.0
  %5314 = vmatprep.subr.mxu0 0.0
  %5315 = vmatpush1.msra.mxu0 0.0
  %5316 = vmatprep.subr.mxu0 0.0
  %5317 = vmatpush1.msra.mxu0 0.0
  %5318 = vmatprep.subr.mxu0 0.0
  %5319 = vmatpush1.msra.mxu0 0.0
  %5320 = vmatprep.subr.mxu0 0.0
  %5321 = vmatpush1.msra.mxu0 0.0
  %5322 = vmatprep.subr.mxu0 0.0
  %5323 = vmatpush1.msra.mxu0 0.0
  %5324 = vmatprep.subr.mxu0 0.0
  %5325 = vmatpush1.msra.mxu0 0.0
  %5326 = vmatprep.subr.mxu0 0.0
  %5327 = vmatpush1.msra.mxu0 0.0
  %5328 = vmatprep.subr.mxu0 0.0
  %5329 = vmatpush1.msra.mxu0 %v568
  %5330 = vmatprep.subr.mxu0 0.0
  %5331 = vmatpush1.msra.mxu0 %v567
  %5332 = vmatprep.subr.mxu0 0.0
  %5333 = vmatpush2.msra.mxu0 0.0
  %5334 = vmatprep.subr.mxu0 0.0
  %5335 = vmatpush2.msra.mxu0 0.0
  %5336 = vmatprep.subr.mxu0 0.0
  %5337 = vmatpush2.msra.mxu0 0.0
  %5338 = vmatprep.subr.mxu0 0.0
  %5339 = vmatpush2.msra.mxu0 0.0
  %5340 = vmatprep.subr.mxu0 0.0
  %5341 = vmatpush2.msra.mxu0 0.0
  %5342 = vmatprep.subr.mxu0 0.0
  %5343 = vmatpush2.msra.mxu0 0.0
  %5344 = vmatprep.subr.mxu0 0.0
  %5345 = vmatpush2.msra.mxu0 0.0
  %5346 = vmatprep.subr.mxu0 0.0
  %5347 = vmatpush2.msra.mxu0 0.0
  %5348 = vmatprep.subr.mxu0 0.0
  %5349 = vmatpush2.msra.mxu0 0.0
  %5350 = vmatprep.subr.mxu0 0.0
  %5351 = vmatpush2.msra.mxu0 0.0
  %5352 = vmatprep.subr.mxu0 0.0
  %5353 = vmatpush2.msra.mxu0 0.0
  %5354 = vmatprep.subr.mxu0 0.0
  %5355 = vmatpush2.msra.mxu0 0.0
  %5356 = vmatprep.subr.mxu0 0.0
  %5357 = vmatpush2.msra.mxu0 0.0
  %5358 = vmatprep.subr.mxu0 0.0
  %5359 = vmatpush2.msra.mxu0 0.0
  %5360 = vmatprep.subr.mxu0 0.0
  %5361 = vmatpush2.msra.mxu0 0.0
  %5362 = vmatprep.subr.mxu0 0.0
  %5363 = vmatpush2.msra.mxu0 0.0
  %5364 = vmatprep.mubr.f32.mxu0 0.0
  %5365 = vmatmul.mubr.f32.gmra.mxu0 %v5292
  %v5366 = vpop.f32.mrf.mxu0
  %v5367 = vadd.f32 %v576, %v5366
  %v5368 = vpop.f32.mrf.mxu0
  %5369 = vmatprep.mubr.f32.mxu0 0.0
  %5370 = vmatmul.mubr.f32.gmra.mxu0 %v5295
  %v5371 = vpop.f32.mrf.mxu0
  %v5372 = vadd.f32 %v576, %v5371
  %v5373 = vpop.f32.mrf.mxu0
  %5374 = vmatprep.mubr.f32.mxu0 0.0
  %5375 = vmatmul.mubr.f32.gmra.mxu0 %v5298
  %v5376 = vpop.f32.mrf.mxu0
  %v5377 = vadd.f32 %v576, %v5376
  %v5378 = vpop.f32.mrf.mxu0
  %5379 = vdwg.mxu0
  %v5380 = vmax.f32 %v5367, 0.0
  %v5381 = vmax.f32 %v5372, 0.0
  %v5382 = vmax.f32 %v5377, 0.0
  %5383 = vmatprep.subr.mxu0 0.0
  %5384 = vmatpush1.msra.mxu0 0.0
  %5385 = vmatprep.subr.mxu0 0.0
  %5386 = vmatpush1.msra.mxu0 0.0
  %5387 = vmatprep.subr.mxu0 0.0
  %5388 = vmatpush1.msra.mxu0 0.0
  %5389 = vmatprep.subr.mxu0 0.0
  %5390 = vmatpush1.msra.mxu0 0.0
  %5391 = vmatprep.subr.mxu0 0.0
  %5392 = vmatpush1.msra.mxu0 0.0
  %5393 = vmatprep.subr.mxu0 0.0
  %5394 = vmatpush1.msra.mxu0 0.0
  %5395 = vmatprep.subr.mxu0 0.0
  %5396 = vmatpush1.msra.mxu0 0.0
  %5397 = vmatprep.subr.mxu0 0.0
  %5398 = vmatpush1.msra.mxu0 0.0
  %5399 = vmatprep.subr.mxu0 0.0
  %5400 = vmatpush1.msra.mxu0 0.0
  %5401 = vmatprep.subr.mxu0 0.0
  %5402 = vmatpush1.msra.mxu0 0.0
  %5403 = vmatprep.subr.mxu0 0.0
  %5404 = vmatpush1.msra.mxu0 0.0
  %5405 = vmatprep.subr.mxu0 0.0
  %5406 = vmatpush1.msra.mxu0 0.0
  %5407 = vmatprep.subr.mxu0 0.0
  %5408 = vmatpush1.msra.mxu0 0.0
  %5409 = vmatprep.subr.mxu0 0.0
  %5410 = vmatpush1.msra.mxu0 %v5382
  %5411 = vmatprep.subr.mxu0 0.0
  %5412 = vmatpush1.msra.mxu0 %v5381
  %5413 = vmatprep.subr.mxu0 0.0
  %5414 = vmatpush1.msra.mxu0 %v5380
  %5415 = vmatprep.subr.mxu0 0.0
  %5416 = vmatpush2.msra.mxu0 0.0
  %5417 = vmatprep.subr.mxu0 0.0
  %5418 = vmatpush2.msra.mxu0 0.0
  %5419 = vmatprep.subr.mxu0 0.0
  %5420 = vmatpush2.msra.mxu0 0.0
  %5421 = vmatprep.subr.mxu0 0.0
  %5422 = vmatpush2.msra.mxu0 0.0
  %5423 = vmatprep.subr.mxu0 0.0
  %5424 = vmatpush2.msra.mxu0 0.0
  %5425 = vmatprep.subr.mxu0 0.0
  %5426 = vmatpush2.msra.mxu0 0.0
  %5427 = vmatprep.subr.mxu0 0.0
  %5428 = vmatpush2.msra.mxu0 0.0
  %5429 = vmatprep.subr.mxu0 0.0
  %5430 = vmatpush2.msra.mxu0 0.0
  %5431 = vmatprep.subr.mxu0 0.0
  %5432 = vmatpush2.msra.mxu0 0.0
  %5433 = vmatprep.subr.mxu0 0.0
  %5434 = vmatpush2.msra.mxu0 0.0
  %5435 = vmatprep.subr.mxu0 0.0
  %5436 = vmatpush2.msra.mxu0 0.0
  %5437 = vmatprep.subr.mxu0 0.0
  %5438 = vmatpush2.msra.mxu0 0.0
  %5439 = vmatprep.subr.mxu0 0.0
  %5440 = vmatpush2.msra.mxu0 0.0
  %5441 = vmatprep.subr.mxu0 0.0
  %5442 = vmatpush2.msra.mxu0 0.0
  %5443 = vmatprep.subr.mxu0 0.0
  %5444 = vmatpush2.msra.mxu0 0.0
  %5445 = vmatprep.subr.mxu0 0.0
  %5446 = vmatpush2.msra.mxu0 0.0
  %5447 = vmatprep.mubr.f32.mxu0 0.0
  %5448 = vmatmul.mubr.f32.gmra.mxu0 %v770
  %v5449 = vpop.f32.mrf.mxu0
  %v5450 = vadd.f32 0.0, %v5449
  %v5451 = vpop.f32.mrf.mxu0
  %5452 = vmatprep.mubr.f32.mxu0 0.0
  %5453 = vmatmul.mubr.f32.gmra.mxu0 %v773
  %v5454 = vpop.f32.mrf.mxu0
  %v5455 = vadd.f32 0.0, %v5454
  %v5456 = vpop.f32.mrf.mxu0
  %5457 = vdwg.mxu0
  %5458 = vmatprep.subr.mxu0 0.0
  %5459 = vmatpush1.msra.mxu0 0.0
  %5460 = vmatprep.subr.mxu0 0.0
  %5461 = vmatpush1.msra.mxu0 0.0
  %5462 = vmatprep.subr.mxu0 0.0
  %5463 = vmatpush1.msra.mxu0 0.0
  %5464 = vmatprep.subr.mxu0 0.0
  %5465 = vmatpush1.msra.mxu0 0.0
  %5466 = vmatprep.subr.mxu0 0.0
  %5467 = vmatpush1.msra.mxu0 0.0
  %5468 = vmatprep.subr.mxu0 0.0
  %5469 = vmatpush1.msra.mxu0 0.0
  %5470 = vmatprep.subr.mxu0 0.0
  %5471 = vmatpush1.msra.mxu0 0.0
  %5472 = vmatprep.subr.mxu0 0.0
  %5473 = vmatpush1.msra.mxu0 0.0
  %5474 = vmatprep.subr.mxu0 0.0
  %5475 = vmatpush1.msra.mxu0 0.0
  %5476 = vmatprep.subr.mxu0 0.0
  %5477 = vmatpush1.msra.mxu0 0.0
  %5478 = vmatprep.subr.mxu0 0.0
  %5479 = vmatpush1.msra.mxu0 0.0
  %5480 = vmatprep.subr.mxu0 0.0
  %5481 = vmatpush1.msra.mxu0 0.0
  %5482 = vmatprep.subr.mxu0 0.0
  %5483 = vmatpush1.msra.mxu0 0.0
  %5484 = vmatprep.subr.mxu0 0.0
  %5485 = vmatpush1.msra.mxu0 0.0
  %5486 = vmatprep.subr.mxu0 0.0
  %5487 = vmatpush1.msra.mxu0 %v4850
  %5488 = vmatprep.subr.mxu0 0.0
  %5489 = vmatpush1.msra.mxu0 %v4847
  %5490 = vmatprep.subr.mxu0 0.0
  %5491 = vmatpush2.msra.mxu0 0.0
  %5492 = vmatprep.subr.mxu0 0.0
  %5493 = vmatpush2.msra.mxu0 0.0
  %5494 = vmatprep.subr.mxu0 0.0
  %5495 = vmatpush2.msra.mxu0 0.0
  %5496 = vmatprep.subr.mxu0 0.0
  %5497 = vmatpush2.msra.mxu0 0.0
  %5498 = vmatprep.subr.mxu0 0.0
  %5499 = vmatpush2.msra.mxu0 0.0
  %5500 = vmatprep.subr.mxu0 0.0
  %5501 = vmatpush2.msra.mxu0 0.0
  %5502 = vmatprep.subr.mxu0 0.0
  %5503 = vmatpush2.msra.mxu0 0.0
  %5504 = vmatprep.subr.mxu0 0.0
  %5505 = vmatpush2.msra.mxu0 0.0
  %5506 = vmatprep.subr.mxu0 0.0
  %5507 = vmatpush2.msra.mxu0 0.0
  %5508 = vmatprep.subr.mxu0 0.0
  %5509 = vmatpush2.msra.mxu0 0.0
  %5510 = vmatprep.subr.mxu0 0.0
  %5511 = vmatpush2.msra.mxu0 0.0
  %5512 = vmatprep.subr.mxu0 0.0
  %5513 = vmatpush2.msra.mxu0 0.0
  %5514 = vmatprep.subr.mxu0 0.0
  %5515 = vmatpush2.msra.mxu0 0.0
  %5516 = vmatprep.subr.mxu0 0.0
  %5517 = vmatpush2.msra.mxu0 0.0
  %5518 = vmatprep.subr.mxu0 0.0
  %5519 = vmatpush2.msra.mxu0 0.0
  %5520 = vmatprep.subr.mxu0 0.0
  %5521 = vmatpush2.msra.mxu0 0.0
  %5522 = vmatprep.mubr.f32.mxu0 0.0
  %5523 = vmatmul.mubr.f32.gmra.mxu0 %v1713
  %v5524 = vpop.f32.mrf.mxu0
  %v5525 = vadd.f32 0.0, %v5524
  %v5526 = vpop.f32.mrf.mxu0
  %5527 = vmatprep.mubr.f32.mxu0 0.0
  %5528 = vmatmul.mubr.f32.gmra.mxu0 %v1716
  %v5529 = vpop.f32.mrf.mxu0
  %v5530 = vadd.f32 0.0, %v5529
  %v5531 = vpop.f32.mrf.mxu0
  %5532 = vdwg.mxu0
  %v5534 = vsel %vm248, %v5525, 0
  %v5537 = vsel %vm248, %v5530, 0
  %5539 = vmatprep.subr.mxu0 0.0
  %5540 = vmatpush1.msra.mxu0 0.0
  %5541 = vmatprep.subr.mxu0 0.0
  %5542 = vmatpush1.msra.mxu0 0.0
  %5543 = vmatprep.subr.mxu0 0.0
  %5544 = vmatpush1.msra.mxu0 0.0
  %5545 = vmatprep.subr.mxu0 0.0
  %5546 = vmatpush1.msra.mxu0 0.0
  %5547 = vmatprep.subr.mxu0 0.0
  %5548 = vmatpush1.msra.mxu0 0.0
  %5549 = vmatprep.subr.mxu0 0.0
  %5550 = vmatpush1.msra.mxu0 0.0
  %5551 = vmatprep.subr.mxu0 0.0
  %5552 = vmatpush1.msra.mxu0 0.0
  %5553 = vmatprep.subr.mxu0 0.0
  %5554 = vmatpush1.msra.mxu0 0.0
  %5555 = vmatprep.subr.mxu0 0.0
  %5556 = vmatpush1.msra.mxu0 0.0
  %5557 = vmatprep.subr.mxu0 0.0
  %5558 = vmatpush1.msra.mxu0 0.0
  %5559 = vmatprep.subr.mxu0 0.0
  %5560 = vmatpush1.msra.mxu0 0.0
  %5561 = vmatprep.subr.mxu0 0.0
  %5562 = vmatpush1.msra.mxu0 0.0
  %5563 = vmatprep.subr.mxu0 0.0
  %5564 = vmatpush1.msra.mxu0 0.0
  %5565 = vmatprep.subr.mxu0 0.0
  %5566 = vmatpush1.msra.mxu0 0.0
  %5567 = vmatprep.subr.mxu0 0.0
  %5568 = vmatpush1.msra.mxu0 %v564
  %5569 = vmatprep.subr.mxu0 0.0
  %5570 = vmatpush1.msra.mxu0 %v563
  %5571 = vmatprep.subr.mxu0 0.0
  %5572 = vmatpush2.msra.mxu0 0.0
  %5573 = vmatprep.subr.mxu0 0.0
  %5574 = vmatpush2.msra.mxu0 0.0
  %5575 = vmatprep.subr.mxu0 0.0
  %5576 = vmatpush2.msra.mxu0 0.0
  %5577 = vmatprep.subr.mxu0 0.0
  %5578 = vmatpush2.msra.mxu0 0.0
  %5579 = vmatprep.subr.mxu0 0.0
  %5580 = vmatpush2.msra.mxu0 0.0
  %5581 = vmatprep.subr.mxu0 0.0
  %5582 = vmatpush2.msra.mxu0 0.0
  %5583 = vmatprep.subr.mxu0 0.0
  %5584 = vmatpush2.msra.mxu0 0.0
  %5585 = vmatprep.subr.mxu0 0.0
  %5586 = vmatpush2.msra.mxu0 0.0
  %5587 = vmatprep.subr.mxu0 0.0
  %5588 = vmatpush2.msra.mxu0 0.0
  %5589 = vmatprep.subr.mxu0 0.0
  %5590 = vmatpush2.msra.mxu0 0.0
  %5591 = vmatprep.subr.mxu0 0.0
  %5592 = vmatpush2.msra.mxu0 0.0
  %5593 = vmatprep.subr.mxu0 0.0
  %5594 = vmatpush2.msra.mxu0 0.0
  %5595 = vmatprep.subr.mxu0 0.0
  %5596 = vmatpush2.msra.mxu0 0.0
  %5597 = vmatprep.subr.mxu0 0.0
  %5598 = vmatpush2.msra.mxu0 0.0
  %5599 = vmatprep.subr.mxu0 0.0
  %5600 = vmatpush2.msra.mxu0 0.0
  %5601 = vmatprep.subr.mxu0 0.0
  %5602 = vmatpush2.msra.mxu0 0.0
  %5603 = vmatprep.mubr.f32.mxu0 0.0
  %5604 = vmatmul.mubr.f32.gmra.mxu0 %v5534
  %v5605 = vpop.f32.mrf.mxu0
  %v5606 = vadd.f32 0.0, %v5605
  %v5607 = vpop.f32.mrf.mxu0
  %5608 = vmatprep.mubr.f32.mxu0 0.0
  %5609 = vmatmul.mubr.f32.gmra.mxu0 %v5537
  %v5610 = vpop.f32.mrf.mxu0
  %v5611 = vadd.f32 0.0, %v5610
  %v5612 = vpop.f32.mrf.mxu0
  %5613 = vdwg.mxu0
  %v5614 = vadd.f32 %v1285, %v5606
  %v5615 = vadd.f32 %v1290, %v5611
  %v5617 = vsel %vm248, %v5450, 0
  %v5620 = vsel %vm248, %v5455, 0
  %5622 = vmatprep.subr.mxu0 0.0
  %5623 = vmatpush1.msra.mxu0 0.0
  %5624 = vmatprep.subr.mxu0 0.0
  %5625 = vmatpush1.msra.mxu0 0.0
  %5626 = vmatprep.subr.mxu0 0.0
  %5627 = vmatpush1.msra.mxu0 0.0
  %5628 = vmatprep.subr.mxu0 0.0
  %5629 = vmatpush1.msra.mxu0 0.0
  %5630 = vmatprep.subr.mxu0 0.0
  %5631 = vmatpush1.msra.mxu0 0.0
  %5632 = vmatprep.subr.mxu0 0.0
  %5633 = vmatpush1.msra.mxu0 0.0
  %5634 = vmatprep.subr.mxu0 0.0
  %5635 = vmatpush1.msra.mxu0 0.0
  %5636 = vmatprep.subr.mxu0 0.0
  %5637 = vmatpush1.msra.mxu0 0.0
  %5638 = vmatprep.subr.mxu0 0.0
  %5639 = vmatpush1.msra.mxu0 0.0
  %5640 = vmatprep.subr.mxu0 0.0
  %5641 = vmatpush1.msra.mxu0 0.0
  %5642 = vmatprep.subr.mxu0 0.0
  %5643 = vmatpush1.msra.mxu0 0.0
  %5644 = vmatprep.subr.mxu0 0.0
  %5645 = vmatpush1.msra.mxu0 0.0
  %5646 = vmatprep.subr.mxu0 0.0
  %5647 = vmatpush1.msra.mxu0 0.0
  %5648 = vmatprep.subr.mxu0 0.0
  %5649 = vmatpush1.msra.mxu0 0.0
  %5650 = vmatprep.subr.mxu0 0.0
  %5651 = vmatpush1.msra.mxu0 %v566
  %5652 = vmatprep.subr.mxu0 0.0
  %5653 = vmatpush1.msra.mxu0 %v565
  %5654 = vmatprep.subr.mxu0 0.0
  %5655 = vmatpush2.msra.mxu0 0.0
  %5656 = vmatprep.subr.mxu0 0.0
  %5657 = vmatpush2.msra.mxu0 0.0
  %5658 = vmatprep.subr.mxu0 0.0
  %5659 = vmatpush2.msra.mxu0 0.0
  %5660 = vmatprep.subr.mxu0 0.0
  %5661 = vmatpush2.msra.mxu0 0.0
  %5662 = vmatprep.subr.mxu0 0.0
  %5663 = vmatpush2.msra.mxu0 0.0
  %5664 = vmatprep.subr.mxu0 0.0
  %5665 = vmatpush2.msra.mxu0 0.0
  %5666 = vmatprep.subr.mxu0 0.0
  %5667 = vmatpush2.msra.mxu0 0.0
  %5668 = vmatprep.subr.mxu0 0.0
  %5669 = vmatpush2.msra.mxu0 0.0
  %5670 = vmatprep.subr.mxu0 0.0
  %5671 = vmatpush2.msra.mxu0 0.0
  %5672 = vmatprep.subr.mxu0 0.0
  %5673 = vmatpush2.msra.mxu0 0.0
  %5674 = vmatprep.subr.mxu0 0.0
  %5675 = vmatpush2.msra.mxu0 0.0
  %5676 = vmatprep.subr.mxu0 0.0
  %5677 = vmatpush2.msra.mxu0 0.0
  %5678 = vmatprep.subr.mxu0 0.0
  %5679 = vmatpush2.msra.mxu0 0.0
  %5680 = vmatprep.subr.mxu0 0.0
  %5681 = vmatpush2.msra.mxu0 0.0
  %5682 = vmatprep.subr.mxu0 0.0
  %5683 = vmatpush2.msra.mxu0 0.0
  %5684 = vmatprep.subr.mxu0 0.0
  %5685 = vmatpush2.msra.mxu0 0.0
  %5686 = vmatprep.mubr.f32.mxu0 0.0
  %5687 = vmatmul.mubr.f32.gmra.mxu0 %v5617
  %v5688 = vpop.f32.mrf.mxu0
  %v5689 = vadd.f32 0.0, %v5688
  %v5690 = vpop.f32.mrf.mxu0
  %5691 = vmatprep.mubr.f32.mxu0 0.0
  %5692 = vmatmul.mubr.f32.gmra.mxu0 %v5620
  %v5693 = vpop.f32.mrf.mxu0
  %v5694 = vadd.f32 0.0, %v5693
  %v5695 = vpop.f32.mrf.mxu0
  %5696 = vdwg.mxu0
  %v5697 = vadd.f32 %v5614, %v5689
  %v5698 = vadd.f32 %v5615, %v5694
  %v5699 = vmax.f32 %v5697, 0.0
  %v5700 = vmax.f32 %v5698, 0.0
  %v5702 = vsel %vm248, %v5699, 0
  %v5705 = vsel %vm248, %v5700, 0
  %5707 = vmatprep.subr.mxu0 0.0
  %5708 = vmatpush1.msra.mxu0 0.0
  %5709 = vmatprep.subr.mxu0 0.0
  %5710 = vmatpush1.msra.mxu0 0.0
  %5711 = vmatprep.subr.mxu0 0.0
  %5712 = vmatpush1.msra.mxu0 0.0
  %5713 = vmatprep.subr.mxu0 0.0
  %5714 = vmatpush1.msra.mxu0 0.0
  %5715 = vmatprep.subr.mxu0 0.0
  %5716 = vmatpush1.msra.mxu0 0.0
  %5717 = vmatprep.subr.mxu0 0.0
  %5718 = vmatpush1.msra.mxu0 0.0
  %5719 = vmatprep.subr.mxu0 0.0
  %5720 = vmatpush1.msra.mxu0 0.0
  %5721 = vmatprep.subr.mxu0 0.0
  %5722 = vmatpush1.msra.mxu0 0.0
  %5723 = vmatprep.subr.mxu0 0.0
  %5724 = vmatpush1.msra.mxu0 0.0
  %5725 = vmatprep.subr.mxu0 0.0
  %5726 = vmatpush1.msra.mxu0 0.0
  %5727 = vmatprep.subr.mxu0 0.0
  %5728 = vmatpush1.msra.mxu0 0.0
  %5729 = vmatprep.subr.mxu0 0.0
  %5730 = vmatpush1.msra.mxu0 0.0
  %5731 = vmatprep.subr.mxu0 0.0
  %5732 = vmatpush1.msra.mxu0 0.0
  %5733 = vmatprep.subr.mxu0 0.0
  %5734 = vmatpush1.msra.mxu0 0.0
  %5735 = vmatprep.subr.mxu0 0.0
  %5736 = vmatpush1.msra.mxu0 %v570
  %5737 = vmatprep.subr.mxu0 0.0
  %5738 = vmatpush1.msra.mxu0 %v569
  %5739 = vmatprep.subr.mxu0 0.0
  %5740 = vmatpush2.msra.mxu0 0.0
  %5741 = vmatprep.subr.mxu0 0.0
  %5742 = vmatpush2.msra.mxu0 0.0
  %5743 = vmatprep.subr.mxu0 0.0
  %5744 = vmatpush2.msra.mxu0 0.0
  %5745 = vmatprep.subr.mxu0 0.0
  %5746 = vmatpush2.msra.mxu0 0.0
  %5747 = vmatprep.subr.mxu0 0.0
  %5748 = vmatpush2.msra.mxu0 0.0
  %5749 = vmatprep.subr.mxu0 0.0
  %5750 = vmatpush2.msra.mxu0 0.0
  %5751 = vmatprep.subr.mxu0 0.0
  %5752 = vmatpush2.msra.mxu0 0.0
  %5753 = vmatprep.subr.mxu0 0.0
  %5754 = vmatpush2.msra.mxu0 0.0
  %5755 = vmatprep.subr.mxu0 0.0
  %5756 = vmatpush2.msra.mxu0 0.0
  %5757 = vmatprep.subr.mxu0 0.0
  %5758 = vmatpush2.msra.mxu0 0.0
  %5759 = vmatprep.subr.mxu0 0.0
  %5760 = vmatpush2.msra.mxu0 0.0
  %5761 = vmatprep.subr.mxu0 0.0
  %5762 = vmatpush2.msra.mxu0 0.0
  %5763 = vmatprep.subr.mxu0 0.0
  %5764 = vmatpush2.msra.mxu0 0.0
  %5765 = vmatprep.subr.mxu0 0.0
  %5766 = vmatpush2.msra.mxu0 0.0
  %5767 = vmatprep.subr.mxu0 0.0
  %5768 = vmatpush2.msra.mxu0 0.0
  %5769 = vmatprep.subr.mxu0 0.0
  %5770 = vmatpush2.msra.mxu0 0.0
  %5771 = vmatprep.mubr.f32.mxu0 0.0
  %5772 = vmatmul.mubr.f32.gmra.mxu0 %v5702
  %v5773 = vpop.f32.mrf.mxu0
  %v5774 = vadd.f32 %v583, %v5773
  %v5775 = vpop.f32.mrf.mxu0
  %5776 = vmatprep.mubr.f32.mxu0 0.0
  %5777 = vmatmul.mubr.f32.gmra.mxu0 %v5705
  %v5778 = vpop.f32.mrf.mxu0
  %v5779 = vadd.f32 %v583, %v5778
  %v5780 = vpop.f32.mrf.mxu0
  %5781 = vdwg.mxu0
  %v5782 = vmax.f32 %v5774, 0.0
  %v5783 = vmax.f32 %v5779, 0.0
  %v5784 = vld [vmem:[%s43] sm:$0xff]
  %v5785 = vld [vmem:[%s43 + $0x8] sm:$0xff]
  %v5786 = vld [vmem:[%s45] sm:$0x1]
  %v5788 = vlaneseq
  %v5789 = vshrl.u32 %v5788, 7
  %v5790 = vsub.s32 0, %v5789
  %v5791 = vrot.slane %v5786, %v5790
  %v5794 = vsel %vm248, %v5782, 0
  %v5797 = vsel %vm248, %v5783, 0
  %5799 = vmatprep.subr.mxu0 0.0
  %5800 = vmatpush1.msra.mxu0 0.0
  %5801 = vmatprep.subr.mxu0 0.0
  %5802 = vmatpush1.msra.mxu0 0.0
  %5803 = vmatprep.subr.mxu0 0.0
  %5804 = vmatpush1.msra.mxu0 0.0
  %5805 = vmatprep.subr.mxu0 0.0
  %5806 = vmatpush1.msra.mxu0 0.0
  %5807 = vmatprep.subr.mxu0 0.0
  %5808 = vmatpush1.msra.mxu0 0.0
  %5809 = vmatprep.subr.mxu0 0.0
  %5810 = vmatpush1.msra.mxu0 0.0
  %5811 = vmatprep.subr.mxu0 0.0
  %5812 = vmatpush1.msra.mxu0 0.0
  %5813 = vmatprep.subr.mxu0 0.0
  %5814 = vmatpush1.msra.mxu0 0.0
  %5815 = vmatprep.subr.mxu0 0.0
  %5816 = vmatpush1.msra.mxu0 0.0
  %5817 = vmatprep.subr.mxu0 0.0
  %5818 = vmatpush1.msra.mxu0 0.0
  %5819 = vmatprep.subr.mxu0 0.0
  %5820 = vmatpush1.msra.mxu0 0.0
  %5821 = vmatprep.subr.mxu0 0.0
  %5822 = vmatpush1.msra.mxu0 0.0
  %5823 = vmatprep.subr.mxu0 0.0
  %5824 = vmatpush1.msra.mxu0 0.0
  %5825 = vmatprep.subr.mxu0 0.0
  %5826 = vmatpush1.msra.mxu0 0.0
  %5827 = vmatprep.subr.mxu0 0.0
  %5828 = vmatpush1.msra.mxu0 %v5785
  %5829 = vmatprep.subr.mxu0 0.0
  %5830 = vmatpush1.msra.mxu0 %v5784
  %5831 = vmatprep.subr.mxu0 0.0
  %5832 = vmatpush2.msra.mxu0 0.0
  %5833 = vmatprep.subr.mxu0 0.0
  %5834 = vmatpush2.msra.mxu0 0.0
  %5835 = vmatprep.subr.mxu0 0.0
  %5836 = vmatpush2.msra.mxu0 0.0
  %5837 = vmatprep.subr.mxu0 0.0
  %5838 = vmatpush2.msra.mxu0 0.0
  %5839 = vmatprep.subr.mxu0 0.0
  %5840 = vmatpush2.msra.mxu0 0.0
  %5841 = vmatprep.subr.mxu0 0.0
  %5842 = vmatpush2.msra.mxu0 0.0
  %5843 = vmatprep.subr.mxu0 0.0
  %5844 = vmatpush2.msra.mxu0 0.0
  %5845 = vmatprep.subr.mxu0 0.0
  %5846 = vmatpush2.msra.mxu0 0.0
  %5847 = vmatprep.subr.mxu0 0.0
  %5848 = vmatpush2.msra.mxu0 0.0
  %5849 = vmatprep.subr.mxu0 0.0
  %5850 = vmatpush2.msra.mxu0 0.0
  %5851 = vmatprep.subr.mxu0 0.0
  %5852 = vmatpush2.msra.mxu0 0.0
  %5853 = vmatprep.subr.mxu0 0.0
  %5854 = vmatpush2.msra.mxu0 0.0
  %5855 = vmatprep.subr.mxu0 0.0
  %5856 = vmatpush2.msra.mxu0 0.0
  %5857 = vmatprep.subr.mxu0 0.0
  %5858 = vmatpush2.msra.mxu0 0.0
  %5859 = vmatprep.subr.mxu0 0.0
  %5860 = vmatpush2.msra.mxu0 0.0
  %5861 = vmatprep.subr.mxu0 0.0
  %5862 = vmatpush2.msra.mxu0 0.0
  %5863 = vmatprep.mubr.f32.mxu0 0.0
  %5864 = vmatmul.mubr.f32.gmra.mxu0 %v5794
  %v5865 = vpop.f32.mrf.mxu0
  %v5866 = vadd.f32 %v5791, %v5865
  %v5867 = vpop.f32.mrf.mxu0
  %5868 = vmatprep.mubr.f32.mxu0 0.0
  %5869 = vmatmul.mubr.f32.gmra.mxu0 %v5797
  %v5870 = vpop.f32.mrf.mxu0
  %v5871 = vadd.f32 %v5791, %v5870
  %v5872 = vpop.f32.mrf.mxu0
  %5873 = vdwg.mxu0
  %v5874 = vmax.f32 %v5866, 0.0
  %v5875 = vmax.f32 %v5871, 0.0
  %v5876 = vld [vmem:[%s47] sm:$0xff]
  %v5877 = vld [vmem:[%s47 + $0x8] sm:$0xff]
  %v5878 = vld [vmem:[%s49] sm:$0x1]
  %v5880 = vlaneseq
  %v5881 = vshrl.u32 %v5880, 7
  %v5882 = vsub.s32 0, %v5881
  %v5883 = vrot.slane %v5878, %v5882
  %v5886 = vsel %vm248, %v5874, 0
  %v5889 = vsel %vm248, %v5875, 0
  %5891 = vmatprep.subr.mxu0 0.0
  %5892 = vmatpush1.msra.mxu0 0.0
  %5893 = vmatprep.subr.mxu0 0.0
  %5894 = vmatpush1.msra.mxu0 0.0
  %5895 = vmatprep.subr.mxu0 0.0
  %5896 = vmatpush1.msra.mxu0 0.0
  %5897 = vmatprep.subr.mxu0 0.0
  %5898 = vmatpush1.msra.mxu0 0.0
  %5899 = vmatprep.subr.mxu0 0.0
  %5900 = vmatpush1.msra.mxu0 0.0
  %5901 = vmatprep.subr.mxu0 0.0
  %5902 = vmatpush1.msra.mxu0 0.0
  %5903 = vmatprep.subr.mxu0 0.0
  %5904 = vmatpush1.msra.mxu0 0.0
  %5905 = vmatprep.subr.mxu0 0.0
  %5906 = vmatpush1.msra.mxu0 0.0
  %5907 = vmatprep.subr.mxu0 0.0
  %5908 = vmatpush1.msra.mxu0 0.0
  %5909 = vmatprep.subr.mxu0 0.0
  %5910 = vmatpush1.msra.mxu0 0.0
  %5911 = vmatprep.subr.mxu0 0.0
  %5912 = vmatpush1.msra.mxu0 0.0
  %5913 = vmatprep.subr.mxu0 0.0
  %5914 = vmatpush1.msra.mxu0 0.0
  %5915 = vmatprep.subr.mxu0 0.0
  %5916 = vmatpush1.msra.mxu0 0.0
  %5917 = vmatprep.subr.mxu0 0.0
  %5918 = vmatpush1.msra.mxu0 0.0
  %5919 = vmatprep.subr.mxu0 0.0
  %5920 = vmatpush1.msra.mxu0 %v5877
  %5921 = vmatprep.subr.mxu0 0.0
  %5922 = vmatpush1.msra.mxu0 %v5876
  %5923 = vmatprep.subr.mxu0 0.0
  %5924 = vmatpush2.msra.mxu0 0.0
  %5925 = vmatprep.subr.mxu0 0.0
  %5926 = vmatpush2.msra.mxu0 0.0
  %5927 = vmatprep.subr.mxu0 0.0
  %5928 = vmatpush2.msra.mxu0 0.0
  %5929 = vmatprep.subr.mxu0 0.0
  %5930 = vmatpush2.msra.mxu0 0.0
  %5931 = vmatprep.subr.mxu0 0.0
  %5932 = vmatpush2.msra.mxu0 0.0
  %5933 = vmatprep.subr.mxu0 0.0
  %5934 = vmatpush2.msra.mxu0 0.0
  %5935 = vmatprep.subr.mxu0 0.0
  %5936 = vmatpush2.msra.mxu0 0.0
  %5937 = vmatprep.subr.mxu0 0.0
  %5938 = vmatpush2.msra.mxu0 0.0
  %5939 = vmatprep.subr.mxu0 0.0
  %5940 = vmatpush2.msra.mxu0 0.0
  %5941 = vmatprep.subr.mxu0 0.0
  %5942 = vmatpush2.msra.mxu0 0.0
  %5943 = vmatprep.subr.mxu0 0.0
  %5944 = vmatpush2.msra.mxu0 0.0
  %5945 = vmatprep.subr.mxu0 0.0
  %5946 = vmatpush2.msra.mxu0 0.0
  %5947 = vmatprep.subr.mxu0 0.0
  %5948 = vmatpush2.msra.mxu0 0.0
  %5949 = vmatprep.subr.mxu0 0.0
  %5950 = vmatpush2.msra.mxu0 0.0
  %5951 = vmatprep.subr.mxu0 0.0
  %5952 = vmatpush2.msra.mxu0 0.0
  %5953 = vmatprep.subr.mxu0 0.0
  %5954 = vmatpush2.msra.mxu0 0.0
  %5955 = vmatprep.mubr.f32.mxu0 0.0
  %5956 = vmatmul.mubr.f32.gmra.mxu0 %v5886
  %v5957 = vpop.f32.mrf.mxu0
  %v5958 = vadd.f32 %v5883, %v5957
  %v5959 = vpop.f32.mrf.mxu0
  %5960 = vmatprep.mubr.f32.mxu0 0.0
  %5961 = vmatmul.mubr.f32.gmra.mxu0 %v5889
  %v5962 = vpop.f32.mrf.mxu0
  %v5963 = vadd.f32 %v5883, %v5962
  %v5964 = vpop.f32.mrf.mxu0
  %5965 = vdwg.mxu0
  %v5966 = vmax.f32 %v5958, 0.0
  %v5967 = vmax.f32 %v5963, 0.0
  %v5968 = vld [vmem:[%s51] sm:$0xff]
  %v5969 = vld [vmem:[%s51 + $0x8] sm:$0xff]
  %v5970 = vld [vmem:[%s53] sm:$0x1]
  %v5972 = vlaneseq
  %v5973 = vshrl.u32 %v5972, 7
  %v5974 = vsub.s32 0, %v5973
  %v5975 = vrot.slane %v5970, %v5974
  %v5978 = vsel %vm248, %v5966, 0
  %v5981 = vsel %vm248, %v5967, 0
  %5983 = vmatprep.subr.mxu0 0.0
  %5984 = vmatpush1.msra.mxu0 0.0
  %5985 = vmatprep.subr.mxu0 0.0
  %5986 = vmatpush1.msra.mxu0 0.0
  %5987 = vmatprep.subr.mxu0 0.0
  %5988 = vmatpush1.msra.mxu0 0.0
  %5989 = vmatprep.subr.mxu0 0.0
  %5990 = vmatpush1.msra.mxu0 0.0
  %5991 = vmatprep.subr.mxu0 0.0
  %5992 = vmatpush1.msra.mxu0 0.0
  %5993 = vmatprep.subr.mxu0 0.0
  %5994 = vmatpush1.msra.mxu0 0.0
  %5995 = vmatprep.subr.mxu0 0.0
  %5996 = vmatpush1.msra.mxu0 0.0
  %5997 = vmatprep.subr.mxu0 0.0
  %5998 = vmatpush1.msra.mxu0 0.0
  %5999 = vmatprep.subr.mxu0 0.0
  %6000 = vmatpush1.msra.mxu0 0.0
  %6001 = vmatprep.subr.mxu0 0.0
  %6002 = vmatpush1.msra.mxu0 0.0
  %6003 = vmatprep.subr.mxu0 0.0
  %6004 = vmatpush1.msra.mxu0 0.0
  %6005 = vmatprep.subr.mxu0 0.0
  %6006 = vmatpush1.msra.mxu0 0.0
  %6007 = vmatprep.subr.mxu0 0.0
  %6008 = vmatpush1.msra.mxu0 0.0
  %6009 = vmatprep.subr.mxu0 0.0
  %6010 = vmatpush1.msra.mxu0 0.0
  %6011 = vmatprep.subr.mxu0 0.0
  %6012 = vmatpush1.msra.mxu0 %v5969
  %6013 = vmatprep.subr.mxu0 0.0
  %6014 = vmatpush1.msra.mxu0 %v5968
  %6015 = vmatprep.subr.mxu0 0.0
  %6016 = vmatpush2.msra.mxu0 0.0
  %6017 = vmatprep.subr.mxu0 0.0
  %6018 = vmatpush2.msra.mxu0 0.0
  %6019 = vmatprep.subr.mxu0 0.0
  %6020 = vmatpush2.msra.mxu0 0.0
  %6021 = vmatprep.subr.mxu0 0.0
  %6022 = vmatpush2.msra.mxu0 0.0
  %6023 = vmatprep.subr.mxu0 0.0
  %6024 = vmatpush2.msra.mxu0 0.0
  %6025 = vmatprep.subr.mxu0 0.0
  %6026 = vmatpush2.msra.mxu0 0.0
  %6027 = vmatprep.subr.mxu0 0.0
  %6028 = vmatpush2.msra.mxu0 0.0
  %6029 = vmatprep.subr.mxu0 0.0
  %6030 = vmatpush2.msra.mxu0 0.0
  %6031 = vmatprep.subr.mxu0 0.0
  %6032 = vmatpush2.msra.mxu0 0.0
  %6033 = vmatprep.subr.mxu0 0.0
  %6034 = vmatpush2.msra.mxu0 0.0
  %6035 = vmatprep.subr.mxu0 0.0
  %6036 = vmatpush2.msra.mxu0 0.0
  %6037 = vmatprep.subr.mxu0 0.0
  %6038 = vmatpush2.msra.mxu0 0.0
  %6039 = vmatprep.subr.mxu0 0.0
  %6040 = vmatpush2.msra.mxu0 0.0
  %6041 = vmatprep.subr.mxu0 0.0
  %6042 = vmatpush2.msra.mxu0 0.0
  %6043 = vmatprep.subr.mxu0 0.0
  %6044 = vmatpush2.msra.mxu0 0.0
  %6045 = vmatprep.subr.mxu0 0.0
  %6046 = vmatpush2.msra.mxu0 0.0
  %6047 = vmatprep.mubr.f32.mxu0 0.0
  %6048 = vmatmul.mubr.f32.gmra.mxu0 %v5978
  %v6049 = vpop.f32.mrf.mxu0
  %v6050 = vadd.f32 %v5975, %v6049
  %v6051 = vpop.f32.mrf.mxu0
  %6052 = vmatprep.mubr.f32.mxu0 0.0
  %6053 = vmatmul.mubr.f32.gmra.mxu0 %v5981
  %v6054 = vpop.f32.mrf.mxu0
  %v6055 = vadd.f32 %v5975, %v6054
  %v6056 = vpop.f32.mrf.mxu0
  %6057 = vdwg.mxu0
  %6058 = vst [vmem:[%s67] sm:$0xff] %v6050
  %6059 = vst [vmem:[%s67 + $0x8] sm:$0xf] %v6055
  %v6060 = vld [vmem:[%s55] sm:$0xff]
  %v6061 = vld [vmem:[%s55 + $0x8] sm:$0xff]
  %v6062 = vld [vmem:[%s57] sm:$0x1]
  %v6064 = vlaneseq
  %v6065 = vshrl.u32 %v6064, 7
  %v6066 = vsub.s32 0, %v6065
  %v6067 = vrot.slane %v6062, %v6066
  %v6070 = vsel %vm248, %v5380, 0
  %v6073 = vsel %vm248, %v5381, 0
  %v6076 = vsel %vm248, %v5382, 0
  %6078 = vmatprep.subr.mxu0 0.0
  %6079 = vmatpush1.msra.mxu0 0.0
  %6080 = vmatprep.subr.mxu0 0.0
  %6081 = vmatpush1.msra.mxu0 0.0
  %6082 = vmatprep.subr.mxu0 0.0
  %6083 = vmatpush1.msra.mxu0 0.0
  %6084 = vmatprep.subr.mxu0 0.0
  %6085 = vmatpush1.msra.mxu0 0.0
  %6086 = vmatprep.subr.mxu0 0.0
  %6087 = vmatpush1.msra.mxu0 0.0
  %6088 = vmatprep.subr.mxu0 0.0
  %6089 = vmatpush1.msra.mxu0 0.0
  %6090 = vmatprep.subr.mxu0 0.0
  %6091 = vmatpush1.msra.mxu0 0.0
  %6092 = vmatprep.subr.mxu0 0.0
  %6093 = vmatpush1.msra.mxu0 0.0
  %6094 = vmatprep.subr.mxu0 0.0
  %6095 = vmatpush1.msra.mxu0 0.0
  %6096 = vmatprep.subr.mxu0 0.0
  %6097 = vmatpush1.msra.mxu0 0.0
  %6098 = vmatprep.subr.mxu0 0.0
  %6099 = vmatpush1.msra.mxu0 0.0
  %6100 = vmatprep.subr.mxu0 0.0
  %6101 = vmatpush1.msra.mxu0 0.0
  %6102 = vmatprep.subr.mxu0 0.0
  %6103 = vmatpush1.msra.mxu0 0.0
  %6104 = vmatprep.subr.mxu0 0.0
  %6105 = vmatpush1.msra.mxu0 0.0
  %6106 = vmatprep.subr.mxu0 0.0
  %6107 = vmatpush1.msra.mxu0 %v6061
  %6108 = vmatprep.subr.mxu0 0.0
  %6109 = vmatpush1.msra.mxu0 %v6060
  %6110 = vmatprep.subr.mxu0 0.0
  %6111 = vmatpush2.msra.mxu0 0.0
  %6112 = vmatprep.subr.mxu0 0.0
  %6113 = vmatpush2.msra.mxu0 0.0
  %6114 = vmatprep.subr.mxu0 0.0
  %6115 = vmatpush2.msra.mxu0 0.0
  %6116 = vmatprep.subr.mxu0 0.0
  %6117 = vmatpush2.msra.mxu0 0.0
  %6118 = vmatprep.subr.mxu0 0.0
  %6119 = vmatpush2.msra.mxu0 0.0
  %6120 = vmatprep.subr.mxu0 0.0
  %6121 = vmatpush2.msra.mxu0 0.0
  %6122 = vmatprep.subr.mxu0 0.0
  %6123 = vmatpush2.msra.mxu0 0.0
  %6124 = vmatprep.subr.mxu0 0.0
  %6125 = vmatpush2.msra.mxu0 0.0
  %6126 = vmatprep.subr.mxu0 0.0
  %6127 = vmatpush2.msra.mxu0 0.0
  %6128 = vmatprep.subr.mxu0 0.0
  %6129 = vmatpush2.msra.mxu0 0.0
  %6130 = vmatprep.subr.mxu0 0.0
  %6131 = vmatpush2.msra.mxu0 0.0
  %6132 = vmatprep.subr.mxu0 0.0
  %6133 = vmatpush2.msra.mxu0 0.0
  %6134 = vmatprep.subr.mxu0 0.0
  %6135 = vmatpush2.msra.mxu0 0.0
  %6136 = vmatprep.subr.mxu0 0.0
  %6137 = vmatpush2.msra.mxu0 0.0
  %6138 = vmatprep.subr.mxu0 0.0
  %6139 = vmatpush2.msra.mxu0 0.0
  %6140 = vmatprep.subr.mxu0 0.0
  %6141 = vmatpush2.msra.mxu0 0.0
  %6142 = vmatprep.mubr.f32.mxu0 0.0
  %6143 = vmatmul.mubr.f32.gmra.mxu0 %v6070
  %v6144 = vpop.f32.mrf.mxu0
  %v6145 = vadd.f32 %v6067, %v6144
  %v6146 = vpop.f32.mrf.mxu0
  %6147 = vmatprep.mubr.f32.mxu0 0.0
  %6148 = vmatmul.mubr.f32.gmra.mxu0 %v6073
  %v6149 = vpop.f32.mrf.mxu0
  %v6150 = vadd.f32 %v6067, %v6149
  %v6151 = vpop.f32.mrf.mxu0
  %6152 = vmatprep.mubr.f32.mxu0 0.0
  %6153 = vmatmul.mubr.f32.gmra.mxu0 %v6076
  %v6154 = vpop.f32.mrf.mxu0
  %v6155 = vadd.f32 %v6067, %v6154
  %v6156 = vpop.f32.mrf.mxu0
  %6157 = vdwg.mxu0
  %v6158 = vmax.f32 %v6145, 0.0
  %v6159 = vmax.f32 %v6150, 0.0
  %v6160 = vmax.f32 %v6155, 0.0
  %v6161 = vld [vmem:[%s59] sm:$0xff]
  %v6162 = vld [vmem:[%s59 + $0x8] sm:$0xff]
  %v6163 = vld [vmem:[%s61] sm:$0x1]
  %v6165 = vlaneseq
  %v6166 = vshrl.u32 %v6165, 7
  %v6167 = vsub.s32 0, %v6166
  %v6168 = vrot.slane %v6163, %v6167
  %v6171 = vsel %vm248, %v6158, 0
  %v6174 = vsel %vm248, %v6159, 0
  %v6177 = vsel %vm248, %v6160, 0
  %6179 = vmatprep.subr.mxu0 0.0
  %6180 = vmatpush1.msra.mxu0 0.0
  %6181 = vmatprep.subr.mxu0 0.0
  %6182 = vmatpush1.msra.mxu0 0.0
  %6183 = vmatprep.subr.mxu0 0.0
  %6184 = vmatpush1.msra.mxu0 0.0
  %6185 = vmatprep.subr.mxu0 0.0
  %6186 = vmatpush1.msra.mxu0 0.0
  %6187 = vmatprep.subr.mxu0 0.0
  %6188 = vmatpush1.msra.mxu0 0.0
  %6189 = vmatprep.subr.mxu0 0.0
  %6190 = vmatpush1.msra.mxu0 0.0
  %6191 = vmatprep.subr.mxu0 0.0
  %6192 = vmatpush1.msra.mxu0 0.0
  %6193 = vmatprep.subr.mxu0 0.0
  %6194 = vmatpush1.msra.mxu0 0.0
  %6195 = vmatprep.subr.mxu0 0.0
  %6196 = vmatpush1.msra.mxu0 0.0
  %6197 = vmatprep.subr.mxu0 0.0
  %6198 = vmatpush1.msra.mxu0 0.0
  %6199 = vmatprep.subr.mxu0 0.0
  %6200 = vmatpush1.msra.mxu0 0.0
  %6201 = vmatprep.subr.mxu0 0.0
  %6202 = vmatpush1.msra.mxu0 0.0
  %6203 = vmatprep.subr.mxu0 0.0
  %6204 = vmatpush1.msra.mxu0 0.0
  %6205 = vmatprep.subr.mxu0 0.0
  %6206 = vmatpush1.msra.mxu0 0.0
  %6207 = vmatprep.subr.mxu0 0.0
  %6208 = vmatpush1.msra.mxu0 %v6162
  %6209 = vmatprep.subr.mxu0 0.0
  %6210 = vmatpush1.msra.mxu0 %v6161
  %6211 = vmatprep.subr.mxu0 0.0
  %6212 = vmatpush2.msra.mxu0 0.0
  %6213 = vmatprep.subr.mxu0 0.0
  %6214 = vmatpush2.msra.mxu0 0.0
  %6215 = vmatprep.subr.mxu0 0.0
  %6216 = vmatpush2.msra.mxu0 0.0
  %6217 = vmatprep.subr.mxu0 0.0
  %6218 = vmatpush2.msra.mxu0 0.0
  %6219 = vmatprep.subr.mxu0 0.0
  %6220 = vmatpush2.msra.mxu0 0.0
  %6221 = vmatprep.subr.mxu0 0.0
  %6222 = vmatpush2.msra.mxu0 0.0
  %6223 = vmatprep.subr.mxu0 0.0
  %6224 = vmatpush2.msra.mxu0 0.0
  %6225 = vmatprep.subr.mxu0 0.0
  %6226 = vmatpush2.msra.mxu0 0.0
  %6227 = vmatprep.subr.mxu0 0.0
  %6228 = vmatpush2.msra.mxu0 0.0
  %6229 = vmatprep.subr.mxu0 0.0
  %6230 = vmatpush2.msra.mxu0 0.0
  %6231 = vmatprep.subr.mxu0 0.0
  %6232 = vmatpush2.msra.mxu0 0.0
  %6233 = vmatprep.subr.mxu0 0.0
  %6234 = vmatpush2.msra.mxu0 0.0
  %6235 = vmatprep.subr.mxu0 0.0
  %6236 = vmatpush2.msra.mxu0 0.0
  %6237 = vmatprep.subr.mxu0 0.0
  %6238 = vmatpush2.msra.mxu0 0.0
  %6239 = vmatprep.subr.mxu0 0.0
  %6240 = vmatpush2.msra.mxu0 0.0
  %6241 = vmatprep.subr.mxu0 0.0
  %6242 = vmatpush2.msra.mxu0 0.0
  %6243 = vmatprep.mubr.f32.mxu0 0.0
  %6244 = vmatmul.mubr.f32.gmra.mxu0 %v6171
  %v6245 = vpop.f32.mrf.mxu0
  %v6246 = vadd.f32 %v6168, %v6245
  %v6247 = vpop.f32.mrf.mxu0
  %6248 = vmatprep.mubr.f32.mxu0 0.0
  %6249 = vmatmul.mubr.f32.gmra.mxu0 %v6174
  %v6250 = vpop.f32.mrf.mxu0
  %v6251 = vadd.f32 %v6168, %v6250
  %v6252 = vpop.f32.mrf.mxu0
  %6253 = vmatprep.mubr.f32.mxu0 0.0
  %6254 = vmatmul.mubr.f32.gmra.mxu0 %v6177
  %v6255 = vpop.f32.mrf.mxu0
  %v6256 = vadd.f32 %v6168, %v6255
  %v6257 = vpop.f32.mrf.mxu0
  %6258 = vdwg.mxu0
  %v6259 = vmax.f32 %v6246, 0.0
  %v6260 = vmax.f32 %v6251, 0.0
  %v6261 = vmax.f32 %v6256, 0.0
  %v6262 = vld [vmem:[%s63] sm:$0xff]
  %v6263 = vld [vmem:[%s63 + $0x8] sm:$0xff]
  %v6264 = vld [vmem:[%s65] sm:$0x1]
  %v6266 = vlaneseq
  %v6267 = vshrl.u32 %v6266, 7
  %v6268 = vsub.s32 0, %v6267
  %v6269 = vrot.slane %v6264, %v6268
  %v6272 = vsel %vm248, %v6259, 0
  %v6275 = vsel %vm248, %v6260, 0
  %v6278 = vsel %vm248, %v6261, 0
  %6280 = vmatprep.subr.mxu0 0.0
  %6281 = vmatpush1.msra.mxu0 0.0
  %6282 = vmatprep.subr.mxu0 0.0
  %6283 = vmatpush1.msra.mxu0 0.0
  %6284 = vmatprep.subr.mxu0 0.0
  %6285 = vmatpush1.msra.mxu0 0.0
  %6286 = vmatprep.subr.mxu0 0.0
  %6287 = vmatpush1.msra.mxu0 0.0
  %6288 = vmatprep.subr.mxu0 0.0
  %6289 = vmatpush1.msra.mxu0 0.0
  %6290 = vmatprep.subr.mxu0 0.0
  %6291 = vmatpush1.msra.mxu0 0.0
  %6292 = vmatprep.subr.mxu0 0.0
  %6293 = vmatpush1.msra.mxu0 0.0
  %6294 = vmatprep.subr.mxu0 0.0
  %6295 = vmatpush1.msra.mxu0 0.0
  %6296 = vmatprep.subr.mxu0 0.0
  %6297 = vmatpush1.msra.mxu0 0.0
  %6298 = vmatprep.subr.mxu0 0.0
  %6299 = vmatpush1.msra.mxu0 0.0
  %6300 = vmatprep.subr.mxu0 0.0
  %6301 = vmatpush1.msra.mxu0 0.0
  %6302 = vmatprep.subr.mxu0 0.0
  %6303 = vmatpush1.msra.mxu0 0.0
  %6304 = vmatprep.subr.mxu0 0.0
  %6305 = vmatpush1.msra.mxu0 0.0
  %6306 = vmatprep.subr.mxu0 0.0
  %6307 = vmatpush1.msra.mxu0 0.0
  %6308 = vmatprep.subr.mxu0 0.0
  %6309 = vmatpush1.msra.mxu0 %v6263
  %6310 = vmatprep.subr.mxu0 0.0
  %6311 = vmatpush1.msra.mxu0 %v6262
  %6312 = vmatprep.subr.mxu0 0.0
  %6313 = vmatpush2.msra.mxu0 0.0
  %6314 = vmatprep.subr.mxu0 0.0
  %6315 = vmatpush2.msra.mxu0 0.0
  %6316 = vmatprep.subr.mxu0 0.0
  %6317 = vmatpush2.msra.mxu0 0.0
  %6318 = vmatprep.subr.mxu0 0.0
  %6319 = vmatpush2.msra.mxu0 0.0
  %6320 = vmatprep.subr.mxu0 0.0
  %6321 = vmatpush2.msra.mxu0 0.0
  %6322 = vmatprep.subr.mxu0 0.0
  %6323 = vmatpush2.msra.mxu0 0.0
  %6324 = vmatprep.subr.mxu0 0.0
  %6325 = vmatpush2.msra.mxu0 0.0
  %6326 = vmatprep.subr.mxu0 0.0
  %6327 = vmatpush2.msra.mxu0 0.0
  %6328 = vmatprep.subr.mxu0 0.0
  %6329 = vmatpush2.msra.mxu0 0.0
  %6330 = vmatprep.subr.mxu0 0.0
  %6331 = vmatpush2.msra.mxu0 0.0
  %6332 = vmatprep.subr.mxu0 0.0
  %6333 = vmatpush2.msra.mxu0 0.0
  %6334 = vmatprep.subr.mxu0 0.0
  %6335 = vmatpush2.msra.mxu0 0.0
  %6336 = vmatprep.subr.mxu0 0.0
  %6337 = vmatpush2.msra.mxu0 0.0
  %6338 = vmatprep.subr.mxu0 0.0
  %6339 = vmatpush2.msra.mxu0 0.0
  %6340 = vmatprep.subr.mxu0 0.0
  %6341 = vmatpush2.msra.mxu0 0.0
  %6342 = vmatprep.subr.mxu0 0.0
  %6343 = vmatpush2.msra.mxu0 0.0
  %6344 = vmatprep.mubr.f32.mxu0 0.0
  %6345 = vmatmul.mubr.f32.gmra.mxu0 %v6272
  %v6346 = vpop.f32.mrf.mxu0
  %v6347 = vadd.f32 %v6269, %v6346
  %v6348 = vpop.f32.mrf.mxu0
  %6349 = vmatprep.mubr.f32.mxu0 0.0
  %6350 = vmatmul.mubr.f32.gmra.mxu0 %v6275
  %v6351 = vpop.f32.mrf.mxu0
  %v6352 = vadd.f32 %v6269, %v6351
  %v6353 = vpop.f32.mrf.mxu0
  %6354 = vmatprep.mubr.f32.mxu0 0.0
  %6355 = vmatmul.mubr.f32.gmra.mxu0 %v6278
  %v6356 = vpop.f32.mrf.mxu0
  %v6357 = vadd.f32 %v6269, %v6356
  %v6358 = vpop.f32.mrf.mxu0
  %6359 = vdwg.mxu0
  %6360 = vst [vmem:[%s69] sm:$0xff] %v6347
  %6361 = vst [vmem:[%s69 + $0x8] sm:$0xff] %v6352
  %6362 = vst [vmem:[%s69 + $0x10] sm:$0xff] %v6357
  // Predicated region
  $region134: #{kgcn_forward.1} parent=0 // pred_check
    _
  $region135: #{kgcn_forward.1} parent=0 // pred_check_branch
    %6364 = sbr.rel (0) target = $region137
  $region136: #{kgcn_forward.1} parent=0 // pred_region
    _
  $region137: #{kgcn_forward.1} parent=0 // pred_fallthru
    _
  // Predicated region
  $region138: #{kgcn_forward.1} parent=0 // pred_check
    _
  $region139: #{kgcn_forward.1} parent=0 // pred_check_branch
    %6366 = sbr.rel (0) target = $region141
  $region140: #{kgcn_forward.1} parent=0 // pred_region
    _
  $region141: #{kgcn_forward.1} parent=0 // pred_fallthru
    _
  // Predicated region
  $region142: #{kgcn_forward.1} parent=0 // pred_check
    _
  $region143: #{kgcn_forward.1} parent=0 // pred_check_branch
    %6368 = sbr.rel (0) target = $region145
  $region144: #{kgcn_forward.1} parent=0 // pred_region
    _
  $region145: #{kgcn_forward.1} parent=0 // pred_fallthru
    _
  // Predicated region
  $region146: #{kgcn_forward.1} parent=0 // pred_check
    _
  $region147: #{kgcn_forward.1} parent=0 // pred_check_branch
    %6370 = sbr.rel (0) target = $region149
  $region148: #{kgcn_forward.1} parent=0 // pred_region
    _
  $region149: #{kgcn_forward.1} parent=0 // pred_fallthru
    _

</llo_original>
